<compile_context>
chip_gen: v5e
topology: v5e:2x2
jax: 0.10.0
libtpu: 0.0.40
codegen_flags: <defaults>
</compile_context>

<pallas_src>
import functools

import numpy as np
import jax
import jax.numpy as jnp
from jax.experimental import pallas as pl
from jax.experimental.pallas import tpu as pltpu

MM_DTYPE = jnp.bfloat16   # MXU input dtype for the big matmuls (f32 accumulate)


# ----------------------------------------------------------------------------
# Pallas kernel: whole batch in one invocation.
# ----------------------------------------------------------------------------
def aspp_kernel(*refs, N, H, W, C, D, pad_y, pad_x, group_offsets):
    ng = len(group_offsets)
    x_ref, w_img_ref, bias_ref, wout_ref = refs[:4]
    gw_refs = refs[4:4 + ng]          # one fused weight per distinct tap set
    out_ref = refs[4 + ng]            # (N, D, H*W) lane-dense output
    xpad_ref = refs[5 + ng]           # bf16 VMEM scratch, zero-padded image

    HW = H * W
    M = N * HW

    # ---- build the zero-padded activation once in VMEM (bf16 for the MXU) --
    xpad_ref[...] = jnp.zeros_like(xpad_ref)
    xpad_ref[:, pad_y:pad_y + H, pad_x:pad_x + W, :] = (
        x_ref[...].astype(xpad_ref.dtype))

    def window(dy, dx):
        # Shifted (N,H,W,C) view of the padded image flattened to (M, C).
        # The H-shift is a free 3rd-minor index; only the W-shift costs a
        # sublane rotation, and each tap is extracted exactly once (im2col).
        y0, x0 = pad_y + dy, pad_x + dx
        return xpad_ref[:, y0:y0 + H, x0:x0 + W, :].reshape(M, C)

    # ---- image-level branch as a rank-1 term --------------------------------
    # AdaptiveAvgPool2d((1,1)) -> 1x1 conv -> bilinear upsample of a 1x1 map
    # (== broadcast).  The 1x1 conv and its slice of the output projection are
    # pre-folded into w_img (C, D); every bias is pre-folded into bias_ref.
    mean_rows = []
    for n in range(N):
        xs = x_ref[n].reshape(HW, C)                                  # f32
        mean_rows.append(jnp.sum(xs, axis=0, keepdims=True) * (1.0 / HW))
    mean = jnp.concatenate(mean_rows, axis=0)                         # (N, C)
    g_tot = jnp.dot(mean, w_img_ref[...],
                    preferred_element_type=jnp.float32) + bias_ref[...]   # (N, D)

    # ---- dense branches: one im2col matmul per distinct tap set -------------
    outs = []
    for offs, w_ref in zip(group_offsets, gw_refs):
        if len(offs) == 1:
            col = window(*offs[0])                                    # (M, C)
        else:
            col = jnp.concatenate([window(dy, dx) for dy, dx in offs],
                                  axis=-1)                            # (M, T*C)
        outs.append(jnp.dot(col, w_ref[...],
                            preferred_element_type=jnp.float32))
    cat = outs[0] if len(outs) == 1 else jnp.concatenate(outs, axis=-1)

    # ---- fused "concat + 1x1 output conv": a single matmul ------------------
    net = jnp.dot(cat.astype(wout_ref.dtype), wout_ref[...],
                  preferred_element_type=jnp.float32)                 # (M, D)

    # ---- lane-dense transposed store: (D, H*W) per batch (H*W on lanes) -----
    for n in range(N):
        rows = net[n * HW:(n + 1) * HW, :] + g_tot[n:n + 1, :]        # (HW, D)
        out_ref[n] = rows.T.astype(out_ref.dtype)                     # (D, HW)


# ----------------------------------------------------------------------------
# Wrapper: parameter re-layout / folding (glue) + pallas_call
# ----------------------------------------------------------------------------
def aspp_pallas(x_nchw, p):
    N, C, H, W = x_nchw.shape
    D = p['conv_b'].shape[0]
    HW = H * W
    assert W % 8 == 0, "keep the (N,H,W,C)->(N*H*W,C) reshape layout-free"

    x_nhwc = jnp.transpose(x_nchw, (0, 2, 3, 1)).astype(jnp.float32)

    def w1x1(w):          # torch (D, C, 1, 1) -> (C, D)
        return jnp.transpose(w[:, :, 0, 0], (1, 0))

    wout = jnp.transpose(p['out_w'][:, :, 0, 0], (1, 0))              # (5D, D)
    wout_rows = [wout[k * D:(k + 1) * D] for k in range(5)]           # img,b1,b6,b12,b18

    # image branch: (gap @ conv_w) @ wout[0:D] == gap @ (conv_w @ wout[0:D])
    w_img = w1x1(p['conv_w']) @ wout_rows[0]                          # (C, D) f32

    # every conv bias is spatially constant after the 1x1 projection -> fold once
    bias_fold = (p['out_b']
                 + p['conv_b'] @ wout_rows[0]
                 + p['b1_b'] @ wout_rows[1]
                 + p['b6_b'] @ wout_rows[2]
                 + p['b12_b'] @ wout_rows[3]
                 + p['b18_b'] @ wout_rows[4]).reshape(1, D)

    # Dense branches: keep only taps whose shifted window overlaps the image
    # (others read pure zero padding); merge branches with identical tap sets
    # (e.g. the degenerate d=18 branch with the 1x1 branch) into one matmul.
    def branch_def(cat_idx, w, d):
        kh, kw = int(w.shape[2]), int(w.shape[3])
        offs, mats = [], []
        for ky in range(kh):
            for kx in range(kw):
                dy, dx = (ky - kh // 2) * d, (kx - kw // 2) * d
                if abs(dy) < H and abs(dx) < W:
                    offs.append((dy, dx))
                    mats.append(jnp.transpose(w[:, :, ky, kx], (1, 0)))   # (C, D)
        return cat_idx, tuple(offs), jnp.concatenate(mats, axis=0)        # (T*C, D)

    branches = [branch_def(1, p['b1_w'], 1),
                branch_def(2, p['b6_w'], 6),
                branch_def(3, p['b12_w'], 12),
                branch_def(4, p['b18_w'], 18)]

    groups, g_order = {}, []
    for cat_idx, offs, wmat in branches:
        if offs not in groups:
            groups[offs] = ([], [])
            g_order.append(offs)
        groups[offs][0].append(cat_idx)
        groups[offs][1].append(wmat)

    group_offsets = tuple(g_order)
    group_weights = [jnp.concatenate(groups[o][1], axis=1).astype(MM_DTYPE)
                     for o in g_order]
    proj_order = [k for o in g_order for k in groups[o][0]]
    wout_cat = jnp.concatenate([wout_rows[k] for k in proj_order],
                               axis=0).astype(MM_DTYPE)               # (4D, D)

    pad_y = max((abs(dy) for o in group_offsets for dy, _ in o), default=0)
    pad_x = max((abs(dx) for o in group_offsets for _, dx in o), default=0)

    args = [x_nhwc, w_img.astype(jnp.float32), bias_fold.astype(jnp.float32),
            wout_cat] + group_weights

    def full_spec(shape):
        nd = len(shape)
        return pl.BlockSpec(shape, lambda i, _nd=nd: (0,) * _nd)

    kernel = functools.partial(
        aspp_kernel, N=N, H=H, W=W, C=C, D=D,
        pad_y=pad_y, pad_x=pad_x, group_offsets=group_offsets)

    out_flat = pl.pallas_call(
        kernel,
        out_shape=jax.ShapeDtypeStruct((N, D, HW), jnp.float32),
        grid=(1,),                      # batch folded into one step (1-TC chips)
        in_specs=[full_spec(a.shape) for a in args],
        out_specs=pl.BlockSpec((N, D, HW), lambda i: (0, 0, 0)),
        scratch_shapes=[pltpu.VMEM((N, H + 2 * pad_y, W + 2 * pad_x, C),
                                   MM_DTYPE)],
        compiler_params=pltpu.CompilerParams(
            dimension_semantics=("arbitrary",)),
    )(*args)

    return out_flat.reshape(N, D, H, W)                               # NCHW


# ----------------------------------------------------------------------------
# Deterministic parameter init (mirrors nn.Conv2d default uniform init shapes)
# ----------------------------------------------------------------------------
def init_params(key, in_channels, depth):
    ks = jax.random.split(key, 12)

    def conv_w(k, out_c, in_c, kh, kw):
        s = 1.0 / np.sqrt(in_c * kh * kw)
        return jax.random.uniform(k, (out_c, in_c, kh, kw), jnp.float32, -s, s)

    def conv_b(k, out_c, fan_in):
        s = 1.0 / np.sqrt(fan_in)
        return jax.random.uniform(k, (out_c,), jnp.float32, -s, s)

    return {
        'conv_w': conv_w(ks[0], depth, in_channels, 1, 1),
        'conv_b': conv_b(ks[1], depth, in_channels),
        'b1_w':   conv_w(ks[2], depth, in_channels, 1, 1),
        'b1_b':   conv_b(ks[3], depth, in_channels),
        'b6_w':   conv_w(ks[4], depth, in_channels, 3, 3),
        'b6_b':   conv_b(ks[5], depth, in_channels * 9),
        'b12_w':  conv_w(ks[6], depth, in_channels, 3, 3),
        'b12_b':  conv_b(ks[7], depth, in_channels * 9),
        'b18_w':  conv_w(ks[8], depth, in_channels, 3, 3),
        'b18_b':  conv_b(ks[9], depth, in_channels * 9),
        'out_w':  conv_w(ks[10], depth, depth * 5, 1, 1),
        'out_b':  conv_b(ks[11], depth, depth * 5),
    }


# ----------------------------------------------------------------------------
# Pure-JAX reference (same math as the PyTorch module) for verification
# ----------------------------------------------------------------------------
def aspp_reference(x, p):
    N, C, H, W = x.shape

    def conv(inp, w, b, d=1, pad=0):
        y = jax.lax.conv_general_dilated(
            inp, w, window_strides=(1, 1),
            padding=((pad, pad), (pad, pad)),
            rhs_dilation=(d, d),
            dimension_numbers=('NCHW', 'OIHW', 'NCHW'))
        return y + b[None, :, None, None]

    mean = jnp.mean(x, axis=(2, 3), keepdims=True)
    img = conv(mean, p['conv_w'], p['conv_b'])
    img = jnp.broadcast_to(img, (N, img.shape[1], H, W))   # bilinear from 1x1
    b1 = conv(x, p['b1_w'], p['b1_b'])
    b6 = conv(x, p['b6_w'], p['b6_b'], d=6, pad=6)
    b12 = conv(x, p['b12_w'], p['b12_b'], d=12, pad=12)
    b18 = conv(x, p['b18_w'], p['b18_b'], d=18, pad=18)
    cat = jnp.concatenate([img, b1, b6, b12, b18], axis=1)
    return conv(cat, p['out_w'], p['out_b'])


if __name__ == "__main__":
    # small shapes consistent with the module (in_channels=16, depth=16)
    N, C_IN, DEPTH, H, W = 2, 16, 16, 16, 16

    key = jax.random.PRNGKey(0)
    kx, kp = jax.random.split(key)
    x = jax.random.normal(kx, (N, C_IN, H, W), jnp.float32)   # NCHW, like PyTorch
    params = init_params(kp, C_IN, DEPTH)

    out = jax.jit(aspp_pallas)(x, params)
    out = jax.block_until_ready(out)

    ref = aspp_reference(x, params)
    # tolerance reflects bf16 MXU inputs (f32 accumulation) vs. the f32 reference
    np.testing.assert_allclose(np.asarray(out), np.asarray(ref),
                               rtol=2e-2, atol=2e-2)
    assert out.shape == (N, DEPTH, H, W)
    print("KERNEL_OK")
</pallas_src>

<mosaic_0001>
module attributes {stable_mosaic.version = 11 : i64} {
  func.func @aspp_kernel(%arg0: i32, %arg1: memref<2x16x16x16xf32, #tpu.memory_space<vmem>>, %arg2: memref<16x16xf32, #tpu.memory_space<vmem>>, %arg3: memref<1x16xf32, #tpu.memory_space<vmem>>, %arg4: memref<64x16xbf16, #tpu.memory_space<vmem>>, %arg5: memref<16x32xbf16, #tpu.memory_space<vmem>>, %arg6: memref<144x16xbf16, #tpu.memory_space<vmem>>, %arg7: memref<144x16xbf16, #tpu.memory_space<vmem>>, %arg8: memref<2x16x256xf32, #tpu.memory_space<vmem>>, %arg9: memref<2x40x40x16xbf16, #tpu.memory_space<vmem>>) attributes {dimension_semantics = [#tpu.dimension_semantics<arbitrary>], iteration_bounds = array<i64: 1>, scalar_prefetch = 0 : i64, scratch_operands = 1 : i64, tpu.core_type = #tpu.core_type<tc>, window_params = [{pipeline_mode = #tpu.pipeline_mode<synchronous>, transform_indices = @transform_0, window_bounds = array<i64: 2, 16, 16, 16>}, {pipeline_mode = #tpu.pipeline_mode<synchronous>, transform_indices = @transform_1, window_bounds = array<i64: 16, 16>}, {pipeline_mode = #tpu.pipeline_mode<synchronous>, transform_indices = @transform_2, window_bounds = array<i64: 1, 16>}, {pipeline_mode = #tpu.pipeline_mode<synchronous>, transform_indices = @transform_3, window_bounds = array<i64: 64, 16>}, {pipeline_mode = #tpu.pipeline_mode<synchronous>, transform_indices = @transform_4, window_bounds = array<i64: 16, 32>}, {pipeline_mode = #tpu.pipeline_mode<synchronous>, transform_indices = @transform_5, window_bounds = array<i64: 144, 16>}, {pipeline_mode = #tpu.pipeline_mode<synchronous>, transform_indices = @transform_6, window_bounds = array<i64: 144, 16>}, {pipeline_mode = #tpu.pipeline_mode<synchronous>, transform_indices = @transform_7, window_bounds = array<i64: 2, 16, 256>}]} {
    %cst = arith.constant 0.000000e+00 : bf16
    %0 = vector.broadcast %cst : bf16 to vector<2x40x40x16xbf16>
    %c0 = arith.constant 0 : index
    %c0_0 = arith.constant 0 : index
    %c0_1 = arith.constant 0 : index
    %c0_2 = arith.constant 0 : index
    %1 = vector.load %arg9[%c0, %c0_0, %c0_1, %c0_2] : memref<2x40x40x16xbf16, #tpu.memory_space<vmem>>, vector<2x40x40x16xbf16>
    tpu.vector_store %arg9[%c0, %c0_0, %c0_1, %c0_2], %0 {strides = array<i32>} : memref<2x40x40x16xbf16, #tpu.memory_space<vmem>>, vector<2x40x40x16xbf16>,
    %c0_3 = arith.constant 0 : index
    %c0_4 = arith.constant 0 : index
    %c0_5 = arith.constant 0 : index
    %c0_6 = arith.constant 0 : index
    %2 = vector.load %arg1[%c0_3, %c0_4, %c0_5, %c0_6] : memref<2x16x16x16xf32, #tpu.memory_space<vmem>>, vector<2x16x16x16xf32>
    %3 = arith.truncf %2 : vector<2x16x16x16xf32> to vector<2x16x16x16xbf16>
    %c0_7 = arith.constant 0 : index
    %c12 = arith.constant 12 : index
    %c12_8 = arith.constant 12 : index
    %c0_9 = arith.constant 0 : index
    %4 = vector.load %arg9[%c0_7, %c12, %c12_8, %c0_9] : memref<2x40x40x16xbf16, #tpu.memory_space<vmem>>, vector<2x16x16x16xbf16>
    tpu.vector_store %arg9[%c0_7, %c12, %c12_8, %c0_9], %3 {strides = array<i32>} : memref<2x40x40x16xbf16, #tpu.memory_space<vmem>>, vector<2x16x16x16xbf16>,
    %c0_10 = arith.constant 0 : index
    %c0_11 = arith.constant 0 : index
    %c0_12 = arith.constant 0 : index
    %c0_13 = arith.constant 0 : index
    %5 = vector.load %arg1[%c0_10, %c0_11, %c0_12, %c0_13] : memref<2x16x16x16xf32, #tpu.memory_space<vmem>>, vector<1x16x16x16xf32>
    %6 = vector.shape_cast %5 : vector<1x16x16x16xf32> to vector<16x16x16xf32>
    %7 = vector.shape_cast %6 : vector<16x16x16xf32> to vector<256x16xf32>
    %cst_14 = arith.constant dense<0.000000e+00> : vector<16xf32>
    %8 = vector.multi_reduction <add>, %7, %cst_14 [0] : vector<256x16xf32> to vector<16xf32>
    %9 = vector.shape_cast %8 : vector<16xf32> to vector<1x16xf32>
    %cst_15 = arith.constant 3.906250e-03 : f32
    %10 = vector.broadcast %cst_15 : f32 to vector<1x16xf32>
    %11 = arith.mulf %9, %10 : vector<1x16xf32>
    %c1 = arith.constant 1 : index
    %c0_16 = arith.constant 0 : index
    %c0_17 = arith.constant 0 : index
    %c0_18 = arith.constant 0 : index
    %12 = vector.load %arg1[%c1, %c0_16, %c0_17, %c0_18] : memref<2x16x16x16xf32, #tpu.memory_space<vmem>>, vector<1x16x16x16xf32>
    %13 = vector.shape_cast %12 : vector<1x16x16x16xf32> to vector<16x16x16xf32>
    %14 = vector.shape_cast %13 : vector<16x16x16xf32> to vector<256x16xf32>
    %cst_19 = arith.constant dense<0.000000e+00> : vector<16xf32>
    %15 = vector.multi_reduction <add>, %14, %cst_19 [0] : vector<256x16xf32> to vector<16xf32>
    %16 = vector.shape_cast %15 : vector<16xf32> to vector<1x16xf32>
    %cst_20 = arith.constant 3.906250e-03 : f32
    %17 = vector.broadcast %cst_20 : f32 to vector<1x16xf32>
    %18 = arith.mulf %16, %17 : vector<1x16xf32>
    %19 = tpu.concatenate %11, %18 in 0 : vector<1x16xf32>, vector<1x16xf32> -> vector<2x16xf32>
    %c0_21 = arith.constant 0 : index
    %c0_22 = arith.constant 0 : index
    %20 = vector.load %arg2[%c0_21, %c0_22] : memref<16x16xf32, #tpu.memory_space<vmem>>, vector<16x16xf32>
    %cst_23 = arith.constant dense<0.000000e+00> : vector<2x16xf32>
    %21 = tpu.matmul %19, %20, %cst_23 {dimension_numbers = #tpu.dot_dimension_numbers<[1], [0], [0], [1], [0, 0, 1, 1], [], []>} : vector<2x16xf32>, vector<16x16xf32>, vector<2x16xf32> -> vector<2x16xf32>
    %c0_24 = arith.constant 0 : index
    %c0_25 = arith.constant 0 : index
    %22 = vector.load %arg3[%c0_24, %c0_25] : memref<1x16xf32, #tpu.memory_space<vmem>>, vector<1x16xf32>
    %23 = vector.broadcast %22 : vector<1x16xf32> to vector<2x16xf32>
    %24 = arith.addf %21, %23 : vector<2x16xf32>
    %c0_26 = arith.constant 0 : index
    %c12_27 = arith.constant 12 : index
    %c12_28 = arith.constant 12 : index
    %c0_29 = arith.constant 0 : index
    %25 = vector.load %arg9[%c0_26, %c12_27, %c12_28, %c0_29] : memref<2x40x40x16xbf16, #tpu.memory_space<vmem>>, vector<2x16x16x16xbf16>
    %26 = vector.shape_cast %25 : vector<2x16x16x16xbf16> to vector<512x16xbf16>
    %c0_30 = arith.constant 0 : index
    %c0_31 = arith.constant 0 : index
    %27 = vector.load %arg5[%c0_30, %c0_31] : memref<16x32xbf16, #tpu.memory_space<vmem>>, vector<16x32xbf16>
    %cst_32 = arith.constant dense<0.000000e+00> : vector<512x32xf32>
    %28 = tpu.matmul %26, %27, %cst_32 {dimension_numbers = #tpu.dot_dimension_numbers<[1], [0], [0], [1], [0, 0, 1, 1], [], []>} : vector<512x16xbf16>, vector<16x32xbf16>, vector<512x32xf32> -> vector<512x32xf32>
    %c0_33 = arith.constant 0 : index
    %c6 = arith.constant 6 : index
    %c6_34 = arith.constant 6 : index
    %c0_35 = arith.constant 0 : index
    %29 = vector.load %arg9[%c0_33, %c6, %c6_34, %c0_35] : memref<2x40x40x16xbf16, #tpu.memory_space<vmem>>, vector<2x16x16x16xbf16>
    %30 = vector.shape_cast %29 : vector<2x16x16x16xbf16> to vector<512x16xbf16>
    %c0_36 = arith.constant 0 : index
    %c6_37 = arith.constant 6 : index
    %c12_38 = arith.constant 12 : index
    %c0_39 = arith.constant 0 : index
    %31 = vector.load %arg9[%c0_36, %c6_37, %c12_38, %c0_39] : memref<2x40x40x16xbf16, #tpu.memory_space<vmem>>, vector<2x16x16x16xbf16>
    %32 = vector.shape_cast %31 : vector<2x16x16x16xbf16> to vector<512x16xbf16>
    %c0_40 = arith.constant 0 : index
    %c6_41 = arith.constant 6 : index
    %c18 = arith.constant 18 : index
    %c0_42 = arith.constant 0 : index
    %33 = vector.load %arg9[%c0_40, %c6_41, %c18, %c0_42] : memref<2x40x40x16xbf16, #tpu.memory_space<vmem>>, vector<2x16x16x16xbf16>
    %34 = vector.shape_cast %33 : vector<2x16x16x16xbf16> to vector<512x16xbf16>
    %c0_43 = arith.constant 0 : index
    %c12_44 = arith.constant 12 : index
    %c6_45 = arith.constant 6 : index
    %c0_46 = arith.constant 0 : index
    %35 = vector.load %arg9[%c0_43, %c12_44, %c6_45, %c0_46] : memref<2x40x40x16xbf16, #tpu.memory_space<vmem>>, vector<2x16x16x16xbf16>
    %36 = vector.shape_cast %35 : vector<2x16x16x16xbf16> to vector<512x16xbf16>
    %c0_47 = arith.constant 0 : index
    %c12_48 = arith.constant 12 : index
    %c12_49 = arith.constant 12 : index
    %c0_50 = arith.constant 0 : index
    %37 = vector.load %arg9[%c0_47, %c12_48, %c12_49, %c0_50] : memref<2x40x40x16xbf16, #tpu.memory_space<vmem>>, vector<2x16x16x16xbf16>
    %38 = vector.shape_cast %37 : vector<2x16x16x16xbf16> to vector<512x16xbf16>
    %c0_51 = arith.constant 0 : index
    %c12_52 = arith.constant 12 : index
    %c18_53 = arith.constant 18 : index
    %c0_54 = arith.constant 0 : index
    %39 = vector.load %arg9[%c0_51, %c12_52, %c18_53, %c0_54] : memref<2x40x40x16xbf16, #tpu.memory_space<vmem>>, vector<2x16x16x16xbf16>
    %40 = vector.shape_cast %39 : vector<2x16x16x16xbf16> to vector<512x16xbf16>
    %c0_55 = arith.constant 0 : index
    %c18_56 = arith.constant 18 : index
    %c6_57 = arith.constant 6 : index
    %c0_58 = arith.constant 0 : index
    %41 = vector.load %arg9[%c0_55, %c18_56, %c6_57, %c0_58] : memref<2x40x40x16xbf16, #tpu.memory_space<vmem>>, vector<2x16x16x16xbf16>
    %42 = vector.shape_cast %41 : vector<2x16x16x16xbf16> to vector<512x16xbf16>
    %c0_59 = arith.constant 0 : index
    %c18_60 = arith.constant 18 : index
    %c12_61 = arith.constant 12 : index
    %c0_62 = arith.constant 0 : index
    %43 = vector.load %arg9[%c0_59, %c18_60, %c12_61, %c0_62] : memref<2x40x40x16xbf16, #tpu.memory_space<vmem>>, vector<2x16x16x16xbf16>
    %44 = vector.shape_cast %43 : vector<2x16x16x16xbf16> to vector<512x16xbf16>
    %c0_63 = arith.constant 0 : index
    %c18_64 = arith.constant 18 : index
    %c18_65 = arith.constant 18 : index
    %c0_66 = arith.constant 0 : index
    %45 = vector.load %arg9[%c0_63, %c18_64, %c18_65, %c0_66] : memref<2x40x40x16xbf16, #tpu.memory_space<vmem>>, vector<2x16x16x16xbf16>
    %46 = vector.shape_cast %45 : vector<2x16x16x16xbf16> to vector<512x16xbf16>
    %47 = tpu.concatenate %30, %32, %34, %36, %38, %40, %42, %44, %46 in 1 : vector<512x16xbf16>, vector<512x16xbf16>, vector<512x16xbf16>, vector<512x16xbf16>, vector<512x16xbf16>, vector<512x16xbf16>, vector<512x16xbf16>, vector<512x16xbf16>, vector<512x16xbf16> -> vector<512x144xbf16>
    %c0_67 = arith.constant 0 : index
    %c0_68 = arith.constant 0 : index
    %48 = vector.load %arg6[%c0_67, %c0_68] : memref<144x16xbf16, #tpu.memory_space<vmem>>, vector<144x16xbf16>
    %cst_69 = arith.constant dense<0.000000e+00> : vector<512x16xf32>
    %49 = tpu.matmul %47, %48, %cst_69 {dimension_numbers = #tpu.dot_dimension_numbers<[1], [0], [0], [1], [0, 0, 1, 1], [], []>} : vector<512x144xbf16>, vector<144x16xbf16>, vector<512x16xf32> -> vector<512x16xf32>
    %c0_70 = arith.constant 0 : index
    %c0_71 = arith.constant 0 : index
    %c0_72 = arith.constant 0 : index
    %c0_73 = arith.constant 0 : index
    %50 = vector.load %arg9[%c0_70, %c0_71, %c0_72, %c0_73] : memref<2x40x40x16xbf16, #tpu.memory_space<vmem>>, vector<2x16x16x16xbf16>
    %51 = vector.shape_cast %50 : vector<2x16x16x16xbf16> to vector<512x16xbf16>
    %c0_74 = arith.constant 0 : index
    %c0_75 = arith.constant 0 : index
    %c12_76 = arith.constant 12 : index
    %c0_77 = arith.constant 0 : index
    %52 = vector.load %arg9[%c0_74, %c0_75, %c12_76, %c0_77] : memref<2x40x40x16xbf16, #tpu.memory_space<vmem>>, vector<2x16x16x16xbf16>
    %53 = vector.shape_cast %52 : vector<2x16x16x16xbf16> to vector<512x16xbf16>
    %c0_78 = arith.constant 0 : index
    %c0_79 = arith.constant 0 : index
    %c24 = arith.constant 24 : index
    %c0_80 = arith.constant 0 : index
    %54 = vector.load %arg9[%c0_78, %c0_79, %c24, %c0_80] : memref<2x40x40x16xbf16, #tpu.memory_space<vmem>>, vector<2x16x16x16xbf16>
    %55 = vector.shape_cast %54 : vector<2x16x16x16xbf16> to vector<512x16xbf16>
    %c0_81 = arith.constant 0 : index
    %c12_82 = arith.constant 12 : index
    %c0_83 = arith.constant 0 : index
    %c0_84 = arith.constant 0 : index
    %56 = vector.load %arg9[%c0_81, %c12_82, %c0_83, %c0_84] : memref<2x40x40x16xbf16, #tpu.memory_space<vmem>>, vector<2x16x16x16xbf16>
    %57 = vector.shape_cast %56 : vector<2x16x16x16xbf16> to vector<512x16xbf16>
    %c0_85 = arith.constant 0 : index
    %c12_86 = arith.constant 12 : index
    %c12_87 = arith.constant 12 : index
    %c0_88 = arith.constant 0 : index
    %58 = vector.load %arg9[%c0_85, %c12_86, %c12_87, %c0_88] : memref<2x40x40x16xbf16, #tpu.memory_space<vmem>>, vector<2x16x16x16xbf16>
    %59 = vector.shape_cast %58 : vector<2x16x16x16xbf16> to vector<512x16xbf16>
    %c0_89 = arith.constant 0 : index
    %c12_90 = arith.constant 12 : index
    %c24_91 = arith.constant 24 : index
    %c0_92 = arith.constant 0 : index
    %60 = vector.load %arg9[%c0_89, %c12_90, %c24_91, %c0_92] : memref<2x40x40x16xbf16, #tpu.memory_space<vmem>>, vector<2x16x16x16xbf16>
    %61 = vector.shape_cast %60 : vector<2x16x16x16xbf16> to vector<512x16xbf16>
    %c0_93 = arith.constant 0 : index
    %c24_94 = arith.constant 24 : index
    %c0_95 = arith.constant 0 : index
    %c0_96 = arith.constant 0 : index
    %62 = vector.load %arg9[%c0_93, %c24_94, %c0_95, %c0_96] : memref<2x40x40x16xbf16, #tpu.memory_space<vmem>>, vector<2x16x16x16xbf16>
    %63 = vector.shape_cast %62 : vector<2x16x16x16xbf16> to vector<512x16xbf16>
    %c0_97 = arith.constant 0 : index
    %c24_98 = arith.constant 24 : index
    %c12_99 = arith.constant 12 : index
    %c0_100 = arith.constant 0 : index
    %64 = vector.load %arg9[%c0_97, %c24_98, %c12_99, %c0_100] : memref<2x40x40x16xbf16, #tpu.memory_space<vmem>>, vector<2x16x16x16xbf16>
    %65 = vector.shape_cast %64 : vector<2x16x16x16xbf16> to vector<512x16xbf16>
    %c0_101 = arith.constant 0 : index
    %c24_102 = arith.constant 24 : index
    %c24_103 = arith.constant 24 : index
    %c0_104 = arith.constant 0 : index
    %66 = vector.load %arg9[%c0_101, %c24_102, %c24_103, %c0_104] : memref<2x40x40x16xbf16, #tpu.memory_space<vmem>>, vector<2x16x16x16xbf16>
    %67 = vector.shape_cast %66 : vector<2x16x16x16xbf16> to vector<512x16xbf16>
    %68 = tpu.concatenate %51, %53, %55, %57, %59, %61, %63, %65, %67 in 1 : vector<512x16xbf16>, vector<512x16xbf16>, vector<512x16xbf16>, vector<512x16xbf16>, vector<512x16xbf16>, vector<512x16xbf16>, vector<512x16xbf16>, vector<512x16xbf16>, vector<512x16xbf16> -> vector<512x144xbf16>
    %c0_105 = arith.constant 0 : index
    %c0_106 = arith.constant 0 : index
    %69 = vector.load %arg7[%c0_105, %c0_106] : memref<144x16xbf16, #tpu.memory_space<vmem>>, vector<144x16xbf16>
    %cst_107 = arith.constant dense<0.000000e+00> : vector<512x16xf32>
    %70 = tpu.matmul %68, %69, %cst_107 {dimension_numbers = #tpu.dot_dimension_numbers<[1], [0], [0], [1], [0, 0, 1, 1], [], []>} : vector<512x144xbf16>, vector<144x16xbf16>, vector<512x16xf32> -> vector<512x16xf32>
    %71 = tpu.concatenate %28, %49, %70 in 1 : vector<512x32xf32>, vector<512x16xf32>, vector<512x16xf32> -> vector<512x64xf32>
    %72 = arith.truncf %71 : vector<512x64xf32> to vector<512x64xbf16>
    %c0_108 = arith.constant 0 : index
    %c0_109 = arith.constant 0 : index
    %73 = vector.load %arg4[%c0_108, %c0_109] : memref<64x16xbf16, #tpu.memory_space<vmem>>, vector<64x16xbf16>
    %cst_110 = arith.constant dense<0.000000e+00> : vector<512x16xf32>
    %74 = tpu.matmul %72, %73, %cst_110 {dimension_numbers = #tpu.dot_dimension_numbers<[1], [0], [0], [1], [0, 0, 1, 1], [], []>} : vector<512x64xbf16>, vector<64x16xbf16>, vector<512x16xf32> -> vector<512x16xf32>
    %75 = vector.extract_strided_slice %74 {offsets = [0, 0], sizes = [256, 16], strides = [1, 1]} : vector<512x16xf32> to vector<256x16xf32>
    %76 = vector.extract_strided_slice %24 {offsets = [0, 0], sizes = [1, 16], strides = [1, 1]} : vector<2x16xf32> to vector<1x16xf32>
    %77 = vector.broadcast %76 : vector<1x16xf32> to vector<256x16xf32>
    %78 = arith.addf %75, %77 : vector<256x16xf32>
    %79 = tpu.transpose %78, [1, 0] : vector<256x16xf32> -> vector<16x256xf32>
    %c0_111 = arith.constant 0 : index
    %c0_112 = arith.constant 0 : index
    %c0_113 = arith.constant 0 : index
    %80 = vector.load %arg8[%c0_111, %c0_112, %c0_113] : memref<2x16x256xf32, #tpu.memory_space<vmem>>, vector<1x16x256xf32>
    %81 = vector.shape_cast %80 : vector<1x16x256xf32> to vector<16x256xf32>
    %82 = vector.shape_cast %79 : vector<16x256xf32> to vector<1x16x256xf32>
    tpu.vector_store %arg8[%c0_111, %c0_112, %c0_113], %82 {strides = array<i32>} : memref<2x16x256xf32, #tpu.memory_space<vmem>>, vector<1x16x256xf32>,
    %83 = vector.extract_strided_slice %74 {offsets = [256, 0], sizes = [256, 16], strides = [1, 1]} : vector<512x16xf32> to vector<256x16xf32>
    %84 = vector.extract_strided_slice %24 {offsets = [1, 0], sizes = [1, 16], strides = [1, 1]} : vector<2x16xf32> to vector<1x16xf32>
    %85 = vector.broadcast %84 : vector<1x16xf32> to vector<256x16xf32>
    %86 = arith.addf %83, %85 : vector<256x16xf32>
    %87 = tpu.transpose %86, [1, 0] : vector<256x16xf32> -> vector<16x256xf32>
    %c1_114 = arith.constant 1 : index
    %c0_115 = arith.constant 0 : index
    %c0_116 = arith.constant 0 : index
    %88 = vector.load %arg8[%c1_114, %c0_115, %c0_116] : memref<2x16x256xf32, #tpu.memory_space<vmem>>, vector<1x16x256xf32>
    %89 = vector.shape_cast %88 : vector<1x16x256xf32> to vector<16x256xf32>
    %90 = vector.shape_cast %87 : vector<16x256xf32> to vector<1x16x256xf32>
    tpu.vector_store %arg8[%c1_114, %c0_115, %c0_116], %90 {strides = array<i32>} : memref<2x16x256xf32, #tpu.memory_space<vmem>>, vector<1x16x256xf32>,
    return
  }
  func.func @transform_0(%arg0: i32) -> (i32, i32, i32, i32) {
    %c0_i32 = arith.constant 0 : i32
    %c0_i32_0 = arith.constant 0 : i32
    %c0_i32_1 = arith.constant 0 : i32
    %c0_i32_2 = arith.constant 0 : i32
    %c0_i32_3 = arith.constant 0 : i32
    return %c0_i32, %c0_i32_0, %c0_i32_1, %c0_i32_2 : i32, i32, i32, i32
  }
  func.func @transform_1(%arg0: i32) -> (i32, i32) {
    %c0_i32 = arith.constant 0 : i32
    %c0_i32_0 = arith.constant 0 : i32
    %c0_i32_1 = arith.constant 0 : i32
    return %c0_i32, %c0_i32_0 : i32, i32
  }
  func.func @transform_2(%arg0: i32) -> (i32, i32) {
    %c0_i32 = arith.constant 0 : i32
    %c0_i32_0 = arith.constant 0 : i32
    %c0_i32_1 = arith.constant 0 : i32
    return %c0_i32, %c0_i32_0 : i32, i32
  }
  func.func @transform_3(%arg0: i32) -> (i32, i32) {
    %c0_i32 = arith.constant 0 : i32
    %c0_i32_0 = arith.constant 0 : i32
    %c0_i32_1 = arith.constant 0 : i32
    return %c0_i32, %c0_i32_0 : i32, i32
  }
  func.func @transform_4(%arg0: i32) -> (i32, i32) {
    %c0_i32 = arith.constant 0 : i32
    %c0_i32_0 = arith.constant 0 : i32
    %c0_i32_1 = arith.constant 0 : i32
    return %c0_i32, %c0_i32_0 : i32, i32
  }
  func.func @transform_5(%arg0: i32) -> (i32, i32) {
    %c0_i32 = arith.constant 0 : i32
    %c0_i32_0 = arith.constant 0 : i32
    %c0_i32_1 = arith.constant 0 : i32
    return %c0_i32, %c0_i32_0 : i32, i32
  }
  func.func @transform_6(%arg0: i32) -> (i32, i32) {
    %c0_i32 = arith.constant 0 : i32
    %c0_i32_0 = arith.constant 0 : i32
    %c0_i32_1 = arith.constant 0 : i32
    return %c0_i32, %c0_i32_0 : i32, i32
  }
  func.func @transform_7(%arg0: i32) -> (i32, i32, i32) {
    %c0_i32 = arith.constant 0 : i32
    %c0_i32_0 = arith.constant 0 : i32
    %c0_i32_1 = arith.constant 0 : i32
    %c0_i32_2 = arith.constant 0 : i32
    return %c0_i32, %c0_i32_0, %c0_i32_1 : i32, i32, i32
  }
}

</mosaic_0001>

<llo_original>
// kernel: aspp_pallas.1
$region0: #{aspp_pallas.1}
  #allocation0 [shape = 'u32[]', space=smem, size = 0x4, offset = 0x4, fixed_abs, tag = 'smem constant byte address 0x4 - core index']
  #allocation1 [shape = 'u32[72,128]{1,0:T(1,128)}', space=vmem, size = 0x9000, scoped, tag = 'internal scratch']
  #allocation2 [shape = 'bf16[2,40,40,16]{3,2,1,0:T(8,128)(2,1)}', space=vmem, size = 0xc8000, scoped, tag = 'scratch operand']
  %s0 = inlined_call_operand.vmem [shape: f32[2,16,16,16], index: 0, kind: input, shape index: {}]
  %s1 = inlined_call_operand.vmem [shape: f32[16,16], index: 1, kind: input, shape index: {}]
  %s2 = inlined_call_operand.vmem [shape: f32[1,16], index: 2, kind: input, shape index: {}]
  %s3 = inlined_call_operand.vmem [shape: bf16[64,16], index: 3, kind: input, shape index: {}]
  %s4 = inlined_call_operand.vmem [shape: bf16[16,32], index: 4, kind: input, shape index: {}]
  %s5 = inlined_call_operand.vmem [shape: bf16[144,16], index: 5, kind: input, shape index: {}]
  %s6 = inlined_call_operand.vmem [shape: bf16[144,16], index: 6, kind: input, shape index: {}]
  %s7 = inlined_call_operand.vmem [shape: f32[2,16,256], index: 7, kind: output, shape index: {}]
  %s8 = sld [smem:[#allocation0]]
  $region38: #{aspp_pallas.1} parent=0
    _
  %s10 = ssub.s32 1, %s8
  %s11 = scalar_select 0, %s10, %s8
  // Predicated region
  $region2: #{aspp_pallas.1} parent=0 // pred_check
    _
  $region3: #{aspp_pallas.1} parent=0 // pred_check_branch
    %13 = sbr.rel (0) target = $region5
  $region4: #{aspp_pallas.1} parent=0 // pred_region
    _
  $region5: #{aspp_pallas.1} parent=0 // pred_fallthru
    _
  // Predicated region
  $region6: #{aspp_pallas.1} parent=0 // pred_check
    _
  $region7: #{aspp_pallas.1} parent=0 // pred_check_branch
    %15 = sbr.rel (0) target = $region9
  $region8: #{aspp_pallas.1} parent=0 // pred_region
    _
  $region9: #{aspp_pallas.1} parent=0 // pred_fallthru
    _
  // Predicated region
  $region10: #{aspp_pallas.1} parent=0 // pred_check
    _
  $region11: #{aspp_pallas.1} parent=0 // pred_check_branch
    %17 = sbr.rel (0) target = $region13
  $region12: #{aspp_pallas.1} parent=0 // pred_region
    _
  $region13: #{aspp_pallas.1} parent=0 // pred_fallthru
    _
  // Predicated region
  $region14: #{aspp_pallas.1} parent=0 // pred_check
    _
  $region15: #{aspp_pallas.1} parent=0 // pred_check_branch
    %19 = sbr.rel (0) target = $region17
  $region16: #{aspp_pallas.1} parent=0 // pred_region
    _
  $region17: #{aspp_pallas.1} parent=0 // pred_fallthru
    _
  // Predicated region
  $region18: #{aspp_pallas.1} parent=0 // pred_check
    _
  $region19: #{aspp_pallas.1} parent=0 // pred_check_branch
    %21 = sbr.rel (0) target = $region21
  $region20: #{aspp_pallas.1} parent=0 // pred_region
    _
  $region21: #{aspp_pallas.1} parent=0 // pred_fallthru
    _
  // Predicated region
  $region22: #{aspp_pallas.1} parent=0 // pred_check
    _
  $region23: #{aspp_pallas.1} parent=0 // pred_check_branch
    %23 = sbr.rel (0) target = $region25
  $region24: #{aspp_pallas.1} parent=0 // pred_region
    _
  $region25: #{aspp_pallas.1} parent=0 // pred_fallthru
    _
  // Predicated region
  $region26: #{aspp_pallas.1} parent=0 // pred_check
    _
  $region27: #{aspp_pallas.1} parent=0 // pred_check_branch
    %25 = sbr.rel (0) target = $region29
  $region28: #{aspp_pallas.1} parent=0 // pred_region
    _
  $region29: #{aspp_pallas.1} parent=0 // pred_fallthru
    _
  %vm27 = vcmask 125952
  %28 = vst.msk [vmem:[#allocation2] sm:$0xf] %vm27, 0
  %29 = vst.msk [vmem:[#allocation2 + $0x4] sm:$0xf] %vm27, 0
  %30 = vst.msk [vmem:[#allocation2 + $0x8] sm:$0xf] %vm27, 0
  %31 = vst.msk [vmem:[#allocation2 + $0xc] sm:$0xf] %vm27, 0
  %32 = vst.msk [vmem:[#allocation2 + $0x10] sm:$0xf] %vm27, 0
  %33 = vst.msk [vmem:[#allocation2 + $0x14] sm:$0xf] %vm27, 0
  %34 = vst.msk [vmem:[#allocation2 + $0x18] sm:$0xf] %vm27, 0
  %35 = vst.msk [vmem:[#allocation2 + $0x1c] sm:$0xf] %vm27, 0
  %36 = vst.msk [vmem:[#allocation2 + $0x20] sm:$0xf] %vm27, 0
  %37 = vst.msk [vmem:[#allocation2 + $0x24] sm:$0xf] %vm27, 0
  %38 = vst.msk [vmem:[#allocation2 + $0x28] sm:$0xf] %vm27, 0
  %39 = vst.msk [vmem:[#allocation2 + $0x2c] sm:$0xf] %vm27, 0
  %40 = vst.msk [vmem:[#allocation2 + $0x30] sm:$0xf] %vm27, 0
  %41 = vst.msk [vmem:[#allocation2 + $0x34] sm:$0xf] %vm27, 0
  %42 = vst.msk [vmem:[#allocation2 + $0x38] sm:$0xf] %vm27, 0
  %43 = vst.msk [vmem:[#allocation2 + $0x3c] sm:$0xf] %vm27, 0
  %44 = vst.msk [vmem:[#allocation2 + $0x40] sm:$0xf] %vm27, 0
  %45 = vst.msk [vmem:[#allocation2 + $0x44] sm:$0xf] %vm27, 0
  %46 = vst.msk [vmem:[#allocation2 + $0x48] sm:$0xf] %vm27, 0
  %47 = vst.msk [vmem:[#allocation2 + $0x4c] sm:$0xf] %vm27, 0
  %48 = vst.msk [vmem:[#allocation2 + $0x50] sm:$0xf] %vm27, 0
  %49 = vst.msk [vmem:[#allocation2 + $0x54] sm:$0xf] %vm27, 0
  %50 = vst.msk [vmem:[#allocation2 + $0x58] sm:$0xf] %vm27, 0
  %51 = vst.msk [vmem:[#allocation2 + $0x5c] sm:$0xf] %vm27, 0
  %52 = vst.msk [vmem:[#allocation2 + $0x60] sm:$0xf] %vm27, 0
  %53 = vst.msk [vmem:[#allocation2 + $0x64] sm:$0xf] %vm27, 0
  %54 = vst.msk [vmem:[#allocation2 + $0x68] sm:$0xf] %vm27, 0
  %55 = vst.msk [vmem:[#allocation2 + $0x6c] sm:$0xf] %vm27, 0
  %56 = vst.msk [vmem:[#allocation2 + $0x70] sm:$0xf] %vm27, 0
  %57 = vst.msk [vmem:[#allocation2 + $0x74] sm:$0xf] %vm27, 0
  %58 = vst.msk [vmem:[#allocation2 + $0x78] sm:$0xf] %vm27, 0
  %59 = vst.msk [vmem:[#allocation2 + $0x7c] sm:$0xf] %vm27, 0
  %60 = vst.msk [vmem:[#allocation2 + $0x80] sm:$0xf] %vm27, 0
  %61 = vst.msk [vmem:[#allocation2 + $0x84] sm:$0xf] %vm27, 0
  %62 = vst.msk [vmem:[#allocation2 + $0x88] sm:$0xf] %vm27, 0
  %63 = vst.msk [vmem:[#allocation2 + $0x8c] sm:$0xf] %vm27, 0
  %64 = vst.msk [vmem:[#allocation2 + $0x90] sm:$0xf] %vm27, 0
  %65 = vst.msk [vmem:[#allocation2 + $0x94] sm:$0xf] %vm27, 0
  %66 = vst.msk [vmem:[#allocation2 + $0x98] sm:$0xf] %vm27, 0
  %67 = vst.msk [vmem:[#allocation2 + $0x9c] sm:$0xf] %vm27, 0
  %68 = vst.msk [vmem:[#allocation2 + $0xa0] sm:$0xf] %vm27, 0
  %69 = vst.msk [vmem:[#allocation2 + $0xa4] sm:$0xf] %vm27, 0
  %70 = vst.msk [vmem:[#allocation2 + $0xa8] sm:$0xf] %vm27, 0
  %71 = vst.msk [vmem:[#allocation2 + $0xac] sm:$0xf] %vm27, 0
  %72 = vst.msk [vmem:[#allocation2 + $0xb0] sm:$0xf] %vm27, 0
  %73 = vst.msk [vmem:[#allocation2 + $0xb4] sm:$0xf] %vm27, 0
  %74 = vst.msk [vmem:[#allocation2 + $0xb8] sm:$0xf] %vm27, 0
  %75 = vst.msk [vmem:[#allocation2 + $0xbc] sm:$0xf] %vm27, 0
  %76 = vst.msk [vmem:[#allocation2 + $0xc0] sm:$0xf] %vm27, 0
  %77 = vst.msk [vmem:[#allocation2 + $0xc4] sm:$0xf] %vm27, 0
  %78 = vst.msk [vmem:[#allocation2 + $0xc8] sm:$0xf] %vm27, 0
  %79 = vst.msk [vmem:[#allocation2 + $0xcc] sm:$0xf] %vm27, 0
  %80 = vst.msk [vmem:[#allocation2 + $0xd0] sm:$0xf] %vm27, 0
  %81 = vst.msk [vmem:[#allocation2 + $0xd4] sm:$0xf] %vm27, 0
  %82 = vst.msk [vmem:[#allocation2 + $0xd8] sm:$0xf] %vm27, 0
  %83 = vst.msk [vmem:[#allocation2 + $0xdc] sm:$0xf] %vm27, 0
  %84 = vst.msk [vmem:[#allocation2 + $0xe0] sm:$0xf] %vm27, 0
  %85 = vst.msk [vmem:[#allocation2 + $0xe4] sm:$0xf] %vm27, 0
  %86 = vst.msk [vmem:[#allocation2 + $0xe8] sm:$0xf] %vm27, 0
  %87 = vst.msk [vmem:[#allocation2 + $0xec] sm:$0xf] %vm27, 0
  %88 = vst.msk [vmem:[#allocation2 + $0xf0] sm:$0xf] %vm27, 0
  %89 = vst.msk [vmem:[#allocation2 + $0xf4] sm:$0xf] %vm27, 0
  %90 = vst.msk [vmem:[#allocation2 + $0xf8] sm:$0xf] %vm27, 0
  %91 = vst.msk [vmem:[#allocation2 + $0xfc] sm:$0xf] %vm27, 0
  %92 = vst.msk [vmem:[#allocation2 + $0x100] sm:$0xf] %vm27, 0
  %93 = vst.msk [vmem:[#allocation2 + $0x104] sm:$0xf] %vm27, 0
  %94 = vst.msk [vmem:[#allocation2 + $0x108] sm:$0xf] %vm27, 0
  %95 = vst.msk [vmem:[#allocation2 + $0x10c] sm:$0xf] %vm27, 0
  %96 = vst.msk [vmem:[#allocation2 + $0x110] sm:$0xf] %vm27, 0
  %97 = vst.msk [vmem:[#allocation2 + $0x114] sm:$0xf] %vm27, 0
  %98 = vst.msk [vmem:[#allocation2 + $0x118] sm:$0xf] %vm27, 0
  %99 = vst.msk [vmem:[#allocation2 + $0x11c] sm:$0xf] %vm27, 0
  %100 = vst.msk [vmem:[#allocation2 + $0x120] sm:$0xf] %vm27, 0
  %101 = vst.msk [vmem:[#allocation2 + $0x124] sm:$0xf] %vm27, 0
  %102 = vst.msk [vmem:[#allocation2 + $0x128] sm:$0xf] %vm27, 0
  %103 = vst.msk [vmem:[#allocation2 + $0x12c] sm:$0xf] %vm27, 0
  %104 = vst.msk [vmem:[#allocation2 + $0x130] sm:$0xf] %vm27, 0
  %105 = vst.msk [vmem:[#allocation2 + $0x134] sm:$0xf] %vm27, 0
  %106 = vst.msk [vmem:[#allocation2 + $0x138] sm:$0xf] %vm27, 0
  %107 = vst.msk [vmem:[#allocation2 + $0x13c] sm:$0xf] %vm27, 0
  %108 = vst.msk [vmem:[#allocation2 + $0x140] sm:$0xf] %vm27, 0
  %109 = vst.msk [vmem:[#allocation2 + $0x144] sm:$0xf] %vm27, 0
  %110 = vst.msk [vmem:[#allocation2 + $0x148] sm:$0xf] %vm27, 0
  %111 = vst.msk [vmem:[#allocation2 + $0x14c] sm:$0xf] %vm27, 0
  %112 = vst.msk [vmem:[#allocation2 + $0x150] sm:$0xf] %vm27, 0
  %113 = vst.msk [vmem:[#allocation2 + $0x154] sm:$0xf] %vm27, 0
  %114 = vst.msk [vmem:[#allocation2 + $0x158] sm:$0xf] %vm27, 0
  %115 = vst.msk [vmem:[#allocation2 + $0x15c] sm:$0xf] %vm27, 0
  %116 = vst.msk [vmem:[#allocation2 + $0x160] sm:$0xf] %vm27, 0
  %117 = vst.msk [vmem:[#allocation2 + $0x164] sm:$0xf] %vm27, 0
  %118 = vst.msk [vmem:[#allocation2 + $0x168] sm:$0xf] %vm27, 0
  %119 = vst.msk [vmem:[#allocation2 + $0x16c] sm:$0xf] %vm27, 0
  %120 = vst.msk [vmem:[#allocation2 + $0x170] sm:$0xf] %vm27, 0
  %121 = vst.msk [vmem:[#allocation2 + $0x174] sm:$0xf] %vm27, 0
  %122 = vst.msk [vmem:[#allocation2 + $0x178] sm:$0xf] %vm27, 0
  %123 = vst.msk [vmem:[#allocation2 + $0x17c] sm:$0xf] %vm27, 0
  %124 = vst.msk [vmem:[#allocation2 + $0x180] sm:$0xf] %vm27, 0
  %125 = vst.msk [vmem:[#allocation2 + $0x184] sm:$0xf] %vm27, 0
  %126 = vst.msk [vmem:[#allocation2 + $0x188] sm:$0xf] %vm27, 0
  %127 = vst.msk [vmem:[#allocation2 + $0x18c] sm:$0xf] %vm27, 0
  %128 = vst.msk [vmem:[#allocation2 + $0x190] sm:$0xf] %vm27, 0
  %129 = vst.msk [vmem:[#allocation2 + $0x194] sm:$0xf] %vm27, 0
  %130 = vst.msk [vmem:[#allocation2 + $0x198] sm:$0xf] %vm27, 0
  %131 = vst.msk [vmem:[#allocation2 + $0x19c] sm:$0xf] %vm27, 0
  %132 = vst.msk [vmem:[#allocation2 + $0x1a0] sm:$0xf] %vm27, 0
  %133 = vst.msk [vmem:[#allocation2 + $0x1a4] sm:$0xf] %vm27, 0
  %134 = vst.msk [vmem:[#allocation2 + $0x1a8] sm:$0xf] %vm27, 0
  %135 = vst.msk [vmem:[#allocation2 + $0x1ac] sm:$0xf] %vm27, 0
  %136 = vst.msk [vmem:[#allocation2 + $0x1b0] sm:$0xf] %vm27, 0
  %137 = vst.msk [vmem:[#allocation2 + $0x1b4] sm:$0xf] %vm27, 0
  %138 = vst.msk [vmem:[#allocation2 + $0x1b8] sm:$0xf] %vm27, 0
  %139 = vst.msk [vmem:[#allocation2 + $0x1bc] sm:$0xf] %vm27, 0
  %140 = vst.msk [vmem:[#allocation2 + $0x1c0] sm:$0xf] %vm27, 0
  %141 = vst.msk [vmem:[#allocation2 + $0x1c4] sm:$0xf] %vm27, 0
  %142 = vst.msk [vmem:[#allocation2 + $0x1c8] sm:$0xf] %vm27, 0
  %143 = vst.msk [vmem:[#allocation2 + $0x1cc] sm:$0xf] %vm27, 0
  %144 = vst.msk [vmem:[#allocation2 + $0x1d0] sm:$0xf] %vm27, 0
  %145 = vst.msk [vmem:[#allocation2 + $0x1d4] sm:$0xf] %vm27, 0
  %146 = vst.msk [vmem:[#allocation2 + $0x1d8] sm:$0xf] %vm27, 0
  %147 = vst.msk [vmem:[#allocation2 + $0x1dc] sm:$0xf] %vm27, 0
  %148 = vst.msk [vmem:[#allocation2 + $0x1e0] sm:$0xf] %vm27, 0
  %149 = vst.msk [vmem:[#allocation2 + $0x1e4] sm:$0xf] %vm27, 0
  %150 = vst.msk [vmem:[#allocation2 + $0x1e8] sm:$0xf] %vm27, 0
  %151 = vst.msk [vmem:[#allocation2 + $0x1ec] sm:$0xf] %vm27, 0
  %152 = vst.msk [vmem:[#allocation2 + $0x1f0] sm:$0xf] %vm27, 0
  %153 = vst.msk [vmem:[#allocation2 + $0x1f4] sm:$0xf] %vm27, 0
  %154 = vst.msk [vmem:[#allocation2 + $0x1f8] sm:$0xf] %vm27, 0
  %155 = vst.msk [vmem:[#allocation2 + $0x1fc] sm:$0xf] %vm27, 0
  %156 = vst.msk [vmem:[#allocation2 + $0x200] sm:$0xf] %vm27, 0
  %157 = vst.msk [vmem:[#allocation2 + $0x204] sm:$0xf] %vm27, 0
  %158 = vst.msk [vmem:[#allocation2 + $0x208] sm:$0xf] %vm27, 0
  %159 = vst.msk [vmem:[#allocation2 + $0x20c] sm:$0xf] %vm27, 0
  %160 = vst.msk [vmem:[#allocation2 + $0x210] sm:$0xf] %vm27, 0
  %161 = vst.msk [vmem:[#allocation2 + $0x214] sm:$0xf] %vm27, 0
  %162 = vst.msk [vmem:[#allocation2 + $0x218] sm:$0xf] %vm27, 0
  %163 = vst.msk [vmem:[#allocation2 + $0x21c] sm:$0xf] %vm27, 0
  %164 = vst.msk [vmem:[#allocation2 + $0x220] sm:$0xf] %vm27, 0
  %165 = vst.msk [vmem:[#allocation2 + $0x224] sm:$0xf] %vm27, 0
  %166 = vst.msk [vmem:[#allocation2 + $0x228] sm:$0xf] %vm27, 0
  %167 = vst.msk [vmem:[#allocation2 + $0x22c] sm:$0xf] %vm27, 0
  %168 = vst.msk [vmem:[#allocation2 + $0x230] sm:$0xf] %vm27, 0
  %169 = vst.msk [vmem:[#allocation2 + $0x234] sm:$0xf] %vm27, 0
  %170 = vst.msk [vmem:[#allocation2 + $0x238] sm:$0xf] %vm27, 0
  %171 = vst.msk [vmem:[#allocation2 + $0x23c] sm:$0xf] %vm27, 0
  %172 = vst.msk [vmem:[#allocation2 + $0x240] sm:$0xf] %vm27, 0
  %173 = vst.msk [vmem:[#allocation2 + $0x244] sm:$0xf] %vm27, 0
  %174 = vst.msk [vmem:[#allocation2 + $0x248] sm:$0xf] %vm27, 0
  %175 = vst.msk [vmem:[#allocation2 + $0x24c] sm:$0xf] %vm27, 0
  %176 = vst.msk [vmem:[#allocation2 + $0x250] sm:$0xf] %vm27, 0
  %177 = vst.msk [vmem:[#allocation2 + $0x254] sm:$0xf] %vm27, 0
  %178 = vst.msk [vmem:[#allocation2 + $0x258] sm:$0xf] %vm27, 0
  %179 = vst.msk [vmem:[#allocation2 + $0x25c] sm:$0xf] %vm27, 0
  %180 = vst.msk [vmem:[#allocation2 + $0x260] sm:$0xf] %vm27, 0
  %181 = vst.msk [vmem:[#allocation2 + $0x264] sm:$0xf] %vm27, 0
  %182 = vst.msk [vmem:[#allocation2 + $0x268] sm:$0xf] %vm27, 0
  %183 = vst.msk [vmem:[#allocation2 + $0x26c] sm:$0xf] %vm27, 0
  %184 = vst.msk [vmem:[#allocation2 + $0x270] sm:$0xf] %vm27, 0
  %185 = vst.msk [vmem:[#allocation2 + $0x274] sm:$0xf] %vm27, 0
  %186 = vst.msk [vmem:[#allocation2 + $0x278] sm:$0xf] %vm27, 0
  %187 = vst.msk [vmem:[#allocation2 + $0x27c] sm:$0xf] %vm27, 0
  %188 = vst.msk [vmem:[#allocation2 + $0x280] sm:$0xf] %vm27, 0
  %189 = vst.msk [vmem:[#allocation2 + $0x284] sm:$0xf] %vm27, 0
  %190 = vst.msk [vmem:[#allocation2 + $0x288] sm:$0xf] %vm27, 0
  %191 = vst.msk [vmem:[#allocation2 + $0x28c] sm:$0xf] %vm27, 0
  %192 = vst.msk [vmem:[#allocation2 + $0x290] sm:$0xf] %vm27, 0
  %193 = vst.msk [vmem:[#allocation2 + $0x294] sm:$0xf] %vm27, 0
  %194 = vst.msk [vmem:[#allocation2 + $0x298] sm:$0xf] %vm27, 0
  %195 = vst.msk [vmem:[#allocation2 + $0x29c] sm:$0xf] %vm27, 0
  %196 = vst.msk [vmem:[#allocation2 + $0x2a0] sm:$0xf] %vm27, 0
  %197 = vst.msk [vmem:[#allocation2 + $0x2a4] sm:$0xf] %vm27, 0
  %198 = vst.msk [vmem:[#allocation2 + $0x2a8] sm:$0xf] %vm27, 0
  %199 = vst.msk [vmem:[#allocation2 + $0x2ac] sm:$0xf] %vm27, 0
  %200 = vst.msk [vmem:[#allocation2 + $0x2b0] sm:$0xf] %vm27, 0
  %201 = vst.msk [vmem:[#allocation2 + $0x2b4] sm:$0xf] %vm27, 0
  %202 = vst.msk [vmem:[#allocation2 + $0x2b8] sm:$0xf] %vm27, 0
  %203 = vst.msk [vmem:[#allocation2 + $0x2bc] sm:$0xf] %vm27, 0
  %204 = vst.msk [vmem:[#allocation2 + $0x2c0] sm:$0xf] %vm27, 0
  %205 = vst.msk [vmem:[#allocation2 + $0x2c4] sm:$0xf] %vm27, 0
  %206 = vst.msk [vmem:[#allocation2 + $0x2c8] sm:$0xf] %vm27, 0
  %207 = vst.msk [vmem:[#allocation2 + $0x2cc] sm:$0xf] %vm27, 0
  %208 = vst.msk [vmem:[#allocation2 + $0x2d0] sm:$0xf] %vm27, 0
  %209 = vst.msk [vmem:[#allocation2 + $0x2d4] sm:$0xf] %vm27, 0
  %210 = vst.msk [vmem:[#allocation2 + $0x2d8] sm:$0xf] %vm27, 0
  %211 = vst.msk [vmem:[#allocation2 + $0x2dc] sm:$0xf] %vm27, 0
  %212 = vst.msk [vmem:[#allocation2 + $0x2e0] sm:$0xf] %vm27, 0
  %213 = vst.msk [vmem:[#allocation2 + $0x2e4] sm:$0xf] %vm27, 0
  %214 = vst.msk [vmem:[#allocation2 + $0x2e8] sm:$0xf] %vm27, 0
  %215 = vst.msk [vmem:[#allocation2 + $0x2ec] sm:$0xf] %vm27, 0
  %216 = vst.msk [vmem:[#allocation2 + $0x2f0] sm:$0xf] %vm27, 0
  %217 = vst.msk [vmem:[#allocation2 + $0x2f4] sm:$0xf] %vm27, 0
  %218 = vst.msk [vmem:[#allocation2 + $0x2f8] sm:$0xf] %vm27, 0
  %219 = vst.msk [vmem:[#allocation2 + $0x2fc] sm:$0xf] %vm27, 0
  %220 = vst.msk [vmem:[#allocation2 + $0x300] sm:$0xf] %vm27, 0
  %221 = vst.msk [vmem:[#allocation2 + $0x304] sm:$0xf] %vm27, 0
  %222 = vst.msk [vmem:[#allocation2 + $0x308] sm:$0xf] %vm27, 0
  %223 = vst.msk [vmem:[#allocation2 + $0x30c] sm:$0xf] %vm27, 0
  %224 = vst.msk [vmem:[#allocation2 + $0x310] sm:$0xf] %vm27, 0
  %225 = vst.msk [vmem:[#allocation2 + $0x314] sm:$0xf] %vm27, 0
  %226 = vst.msk [vmem:[#allocation2 + $0x318] sm:$0xf] %vm27, 0
  %227 = vst.msk [vmem:[#allocation2 + $0x31c] sm:$0xf] %vm27, 0
  %228 = vst.msk [vmem:[#allocation2 + $0x320] sm:$0xf] %vm27, 0
  %229 = vst.msk [vmem:[#allocation2 + $0x324] sm:$0xf] %vm27, 0
  %230 = vst.msk [vmem:[#allocation2 + $0x328] sm:$0xf] %vm27, 0
  %231 = vst.msk [vmem:[#allocation2 + $0x32c] sm:$0xf] %vm27, 0
  %232 = vst.msk [vmem:[#allocation2 + $0x330] sm:$0xf] %vm27, 0
  %233 = vst.msk [vmem:[#allocation2 + $0x334] sm:$0xf] %vm27, 0
  %234 = vst.msk [vmem:[#allocation2 + $0x338] sm:$0xf] %vm27, 0
  %235 = vst.msk [vmem:[#allocation2 + $0x33c] sm:$0xf] %vm27, 0
  %236 = vst.msk [vmem:[#allocation2 + $0x340] sm:$0xf] %vm27, 0
  %237 = vst.msk [vmem:[#allocation2 + $0x344] sm:$0xf] %vm27, 0
  %238 = vst.msk [vmem:[#allocation2 + $0x348] sm:$0xf] %vm27, 0
  %239 = vst.msk [vmem:[#allocation2 + $0x34c] sm:$0xf] %vm27, 0
  %240 = vst.msk [vmem:[#allocation2 + $0x350] sm:$0xf] %vm27, 0
  %241 = vst.msk [vmem:[#allocation2 + $0x354] sm:$0xf] %vm27, 0
  %242 = vst.msk [vmem:[#allocation2 + $0x358] sm:$0xf] %vm27, 0
  %243 = vst.msk [vmem:[#allocation2 + $0x35c] sm:$0xf] %vm27, 0
  %244 = vst.msk [vmem:[#allocation2 + $0x360] sm:$0xf] %vm27, 0
  %245 = vst.msk [vmem:[#allocation2 + $0x364] sm:$0xf] %vm27, 0
  %246 = vst.msk [vmem:[#allocation2 + $0x368] sm:$0xf] %vm27, 0
  %247 = vst.msk [vmem:[#allocation2 + $0x36c] sm:$0xf] %vm27, 0
  %248 = vst.msk [vmem:[#allocation2 + $0x370] sm:$0xf] %vm27, 0
  %249 = vst.msk [vmem:[#allocation2 + $0x374] sm:$0xf] %vm27, 0
  %250 = vst.msk [vmem:[#allocation2 + $0x378] sm:$0xf] %vm27, 0
  %251 = vst.msk [vmem:[#allocation2 + $0x37c] sm:$0xf] %vm27, 0
  %252 = vst.msk [vmem:[#allocation2 + $0x380] sm:$0xf] %vm27, 0
  %253 = vst.msk [vmem:[#allocation2 + $0x384] sm:$0xf] %vm27, 0
  %254 = vst.msk [vmem:[#allocation2 + $0x388] sm:$0xf] %vm27, 0
  %255 = vst.msk [vmem:[#allocation2 + $0x38c] sm:$0xf] %vm27, 0
  %256 = vst.msk [vmem:[#allocation2 + $0x390] sm:$0xf] %vm27, 0
  %257 = vst.msk [vmem:[#allocation2 + $0x394] sm:$0xf] %vm27, 0
  %258 = vst.msk [vmem:[#allocation2 + $0x398] sm:$0xf] %vm27, 0
  %259 = vst.msk [vmem:[#allocation2 + $0x39c] sm:$0xf] %vm27, 0
  %260 = vst.msk [vmem:[#allocation2 + $0x3a0] sm:$0xf] %vm27, 0
  %261 = vst.msk [vmem:[#allocation2 + $0x3a4] sm:$0xf] %vm27, 0
  %262 = vst.msk [vmem:[#allocation2 + $0x3a8] sm:$0xf] %vm27, 0
  %263 = vst.msk [vmem:[#allocation2 + $0x3ac] sm:$0xf] %vm27, 0
  %264 = vst.msk [vmem:[#allocation2 + $0x3b0] sm:$0xf] %vm27, 0
  %265 = vst.msk [vmem:[#allocation2 + $0x3b4] sm:$0xf] %vm27, 0
  %266 = vst.msk [vmem:[#allocation2 + $0x3b8] sm:$0xf] %vm27, 0
  %267 = vst.msk [vmem:[#allocation2 + $0x3bc] sm:$0xf] %vm27, 0
  %268 = vst.msk [vmem:[#allocation2 + $0x3c0] sm:$0xf] %vm27, 0
  %269 = vst.msk [vmem:[#allocation2 + $0x3c4] sm:$0xf] %vm27, 0
  %270 = vst.msk [vmem:[#allocation2 + $0x3c8] sm:$0xf] %vm27, 0
  %271 = vst.msk [vmem:[#allocation2 + $0x3cc] sm:$0xf] %vm27, 0
  %272 = vst.msk [vmem:[#allocation2 + $0x3d0] sm:$0xf] %vm27, 0
  %273 = vst.msk [vmem:[#allocation2 + $0x3d4] sm:$0xf] %vm27, 0
  %274 = vst.msk [vmem:[#allocation2 + $0x3d8] sm:$0xf] %vm27, 0
  %275 = vst.msk [vmem:[#allocation2 + $0x3dc] sm:$0xf] %vm27, 0
  %276 = vst.msk [vmem:[#allocation2 + $0x3e0] sm:$0xf] %vm27, 0
  %277 = vst.msk [vmem:[#allocation2 + $0x3e4] sm:$0xf] %vm27, 0
  %278 = vst.msk [vmem:[#allocation2 + $0x3e8] sm:$0xf] %vm27, 0
  %279 = vst.msk [vmem:[#allocation2 + $0x3ec] sm:$0xf] %vm27, 0
  %280 = vst.msk [vmem:[#allocation2 + $0x3f0] sm:$0xf] %vm27, 0
  %281 = vst.msk [vmem:[#allocation2 + $0x3f4] sm:$0xf] %vm27, 0
  %282 = vst.msk [vmem:[#allocation2 + $0x3f8] sm:$0xf] %vm27, 0
  %283 = vst.msk [vmem:[#allocation2 + $0x3fc] sm:$0xf] %vm27, 0
  %284 = vst.msk [vmem:[#allocation2 + $0x400] sm:$0xf] %vm27, 0
  %285 = vst.msk [vmem:[#allocation2 + $0x404] sm:$0xf] %vm27, 0
  %286 = vst.msk [vmem:[#allocation2 + $0x408] sm:$0xf] %vm27, 0
  %287 = vst.msk [vmem:[#allocation2 + $0x40c] sm:$0xf] %vm27, 0
  %288 = vst.msk [vmem:[#allocation2 + $0x410] sm:$0xf] %vm27, 0
  %289 = vst.msk [vmem:[#allocation2 + $0x414] sm:$0xf] %vm27, 0
  %290 = vst.msk [vmem:[#allocation2 + $0x418] sm:$0xf] %vm27, 0
  %291 = vst.msk [vmem:[#allocation2 + $0x41c] sm:$0xf] %vm27, 0
  %292 = vst.msk [vmem:[#allocation2 + $0x420] sm:$0xf] %vm27, 0
  %293 = vst.msk [vmem:[#allocation2 + $0x424] sm:$0xf] %vm27, 0
  %294 = vst.msk [vmem:[#allocation2 + $0x428] sm:$0xf] %vm27, 0
  %295 = vst.msk [vmem:[#allocation2 + $0x42c] sm:$0xf] %vm27, 0
  %296 = vst.msk [vmem:[#allocation2 + $0x430] sm:$0xf] %vm27, 0
  %297 = vst.msk [vmem:[#allocation2 + $0x434] sm:$0xf] %vm27, 0
  %298 = vst.msk [vmem:[#allocation2 + $0x438] sm:$0xf] %vm27, 0
  %299 = vst.msk [vmem:[#allocation2 + $0x43c] sm:$0xf] %vm27, 0
  %300 = vst.msk [vmem:[#allocation2 + $0x440] sm:$0xf] %vm27, 0
  %301 = vst.msk [vmem:[#allocation2 + $0x444] sm:$0xf] %vm27, 0
  %302 = vst.msk [vmem:[#allocation2 + $0x448] sm:$0xf] %vm27, 0
  %303 = vst.msk [vmem:[#allocation2 + $0x44c] sm:$0xf] %vm27, 0
  %304 = vst.msk [vmem:[#allocation2 + $0x450] sm:$0xf] %vm27, 0
  %305 = vst.msk [vmem:[#allocation2 + $0x454] sm:$0xf] %vm27, 0
  %306 = vst.msk [vmem:[#allocation2 + $0x458] sm:$0xf] %vm27, 0
  %307 = vst.msk [vmem:[#allocation2 + $0x45c] sm:$0xf] %vm27, 0
  %308 = vst.msk [vmem:[#allocation2 + $0x460] sm:$0xf] %vm27, 0
  %309 = vst.msk [vmem:[#allocation2 + $0x464] sm:$0xf] %vm27, 0
  %310 = vst.msk [vmem:[#allocation2 + $0x468] sm:$0xf] %vm27, 0
  %311 = vst.msk [vmem:[#allocation2 + $0x46c] sm:$0xf] %vm27, 0
  %312 = vst.msk [vmem:[#allocation2 + $0x470] sm:$0xf] %vm27, 0
  %313 = vst.msk [vmem:[#allocation2 + $0x474] sm:$0xf] %vm27, 0
  %314 = vst.msk [vmem:[#allocation2 + $0x478] sm:$0xf] %vm27, 0
  %315 = vst.msk [vmem:[#allocation2 + $0x47c] sm:$0xf] %vm27, 0
  %316 = vst.msk [vmem:[#allocation2 + $0x480] sm:$0xf] %vm27, 0
  %317 = vst.msk [vmem:[#allocation2 + $0x484] sm:$0xf] %vm27, 0
  %318 = vst.msk [vmem:[#allocation2 + $0x488] sm:$0xf] %vm27, 0
  %319 = vst.msk [vmem:[#allocation2 + $0x48c] sm:$0xf] %vm27, 0
  %320 = vst.msk [vmem:[#allocation2 + $0x490] sm:$0xf] %vm27, 0
  %321 = vst.msk [vmem:[#allocation2 + $0x494] sm:$0xf] %vm27, 0
  %322 = vst.msk [vmem:[#allocation2 + $0x498] sm:$0xf] %vm27, 0
  %323 = vst.msk [vmem:[#allocation2 + $0x49c] sm:$0xf] %vm27, 0
  %324 = vst.msk [vmem:[#allocation2 + $0x4a0] sm:$0xf] %vm27, 0
  %325 = vst.msk [vmem:[#allocation2 + $0x4a4] sm:$0xf] %vm27, 0
  %326 = vst.msk [vmem:[#allocation2 + $0x4a8] sm:$0xf] %vm27, 0
  %327 = vst.msk [vmem:[#allocation2 + $0x4ac] sm:$0xf] %vm27, 0
  %328 = vst.msk [vmem:[#allocation2 + $0x4b0] sm:$0xf] %vm27, 0
  %329 = vst.msk [vmem:[#allocation2 + $0x4b4] sm:$0xf] %vm27, 0
  %330 = vst.msk [vmem:[#allocation2 + $0x4b8] sm:$0xf] %vm27, 0
  %331 = vst.msk [vmem:[#allocation2 + $0x4bc] sm:$0xf] %vm27, 0
  %332 = vst.msk [vmem:[#allocation2 + $0x4c0] sm:$0xf] %vm27, 0
  %333 = vst.msk [vmem:[#allocation2 + $0x4c4] sm:$0xf] %vm27, 0
  %334 = vst.msk [vmem:[#allocation2 + $0x4c8] sm:$0xf] %vm27, 0
  %335 = vst.msk [vmem:[#allocation2 + $0x4cc] sm:$0xf] %vm27, 0
  %336 = vst.msk [vmem:[#allocation2 + $0x4d0] sm:$0xf] %vm27, 0
  %337 = vst.msk [vmem:[#allocation2 + $0x4d4] sm:$0xf] %vm27, 0
  %338 = vst.msk [vmem:[#allocation2 + $0x4d8] sm:$0xf] %vm27, 0
  %339 = vst.msk [vmem:[#allocation2 + $0x4dc] sm:$0xf] %vm27, 0
  %340 = vst.msk [vmem:[#allocation2 + $0x4e0] sm:$0xf] %vm27, 0
  %341 = vst.msk [vmem:[#allocation2 + $0x4e4] sm:$0xf] %vm27, 0
  %342 = vst.msk [vmem:[#allocation2 + $0x4e8] sm:$0xf] %vm27, 0
  %343 = vst.msk [vmem:[#allocation2 + $0x4ec] sm:$0xf] %vm27, 0
  %344 = vst.msk [vmem:[#allocation2 + $0x4f0] sm:$0xf] %vm27, 0
  %345 = vst.msk [vmem:[#allocation2 + $0x4f4] sm:$0xf] %vm27, 0
  %346 = vst.msk [vmem:[#allocation2 + $0x4f8] sm:$0xf] %vm27, 0
  %347 = vst.msk [vmem:[#allocation2 + $0x4fc] sm:$0xf] %vm27, 0
  %348 = vst.msk [vmem:[#allocation2 + $0x500] sm:$0xf] %vm27, 0
  %349 = vst.msk [vmem:[#allocation2 + $0x504] sm:$0xf] %vm27, 0
  %350 = vst.msk [vmem:[#allocation2 + $0x508] sm:$0xf] %vm27, 0
  %351 = vst.msk [vmem:[#allocation2 + $0x50c] sm:$0xf] %vm27, 0
  %352 = vst.msk [vmem:[#allocation2 + $0x510] sm:$0xf] %vm27, 0
  %353 = vst.msk [vmem:[#allocation2 + $0x514] sm:$0xf] %vm27, 0
  %354 = vst.msk [vmem:[#allocation2 + $0x518] sm:$0xf] %vm27, 0
  %355 = vst.msk [vmem:[#allocation2 + $0x51c] sm:$0xf] %vm27, 0
  %356 = vst.msk [vmem:[#allocation2 + $0x520] sm:$0xf] %vm27, 0
  %357 = vst.msk [vmem:[#allocation2 + $0x524] sm:$0xf] %vm27, 0
  %358 = vst.msk [vmem:[#allocation2 + $0x528] sm:$0xf] %vm27, 0
  %359 = vst.msk [vmem:[#allocation2 + $0x52c] sm:$0xf] %vm27, 0
  %360 = vst.msk [vmem:[#allocation2 + $0x530] sm:$0xf] %vm27, 0
  %361 = vst.msk [vmem:[#allocation2 + $0x534] sm:$0xf] %vm27, 0
  %362 = vst.msk [vmem:[#allocation2 + $0x538] sm:$0xf] %vm27, 0
  %363 = vst.msk [vmem:[#allocation2 + $0x53c] sm:$0xf] %vm27, 0
  %364 = vst.msk [vmem:[#allocation2 + $0x540] sm:$0xf] %vm27, 0
  %365 = vst.msk [vmem:[#allocation2 + $0x544] sm:$0xf] %vm27, 0
  %366 = vst.msk [vmem:[#allocation2 + $0x548] sm:$0xf] %vm27, 0
  %367 = vst.msk [vmem:[#allocation2 + $0x54c] sm:$0xf] %vm27, 0
  %368 = vst.msk [vmem:[#allocation2 + $0x550] sm:$0xf] %vm27, 0
  %369 = vst.msk [vmem:[#allocation2 + $0x554] sm:$0xf] %vm27, 0
  %370 = vst.msk [vmem:[#allocation2 + $0x558] sm:$0xf] %vm27, 0
  %371 = vst.msk [vmem:[#allocation2 + $0x55c] sm:$0xf] %vm27, 0
  %372 = vst.msk [vmem:[#allocation2 + $0x560] sm:$0xf] %vm27, 0
  %373 = vst.msk [vmem:[#allocation2 + $0x564] sm:$0xf] %vm27, 0
  %374 = vst.msk [vmem:[#allocation2 + $0x568] sm:$0xf] %vm27, 0
  %375 = vst.msk [vmem:[#allocation2 + $0x56c] sm:$0xf] %vm27, 0
  %376 = vst.msk [vmem:[#allocation2 + $0x570] sm:$0xf] %vm27, 0
  %377 = vst.msk [vmem:[#allocation2 + $0x574] sm:$0xf] %vm27, 0
  %378 = vst.msk [vmem:[#allocation2 + $0x578] sm:$0xf] %vm27, 0
  %379 = vst.msk [vmem:[#allocation2 + $0x57c] sm:$0xf] %vm27, 0
  %380 = vst.msk [vmem:[#allocation2 + $0x580] sm:$0xf] %vm27, 0
  %381 = vst.msk [vmem:[#allocation2 + $0x584] sm:$0xf] %vm27, 0
  %382 = vst.msk [vmem:[#allocation2 + $0x588] sm:$0xf] %vm27, 0
  %383 = vst.msk [vmem:[#allocation2 + $0x58c] sm:$0xf] %vm27, 0
  %384 = vst.msk [vmem:[#allocation2 + $0x590] sm:$0xf] %vm27, 0
  %385 = vst.msk [vmem:[#allocation2 + $0x594] sm:$0xf] %vm27, 0
  %386 = vst.msk [vmem:[#allocation2 + $0x598] sm:$0xf] %vm27, 0
  %387 = vst.msk [vmem:[#allocation2 + $0x59c] sm:$0xf] %vm27, 0
  %388 = vst.msk [vmem:[#allocation2 + $0x5a0] sm:$0xf] %vm27, 0
  %389 = vst.msk [vmem:[#allocation2 + $0x5a4] sm:$0xf] %vm27, 0
  %390 = vst.msk [vmem:[#allocation2 + $0x5a8] sm:$0xf] %vm27, 0
  %391 = vst.msk [vmem:[#allocation2 + $0x5ac] sm:$0xf] %vm27, 0
  %392 = vst.msk [vmem:[#allocation2 + $0x5b0] sm:$0xf] %vm27, 0
  %393 = vst.msk [vmem:[#allocation2 + $0x5b4] sm:$0xf] %vm27, 0
  %394 = vst.msk [vmem:[#allocation2 + $0x5b8] sm:$0xf] %vm27, 0
  %395 = vst.msk [vmem:[#allocation2 + $0x5bc] sm:$0xf] %vm27, 0
  %396 = vst.msk [vmem:[#allocation2 + $0x5c0] sm:$0xf] %vm27, 0
  %397 = vst.msk [vmem:[#allocation2 + $0x5c4] sm:$0xf] %vm27, 0
  %398 = vst.msk [vmem:[#allocation2 + $0x5c8] sm:$0xf] %vm27, 0
  %399 = vst.msk [vmem:[#allocation2 + $0x5cc] sm:$0xf] %vm27, 0
  %400 = vst.msk [vmem:[#allocation2 + $0x5d0] sm:$0xf] %vm27, 0
  %401 = vst.msk [vmem:[#allocation2 + $0x5d4] sm:$0xf] %vm27, 0
  %402 = vst.msk [vmem:[#allocation2 + $0x5d8] sm:$0xf] %vm27, 0
  %403 = vst.msk [vmem:[#allocation2 + $0x5dc] sm:$0xf] %vm27, 0
  %404 = vst.msk [vmem:[#allocation2 + $0x5e0] sm:$0xf] %vm27, 0
  %405 = vst.msk [vmem:[#allocation2 + $0x5e4] sm:$0xf] %vm27, 0
  %406 = vst.msk [vmem:[#allocation2 + $0x5e8] sm:$0xf] %vm27, 0
  %407 = vst.msk [vmem:[#allocation2 + $0x5ec] sm:$0xf] %vm27, 0
  %408 = vst.msk [vmem:[#allocation2 + $0x5f0] sm:$0xf] %vm27, 0
  %409 = vst.msk [vmem:[#allocation2 + $0x5f4] sm:$0xf] %vm27, 0
  %410 = vst.msk [vmem:[#allocation2 + $0x5f8] sm:$0xf] %vm27, 0
  %411 = vst.msk [vmem:[#allocation2 + $0x5fc] sm:$0xf] %vm27, 0
  %412 = vst.msk [vmem:[#allocation2 + $0x600] sm:$0xf] %vm27, 0
  %413 = vst.msk [vmem:[#allocation2 + $0x604] sm:$0xf] %vm27, 0
  %414 = vst.msk [vmem:[#allocation2 + $0x608] sm:$0xf] %vm27, 0
  %415 = vst.msk [vmem:[#allocation2 + $0x60c] sm:$0xf] %vm27, 0
  %416 = vst.msk [vmem:[#allocation2 + $0x610] sm:$0xf] %vm27, 0
  %417 = vst.msk [vmem:[#allocation2 + $0x614] sm:$0xf] %vm27, 0
  %418 = vst.msk [vmem:[#allocation2 + $0x618] sm:$0xf] %vm27, 0
  %419 = vst.msk [vmem:[#allocation2 + $0x61c] sm:$0xf] %vm27, 0
  %420 = vst.msk [vmem:[#allocation2 + $0x620] sm:$0xf] %vm27, 0
  %421 = vst.msk [vmem:[#allocation2 + $0x624] sm:$0xf] %vm27, 0
  %422 = vst.msk [vmem:[#allocation2 + $0x628] sm:$0xf] %vm27, 0
  %423 = vst.msk [vmem:[#allocation2 + $0x62c] sm:$0xf] %vm27, 0
  %424 = vst.msk [vmem:[#allocation2 + $0x630] sm:$0xf] %vm27, 0
  %425 = vst.msk [vmem:[#allocation2 + $0x634] sm:$0xf] %vm27, 0
  %426 = vst.msk [vmem:[#allocation2 + $0x638] sm:$0xf] %vm27, 0
  %427 = vst.msk [vmem:[#allocation2 + $0x63c] sm:$0xf] %vm27, 0
  %v428 = vld [vmem:[%s0] sm:$0xff]
  %v429 = vld [vmem:[%s0 + $0x8] sm:$0xff]
  %v430 = vld [vmem:[%s0 + $0x10] sm:$0xff]
  %v431 = vld [vmem:[%s0 + $0x18] sm:$0xff]
  %v432 = vld [vmem:[%s0 + $0x20] sm:$0xff]
  %v433 = vld [vmem:[%s0 + $0x28] sm:$0xff]
  %v434 = vld [vmem:[%s0 + $0x30] sm:$0xff]
  %v435 = vld [vmem:[%s0 + $0x38] sm:$0xff]
  %v436 = vld [vmem:[%s0 + $0x40] sm:$0xff]
  %v437 = vld [vmem:[%s0 + $0x48] sm:$0xff]
  %v438 = vld [vmem:[%s0 + $0x50] sm:$0xff]
  %v439 = vld [vmem:[%s0 + $0x58] sm:$0xff]
  %v440 = vld [vmem:[%s0 + $0x60] sm:$0xff]
  %v441 = vld [vmem:[%s0 + $0x68] sm:$0xff]
  %v442 = vld [vmem:[%s0 + $0x70] sm:$0xff]
  %v443 = vld [vmem:[%s0 + $0x78] sm:$0xff]
  %v444 = vld [vmem:[%s0 + $0x80] sm:$0xff]
  %v445 = vld [vmem:[%s0 + $0x88] sm:$0xff]
  %v446 = vld [vmem:[%s0 + $0x90] sm:$0xff]
  %v447 = vld [vmem:[%s0 + $0x98] sm:$0xff]
  %v448 = vld [vmem:[%s0 + $0xa0] sm:$0xff]
  %v449 = vld [vmem:[%s0 + $0xa8] sm:$0xff]
  %v450 = vld [vmem:[%s0 + $0xb0] sm:$0xff]
  %v451 = vld [vmem:[%s0 + $0xb8] sm:$0xff]
  %v452 = vld [vmem:[%s0 + $0xc0] sm:$0xff]
  %v453 = vld [vmem:[%s0 + $0xc8] sm:$0xff]
  %v454 = vld [vmem:[%s0 + $0xd0] sm:$0xff]
  %v455 = vld [vmem:[%s0 + $0xd8] sm:$0xff]
  %v456 = vld [vmem:[%s0 + $0xe0] sm:$0xff]
  %v457 = vld [vmem:[%s0 + $0xe8] sm:$0xff]
  %v458 = vld [vmem:[%s0 + $0xf0] sm:$0xff]
  %v459 = vld [vmem:[%s0 + $0xf8] sm:$0xff]
  %v460 = vld [vmem:[%s0 + $0x100] sm:$0xff]
  %v461 = vld [vmem:[%s0 + $0x108] sm:$0xff]
  %v462 = vld [vmem:[%s0 + $0x110] sm:$0xff]
  %v463 = vld [vmem:[%s0 + $0x118] sm:$0xff]
  %v464 = vld [vmem:[%s0 + $0x120] sm:$0xff]
  %v465 = vld [vmem:[%s0 + $0x128] sm:$0xff]
  %v466 = vld [vmem:[%s0 + $0x130] sm:$0xff]
  %v467 = vld [vmem:[%s0 + $0x138] sm:$0xff]
  %v468 = vld [vmem:[%s0 + $0x140] sm:$0xff]
  %v469 = vld [vmem:[%s0 + $0x148] sm:$0xff]
  %v470 = vld [vmem:[%s0 + $0x150] sm:$0xff]
  %v471 = vld [vmem:[%s0 + $0x158] sm:$0xff]
  %v472 = vld [vmem:[%s0 + $0x160] sm:$0xff]
  %v473 = vld [vmem:[%s0 + $0x168] sm:$0xff]
  %v474 = vld [vmem:[%s0 + $0x170] sm:$0xff]
  %v475 = vld [vmem:[%s0 + $0x178] sm:$0xff]
  %v476 = vld [vmem:[%s0 + $0x180] sm:$0xff]
  %v477 = vld [vmem:[%s0 + $0x188] sm:$0xff]
  %v478 = vld [vmem:[%s0 + $0x190] sm:$0xff]
  %v479 = vld [vmem:[%s0 + $0x198] sm:$0xff]
  %v480 = vld [vmem:[%s0 + $0x1a0] sm:$0xff]
  %v481 = vld [vmem:[%s0 + $0x1a8] sm:$0xff]
  %v482 = vld [vmem:[%s0 + $0x1b0] sm:$0xff]
  %v483 = vld [vmem:[%s0 + $0x1b8] sm:$0xff]
  %v484 = vld [vmem:[%s0 + $0x1c0] sm:$0xff]
  %v485 = vld [vmem:[%s0 + $0x1c8] sm:$0xff]
  %v486 = vld [vmem:[%s0 + $0x1d0] sm:$0xff]
  %v487 = vld [vmem:[%s0 + $0x1d8] sm:$0xff]
  %v488 = vld [vmem:[%s0 + $0x1e0] sm:$0xff]
  %v489 = vld [vmem:[%s0 + $0x1e8] sm:$0xff]
  %v490 = vld [vmem:[%s0 + $0x1f0] sm:$0xff]
  %v491 = vld [vmem:[%s0 + $0x1f8] sm:$0xff]
  %v492 = vpack.c.bf16 %v428, %v428
  %v493 = vpack.c.bf16 %v429, %v429
  %v494 = vpack.c.bf16 %v430, %v430
  %v495 = vpack.c.bf16 %v431, %v431
  %v496 = vpack.c.bf16 %v432, %v432
  %v497 = vpack.c.bf16 %v433, %v433
  %v498 = vpack.c.bf16 %v434, %v434
  %v499 = vpack.c.bf16 %v435, %v435
  %v500 = vpack.c.bf16 %v436, %v436
  %v501 = vpack.c.bf16 %v437, %v437
  %v502 = vpack.c.bf16 %v438, %v438
  %v503 = vpack.c.bf16 %v439, %v439
  %v504 = vpack.c.bf16 %v440, %v440
  %v505 = vpack.c.bf16 %v441, %v441
  %v506 = vpack.c.bf16 %v442, %v442
  %v507 = vpack.c.bf16 %v443, %v443
  %v508 = vpack.c.bf16 %v444, %v444
  %v509 = vpack.c.bf16 %v445, %v445
  %v510 = vpack.c.bf16 %v446, %v446
  %v511 = vpack.c.bf16 %v447, %v447
  %v512 = vpack.c.bf16 %v448, %v448
  %v513 = vpack.c.bf16 %v449, %v449
  %v514 = vpack.c.bf16 %v450, %v450
  %v515 = vpack.c.bf16 %v451, %v451
  %v516 = vpack.c.bf16 %v452, %v452
  %v517 = vpack.c.bf16 %v453, %v453
  %v518 = vpack.c.bf16 %v454, %v454
  %v519 = vpack.c.bf16 %v455, %v455
  %v520 = vpack.c.bf16 %v456, %v456
  %v521 = vpack.c.bf16 %v457, %v457
  %v522 = vpack.c.bf16 %v458, %v458
  %v523 = vpack.c.bf16 %v459, %v459
  %v524 = vpack.c.bf16 %v460, %v460
  %v525 = vpack.c.bf16 %v461, %v461
  %v526 = vpack.c.bf16 %v462, %v462
  %v527 = vpack.c.bf16 %v463, %v463
  %v528 = vpack.c.bf16 %v464, %v464
  %v529 = vpack.c.bf16 %v465, %v465
  %v530 = vpack.c.bf16 %v466, %v466
  %v531 = vpack.c.bf16 %v467, %v467
  %v532 = vpack.c.bf16 %v468, %v468
  %v533 = vpack.c.bf16 %v469, %v469
  %v534 = vpack.c.bf16 %v470, %v470
  %v535 = vpack.c.bf16 %v471, %v471
  %v536 = vpack.c.bf16 %v472, %v472
  %v537 = vpack.c.bf16 %v473, %v473
  %v538 = vpack.c.bf16 %v474, %v474
  %v539 = vpack.c.bf16 %v475, %v475
  %v540 = vpack.c.bf16 %v476, %v476
  %v541 = vpack.c.bf16 %v477, %v477
  %v542 = vpack.c.bf16 %v478, %v478
  %v543 = vpack.c.bf16 %v479, %v479
  %v544 = vpack.c.bf16 %v480, %v480
  %v545 = vpack.c.bf16 %v481, %v481
  %v546 = vpack.c.bf16 %v482, %v482
  %v547 = vpack.c.bf16 %v483, %v483
  %v548 = vpack.c.bf16 %v484, %v484
  %v549 = vpack.c.bf16 %v485, %v485
  %v550 = vpack.c.bf16 %v486, %v486
  %v551 = vpack.c.bf16 %v487, %v487
  %v552 = vpack.c.bf16 %v488, %v488
  %v553 = vpack.c.bf16 %v489, %v489
  %v554 = vpack.c.bf16 %v490, %v490
  %v555 = vpack.c.bf16 %v491, %v491
  %vm620 = vcmask 1041408
  %vm621 = vcmask 1045508
  %vm622 = vmor %vm620, %vm621
  %v623 = vrot.slane %v492, 6
  %v624 = vrot.slane %v623, 4
  %v625 = vrot.slane %v493, 6
  %v626 = vsel %vm622, %v624, %v625
  %v627 = vrot.slane %v625, 4
  %v628 = vrot.slane %v494, 6
  %v629 = vrot.slane %v628, 4
  %v630 = vrot.slane %v495, 6
  %v631 = vsel %vm622, %v629, %v630
  %v632 = vrot.slane %v630, 4
  %v633 = vrot.slane %v496, 6
  %v634 = vrot.slane %v633, 4
  %v635 = vrot.slane %v497, 6
  %v636 = vsel %vm622, %v634, %v635
  %v637 = vrot.slane %v635, 4
  %v638 = vrot.slane %v498, 6
  %v639 = vrot.slane %v638, 4
  %v640 = vrot.slane %v499, 6
  %v641 = vsel %vm622, %v639, %v640
  %v642 = vrot.slane %v640, 4
  %v643 = vrot.slane %v500, 6
  %v644 = vrot.slane %v643, 4
  %v645 = vrot.slane %v501, 6
  %v646 = vsel %vm622, %v644, %v645
  %v647 = vrot.slane %v645, 4
  %v648 = vrot.slane %v502, 6
  %v649 = vrot.slane %v648, 4
  %v650 = vrot.slane %v503, 6
  %v651 = vsel %vm622, %v649, %v650
  %v652 = vrot.slane %v650, 4
  %v653 = vrot.slane %v504, 6
  %v654 = vrot.slane %v653, 4
  %v655 = vrot.slane %v505, 6
  %v656 = vsel %vm622, %v654, %v655
  %v657 = vrot.slane %v655, 4
  %v658 = vrot.slane %v506, 6
  %v659 = vrot.slane %v658, 4
  %v660 = vrot.slane %v507, 6
  %v661 = vsel %vm622, %v659, %v660
  %v662 = vrot.slane %v660, 4
  %v663 = vrot.slane %v508, 6
  %v664 = vrot.slane %v663, 4
  %v665 = vrot.slane %v509, 6
  %v666 = vsel %vm622, %v664, %v665
  %v667 = vrot.slane %v665, 4
  %v668 = vrot.slane %v510, 6
  %v669 = vrot.slane %v668, 4
  %v670 = vrot.slane %v511, 6
  %v671 = vsel %vm622, %v669, %v670
  %v672 = vrot.slane %v670, 4
  %v673 = vrot.slane %v512, 6
  %v674 = vrot.slane %v673, 4
  %v675 = vrot.slane %v513, 6
  %v676 = vsel %vm622, %v674, %v675
  %v677 = vrot.slane %v675, 4
  %v678 = vrot.slane %v514, 6
  %v679 = vrot.slane %v678, 4
  %v680 = vrot.slane %v515, 6
  %v681 = vsel %vm622, %v679, %v680
  %v682 = vrot.slane %v680, 4
  %v683 = vrot.slane %v516, 6
  %v684 = vrot.slane %v683, 4
  %v685 = vrot.slane %v517, 6
  %v686 = vsel %vm622, %v684, %v685
  %v687 = vrot.slane %v685, 4
  %v688 = vrot.slane %v518, 6
  %v689 = vrot.slane %v688, 4
  %v690 = vrot.slane %v519, 6
  %v691 = vsel %vm622, %v689, %v690
  %v692 = vrot.slane %v690, 4
  %v693 = vrot.slane %v520, 6
  %v694 = vrot.slane %v693, 4
  %v695 = vrot.slane %v521, 6
  %v696 = vsel %vm622, %v694, %v695
  %v697 = vrot.slane %v695, 4
  %v698 = vrot.slane %v522, 6
  %v699 = vrot.slane %v698, 4
  %v700 = vrot.slane %v523, 6
  %v701 = vsel %vm622, %v699, %v700
  %v702 = vrot.slane %v700, 4
  %v703 = vrot.slane %v524, 6
  %v704 = vrot.slane %v703, 4
  %v705 = vrot.slane %v525, 6
  %v706 = vsel %vm622, %v704, %v705
  %v707 = vrot.slane %v705, 4
  %v708 = vrot.slane %v526, 6
  %v709 = vrot.slane %v708, 4
  %v710 = vrot.slane %v527, 6
  %v711 = vsel %vm622, %v709, %v710
  %v712 = vrot.slane %v710, 4
  %v713 = vrot.slane %v528, 6
  %v714 = vrot.slane %v713, 4
  %v715 = vrot.slane %v529, 6
  %v716 = vsel %vm622, %v714, %v715
  %v717 = vrot.slane %v715, 4
  %v718 = vrot.slane %v530, 6
  %v719 = vrot.slane %v718, 4
  %v720 = vrot.slane %v531, 6
  %v721 = vsel %vm622, %v719, %v720
  %v722 = vrot.slane %v720, 4
  %v723 = vrot.slane %v532, 6
  %v724 = vrot.slane %v723, 4
  %v725 = vrot.slane %v533, 6
  %v726 = vsel %vm622, %v724, %v725
  %v727 = vrot.slane %v725, 4
  %v728 = vrot.slane %v534, 6
  %v729 = vrot.slane %v728, 4
  %v730 = vrot.slane %v535, 6
  %v731 = vsel %vm622, %v729, %v730
  %v732 = vrot.slane %v730, 4
  %v733 = vrot.slane %v536, 6
  %v734 = vrot.slane %v733, 4
  %v735 = vrot.slane %v537, 6
  %v736 = vsel %vm622, %v734, %v735
  %v737 = vrot.slane %v735, 4
  %v738 = vrot.slane %v538, 6
  %v739 = vrot.slane %v738, 4
  %v740 = vrot.slane %v539, 6
  %v741 = vsel %vm622, %v739, %v740
  %v742 = vrot.slane %v740, 4
  %v743 = vrot.slane %v540, 6
  %v744 = vrot.slane %v743, 4
  %v745 = vrot.slane %v541, 6
  %v746 = vsel %vm622, %v744, %v745
  %v747 = vrot.slane %v745, 4
  %v748 = vrot.slane %v542, 6
  %v749 = vrot.slane %v748, 4
  %v750 = vrot.slane %v543, 6
  %v751 = vsel %vm622, %v749, %v750
  %v752 = vrot.slane %v750, 4
  %v753 = vrot.slane %v544, 6
  %v754 = vrot.slane %v753, 4
  %v755 = vrot.slane %v545, 6
  %v756 = vsel %vm622, %v754, %v755
  %v757 = vrot.slane %v755, 4
  %v758 = vrot.slane %v546, 6
  %v759 = vrot.slane %v758, 4
  %v760 = vrot.slane %v547, 6
  %v761 = vsel %vm622, %v759, %v760
  %v762 = vrot.slane %v760, 4
  %v763 = vrot.slane %v548, 6
  %v764 = vrot.slane %v763, 4
  %v765 = vrot.slane %v549, 6
  %v766 = vsel %vm622, %v764, %v765
  %v767 = vrot.slane %v765, 4
  %v768 = vrot.slane %v550, 6
  %v769 = vrot.slane %v768, 4
  %v770 = vrot.slane %v551, 6
  %v771 = vsel %vm622, %v769, %v770
  %v772 = vrot.slane %v770, 4
  %v773 = vrot.slane %v552, 6
  %v774 = vrot.slane %v773, 4
  %v775 = vrot.slane %v553, 6
  %v776 = vsel %vm622, %v774, %v775
  %v777 = vrot.slane %v775, 4
  %v778 = vrot.slane %v554, 6
  %v779 = vrot.slane %v778, 4
  %v780 = vrot.slane %v555, 6
  %v781 = vsel %vm622, %v779, %v780
  %v782 = vrot.slane %v780, 4
  %s879 = scalar_lea.vmem [#allocation2], 240
  %vm880 = vcmask 125954
  %881 = vst.msk [vmem:[%s879 + $0x4] sm:$0xc] %vm880, %v623
  %882 = vst.msk [vmem:[%s879 + $0x8] sm:$0xf] %vm27, %v626
  %vm883 = vcmask 123904
  %884 = vst.msk [vmem:[%s879 + $0xc] sm:$0x3] %vm883, %v627
  %885 = vst.msk [vmem:[%s879 + $0x18] sm:$0xc] %vm880, %v628
  %886 = vst.msk [vmem:[%s879 + $0x1c] sm:$0xf] %vm27, %v631
  %887 = vst.msk [vmem:[%s879 + $0x20] sm:$0x3] %vm883, %v632
  %888 = vst.msk [vmem:[%s879 + $0x2c] sm:$0xc] %vm880, %v633
  %889 = vst.msk [vmem:[%s879 + $0x30] sm:$0xf] %vm27, %v636
  %890 = vst.msk [vmem:[%s879 + $0x34] sm:$0x3] %vm883, %v637
  %891 = vst.msk [vmem:[%s879 + $0x40] sm:$0xc] %vm880, %v638
  %892 = vst.msk [vmem:[%s879 + $0x44] sm:$0xf] %vm27, %v641
  %893 = vst.msk [vmem:[%s879 + $0x48] sm:$0x3] %vm883, %v642
  %894 = vst.msk [vmem:[%s879 + $0x54] sm:$0xc] %vm880, %v643
  %895 = vst.msk [vmem:[%s879 + $0x58] sm:$0xf] %vm27, %v646
  %896 = vst.msk [vmem:[%s879 + $0x5c] sm:$0x3] %vm883, %v647
  %897 = vst.msk [vmem:[%s879 + $0x68] sm:$0xc] %vm880, %v648
  %898 = vst.msk [vmem:[%s879 + $0x6c] sm:$0xf] %vm27, %v651
  %899 = vst.msk [vmem:[%s879 + $0x70] sm:$0x3] %vm883, %v652
  %900 = vst.msk [vmem:[%s879 + $0x7c] sm:$0xc] %vm880, %v653
  %901 = vst.msk [vmem:[%s879 + $0x80] sm:$0xf] %vm27, %v656
  %902 = vst.msk [vmem:[%s879 + $0x84] sm:$0x3] %vm883, %v657
  %903 = vst.msk [vmem:[%s879 + $0x90] sm:$0xc] %vm880, %v658
  %904 = vst.msk [vmem:[%s879 + $0x94] sm:$0xf] %vm27, %v661
  %905 = vst.msk [vmem:[%s879 + $0x98] sm:$0x3] %vm883, %v662
  %906 = vst.msk [vmem:[%s879 + $0xa4] sm:$0xc] %vm880, %v663
  %907 = vst.msk [vmem:[%s879 + $0xa8] sm:$0xf] %vm27, %v666
  %908 = vst.msk [vmem:[%s879 + $0xac] sm:$0x3] %vm883, %v667
  %909 = vst.msk [vmem:[%s879 + $0xb8] sm:$0xc] %vm880, %v668
  %910 = vst.msk [vmem:[%s879 + $0xbc] sm:$0xf] %vm27, %v671
  %911 = vst.msk [vmem:[%s879 + $0xc0] sm:$0x3] %vm883, %v672
  %912 = vst.msk [vmem:[%s879 + $0xcc] sm:$0xc] %vm880, %v673
  %913 = vst.msk [vmem:[%s879 + $0xd0] sm:$0xf] %vm27, %v676
  %914 = vst.msk [vmem:[%s879 + $0xd4] sm:$0x3] %vm883, %v677
  %915 = vst.msk [vmem:[%s879 + $0xe0] sm:$0xc] %vm880, %v678
  %916 = vst.msk [vmem:[%s879 + $0xe4] sm:$0xf] %vm27, %v681
  %917 = vst.msk [vmem:[%s879 + $0xe8] sm:$0x3] %vm883, %v682
  %918 = vst.msk [vmem:[%s879 + $0xf4] sm:$0xc] %vm880, %v683
  %919 = vst.msk [vmem:[%s879 + $0xf8] sm:$0xf] %vm27, %v686
  %920 = vst.msk [vmem:[%s879 + $0xfc] sm:$0x3] %vm883, %v687
  %921 = vst.msk [vmem:[%s879 + $0x108] sm:$0xc] %vm880, %v688
  %922 = vst.msk [vmem:[%s879 + $0x10c] sm:$0xf] %vm27, %v691
  %923 = vst.msk [vmem:[%s879 + $0x110] sm:$0x3] %vm883, %v692
  %924 = vst.msk [vmem:[%s879 + $0x11c] sm:$0xc] %vm880, %v693
  %925 = vst.msk [vmem:[%s879 + $0x120] sm:$0xf] %vm27, %v696
  %926 = vst.msk [vmem:[%s879 + $0x124] sm:$0x3] %vm883, %v697
  %927 = vst.msk [vmem:[%s879 + $0x130] sm:$0xc] %vm880, %v698
  %928 = vst.msk [vmem:[%s879 + $0x134] sm:$0xf] %vm27, %v701
  %929 = vst.msk [vmem:[%s879 + $0x138] sm:$0x3] %vm883, %v702
  %930 = vst.msk [vmem:[%s879 + $0x324] sm:$0xc] %vm880, %v703
  %931 = vst.msk [vmem:[%s879 + $0x328] sm:$0xf] %vm27, %v706
  %932 = vst.msk [vmem:[%s879 + $0x32c] sm:$0x3] %vm883, %v707
  %933 = vst.msk [vmem:[%s879 + $0x338] sm:$0xc] %vm880, %v708
  %934 = vst.msk [vmem:[%s879 + $0x33c] sm:$0xf] %vm27, %v711
  %935 = vst.msk [vmem:[%s879 + $0x340] sm:$0x3] %vm883, %v712
  %936 = vst.msk [vmem:[%s879 + $0x34c] sm:$0xc] %vm880, %v713
  %937 = vst.msk [vmem:[%s879 + $0x350] sm:$0xf] %vm27, %v716
  %938 = vst.msk [vmem:[%s879 + $0x354] sm:$0x3] %vm883, %v717
  %939 = vst.msk [vmem:[%s879 + $0x360] sm:$0xc] %vm880, %v718
  %940 = vst.msk [vmem:[%s879 + $0x364] sm:$0xf] %vm27, %v721
  %941 = vst.msk [vmem:[%s879 + $0x368] sm:$0x3] %vm883, %v722
  %942 = vst.msk [vmem:[%s879 + $0x374] sm:$0xc] %vm880, %v723
  %943 = vst.msk [vmem:[%s879 + $0x378] sm:$0xf] %vm27, %v726
  %944 = vst.msk [vmem:[%s879 + $0x37c] sm:$0x3] %vm883, %v727
  %945 = vst.msk [vmem:[%s879 + $0x388] sm:$0xc] %vm880, %v728
  %946 = vst.msk [vmem:[%s879 + $0x38c] sm:$0xf] %vm27, %v731
  %947 = vst.msk [vmem:[%s879 + $0x390] sm:$0x3] %vm883, %v732
  %948 = vst.msk [vmem:[%s879 + $0x39c] sm:$0xc] %vm880, %v733
  %949 = vst.msk [vmem:[%s879 + $0x3a0] sm:$0xf] %vm27, %v736
  %950 = vst.msk [vmem:[%s879 + $0x3a4] sm:$0x3] %vm883, %v737
  %951 = vst.msk [vmem:[%s879 + $0x3b0] sm:$0xc] %vm880, %v738
  %952 = vst.msk [vmem:[%s879 + $0x3b4] sm:$0xf] %vm27, %v741
  %953 = vst.msk [vmem:[%s879 + $0x3b8] sm:$0x3] %vm883, %v742
  %954 = vst.msk [vmem:[%s879 + $0x3c4] sm:$0xc] %vm880, %v743
  %955 = vst.msk [vmem:[%s879 + $0x3c8] sm:$0xf] %vm27, %v746
  %956 = vst.msk [vmem:[%s879 + $0x3cc] sm:$0x3] %vm883, %v747
  %957 = vst.msk [vmem:[%s879 + $0x3d8] sm:$0xc] %vm880, %v748
  %958 = vst.msk [vmem:[%s879 + $0x3dc] sm:$0xf] %vm27, %v751
  %959 = vst.msk [vmem:[%s879 + $0x3e0] sm:$0x3] %vm883, %v752
  %960 = vst.msk [vmem:[%s879 + $0x3ec] sm:$0xc] %vm880, %v753
  %961 = vst.msk [vmem:[%s879 + $0x3f0] sm:$0xf] %vm27, %v756
  %962 = vst.msk [vmem:[%s879 + $0x3f4] sm:$0x3] %vm883, %v757
  %963 = vst.msk [vmem:[%s879 + $0x400] sm:$0xc] %vm880, %v758
  %964 = vst.msk [vmem:[%s879 + $0x404] sm:$0xf] %vm27, %v761
  %965 = vst.msk [vmem:[%s879 + $0x408] sm:$0x3] %vm883, %v762
  %966 = vst.msk [vmem:[%s879 + $0x414] sm:$0xc] %vm880, %v763
  %967 = vst.msk [vmem:[%s879 + $0x418] sm:$0xf] %vm27, %v766
  %968 = vst.msk [vmem:[%s879 + $0x41c] sm:$0x3] %vm883, %v767
  %969 = vst.msk [vmem:[%s879 + $0x428] sm:$0xc] %vm880, %v768
  %970 = vst.msk [vmem:[%s879 + $0x42c] sm:$0xf] %vm27, %v771
  %971 = vst.msk [vmem:[%s879 + $0x430] sm:$0x3] %vm883, %v772
  %972 = vst.msk [vmem:[%s879 + $0x43c] sm:$0xc] %vm880, %v773
  %973 = vst.msk [vmem:[%s879 + $0x440] sm:$0xf] %vm27, %v776
  %974 = vst.msk [vmem:[%s879 + $0x444] sm:$0x3] %vm883, %v777
  %975 = vst.msk [vmem:[%s879 + $0x450] sm:$0xc] %vm880, %v778
  %976 = vst.msk [vmem:[%s879 + $0x454] sm:$0xf] %vm27, %v781
  %977 = vst.msk [vmem:[%s879 + $0x458] sm:$0x3] %vm883, %v782
  %v978 = vld [vmem:[%s0] sm:$0xff]
  %v979 = vld [vmem:[%s0 + $0x8] sm:$0xff]
  %v980 = vld [vmem:[%s0 + $0x10] sm:$0xff]
  %v981 = vld [vmem:[%s0 + $0x18] sm:$0xff]
  %v982 = vld [vmem:[%s0 + $0x20] sm:$0xff]
  %v983 = vld [vmem:[%s0 + $0x28] sm:$0xff]
  %v984 = vld [vmem:[%s0 + $0x30] sm:$0xff]
  %v985 = vld [vmem:[%s0 + $0x38] sm:$0xff]
  %v986 = vld [vmem:[%s0 + $0x40] sm:$0xff]
  %v987 = vld [vmem:[%s0 + $0x48] sm:$0xff]
  %v988 = vld [vmem:[%s0 + $0x50] sm:$0xff]
  %v989 = vld [vmem:[%s0 + $0x58] sm:$0xff]
  %v990 = vld [vmem:[%s0 + $0x60] sm:$0xff]
  %v991 = vld [vmem:[%s0 + $0x68] sm:$0xff]
  %v992 = vld [vmem:[%s0 + $0x70] sm:$0xff]
  %v993 = vld [vmem:[%s0 + $0x78] sm:$0xff]
  %v994 = vld [vmem:[%s0 + $0x80] sm:$0xff]
  %v995 = vld [vmem:[%s0 + $0x88] sm:$0xff]
  %v996 = vld [vmem:[%s0 + $0x90] sm:$0xff]
  %v997 = vld [vmem:[%s0 + $0x98] sm:$0xff]
  %v998 = vld [vmem:[%s0 + $0xa0] sm:$0xff]
  %v999 = vld [vmem:[%s0 + $0xa8] sm:$0xff]
  %v1000 = vld [vmem:[%s0 + $0xb0] sm:$0xff]
  %v1001 = vld [vmem:[%s0 + $0xb8] sm:$0xff]
  %v1002 = vld [vmem:[%s0 + $0xc0] sm:$0xff]
  %v1003 = vld [vmem:[%s0 + $0xc8] sm:$0xff]
  %v1004 = vld [vmem:[%s0 + $0xd0] sm:$0xff]
  %v1005 = vld [vmem:[%s0 + $0xd8] sm:$0xff]
  %v1006 = vld [vmem:[%s0 + $0xe0] sm:$0xff]
  %v1007 = vld [vmem:[%s0 + $0xe8] sm:$0xff]
  %v1008 = vld [vmem:[%s0 + $0xf0] sm:$0xff]
  %v1009 = vld [vmem:[%s0 + $0xf8] sm:$0xff]
  %vm1010 = vcmask 130048
  %v1011 = vsel %vm1010, %v978, 0.0
  %v1012 = vsel %vm1010, %v979, 0.0
  %v1013 = vadd.f32 %v1011, %v1012
  %v1014 = vsel %vm1010, %v980, 0.0
  %v1015 = vadd.f32 %v1013, %v1014
  %v1016 = vsel %vm1010, %v981, 0.0
  %v1017 = vadd.f32 %v1015, %v1016
  %v1018 = vsel %vm1010, %v982, 0.0
  %v1019 = vadd.f32 %v1017, %v1018
  %v1020 = vsel %vm1010, %v983, 0.0
  %v1021 = vadd.f32 %v1019, %v1020
  %v1022 = vsel %vm1010, %v984, 0.0
  %v1023 = vadd.f32 %v1021, %v1022
  %v1024 = vsel %vm1010, %v985, 0.0
  %v1025 = vadd.f32 %v1023, %v1024
  %v1026 = vsel %vm1010, %v986, 0.0
  %v1027 = vadd.f32 %v1025, %v1026
  %v1028 = vsel %vm1010, %v987, 0.0
  %v1029 = vadd.f32 %v1027, %v1028
  %v1030 = vsel %vm1010, %v988, 0.0
  %v1031 = vadd.f32 %v1029, %v1030
  %v1032 = vsel %vm1010, %v989, 0.0
  %v1033 = vadd.f32 %v1031, %v1032
  %v1034 = vsel %vm1010, %v990, 0.0
  %v1035 = vadd.f32 %v1033, %v1034
  %v1036 = vsel %vm1010, %v991, 0.0
  %v1037 = vadd.f32 %v1035, %v1036
  %v1038 = vsel %vm1010, %v992, 0.0
  %v1039 = vadd.f32 %v1037, %v1038
  %v1040 = vsel %vm1010, %v993, 0.0
  %v1041 = vadd.f32 %v1039, %v1040
  %v1042 = vsel %vm1010, %v994, 0.0
  %v1043 = vadd.f32 %v1041, %v1042
  %v1044 = vsel %vm1010, %v995, 0.0
  %v1045 = vadd.f32 %v1043, %v1044
  %v1046 = vsel %vm1010, %v996, 0.0
  %v1047 = vadd.f32 %v1045, %v1046
  %v1048 = vsel %vm1010, %v997, 0.0
  %v1049 = vadd.f32 %v1047, %v1048
  %v1050 = vsel %vm1010, %v998, 0.0
  %v1051 = vadd.f32 %v1049, %v1050
  %v1052 = vsel %vm1010, %v999, 0.0
  %v1053 = vadd.f32 %v1051, %v1052
  %v1054 = vsel %vm1010, %v1000, 0.0
  %v1055 = vadd.f32 %v1053, %v1054
  %v1056 = vsel %vm1010, %v1001, 0.0
  %v1057 = vadd.f32 %v1055, %v1056
  %v1058 = vsel %vm1010, %v1002, 0.0
  %v1059 = vadd.f32 %v1057, %v1058
  %v1060 = vsel %vm1010, %v1003, 0.0
  %v1061 = vadd.f32 %v1059, %v1060
  %v1062 = vsel %vm1010, %v1004, 0.0
  %v1063 = vadd.f32 %v1061, %v1062
  %v1064 = vsel %vm1010, %v1005, 0.0
  %v1065 = vadd.f32 %v1063, %v1064
  %v1066 = vsel %vm1010, %v1006, 0.0
  %v1067 = vadd.f32 %v1065, %v1066
  %v1068 = vsel %vm1010, %v1007, 0.0
  %v1069 = vadd.f32 %v1067, %v1068
  %v1070 = vsel %vm1010, %v1008, 0.0
  %v1071 = vadd.f32 %v1069, %v1070
  %v1072 = vsel %vm1010, %v1009, 0.0
  %v1073 = vadd.f32 %v1071, %v1072
  %v1074 = vrot.slane %v1073, 4
  %v1075 = vadd.f32 %v1073, %v1074
  %v1076 = vrot.slane %v1075, 2
  %v1077 = vadd.f32 %v1075, %v1076
  %v1078 = vrot.slane %v1077, 1
  %v1079 = vadd.f32 %v1077, %v1078
  %v1080 = vmul.f32 %v1079, 0.00390625
  %s1081 = scalar_lea.vmem %s0, 256
  %v1082 = vld [vmem:[%s1081] sm:$0xff]
  %v1083 = vld [vmem:[%s1081 + $0x8] sm:$0xff]
  %v1084 = vld [vmem:[%s1081 + $0x10] sm:$0xff]
  %v1085 = vld [vmem:[%s1081 + $0x18] sm:$0xff]
  %v1086 = vld [vmem:[%s1081 + $0x20] sm:$0xff]
  %v1087 = vld [vmem:[%s1081 + $0x28] sm:$0xff]
  %v1088 = vld [vmem:[%s1081 + $0x30] sm:$0xff]
  %v1089 = vld [vmem:[%s1081 + $0x38] sm:$0xff]
  %v1090 = vld [vmem:[%s1081 + $0x40] sm:$0xff]
  %v1091 = vld [vmem:[%s1081 + $0x48] sm:$0xff]
  %v1092 = vld [vmem:[%s1081 + $0x50] sm:$0xff]
  %v1093 = vld [vmem:[%s1081 + $0x58] sm:$0xff]
  %v1094 = vld [vmem:[%s1081 + $0x60] sm:$0xff]
  %v1095 = vld [vmem:[%s1081 + $0x68] sm:$0xff]
  %v1096 = vld [vmem:[%s1081 + $0x70] sm:$0xff]
  %v1097 = vld [vmem:[%s1081 + $0x78] sm:$0xff]
  %v1098 = vld [vmem:[%s1081 + $0x80] sm:$0xff]
  %v1099 = vld [vmem:[%s1081 + $0x88] sm:$0xff]
  %v1100 = vld [vmem:[%s1081 + $0x90] sm:$0xff]
  %v1101 = vld [vmem:[%s1081 + $0x98] sm:$0xff]
  %v1102 = vld [vmem:[%s1081 + $0xa0] sm:$0xff]
  %v1103 = vld [vmem:[%s1081 + $0xa8] sm:$0xff]
  %v1104 = vld [vmem:[%s1081 + $0xb0] sm:$0xff]
  %v1105 = vld [vmem:[%s1081 + $0xb8] sm:$0xff]
  %v1106 = vld [vmem:[%s1081 + $0xc0] sm:$0xff]
  %v1107 = vld [vmem:[%s1081 + $0xc8] sm:$0xff]
  %v1108 = vld [vmem:[%s1081 + $0xd0] sm:$0xff]
  %v1109 = vld [vmem:[%s1081 + $0xd8] sm:$0xff]
  %v1110 = vld [vmem:[%s1081 + $0xe0] sm:$0xff]
  %v1111 = vld [vmem:[%s1081 + $0xe8] sm:$0xff]
  %v1112 = vld [vmem:[%s1081 + $0xf0] sm:$0xff]
  %v1113 = vld [vmem:[%s1081 + $0xf8] sm:$0xff]
  %v1114 = vsel %vm1010, %v1082, 0.0
  %v1115 = vsel %vm1010, %v1083, 0.0
  %v1116 = vadd.f32 %v1114, %v1115
  %v1117 = vsel %vm1010, %v1084, 0.0
  %v1118 = vadd.f32 %v1116, %v1117
  %v1119 = vsel %vm1010, %v1085, 0.0
  %v1120 = vadd.f32 %v1118, %v1119
  %v1121 = vsel %vm1010, %v1086, 0.0
  %v1122 = vadd.f32 %v1120, %v1121
  %v1123 = vsel %vm1010, %v1087, 0.0
  %v1124 = vadd.f32 %v1122, %v1123
  %v1125 = vsel %vm1010, %v1088, 0.0
  %v1126 = vadd.f32 %v1124, %v1125
  %v1127 = vsel %vm1010, %v1089, 0.0
  %v1128 = vadd.f32 %v1126, %v1127
  %v1129 = vsel %vm1010, %v1090, 0.0
  %v1130 = vadd.f32 %v1128, %v1129
  %v1131 = vsel %vm1010, %v1091, 0.0
  %v1132 = vadd.f32 %v1130, %v1131
  %v1133 = vsel %vm1010, %v1092, 0.0
  %v1134 = vadd.f32 %v1132, %v1133
  %v1135 = vsel %vm1010, %v1093, 0.0
  %v1136 = vadd.f32 %v1134, %v1135
  %v1137 = vsel %vm1010, %v1094, 0.0
  %v1138 = vadd.f32 %v1136, %v1137
  %v1139 = vsel %vm1010, %v1095, 0.0
  %v1140 = vadd.f32 %v1138, %v1139
  %v1141 = vsel %vm1010, %v1096, 0.0
  %v1142 = vadd.f32 %v1140, %v1141
  %v1143 = vsel %vm1010, %v1097, 0.0
  %v1144 = vadd.f32 %v1142, %v1143
  %v1145 = vsel %vm1010, %v1098, 0.0
  %v1146 = vadd.f32 %v1144, %v1145
  %v1147 = vsel %vm1010, %v1099, 0.0
  %v1148 = vadd.f32 %v1146, %v1147
  %v1149 = vsel %vm1010, %v1100, 0.0
  %v1150 = vadd.f32 %v1148, %v1149
  %v1151 = vsel %vm1010, %v1101, 0.0
  %v1152 = vadd.f32 %v1150, %v1151
  %v1153 = vsel %vm1010, %v1102, 0.0
  %v1154 = vadd.f32 %v1152, %v1153
  %v1155 = vsel %vm1010, %v1103, 0.0
  %v1156 = vadd.f32 %v1154, %v1155
  %v1157 = vsel %vm1010, %v1104, 0.0
  %v1158 = vadd.f32 %v1156, %v1157
  %v1159 = vsel %vm1010, %v1105, 0.0
  %v1160 = vadd.f32 %v1158, %v1159
  %v1161 = vsel %vm1010, %v1106, 0.0
  %v1162 = vadd.f32 %v1160, %v1161
  %v1163 = vsel %vm1010, %v1107, 0.0
  %v1164 = vadd.f32 %v1162, %v1163
  %v1165 = vsel %vm1010, %v1108, 0.0
  %v1166 = vadd.f32 %v1164, %v1165
  %v1167 = vsel %vm1010, %v1109, 0.0
  %v1168 = vadd.f32 %v1166, %v1167
  %v1169 = vsel %vm1010, %v1110, 0.0
  %v1170 = vadd.f32 %v1168, %v1169
  %v1171 = vsel %vm1010, %v1111, 0.0
  %v1172 = vadd.f32 %v1170, %v1171
  %v1173 = vsel %vm1010, %v1112, 0.0
  %v1174 = vadd.f32 %v1172, %v1173
  %v1175 = vsel %vm1010, %v1113, 0.0
  %v1176 = vadd.f32 %v1174, %v1175
  %v1177 = vrot.slane %v1176, 4
  %v1178 = vadd.f32 %v1176, %v1177
  %v1179 = vrot.slane %v1178, 2
  %v1180 = vadd.f32 %v1178, %v1179
  %v1181 = vrot.slane %v1180, 1
  %v1182 = vadd.f32 %v1180, %v1181
  %v1183 = vmul.f32 %v1182, 0.00390625
  %vm1184 = vcmask 1040384
  %v1185 = vsel %vm1184, %v1080, %v1183
  %v1186 = vld [vmem:[%s1] sm:$0xff]
  %v1187 = vld [vmem:[%s1 + $0x8] sm:$0xff]
  %v1188 = vld [vmem:[%s2] sm:$0x1]
  %v1190 = vperm.slane %v1188, 0
  %v1193 = vsel %vm1010, %v1185, 0
  %1195 = vmatpush.msra.mxu0 0.0
  %1196 = vmatpush.msra.mxu0 0.0
  %1197 = vmatpush.msra.mxu0 0.0
  %1198 = vmatpush.msra.mxu0 0.0
  %1199 = vmatpush.msra.mxu0 0.0
  %1200 = vmatpush.msra.mxu0 0.0
  %1201 = vmatpush.msra.mxu0 0.0
  %1202 = vmatpush.msra.mxu0 0.0
  %1203 = vmatpush.msra.mxu0 0.0
  %1204 = vmatpush.msra.mxu0 0.0
  %1205 = vmatpush.msra.mxu0 0.0
  %1206 = vmatpush.msra.mxu0 0.0
  %1207 = vmatpush.msra.mxu0 0.0
  %1208 = vmatpush.msra.mxu0 0.0
  %1209 = vmatpush.msra.mxu0 %v1187
  %1210 = vmatpush.msra.mxu0 %v1186
  %1211 = vmatmul.f32.gmra.mxu0 %v1193
  %v1212 = vpop.f32.mrf.mxu0
  %v1213 = vadd.f32 %v1190, %v1212
  %1214 = vdwg.mxu0
  %v1215 = vld [vmem:[%s879 + $0x4] sm:$0xc]
  %v1216 = vld [vmem:[%s879 + $0x8] sm:$0xf]
  %v1217 = vld [vmem:[%s879 + $0xc] sm:$0x3]
  %v1218 = vld [vmem:[%s879 + $0x18] sm:$0xc]
  %v1219 = vld [vmem:[%s879 + $0x1c] sm:$0xf]
  %v1220 = vld [vmem:[%s879 + $0x20] sm:$0x3]
  %v1221 = vld [vmem:[%s879 + $0x2c] sm:$0xc]
  %v1222 = vld [vmem:[%s879 + $0x30] sm:$0xf]
  %v1223 = vld [vmem:[%s879 + $0x34] sm:$0x3]
  %v1224 = vld [vmem:[%s879 + $0x40] sm:$0xc]
  %v1225 = vld [vmem:[%s879 + $0x44] sm:$0xf]
  %v1226 = vld [vmem:[%s879 + $0x48] sm:$0x3]
  %v1227 = vld [vmem:[%s879 + $0x54] sm:$0xc]
  %v1228 = vld [vmem:[%s879 + $0x58] sm:$0xf]
  %v1229 = vld [vmem:[%s879 + $0x5c] sm:$0x3]
  %v1230 = vld [vmem:[%s879 + $0x68] sm:$0xc]
  %v1231 = vld [vmem:[%s879 + $0x6c] sm:$0xf]
  %v1232 = vld [vmem:[%s879 + $0x70] sm:$0x3]
  %v1233 = vld [vmem:[%s879 + $0x7c] sm:$0xc]
  %v1234 = vld [vmem:[%s879 + $0x80] sm:$0xf]
  %v1235 = vld [vmem:[%s879 + $0x84] sm:$0x3]
  %v1236 = vld [vmem:[%s879 + $0x90] sm:$0xc]
  %v1237 = vld [vmem:[%s879 + $0x94] sm:$0xf]
  %v1238 = vld [vmem:[%s879 + $0x98] sm:$0x3]
  %v1239 = vld [vmem:[%s879 + $0xa4] sm:$0xc]
  %v1240 = vld [vmem:[%s879 + $0xa8] sm:$0xf]
  %v1241 = vld [vmem:[%s879 + $0xac] sm:$0x3]
  %v1242 = vld [vmem:[%s879 + $0xb8] sm:$0xc]
  %v1243 = vld [vmem:[%s879 + $0xbc] sm:$0xf]
  %v1244 = vld [vmem:[%s879 + $0xc0] sm:$0x3]
  %v1245 = vld [vmem:[%s879 + $0xcc] sm:$0xc]
  %v1246 = vld [vmem:[%s879 + $0xd0] sm:$0xf]
  %v1247 = vld [vmem:[%s879 + $0xd4] sm:$0x3]
  %v1248 = vld [vmem:[%s879 + $0xe0] sm:$0xc]
  %v1249 = vld [vmem:[%s879 + $0xe4] sm:$0xf]
  %v1250 = vld [vmem:[%s879 + $0xe8] sm:$0x3]
  %v1251 = vld [vmem:[%s879 + $0xf4] sm:$0xc]
  %v1252 = vld [vmem:[%s879 + $0xf8] sm:$0xf]
  %v1253 = vld [vmem:[%s879 + $0xfc] sm:$0x3]
  %v1254 = vld [vmem:[%s879 + $0x108] sm:$0xc]
  %v1255 = vld [vmem:[%s879 + $0x10c] sm:$0xf]
  %v1256 = vld [vmem:[%s879 + $0x110] sm:$0x3]
  %v1257 = vld [vmem:[%s879 + $0x11c] sm:$0xc]
  %v1258 = vld [vmem:[%s879 + $0x120] sm:$0xf]
  %v1259 = vld [vmem:[%s879 + $0x124] sm:$0x3]
  %v1260 = vld [vmem:[%s879 + $0x130] sm:$0xc]
  %v1261 = vld [vmem:[%s879 + $0x134] sm:$0xf]
  %v1262 = vld [vmem:[%s879 + $0x138] sm:$0x3]
  %v1263 = vld [vmem:[%s879 + $0x324] sm:$0xc]
  %v1264 = vld [vmem:[%s879 + $0x328] sm:$0xf]
  %v1265 = vld [vmem:[%s879 + $0x32c] sm:$0x3]
  %v1266 = vld [vmem:[%s879 + $0x338] sm:$0xc]
  %v1267 = vld [vmem:[%s879 + $0x33c] sm:$0xf]
  %v1268 = vld [vmem:[%s879 + $0x340] sm:$0x3]
  %v1269 = vld [vmem:[%s879 + $0x34c] sm:$0xc]
  %v1270 = vld [vmem:[%s879 + $0x350] sm:$0xf]
  %v1271 = vld [vmem:[%s879 + $0x354] sm:$0x3]
  %v1272 = vld [vmem:[%s879 + $0x360] sm:$0xc]
  %v1273 = vld [vmem:[%s879 + $0x364] sm:$0xf]
  %v1274 = vld [vmem:[%s879 + $0x368] sm:$0x3]
  %v1275 = vld [vmem:[%s879 + $0x374] sm:$0xc]
  %v1276 = vld [vmem:[%s879 + $0x378] sm:$0xf]
  %v1277 = vld [vmem:[%s879 + $0x37c] sm:$0x3]
  %v1278 = vld [vmem:[%s879 + $0x388] sm:$0xc]
  %v1279 = vld [vmem:[%s879 + $0x38c] sm:$0xf]
  %v1280 = vld [vmem:[%s879 + $0x390] sm:$0x3]
  %v1281 = vld [vmem:[%s879 + $0x39c] sm:$0xc]
  %v1282 = vld [vmem:[%s879 + $0x3a0] sm:$0xf]
  %v1283 = vld [vmem:[%s879 + $0x3a4] sm:$0x3]
  %v1284 = vld [vmem:[%s879 + $0x3b0] sm:$0xc]
  %v1285 = vld [vmem:[%s879 + $0x3b4] sm:$0xf]
  %v1286 = vld [vmem:[%s879 + $0x3b8] sm:$0x3]
  %v1287 = vld [vmem:[%s879 + $0x3c4] sm:$0xc]
  %v1288 = vld [vmem:[%s879 + $0x3c8] sm:$0xf]
  %v1289 = vld [vmem:[%s879 + $0x3cc] sm:$0x3]
  %v1290 = vld [vmem:[%s879 + $0x3d8] sm:$0xc]
  %v1291 = vld [vmem:[%s879 + $0x3dc] sm:$0xf]
  %v1292 = vld [vmem:[%s879 + $0x3e0] sm:$0x3]
  %v1293 = vld [vmem:[%s879 + $0x3ec] sm:$0xc]
  %v1294 = vld [vmem:[%s879 + $0x3f0] sm:$0xf]
  %v1295 = vld [vmem:[%s879 + $0x3f4] sm:$0x3]
  %v1296 = vld [vmem:[%s879 + $0x400] sm:$0xc]
  %v1297 = vld [vmem:[%s879 + $0x404] sm:$0xf]
  %v1298 = vld [vmem:[%s879 + $0x408] sm:$0x3]
  %v1299 = vld [vmem:[%s879 + $0x414] sm:$0xc]
  %v1300 = vld [vmem:[%s879 + $0x418] sm:$0xf]
  %v1301 = vld [vmem:[%s879 + $0x41c] sm:$0x3]
  %v1302 = vld [vmem:[%s879 + $0x428] sm:$0xc]
  %v1303 = vld [vmem:[%s879 + $0x42c] sm:$0xf]
  %v1304 = vld [vmem:[%s879 + $0x430] sm:$0x3]
  %v1305 = vld [vmem:[%s879 + $0x43c] sm:$0xc]
  %v1306 = vld [vmem:[%s879 + $0x440] sm:$0xf]
  %v1307 = vld [vmem:[%s879 + $0x444] sm:$0x3]
  %v1308 = vld [vmem:[%s879 + $0x450] sm:$0xc]
  %v1309 = vld [vmem:[%s879 + $0x454] sm:$0xf]
  %v1310 = vld [vmem:[%s879 + $0x458] sm:$0x3]
  %v1407 = vrot.slane %v1215, 6
  %v1408 = vrot.slane %v1407, 4
  %v1409 = vrot.slane %v1216, 6
  %v1410 = vsel %vm622, %v1408, %v1409
  %v1411 = vrot.slane %v1409, 4
  %v1412 = vrot.slane %v1217, 6
  %v1413 = vsel %vm622, %v1411, %v1412
  %v1414 = vrot.slane %v1218, 6
  %v1415 = vrot.slane %v1414, 4
  %v1416 = vrot.slane %v1219, 6
  %v1417 = vsel %vm622, %v1415, %v1416
  %v1418 = vrot.slane %v1416, 4
  %v1419 = vrot.slane %v1220, 6
  %v1420 = vsel %vm622, %v1418, %v1419
  %v1421 = vrot.slane %v1221, 6
  %v1422 = vrot.slane %v1421, 4
  %v1423 = vrot.slane %v1222, 6
  %v1424 = vsel %vm622, %v1422, %v1423
  %v1425 = vrot.slane %v1423, 4
  %v1426 = vrot.slane %v1223, 6
  %v1427 = vsel %vm622, %v1425, %v1426
  %v1428 = vrot.slane %v1224, 6
  %v1429 = vrot.slane %v1428, 4
  %v1430 = vrot.slane %v1225, 6
  %v1431 = vsel %vm622, %v1429, %v1430
  %v1432 = vrot.slane %v1430, 4
  %v1433 = vrot.slane %v1226, 6
  %v1434 = vsel %vm622, %v1432, %v1433
  %v1435 = vrot.slane %v1227, 6
  %v1436 = vrot.slane %v1435, 4
  %v1437 = vrot.slane %v1228, 6
  %v1438 = vsel %vm622, %v1436, %v1437
  %v1439 = vrot.slane %v1437, 4
  %v1440 = vrot.slane %v1229, 6
  %v1441 = vsel %vm622, %v1439, %v1440
  %v1442 = vrot.slane %v1230, 6
  %v1443 = vrot.slane %v1442, 4
  %v1444 = vrot.slane %v1231, 6
  %v1445 = vsel %vm622, %v1443, %v1444
  %v1446 = vrot.slane %v1444, 4
  %v1447 = vrot.slane %v1232, 6
  %v1448 = vsel %vm622, %v1446, %v1447
  %v1449 = vrot.slane %v1233, 6
  %v1450 = vrot.slane %v1449, 4
  %v1451 = vrot.slane %v1234, 6
  %v1452 = vsel %vm622, %v1450, %v1451
  %v1453 = vrot.slane %v1451, 4
  %v1454 = vrot.slane %v1235, 6
  %v1455 = vsel %vm622, %v1453, %v1454
  %v1456 = vrot.slane %v1236, 6
  %v1457 = vrot.slane %v1456, 4
  %v1458 = vrot.slane %v1237, 6
  %v1459 = vsel %vm622, %v1457, %v1458
  %v1460 = vrot.slane %v1458, 4
  %v1461 = vrot.slane %v1238, 6
  %v1462 = vsel %vm622, %v1460, %v1461
  %v1463 = vrot.slane %v1239, 6
  %v1464 = vrot.slane %v1463, 4
  %v1465 = vrot.slane %v1240, 6
  %v1466 = vsel %vm622, %v1464, %v1465
  %v1467 = vrot.slane %v1465, 4
  %v1468 = vrot.slane %v1241, 6
  %v1469 = vsel %vm622, %v1467, %v1468
  %v1470 = vrot.slane %v1242, 6
  %v1471 = vrot.slane %v1470, 4
  %v1472 = vrot.slane %v1243, 6
  %v1473 = vsel %vm622, %v1471, %v1472
  %v1474 = vrot.slane %v1472, 4
  %v1475 = vrot.slane %v1244, 6
  %v1476 = vsel %vm622, %v1474, %v1475
  %v1477 = vrot.slane %v1245, 6
  %v1478 = vrot.slane %v1477, 4
  %v1479 = vrot.slane %v1246, 6
  %v1480 = vsel %vm622, %v1478, %v1479
  %v1481 = vrot.slane %v1479, 4
  %v1482 = vrot.slane %v1247, 6
  %v1483 = vsel %vm622, %v1481, %v1482
  %v1484 = vrot.slane %v1248, 6
  %v1485 = vrot.slane %v1484, 4
  %v1486 = vrot.slane %v1249, 6
  %v1487 = vsel %vm622, %v1485, %v1486
  %v1488 = vrot.slane %v1486, 4
  %v1489 = vrot.slane %v1250, 6
  %v1490 = vsel %vm622, %v1488, %v1489
  %v1491 = vrot.slane %v1251, 6
  %v1492 = vrot.slane %v1491, 4
  %v1493 = vrot.slane %v1252, 6
  %v1494 = vsel %vm622, %v1492, %v1493
  %v1495 = vrot.slane %v1493, 4
  %v1496 = vrot.slane %v1253, 6
  %v1497 = vsel %vm622, %v1495, %v1496
  %v1498 = vrot.slane %v1254, 6
  %v1499 = vrot.slane %v1498, 4
  %v1500 = vrot.slane %v1255, 6
  %v1501 = vsel %vm622, %v1499, %v1500
  %v1502 = vrot.slane %v1500, 4
  %v1503 = vrot.slane %v1256, 6
  %v1504 = vsel %vm622, %v1502, %v1503
  %v1505 = vrot.slane %v1257, 6
  %v1506 = vrot.slane %v1505, 4
  %v1507 = vrot.slane %v1258, 6
  %v1508 = vsel %vm622, %v1506, %v1507
  %v1509 = vrot.slane %v1507, 4
  %v1510 = vrot.slane %v1259, 6
  %v1511 = vsel %vm622, %v1509, %v1510
  %v1512 = vrot.slane %v1260, 6
  %v1513 = vrot.slane %v1512, 4
  %v1514 = vrot.slane %v1261, 6
  %v1515 = vsel %vm622, %v1513, %v1514
  %v1516 = vrot.slane %v1514, 4
  %v1517 = vrot.slane %v1262, 6
  %v1518 = vsel %vm622, %v1516, %v1517
  %v1519 = vrot.slane %v1263, 6
  %v1520 = vrot.slane %v1519, 4
  %v1521 = vrot.slane %v1264, 6
  %v1522 = vsel %vm622, %v1520, %v1521
  %v1523 = vrot.slane %v1521, 4
  %v1524 = vrot.slane %v1265, 6
  %v1525 = vsel %vm622, %v1523, %v1524
  %v1526 = vrot.slane %v1266, 6
  %v1527 = vrot.slane %v1526, 4
  %v1528 = vrot.slane %v1267, 6
  %v1529 = vsel %vm622, %v1527, %v1528
  %v1530 = vrot.slane %v1528, 4
  %v1531 = vrot.slane %v1268, 6
  %v1532 = vsel %vm622, %v1530, %v1531
  %v1533 = vrot.slane %v1269, 6
  %v1534 = vrot.slane %v1533, 4
  %v1535 = vrot.slane %v1270, 6
  %v1536 = vsel %vm622, %v1534, %v1535
  %v1537 = vrot.slane %v1535, 4
  %v1538 = vrot.slane %v1271, 6
  %v1539 = vsel %vm622, %v1537, %v1538
  %v1540 = vrot.slane %v1272, 6
  %v1541 = vrot.slane %v1540, 4
  %v1542 = vrot.slane %v1273, 6
  %v1543 = vsel %vm622, %v1541, %v1542
  %v1544 = vrot.slane %v1542, 4
  %v1545 = vrot.slane %v1274, 6
  %v1546 = vsel %vm622, %v1544, %v1545
  %v1547 = vrot.slane %v1275, 6
  %v1548 = vrot.slane %v1547, 4
  %v1549 = vrot.slane %v1276, 6
  %v1550 = vsel %vm622, %v1548, %v1549
  %v1551 = vrot.slane %v1549, 4
  %v1552 = vrot.slane %v1277, 6
  %v1553 = vsel %vm622, %v1551, %v1552
  %v1554 = vrot.slane %v1278, 6
  %v1555 = vrot.slane %v1554, 4
  %v1556 = vrot.slane %v1279, 6
  %v1557 = vsel %vm622, %v1555, %v1556
  %v1558 = vrot.slane %v1556, 4
  %v1559 = vrot.slane %v1280, 6
  %v1560 = vsel %vm622, %v1558, %v1559
  %v1561 = vrot.slane %v1281, 6
  %v1562 = vrot.slane %v1561, 4
  %v1563 = vrot.slane %v1282, 6
  %v1564 = vsel %vm622, %v1562, %v1563
  %v1565 = vrot.slane %v1563, 4
  %v1566 = vrot.slane %v1283, 6
  %v1567 = vsel %vm622, %v1565, %v1566
  %v1568 = vrot.slane %v1284, 6
  %v1569 = vrot.slane %v1568, 4
  %v1570 = vrot.slane %v1285, 6
  %v1571 = vsel %vm622, %v1569, %v1570
  %v1572 = vrot.slane %v1570, 4
  %v1573 = vrot.slane %v1286, 6
  %v1574 = vsel %vm622, %v1572, %v1573
  %v1575 = vrot.slane %v1287, 6
  %v1576 = vrot.slane %v1575, 4
  %v1577 = vrot.slane %v1288, 6
  %v1578 = vsel %vm622, %v1576, %v1577
  %v1579 = vrot.slane %v1577, 4
  %v1580 = vrot.slane %v1289, 6
  %v1581 = vsel %vm622, %v1579, %v1580
  %v1582 = vrot.slane %v1290, 6
  %v1583 = vrot.slane %v1582, 4
  %v1584 = vrot.slane %v1291, 6
  %v1585 = vsel %vm622, %v1583, %v1584
  %v1586 = vrot.slane %v1584, 4
  %v1587 = vrot.slane %v1292, 6
  %v1588 = vsel %vm622, %v1586, %v1587
  %v1589 = vrot.slane %v1293, 6
  %v1590 = vrot.slane %v1589, 4
  %v1591 = vrot.slane %v1294, 6
  %v1592 = vsel %vm622, %v1590, %v1591
  %v1593 = vrot.slane %v1591, 4
  %v1594 = vrot.slane %v1295, 6
  %v1595 = vsel %vm622, %v1593, %v1594
  %v1596 = vrot.slane %v1296, 6
  %v1597 = vrot.slane %v1596, 4
  %v1598 = vrot.slane %v1297, 6
  %v1599 = vsel %vm622, %v1597, %v1598
  %v1600 = vrot.slane %v1598, 4
  %v1601 = vrot.slane %v1298, 6
  %v1602 = vsel %vm622, %v1600, %v1601
  %v1603 = vrot.slane %v1299, 6
  %v1604 = vrot.slane %v1603, 4
  %v1605 = vrot.slane %v1300, 6
  %v1606 = vsel %vm622, %v1604, %v1605
  %v1607 = vrot.slane %v1605, 4
  %v1608 = vrot.slane %v1301, 6
  %v1609 = vsel %vm622, %v1607, %v1608
  %v1610 = vrot.slane %v1302, 6
  %v1611 = vrot.slane %v1610, 4
  %v1612 = vrot.slane %v1303, 6
  %v1613 = vsel %vm622, %v1611, %v1612
  %v1614 = vrot.slane %v1612, 4
  %v1615 = vrot.slane %v1304, 6
  %v1616 = vsel %vm622, %v1614, %v1615
  %v1617 = vrot.slane %v1305, 6
  %v1618 = vrot.slane %v1617, 4
  %v1619 = vrot.slane %v1306, 6
  %v1620 = vsel %vm622, %v1618, %v1619
  %v1621 = vrot.slane %v1619, 4
  %v1622 = vrot.slane %v1307, 6
  %v1623 = vsel %vm622, %v1621, %v1622
  %v1624 = vrot.slane %v1308, 6
  %v1625 = vrot.slane %v1624, 4
  %v1626 = vrot.slane %v1309, 6
  %v1627 = vsel %vm622, %v1625, %v1626
  %v1628 = vrot.slane %v1626, 4
  %v1629 = vrot.slane %v1310, 6
  %v1630 = vsel %vm622, %v1628, %v1629
  %v1631 = vld [vmem:[%s4] sm:$0xf]
  %v1632 = vld [vmem:[%s4 + $0x4] sm:$0xf]
  %v1633 = vunpack.c.l.b16 %v1410
  %v1634 = vunpack.c.l.b16 %v1413
  %v1635 = vunpack.c.l.b16 %v1417
  %v1636 = vunpack.c.l.b16 %v1420
  %v1637 = vunpack.c.l.b16 %v1424
  %v1638 = vunpack.c.l.b16 %v1427
  %v1639 = vunpack.c.l.b16 %v1431
  %v1640 = vunpack.c.l.b16 %v1434
  %v1641 = vunpack.c.l.b16 %v1438
  %v1642 = vunpack.c.l.b16 %v1441
  %v1643 = vunpack.c.l.b16 %v1445
  %v1644 = vunpack.c.l.b16 %v1448
  %v1645 = vunpack.c.l.b16 %v1452
  %v1646 = vunpack.c.l.b16 %v1455
  %v1647 = vunpack.c.l.b16 %v1459
  %v1648 = vunpack.c.l.b16 %v1462
  %v1649 = vunpack.c.l.b16 %v1466
  %v1650 = vunpack.c.l.b16 %v1469
  %v1651 = vunpack.c.l.b16 %v1473
  %v1652 = vunpack.c.l.b16 %v1476
  %v1653 = vunpack.c.l.b16 %v1480
  %v1654 = vunpack.c.l.b16 %v1483
  %v1655 = vunpack.c.l.b16 %v1487
  %v1656 = vunpack.c.l.b16 %v1490
  %v1657 = vunpack.c.l.b16 %v1494
  %v1658 = vunpack.c.l.b16 %v1497
  %v1659 = vunpack.c.l.b16 %v1501
  %v1660 = vunpack.c.l.b16 %v1504
  %v1661 = vunpack.c.l.b16 %v1508
  %v1662 = vunpack.c.l.b16 %v1511
  %v1663 = vunpack.c.l.b16 %v1515
  %v1664 = vunpack.c.l.b16 %v1518
  %v1665 = vunpack.c.l.b16 %v1522
  %v1666 = vunpack.c.l.b16 %v1525
  %v1667 = vunpack.c.l.b16 %v1529
  %v1668 = vunpack.c.l.b16 %v1532
  %v1669 = vunpack.c.l.b16 %v1536
  %v1670 = vunpack.c.l.b16 %v1539
  %v1671 = vunpack.c.l.b16 %v1543
  %v1672 = vunpack.c.l.b16 %v1546
  %v1673 = vunpack.c.l.b16 %v1550
  %v1674 = vunpack.c.l.b16 %v1553
  %v1675 = vunpack.c.l.b16 %v1557
  %v1676 = vunpack.c.l.b16 %v1560
  %v1677 = vunpack.c.l.b16 %v1564
  %v1678 = vunpack.c.l.b16 %v1567
  %v1679 = vunpack.c.l.b16 %v1571
  %v1680 = vunpack.c.l.b16 %v1574
  %v1681 = vunpack.c.l.b16 %v1578
  %v1682 = vunpack.c.l.b16 %v1581
  %v1683 = vunpack.c.l.b16 %v1585
  %v1684 = vunpack.c.l.b16 %v1588
  %v1685 = vunpack.c.l.b16 %v1592
  %v1686 = vunpack.c.l.b16 %v1595
  %v1687 = vunpack.c.l.b16 %v1599
  %v1688 = vunpack.c.l.b16 %v1602
  %v1689 = vunpack.c.l.b16 %v1606
  %v1690 = vunpack.c.l.b16 %v1609
  %v1691 = vunpack.c.l.b16 %v1613
  %v1692 = vunpack.c.l.b16 %v1616
  %v1693 = vunpack.c.l.b16 %v1620
  %v1694 = vunpack.c.l.b16 %v1623
  %v1695 = vunpack.c.l.b16 %v1627
  %v1696 = vunpack.c.l.b16 %v1630
  %v1697 = vpack.c.b16 %v1634, %v1633
  %v1698 = vpack.c.b16 %v1636, %v1635
  %v1699 = vpack.c.b16 %v1638, %v1637
  %v1700 = vpack.c.b16 %v1640, %v1639
  %v1701 = vpack.c.b16 %v1642, %v1641
  %v1702 = vpack.c.b16 %v1644, %v1643
  %v1703 = vpack.c.b16 %v1646, %v1645
  %v1704 = vpack.c.b16 %v1648, %v1647
  %v1705 = vpack.c.b16 %v1650, %v1649
  %v1706 = vpack.c.b16 %v1652, %v1651
  %v1707 = vpack.c.b16 %v1654, %v1653
  %v1708 = vpack.c.b16 %v1656, %v1655
  %v1709 = vpack.c.b16 %v1658, %v1657
  %v1710 = vpack.c.b16 %v1660, %v1659
  %v1711 = vpack.c.b16 %v1662, %v1661
  %v1712 = vpack.c.b16 %v1664, %v1663
  %v1713 = vpack.c.b16 %v1666, %v1665
  %v1714 = vpack.c.b16 %v1668, %v1667
  %v1715 = vpack.c.b16 %v1670, %v1669
  %v1716 = vpack.c.b16 %v1672, %v1671
  %v1717 = vpack.c.b16 %v1674, %v1673
  %v1718 = vpack.c.b16 %v1676, %v1675
  %v1719 = vpack.c.b16 %v1678, %v1677
  %v1720 = vpack.c.b16 %v1680, %v1679
  %v1721 = vpack.c.b16 %v1682, %v1681
  %v1722 = vpack.c.b16 %v1684, %v1683
  %v1723 = vpack.c.b16 %v1686, %v1685
  %v1724 = vpack.c.b16 %v1688, %v1687
  %v1725 = vpack.c.b16 %v1690, %v1689
  %v1726 = vpack.c.b16 %v1692, %v1691
  %v1727 = vpack.c.b16 %v1694, %v1693
  %v1728 = vpack.c.b16 %v1696, %v1695
  %v1731 = vunpack.c.l.b16 %v1631
  %v1732 = vunpack.c.l.b16 %v1632
  %v1733 = vpack.c.b16 %v1732, %v1731
  %v1736 = vsel %vm1010, %v1697, 0
  %v1739 = vsel %vm1010, %v1698, 0
  %v1742 = vsel %vm1010, %v1699, 0
  %v1745 = vsel %vm1010, %v1700, 0
  %v1748 = vsel %vm1010, %v1701, 0
  %v1751 = vsel %vm1010, %v1702, 0
  %v1754 = vsel %vm1010, %v1703, 0
  %v1757 = vsel %vm1010, %v1704, 0
  %v1760 = vsel %vm1010, %v1705, 0
  %v1763 = vsel %vm1010, %v1706, 0
  %v1766 = vsel %vm1010, %v1707, 0
  %v1769 = vsel %vm1010, %v1708, 0
  %v1772 = vsel %vm1010, %v1709, 0
  %v1775 = vsel %vm1010, %v1710, 0
  %v1778 = vsel %vm1010, %v1711, 0
  %v1781 = vsel %vm1010, %v1712, 0
  %v1784 = vsel %vm1010, %v1713, 0
  %v1787 = vsel %vm1010, %v1714, 0
  %v1790 = vsel %vm1010, %v1715, 0
  %v1793 = vsel %vm1010, %v1716, 0
  %v1796 = vsel %vm1010, %v1717, 0
  %v1799 = vsel %vm1010, %v1718, 0
  %v1802 = vsel %vm1010, %v1719, 0
  %v1805 = vsel %vm1010, %v1720, 0
  %v1808 = vsel %vm1010, %v1721, 0
  %v1811 = vsel %vm1010, %v1722, 0
  %v1814 = vsel %vm1010, %v1723, 0
  %v1817 = vsel %vm1010, %v1724, 0
  %v1820 = vsel %vm1010, %v1725, 0
  %v1823 = vsel %vm1010, %v1726, 0
  %v1826 = vsel %vm1010, %v1727, 0
  %v1829 = vsel %vm1010, %v1728, 0
  %1831 = vmatpush.bf16.msra.mxu0 0
  %1832 = vmatpush.bf16.msra.mxu0 0
  %1833 = vmatpush.bf16.msra.mxu0 0
  %1834 = vmatpush.bf16.msra.mxu0 0
  %1835 = vmatpush.bf16.msra.mxu0 0
  %1836 = vmatpush.bf16.msra.mxu0 0
  %1837 = vmatpush.bf16.msra.mxu0 0
  %1838 = vmatpush.bf16.msra.mxu0 %v1733
  %1839 = vmatmul.bf16.gmra.mxu0 %v1736
  %v1840 = vpop.f32.mrf.mxu0
  %v1841 = vadd.f32 0.0, %v1840
  %v1842 = vpop.f32.mrf.mxu0
  %v1843 = vadd.f32 0.0, %v1842
  %1844 = vmatmul.bf16.gmra.mxu0 %v1739
  %v1845 = vpop.f32.mrf.mxu0
  %v1846 = vadd.f32 0.0, %v1845
  %v1847 = vpop.f32.mrf.mxu0
  %v1848 = vadd.f32 0.0, %v1847
  %1849 = vmatmul.bf16.gmra.mxu0 %v1742
  %v1850 = vpop.f32.mrf.mxu0
  %v1851 = vadd.f32 0.0, %v1850
  %v1852 = vpop.f32.mrf.mxu0
  %v1853 = vadd.f32 0.0, %v1852
  %1854 = vmatmul.bf16.gmra.mxu0 %v1745
  %v1855 = vpop.f32.mrf.mxu0
  %v1856 = vadd.f32 0.0, %v1855
  %v1857 = vpop.f32.mrf.mxu0
  %v1858 = vadd.f32 0.0, %v1857
  %1859 = vmatmul.bf16.gmra.mxu0 %v1748
  %v1860 = vpop.f32.mrf.mxu0
  %v1861 = vadd.f32 0.0, %v1860
  %v1862 = vpop.f32.mrf.mxu0
  %v1863 = vadd.f32 0.0, %v1862
  %1864 = vmatmul.bf16.gmra.mxu0 %v1751
  %v1865 = vpop.f32.mrf.mxu0
  %v1866 = vadd.f32 0.0, %v1865
  %v1867 = vpop.f32.mrf.mxu0
  %v1868 = vadd.f32 0.0, %v1867
  %1869 = vmatmul.bf16.gmra.mxu0 %v1754
  %v1870 = vpop.f32.mrf.mxu0
  %v1871 = vadd.f32 0.0, %v1870
  %v1872 = vpop.f32.mrf.mxu0
  %v1873 = vadd.f32 0.0, %v1872
  %1874 = vmatmul.bf16.gmra.mxu0 %v1757
  %v1875 = vpop.f32.mrf.mxu0
  %v1876 = vadd.f32 0.0, %v1875
  %v1877 = vpop.f32.mrf.mxu0
  %v1878 = vadd.f32 0.0, %v1877
  %1879 = vmatmul.bf16.gmra.mxu0 %v1760
  %v1880 = vpop.f32.mrf.mxu0
  %v1881 = vadd.f32 0.0, %v1880
  %v1882 = vpop.f32.mrf.mxu0
  %v1883 = vadd.f32 0.0, %v1882
  %1884 = vmatmul.bf16.gmra.mxu0 %v1763
  %v1885 = vpop.f32.mrf.mxu0
  %v1886 = vadd.f32 0.0, %v1885
  %v1887 = vpop.f32.mrf.mxu0
  %v1888 = vadd.f32 0.0, %v1887
  %1889 = vmatmul.bf16.gmra.mxu0 %v1766
  %v1890 = vpop.f32.mrf.mxu0
  %v1891 = vadd.f32 0.0, %v1890
  %v1892 = vpop.f32.mrf.mxu0
  %v1893 = vadd.f32 0.0, %v1892
  %1894 = vmatmul.bf16.gmra.mxu0 %v1769
  %v1895 = vpop.f32.mrf.mxu0
  %v1896 = vadd.f32 0.0, %v1895
  %v1897 = vpop.f32.mrf.mxu0
  %v1898 = vadd.f32 0.0, %v1897
  %1899 = vmatmul.bf16.gmra.mxu0 %v1772
  %v1900 = vpop.f32.mrf.mxu0
  %v1901 = vadd.f32 0.0, %v1900
  %v1902 = vpop.f32.mrf.mxu0
  %v1903 = vadd.f32 0.0, %v1902
  %1904 = vmatmul.bf16.gmra.mxu0 %v1775
  %v1905 = vpop.f32.mrf.mxu0
  %v1906 = vadd.f32 0.0, %v1905
  %v1907 = vpop.f32.mrf.mxu0
  %v1908 = vadd.f32 0.0, %v1907
  %1909 = vmatmul.bf16.gmra.mxu0 %v1778
  %v1910 = vpop.f32.mrf.mxu0
  %v1911 = vadd.f32 0.0, %v1910
  %v1912 = vpop.f32.mrf.mxu0
  %v1913 = vadd.f32 0.0, %v1912
  %1914 = vmatmul.bf16.gmra.mxu0 %v1781
  %v1915 = vpop.f32.mrf.mxu0
  %v1916 = vadd.f32 0.0, %v1915
  %v1917 = vpop.f32.mrf.mxu0
  %v1918 = vadd.f32 0.0, %v1917
  %1919 = vmatmul.bf16.gmra.mxu0 %v1784
  %v1920 = vpop.f32.mrf.mxu0
  %v1921 = vadd.f32 0.0, %v1920
  %v1922 = vpop.f32.mrf.mxu0
  %v1923 = vadd.f32 0.0, %v1922
  %1924 = vmatmul.bf16.gmra.mxu0 %v1787
  %v1925 = vpop.f32.mrf.mxu0
  %v1926 = vadd.f32 0.0, %v1925
  %v1927 = vpop.f32.mrf.mxu0
  %v1928 = vadd.f32 0.0, %v1927
  %1929 = vmatmul.bf16.gmra.mxu0 %v1790
  %v1930 = vpop.f32.mrf.mxu0
  %v1931 = vadd.f32 0.0, %v1930
  %v1932 = vpop.f32.mrf.mxu0
  %v1933 = vadd.f32 0.0, %v1932
  %1934 = vmatmul.bf16.gmra.mxu0 %v1793
  %v1935 = vpop.f32.mrf.mxu0
  %v1936 = vadd.f32 0.0, %v1935
  %v1937 = vpop.f32.mrf.mxu0
  %v1938 = vadd.f32 0.0, %v1937
  %1939 = vmatmul.bf16.gmra.mxu0 %v1796
  %v1940 = vpop.f32.mrf.mxu0
  %v1941 = vadd.f32 0.0, %v1940
  %v1942 = vpop.f32.mrf.mxu0
  %v1943 = vadd.f32 0.0, %v1942
  %1944 = vmatmul.bf16.gmra.mxu0 %v1799
  %v1945 = vpop.f32.mrf.mxu0
  %v1946 = vadd.f32 0.0, %v1945
  %v1947 = vpop.f32.mrf.mxu0
  %v1948 = vadd.f32 0.0, %v1947
  %1949 = vmatmul.bf16.gmra.mxu0 %v1802
  %v1950 = vpop.f32.mrf.mxu0
  %v1951 = vadd.f32 0.0, %v1950
  %v1952 = vpop.f32.mrf.mxu0
  %v1953 = vadd.f32 0.0, %v1952
  %1954 = vmatmul.bf16.gmra.mxu0 %v1805
  %v1955 = vpop.f32.mrf.mxu0
  %v1956 = vadd.f32 0.0, %v1955
  %v1957 = vpop.f32.mrf.mxu0
  %v1958 = vadd.f32 0.0, %v1957
  %1959 = vmatmul.bf16.gmra.mxu0 %v1808
  %v1960 = vpop.f32.mrf.mxu0
  %v1961 = vadd.f32 0.0, %v1960
  %v1962 = vpop.f32.mrf.mxu0
  %v1963 = vadd.f32 0.0, %v1962
  %1964 = vmatmul.bf16.gmra.mxu0 %v1811
  %v1965 = vpop.f32.mrf.mxu0
  %v1966 = vadd.f32 0.0, %v1965
  %v1967 = vpop.f32.mrf.mxu0
  %v1968 = vadd.f32 0.0, %v1967
  %1969 = vmatmul.bf16.gmra.mxu0 %v1814
  %v1970 = vpop.f32.mrf.mxu0
  %v1971 = vadd.f32 0.0, %v1970
  %v1972 = vpop.f32.mrf.mxu0
  %v1973 = vadd.f32 0.0, %v1972
  %1974 = vmatmul.bf16.gmra.mxu0 %v1817
  %v1975 = vpop.f32.mrf.mxu0
  %v1976 = vadd.f32 0.0, %v1975
  %v1977 = vpop.f32.mrf.mxu0
  %v1978 = vadd.f32 0.0, %v1977
  %1979 = vmatmul.bf16.gmra.mxu0 %v1820
  %v1980 = vpop.f32.mrf.mxu0
  %v1981 = vadd.f32 0.0, %v1980
  %v1982 = vpop.f32.mrf.mxu0
  %v1983 = vadd.f32 0.0, %v1982
  %1984 = vmatmul.bf16.gmra.mxu0 %v1823
  %v1985 = vpop.f32.mrf.mxu0
  %v1986 = vadd.f32 0.0, %v1985
  %v1987 = vpop.f32.mrf.mxu0
  %v1988 = vadd.f32 0.0, %v1987
  %1989 = vmatmul.bf16.gmra.mxu0 %v1826
  %v1990 = vpop.f32.mrf.mxu0
  %v1991 = vadd.f32 0.0, %v1990
  %v1992 = vpop.f32.mrf.mxu0
  %v1993 = vadd.f32 0.0, %v1992
  %1994 = vmatmul.bf16.gmra.mxu0 %v1829
  %v1995 = vpop.f32.mrf.mxu0
  %v1996 = vadd.f32 0.0, %v1995
  %v1997 = vpop.f32.mrf.mxu0
  %v1998 = vadd.f32 0.0, %v1997
  %1999 = vdwg.mxu0
  %s2000 = scalar_lea.vmem [#allocation2], 120
  %v2001 = vld [vmem:[%s2000] sm:$0x8]
  %v2002 = vld [vmem:[%s2000 + $0x4] sm:$0xf]
  %v2003 = vld [vmem:[%s2000 + $0x8] sm:$0x7]
  %v2004 = vld [vmem:[%s2000 + $0x14] sm:$0x8]
  %v2005 = vld [vmem:[%s2000 + $0x18] sm:$0xf]
  %v2006 = vld [vmem:[%s2000 + $0x1c] sm:$0x7]
  %v2007 = vld [vmem:[%s2000 + $0x28] sm:$0x8]
  %v2008 = vld [vmem:[%s2000 + $0x2c] sm:$0xf]
  %v2009 = vld [vmem:[%s2000 + $0x30] sm:$0x7]
  %v2010 = vld [vmem:[%s2000 + $0x3c] sm:$0x8]
  %v2011 = vld [vmem:[%s2000 + $0x40] sm:$0xf]
  %v2012 = vld [vmem:[%s2000 + $0x44] sm:$0x7]
  %v2013 = vld [vmem:[%s2000 + $0x50] sm:$0x8]
  %v2014 = vld [vmem:[%s2000 + $0x54] sm:$0xf]
  %v2015 = vld [vmem:[%s2000 + $0x58] sm:$0x7]
  %v2016 = vld [vmem:[%s2000 + $0x64] sm:$0x8]
  %v2017 = vld [vmem:[%s2000 + $0x68] sm:$0xf]
  %v2018 = vld [vmem:[%s2000 + $0x6c] sm:$0x7]
  %v2019 = vld [vmem:[%s2000 + $0x78] sm:$0x8]
  %v2020 = vld [vmem:[%s2000 + $0x7c] sm:$0xf]
  %v2021 = vld [vmem:[%s2000 + $0x80] sm:$0x7]
  %v2022 = vld [vmem:[%s2000 + $0x8c] sm:$0x8]
  %v2023 = vld [vmem:[%s2000 + $0x90] sm:$0xf]
  %v2024 = vld [vmem:[%s2000 + $0x94] sm:$0x7]
  %v2025 = vld [vmem:[%s2000 + $0xa0] sm:$0x8]
  %v2026 = vld [vmem:[%s2000 + $0xa4] sm:$0xf]
  %v2027 = vld [vmem:[%s2000 + $0xa8] sm:$0x7]
  %v2028 = vld [vmem:[%s2000 + $0xb4] sm:$0x8]
  %v2029 = vld [vmem:[%s2000 + $0xb8] sm:$0xf]
  %v2030 = vld [vmem:[%s2000 + $0xbc] sm:$0x7]
  %v2031 = vld [vmem:[%s2000 + $0xc8] sm:$0x8]
  %v2032 = vld [vmem:[%s2000 + $0xcc] sm:$0xf]
  %v2033 = vld [vmem:[%s2000 + $0xd0] sm:$0x7]
  %v2034 = vld [vmem:[%s2000 + $0xdc] sm:$0x8]
  %v2035 = vld [vmem:[%s2000 + $0xe0] sm:$0xf]
  %v2036 = vld [vmem:[%s2000 + $0xe4] sm:$0x7]
  %v2037 = vld [vmem:[%s2000 + $0xf0] sm:$0x8]
  %v2038 = vld [vmem:[%s2000 + $0xf4] sm:$0xf]
  %v2039 = vld [vmem:[%s2000 + $0xf8] sm:$0x7]
  %v2040 = vld [vmem:[%s2000 + $0x104] sm:$0x8]
  %v2041 = vld [vmem:[%s2000 + $0x108] sm:$0xf]
  %v2042 = vld [vmem:[%s2000 + $0x10c] sm:$0x7]
  %v2043 = vld [vmem:[%s2000 + $0x118] sm:$0x8]
  %v2044 = vld [vmem:[%s2000 + $0x11c] sm:$0xf]
  %v2045 = vld [vmem:[%s2000 + $0x120] sm:$0x7]
  %v2046 = vld [vmem:[%s2000 + $0x12c] sm:$0x8]
  %v2047 = vld [vmem:[%s2000 + $0x130] sm:$0xf]
  %v2048 = vld [vmem:[%s2000 + $0x134] sm:$0x7]
  %v2049 = vld [vmem:[%s2000 + $0x320] sm:$0x8]
  %v2050 = vld [vmem:[%s2000 + $0x324] sm:$0xf]
  %v2051 = vld [vmem:[%s2000 + $0x328] sm:$0x7]
  %v2052 = vld [vmem:[%s2000 + $0x334] sm:$0x8]
  %v2053 = vld [vmem:[%s2000 + $0x338] sm:$0xf]
  %v2054 = vld [vmem:[%s2000 + $0x33c] sm:$0x7]
  %v2055 = vld [vmem:[%s2000 + $0x348] sm:$0x8]
  %v2056 = vld [vmem:[%s2000 + $0x34c] sm:$0xf]
  %v2057 = vld [vmem:[%s2000 + $0x350] sm:$0x7]
  %v2058 = vld [vmem:[%s2000 + $0x35c] sm:$0x8]
  %v2059 = vld [vmem:[%s2000 + $0x360] sm:$0xf]
  %v2060 = vld [vmem:[%s2000 + $0x364] sm:$0x7]
  %v2061 = vld [vmem:[%s2000 + $0x370] sm:$0x8]
  %v2062 = vld [vmem:[%s2000 + $0x374] sm:$0xf]
  %v2063 = vld [vmem:[%s2000 + $0x378] sm:$0x7]
  %v2064 = vld [vmem:[%s2000 + $0x384] sm:$0x8]
  %v2065 = vld [vmem:[%s2000 + $0x388] sm:$0xf]
  %v2066 = vld [vmem:[%s2000 + $0x38c] sm:$0x7]
  %v2067 = vld [vmem:[%s2000 + $0x398] sm:$0x8]
  %v2068 = vld [vmem:[%s2000 + $0x39c] sm:$0xf]
  %v2069 = vld [vmem:[%s2000 + $0x3a0] sm:$0x7]
  %v2070 = vld [vmem:[%s2000 + $0x3ac] sm:$0x8]
  %v2071 = vld [vmem:[%s2000 + $0x3b0] sm:$0xf]
  %v2072 = vld [vmem:[%s2000 + $0x3b4] sm:$0x7]
  %v2073 = vld [vmem:[%s2000 + $0x3c0] sm:$0x8]
  %v2074 = vld [vmem:[%s2000 + $0x3c4] sm:$0xf]
  %v2075 = vld [vmem:[%s2000 + $0x3c8] sm:$0x7]
  %v2076 = vld [vmem:[%s2000 + $0x3d4] sm:$0x8]
  %v2077 = vld [vmem:[%s2000 + $0x3d8] sm:$0xf]
  %v2078 = vld [vmem:[%s2000 + $0x3dc] sm:$0x7]
  %v2079 = vld [vmem:[%s2000 + $0x3e8] sm:$0x8]
  %v2080 = vld [vmem:[%s2000 + $0x3ec] sm:$0xf]
  %v2081 = vld [vmem:[%s2000 + $0x3f0] sm:$0x7]
  %v2082 = vld [vmem:[%s2000 + $0x3fc] sm:$0x8]
  %v2083 = vld [vmem:[%s2000 + $0x400] sm:$0xf]
  %v2084 = vld [vmem:[%s2000 + $0x404] sm:$0x7]
  %v2085 = vld [vmem:[%s2000 + $0x410] sm:$0x8]
  %v2086 = vld [vmem:[%s2000 + $0x414] sm:$0xf]
  %v2087 = vld [vmem:[%s2000 + $0x418] sm:$0x7]
  %v2088 = vld [vmem:[%s2000 + $0x424] sm:$0x8]
  %v2089 = vld [vmem:[%s2000 + $0x428] sm:$0xf]
  %v2090 = vld [vmem:[%s2000 + $0x42c] sm:$0x7]
  %v2091 = vld [vmem:[%s2000 + $0x438] sm:$0x8]
  %v2092 = vld [vmem:[%s2000 + $0x43c] sm:$0xf]
  %v2093 = vld [vmem:[%s2000 + $0x440] sm:$0x7]
  %v2094 = vld [vmem:[%s2000 + $0x44c] sm:$0x8]
  %v2095 = vld [vmem:[%s2000 + $0x450] sm:$0xf]
  %v2096 = vld [vmem:[%s2000 + $0x454] sm:$0x7]
  %vm2193 = vcmask 1040384
  %vm2194 = vcmask 1044484
  %vm2195 = vmor %vm2193, %vm2194
  %v2196 = vrot.slane %v2001, 7
  %v2197 = vrot.slane %v2196, 4
  %v2198 = vrot.slane %v2002, 7
  %v2199 = vsel %vm2195, %v2197, %v2198
  %v2200 = vrot.slane %v2198, 4
  %v2201 = vrot.slane %v2003, 7
  %v2202 = vsel %vm2195, %v2200, %v2201
  %v2203 = vrot.slane %v2004, 7
  %v2204 = vrot.slane %v2203, 4
  %v2205 = vrot.slane %v2005, 7
  %v2206 = vsel %vm2195, %v2204, %v2205
  %v2207 = vrot.slane %v2205, 4
  %v2208 = vrot.slane %v2006, 7
  %v2209 = vsel %vm2195, %v2207, %v2208
  %v2210 = vrot.slane %v2007, 7
  %v2211 = vrot.slane %v2210, 4
  %v2212 = vrot.slane %v2008, 7
  %v2213 = vsel %vm2195, %v2211, %v2212
  %v2214 = vrot.slane %v2212, 4
  %v2215 = vrot.slane %v2009, 7
  %v2216 = vsel %vm2195, %v2214, %v2215
  %v2217 = vrot.slane %v2010, 7
  %v2218 = vrot.slane %v2217, 4
  %v2219 = vrot.slane %v2011, 7
  %v2220 = vsel %vm2195, %v2218, %v2219
  %v2221 = vrot.slane %v2219, 4
  %v2222 = vrot.slane %v2012, 7
  %v2223 = vsel %vm2195, %v2221, %v2222
  %v2224 = vrot.slane %v2013, 7
  %v2225 = vrot.slane %v2224, 4
  %v2226 = vrot.slane %v2014, 7
  %v2227 = vsel %vm2195, %v2225, %v2226
  %v2228 = vrot.slane %v2226, 4
  %v2229 = vrot.slane %v2015, 7
  %v2230 = vsel %vm2195, %v2228, %v2229
  %v2231 = vrot.slane %v2016, 7
  %v2232 = vrot.slane %v2231, 4
  %v2233 = vrot.slane %v2017, 7
  %v2234 = vsel %vm2195, %v2232, %v2233
  %v2235 = vrot.slane %v2233, 4
  %v2236 = vrot.slane %v2018, 7
  %v2237 = vsel %vm2195, %v2235, %v2236
  %v2238 = vrot.slane %v2019, 7
  %v2239 = vrot.slane %v2238, 4
  %v2240 = vrot.slane %v2020, 7
  %v2241 = vsel %vm2195, %v2239, %v2240
  %v2242 = vrot.slane %v2240, 4
  %v2243 = vrot.slane %v2021, 7
  %v2244 = vsel %vm2195, %v2242, %v2243
  %v2245 = vrot.slane %v2022, 7
  %v2246 = vrot.slane %v2245, 4
  %v2247 = vrot.slane %v2023, 7
  %v2248 = vsel %vm2195, %v2246, %v2247
  %v2249 = vrot.slane %v2247, 4
  %v2250 = vrot.slane %v2024, 7
  %v2251 = vsel %vm2195, %v2249, %v2250
  %v2252 = vrot.slane %v2025, 7
  %v2253 = vrot.slane %v2252, 4
  %v2254 = vrot.slane %v2026, 7
  %v2255 = vsel %vm2195, %v2253, %v2254
  %v2256 = vrot.slane %v2254, 4
  %v2257 = vrot.slane %v2027, 7
  %v2258 = vsel %vm2195, %v2256, %v2257
  %v2259 = vrot.slane %v2028, 7
  %v2260 = vrot.slane %v2259, 4
  %v2261 = vrot.slane %v2029, 7
  %v2262 = vsel %vm2195, %v2260, %v2261
  %v2263 = vrot.slane %v2261, 4
  %v2264 = vrot.slane %v2030, 7
  %v2265 = vsel %vm2195, %v2263, %v2264
  %v2266 = vrot.slane %v2031, 7
  %v2267 = vrot.slane %v2266, 4
  %v2268 = vrot.slane %v2032, 7
  %v2269 = vsel %vm2195, %v2267, %v2268
  %v2270 = vrot.slane %v2268, 4
  %v2271 = vrot.slane %v2033, 7
  %v2272 = vsel %vm2195, %v2270, %v2271
  %v2273 = vrot.slane %v2034, 7
  %v2274 = vrot.slane %v2273, 4
  %v2275 = vrot.slane %v2035, 7
  %v2276 = vsel %vm2195, %v2274, %v2275
  %v2277 = vrot.slane %v2275, 4
  %v2278 = vrot.slane %v2036, 7
  %v2279 = vsel %vm2195, %v2277, %v2278
  %v2280 = vrot.slane %v2037, 7
  %v2281 = vrot.slane %v2280, 4
  %v2282 = vrot.slane %v2038, 7
  %v2283 = vsel %vm2195, %v2281, %v2282
  %v2284 = vrot.slane %v2282, 4
  %v2285 = vrot.slane %v2039, 7
  %v2286 = vsel %vm2195, %v2284, %v2285
  %v2287 = vrot.slane %v2040, 7
  %v2288 = vrot.slane %v2287, 4
  %v2289 = vrot.slane %v2041, 7
  %v2290 = vsel %vm2195, %v2288, %v2289
  %v2291 = vrot.slane %v2289, 4
  %v2292 = vrot.slane %v2042, 7
  %v2293 = vsel %vm2195, %v2291, %v2292
  %v2294 = vrot.slane %v2043, 7
  %v2295 = vrot.slane %v2294, 4
  %v2296 = vrot.slane %v2044, 7
  %v2297 = vsel %vm2195, %v2295, %v2296
  %v2298 = vrot.slane %v2296, 4
  %v2299 = vrot.slane %v2045, 7
  %v2300 = vsel %vm2195, %v2298, %v2299
  %v2301 = vrot.slane %v2046, 7
  %v2302 = vrot.slane %v2301, 4
  %v2303 = vrot.slane %v2047, 7
  %v2304 = vsel %vm2195, %v2302, %v2303
  %v2305 = vrot.slane %v2303, 4
  %v2306 = vrot.slane %v2048, 7
  %v2307 = vsel %vm2195, %v2305, %v2306
  %v2308 = vrot.slane %v2049, 7
  %v2309 = vrot.slane %v2308, 4
  %v2310 = vrot.slane %v2050, 7
  %v2311 = vsel %vm2195, %v2309, %v2310
  %v2312 = vrot.slane %v2310, 4
  %v2313 = vrot.slane %v2051, 7
  %v2314 = vsel %vm2195, %v2312, %v2313
  %v2315 = vrot.slane %v2052, 7
  %v2316 = vrot.slane %v2315, 4
  %v2317 = vrot.slane %v2053, 7
  %v2318 = vsel %vm2195, %v2316, %v2317
  %v2319 = vrot.slane %v2317, 4
  %v2320 = vrot.slane %v2054, 7
  %v2321 = vsel %vm2195, %v2319, %v2320
  %v2322 = vrot.slane %v2055, 7
  %v2323 = vrot.slane %v2322, 4
  %v2324 = vrot.slane %v2056, 7
  %v2325 = vsel %vm2195, %v2323, %v2324
  %v2326 = vrot.slane %v2324, 4
  %v2327 = vrot.slane %v2057, 7
  %v2328 = vsel %vm2195, %v2326, %v2327
  %v2329 = vrot.slane %v2058, 7
  %v2330 = vrot.slane %v2329, 4
  %v2331 = vrot.slane %v2059, 7
  %v2332 = vsel %vm2195, %v2330, %v2331
  %v2333 = vrot.slane %v2331, 4
  %v2334 = vrot.slane %v2060, 7
  %v2335 = vsel %vm2195, %v2333, %v2334
  %v2336 = vrot.slane %v2061, 7
  %v2337 = vrot.slane %v2336, 4
  %v2338 = vrot.slane %v2062, 7
  %v2339 = vsel %vm2195, %v2337, %v2338
  %v2340 = vrot.slane %v2338, 4
  %v2341 = vrot.slane %v2063, 7
  %v2342 = vsel %vm2195, %v2340, %v2341
  %v2343 = vrot.slane %v2064, 7
  %v2344 = vrot.slane %v2343, 4
  %v2345 = vrot.slane %v2065, 7
  %v2346 = vsel %vm2195, %v2344, %v2345
  %v2347 = vrot.slane %v2345, 4
  %v2348 = vrot.slane %v2066, 7
  %v2349 = vsel %vm2195, %v2347, %v2348
  %v2350 = vrot.slane %v2067, 7
  %v2351 = vrot.slane %v2350, 4
  %v2352 = vrot.slane %v2068, 7
  %v2353 = vsel %vm2195, %v2351, %v2352
  %v2354 = vrot.slane %v2352, 4
  %v2355 = vrot.slane %v2069, 7
  %v2356 = vsel %vm2195, %v2354, %v2355
  %v2357 = vrot.slane %v2070, 7
  %v2358 = vrot.slane %v2357, 4
  %v2359 = vrot.slane %v2071, 7
  %v2360 = vsel %vm2195, %v2358, %v2359
  %v2361 = vrot.slane %v2359, 4
  %v2362 = vrot.slane %v2072, 7
  %v2363 = vsel %vm2195, %v2361, %v2362
  %v2364 = vrot.slane %v2073, 7
  %v2365 = vrot.slane %v2364, 4
  %v2366 = vrot.slane %v2074, 7
  %v2367 = vsel %vm2195, %v2365, %v2366
  %v2368 = vrot.slane %v2366, 4
  %v2369 = vrot.slane %v2075, 7
  %v2370 = vsel %vm2195, %v2368, %v2369
  %v2371 = vrot.slane %v2076, 7
  %v2372 = vrot.slane %v2371, 4
  %v2373 = vrot.slane %v2077, 7
  %v2374 = vsel %vm2195, %v2372, %v2373
  %v2375 = vrot.slane %v2373, 4
  %v2376 = vrot.slane %v2078, 7
  %v2377 = vsel %vm2195, %v2375, %v2376
  %v2378 = vrot.slane %v2079, 7
  %v2379 = vrot.slane %v2378, 4
  %v2380 = vrot.slane %v2080, 7
  %v2381 = vsel %vm2195, %v2379, %v2380
  %v2382 = vrot.slane %v2380, 4
  %v2383 = vrot.slane %v2081, 7
  %v2384 = vsel %vm2195, %v2382, %v2383
  %v2385 = vrot.slane %v2082, 7
  %v2386 = vrot.slane %v2385, 4
  %v2387 = vrot.slane %v2083, 7
  %v2388 = vsel %vm2195, %v2386, %v2387
  %v2389 = vrot.slane %v2387, 4
  %v2390 = vrot.slane %v2084, 7
  %v2391 = vsel %vm2195, %v2389, %v2390
  %v2392 = vrot.slane %v2085, 7
  %v2393 = vrot.slane %v2392, 4
  %v2394 = vrot.slane %v2086, 7
  %v2395 = vsel %vm2195, %v2393, %v2394
  %v2396 = vrot.slane %v2394, 4
  %v2397 = vrot.slane %v2087, 7
  %v2398 = vsel %vm2195, %v2396, %v2397
  %v2399 = vrot.slane %v2088, 7
  %v2400 = vrot.slane %v2399, 4
  %v2401 = vrot.slane %v2089, 7
  %v2402 = vsel %vm2195, %v2400, %v2401
  %v2403 = vrot.slane %v2401, 4
  %v2404 = vrot.slane %v2090, 7
  %v2405 = vsel %vm2195, %v2403, %v2404
  %v2406 = vrot.slane %v2091, 7
  %v2407 = vrot.slane %v2406, 4
  %v2408 = vrot.slane %v2092, 7
  %v2409 = vsel %vm2195, %v2407, %v2408
  %v2410 = vrot.slane %v2408, 4
  %v2411 = vrot.slane %v2093, 7
  %v2412 = vsel %vm2195, %v2410, %v2411
  %v2413 = vrot.slane %v2094, 7
  %v2414 = vrot.slane %v2413, 4
  %v2415 = vrot.slane %v2095, 7
  %v2416 = vsel %vm2195, %v2414, %v2415
  %v2417 = vrot.slane %v2415, 4
  %v2418 = vrot.slane %v2096, 7
  %v2419 = vsel %vm2195, %v2417, %v2418
  %v2420 = vld [vmem:[%s2000 + $0x4] sm:$0xc]
  %v2421 = vld [vmem:[%s2000 + $0x8] sm:$0xf]
  %v2422 = vld [vmem:[%s2000 + $0xc] sm:$0x3]
  %v2423 = vld [vmem:[%s2000 + $0x18] sm:$0xc]
  %v2424 = vld [vmem:[%s2000 + $0x1c] sm:$0xf]
  %v2425 = vld [vmem:[%s2000 + $0x20] sm:$0x3]
  %v2426 = vld [vmem:[%s2000 + $0x2c] sm:$0xc]
  %v2427 = vld [vmem:[%s2000 + $0x30] sm:$0xf]
  %v2428 = vld [vmem:[%s2000 + $0x34] sm:$0x3]
  %v2429 = vld [vmem:[%s2000 + $0x40] sm:$0xc]
  %v2430 = vld [vmem:[%s2000 + $0x44] sm:$0xf]
  %v2431 = vld [vmem:[%s2000 + $0x48] sm:$0x3]
  %v2432 = vld [vmem:[%s2000 + $0x54] sm:$0xc]
  %v2433 = vld [vmem:[%s2000 + $0x58] sm:$0xf]
  %v2434 = vld [vmem:[%s2000 + $0x5c] sm:$0x3]
  %v2435 = vld [vmem:[%s2000 + $0x68] sm:$0xc]
  %v2436 = vld [vmem:[%s2000 + $0x6c] sm:$0xf]
  %v2437 = vld [vmem:[%s2000 + $0x70] sm:$0x3]
  %v2438 = vld [vmem:[%s2000 + $0x7c] sm:$0xc]
  %v2439 = vld [vmem:[%s2000 + $0x80] sm:$0xf]
  %v2440 = vld [vmem:[%s2000 + $0x84] sm:$0x3]
  %v2441 = vld [vmem:[%s2000 + $0x90] sm:$0xc]
  %v2442 = vld [vmem:[%s2000 + $0x94] sm:$0xf]
  %v2443 = vld [vmem:[%s2000 + $0x98] sm:$0x3]
  %v2444 = vld [vmem:[%s2000 + $0xa4] sm:$0xc]
  %v2445 = vld [vmem:[%s2000 + $0xa8] sm:$0xf]
  %v2446 = vld [vmem:[%s2000 + $0xac] sm:$0x3]
  %v2447 = vld [vmem:[%s2000 + $0xb8] sm:$0xc]
  %v2448 = vld [vmem:[%s2000 + $0xbc] sm:$0xf]
  %v2449 = vld [vmem:[%s2000 + $0xc0] sm:$0x3]
  %v2450 = vld [vmem:[%s2000 + $0xcc] sm:$0xc]
  %v2451 = vld [vmem:[%s2000 + $0xd0] sm:$0xf]
  %v2452 = vld [vmem:[%s2000 + $0xd4] sm:$0x3]
  %v2453 = vld [vmem:[%s2000 + $0xe0] sm:$0xc]
  %v2454 = vld [vmem:[%s2000 + $0xe4] sm:$0xf]
  %v2455 = vld [vmem:[%s2000 + $0xe8] sm:$0x3]
  %v2456 = vld [vmem:[%s2000 + $0xf4] sm:$0xc]
  %v2457 = vld [vmem:[%s2000 + $0xf8] sm:$0xf]
  %v2458 = vld [vmem:[%s2000 + $0xfc] sm:$0x3]
  %v2459 = vld [vmem:[%s2000 + $0x108] sm:$0xc]
  %v2460 = vld [vmem:[%s2000 + $0x10c] sm:$0xf]
  %v2461 = vld [vmem:[%s2000 + $0x110] sm:$0x3]
  %v2462 = vld [vmem:[%s2000 + $0x11c] sm:$0xc]
  %v2463 = vld [vmem:[%s2000 + $0x120] sm:$0xf]
  %v2464 = vld [vmem:[%s2000 + $0x124] sm:$0x3]
  %v2465 = vld [vmem:[%s2000 + $0x130] sm:$0xc]
  %v2466 = vld [vmem:[%s2000 + $0x134] sm:$0xf]
  %v2467 = vld [vmem:[%s2000 + $0x138] sm:$0x3]
  %v2468 = vld [vmem:[%s2000 + $0x324] sm:$0xc]
  %v2469 = vld [vmem:[%s2000 + $0x328] sm:$0xf]
  %v2470 = vld [vmem:[%s2000 + $0x32c] sm:$0x3]
  %v2471 = vld [vmem:[%s2000 + $0x338] sm:$0xc]
  %v2472 = vld [vmem:[%s2000 + $0x33c] sm:$0xf]
  %v2473 = vld [vmem:[%s2000 + $0x340] sm:$0x3]
  %v2474 = vld [vmem:[%s2000 + $0x34c] sm:$0xc]
  %v2475 = vld [vmem:[%s2000 + $0x350] sm:$0xf]
  %v2476 = vld [vmem:[%s2000 + $0x354] sm:$0x3]
  %v2477 = vld [vmem:[%s2000 + $0x360] sm:$0xc]
  %v2478 = vld [vmem:[%s2000 + $0x364] sm:$0xf]
  %v2479 = vld [vmem:[%s2000 + $0x368] sm:$0x3]
  %v2480 = vld [vmem:[%s2000 + $0x374] sm:$0xc]
  %v2481 = vld [vmem:[%s2000 + $0x378] sm:$0xf]
  %v2482 = vld [vmem:[%s2000 + $0x37c] sm:$0x3]
  %v2483 = vld [vmem:[%s2000 + $0x388] sm:$0xc]
  %v2484 = vld [vmem:[%s2000 + $0x38c] sm:$0xf]
  %v2485 = vld [vmem:[%s2000 + $0x390] sm:$0x3]
  %v2486 = vld [vmem:[%s2000 + $0x39c] sm:$0xc]
  %v2487 = vld [vmem:[%s2000 + $0x3a0] sm:$0xf]
  %v2488 = vld [vmem:[%s2000 + $0x3a4] sm:$0x3]
  %v2489 = vld [vmem:[%s2000 + $0x3b0] sm:$0xc]
  %v2490 = vld [vmem:[%s2000 + $0x3b4] sm:$0xf]
  %v2491 = vld [vmem:[%s2000 + $0x3b8] sm:$0x3]
  %v2492 = vld [vmem:[%s2000 + $0x3c4] sm:$0xc]
  %v2493 = vld [vmem:[%s2000 + $0x3c8] sm:$0xf]
  %v2494 = vld [vmem:[%s2000 + $0x3cc] sm:$0x3]
  %v2495 = vld [vmem:[%s2000 + $0x3d8] sm:$0xc]
  %v2496 = vld [vmem:[%s2000 + $0x3dc] sm:$0xf]
  %v2497 = vld [vmem:[%s2000 + $0x3e0] sm:$0x3]
  %v2498 = vld [vmem:[%s2000 + $0x3ec] sm:$0xc]
  %v2499 = vld [vmem:[%s2000 + $0x3f0] sm:$0xf]
  %v2500 = vld [vmem:[%s2000 + $0x3f4] sm:$0x3]
  %v2501 = vld [vmem:[%s2000 + $0x400] sm:$0xc]
  %v2502 = vld [vmem:[%s2000 + $0x404] sm:$0xf]
  %v2503 = vld [vmem:[%s2000 + $0x408] sm:$0x3]
  %v2504 = vld [vmem:[%s2000 + $0x414] sm:$0xc]
  %v2505 = vld [vmem:[%s2000 + $0x418] sm:$0xf]
  %v2506 = vld [vmem:[%s2000 + $0x41c] sm:$0x3]
  %v2507 = vld [vmem:[%s2000 + $0x428] sm:$0xc]
  %v2508 = vld [vmem:[%s2000 + $0x42c] sm:$0xf]
  %v2509 = vld [vmem:[%s2000 + $0x430] sm:$0x3]
  %v2510 = vld [vmem:[%s2000 + $0x43c] sm:$0xc]
  %v2511 = vld [vmem:[%s2000 + $0x440] sm:$0xf]
  %v2512 = vld [vmem:[%s2000 + $0x444] sm:$0x3]
  %v2513 = vld [vmem:[%s2000 + $0x450] sm:$0xc]
  %v2514 = vld [vmem:[%s2000 + $0x454] sm:$0xf]
  %v2515 = vld [vmem:[%s2000 + $0x458] sm:$0x3]
  %v2612 = vrot.slane %v2420, 6
  %v2613 = vrot.slane %v2612, 4
  %v2614 = vrot.slane %v2421, 6
  %v2615 = vsel %vm622, %v2613, %v2614
  %v2616 = vrot.slane %v2614, 4
  %v2617 = vrot.slane %v2422, 6
  %v2618 = vsel %vm622, %v2616, %v2617
  %v2619 = vrot.slane %v2423, 6
  %v2620 = vrot.slane %v2619, 4
  %v2621 = vrot.slane %v2424, 6
  %v2622 = vsel %vm622, %v2620, %v2621
  %v2623 = vrot.slane %v2621, 4
  %v2624 = vrot.slane %v2425, 6
  %v2625 = vsel %vm622, %v2623, %v2624
  %v2626 = vrot.slane %v2426, 6
  %v2627 = vrot.slane %v2626, 4
  %v2628 = vrot.slane %v2427, 6
  %v2629 = vsel %vm622, %v2627, %v2628
  %v2630 = vrot.slane %v2628, 4
  %v2631 = vrot.slane %v2428, 6
  %v2632 = vsel %vm622, %v2630, %v2631
  %v2633 = vrot.slane %v2429, 6
  %v2634 = vrot.slane %v2633, 4
  %v2635 = vrot.slane %v2430, 6
  %v2636 = vsel %vm622, %v2634, %v2635
  %v2637 = vrot.slane %v2635, 4
  %v2638 = vrot.slane %v2431, 6
  %v2639 = vsel %vm622, %v2637, %v2638
  %v2640 = vrot.slane %v2432, 6
  %v2641 = vrot.slane %v2640, 4
  %v2642 = vrot.slane %v2433, 6
  %v2643 = vsel %vm622, %v2641, %v2642
  %v2644 = vrot.slane %v2642, 4
  %v2645 = vrot.slane %v2434, 6
  %v2646 = vsel %vm622, %v2644, %v2645
  %v2647 = vrot.slane %v2435, 6
  %v2648 = vrot.slane %v2647, 4
  %v2649 = vrot.slane %v2436, 6
  %v2650 = vsel %vm622, %v2648, %v2649
  %v2651 = vrot.slane %v2649, 4
  %v2652 = vrot.slane %v2437, 6
  %v2653 = vsel %vm622, %v2651, %v2652
  %v2654 = vrot.slane %v2438, 6
  %v2655 = vrot.slane %v2654, 4
  %v2656 = vrot.slane %v2439, 6
  %v2657 = vsel %vm622, %v2655, %v2656
  %v2658 = vrot.slane %v2656, 4
  %v2659 = vrot.slane %v2440, 6
  %v2660 = vsel %vm622, %v2658, %v2659
  %v2661 = vrot.slane %v2441, 6
  %v2662 = vrot.slane %v2661, 4
  %v2663 = vrot.slane %v2442, 6
  %v2664 = vsel %vm622, %v2662, %v2663
  %v2665 = vrot.slane %v2663, 4
  %v2666 = vrot.slane %v2443, 6
  %v2667 = vsel %vm622, %v2665, %v2666
  %v2668 = vrot.slane %v2444, 6
  %v2669 = vrot.slane %v2668, 4
  %v2670 = vrot.slane %v2445, 6
  %v2671 = vsel %vm622, %v2669, %v2670
  %v2672 = vrot.slane %v2670, 4
  %v2673 = vrot.slane %v2446, 6
  %v2674 = vsel %vm622, %v2672, %v2673
  %v2675 = vrot.slane %v2447, 6
  %v2676 = vrot.slane %v2675, 4
  %v2677 = vrot.slane %v2448, 6
  %v2678 = vsel %vm622, %v2676, %v2677
  %v2679 = vrot.slane %v2677, 4
  %v2680 = vrot.slane %v2449, 6
  %v2681 = vsel %vm622, %v2679, %v2680
  %v2682 = vrot.slane %v2450, 6
  %v2683 = vrot.slane %v2682, 4
  %v2684 = vrot.slane %v2451, 6
  %v2685 = vsel %vm622, %v2683, %v2684
  %v2686 = vrot.slane %v2684, 4
  %v2687 = vrot.slane %v2452, 6
  %v2688 = vsel %vm622, %v2686, %v2687
  %v2689 = vrot.slane %v2453, 6
  %v2690 = vrot.slane %v2689, 4
  %v2691 = vrot.slane %v2454, 6
  %v2692 = vsel %vm622, %v2690, %v2691
  %v2693 = vrot.slane %v2691, 4
  %v2694 = vrot.slane %v2455, 6
  %v2695 = vsel %vm622, %v2693, %v2694
  %v2696 = vrot.slane %v2456, 6
  %v2697 = vrot.slane %v2696, 4
  %v2698 = vrot.slane %v2457, 6
  %v2699 = vsel %vm622, %v2697, %v2698
  %v2700 = vrot.slane %v2698, 4
  %v2701 = vrot.slane %v2458, 6
  %v2702 = vsel %vm622, %v2700, %v2701
  %v2703 = vrot.slane %v2459, 6
  %v2704 = vrot.slane %v2703, 4
  %v2705 = vrot.slane %v2460, 6
  %v2706 = vsel %vm622, %v2704, %v2705
  %v2707 = vrot.slane %v2705, 4
  %v2708 = vrot.slane %v2461, 6
  %v2709 = vsel %vm622, %v2707, %v2708
  %v2710 = vrot.slane %v2462, 6
  %v2711 = vrot.slane %v2710, 4
  %v2712 = vrot.slane %v2463, 6
  %v2713 = vsel %vm622, %v2711, %v2712
  %v2714 = vrot.slane %v2712, 4
  %v2715 = vrot.slane %v2464, 6
  %v2716 = vsel %vm622, %v2714, %v2715
  %v2717 = vrot.slane %v2465, 6
  %v2718 = vrot.slane %v2717, 4
  %v2719 = vrot.slane %v2466, 6
  %v2720 = vsel %vm622, %v2718, %v2719
  %v2721 = vrot.slane %v2719, 4
  %v2722 = vrot.slane %v2467, 6
  %v2723 = vsel %vm622, %v2721, %v2722
  %v2724 = vrot.slane %v2468, 6
  %v2725 = vrot.slane %v2724, 4
  %v2726 = vrot.slane %v2469, 6
  %v2727 = vsel %vm622, %v2725, %v2726
  %v2728 = vrot.slane %v2726, 4
  %v2729 = vrot.slane %v2470, 6
  %v2730 = vsel %vm622, %v2728, %v2729
  %v2731 = vrot.slane %v2471, 6
  %v2732 = vrot.slane %v2731, 4
  %v2733 = vrot.slane %v2472, 6
  %v2734 = vsel %vm622, %v2732, %v2733
  %v2735 = vrot.slane %v2733, 4
  %v2736 = vrot.slane %v2473, 6
  %v2737 = vsel %vm622, %v2735, %v2736
  %v2738 = vrot.slane %v2474, 6
  %v2739 = vrot.slane %v2738, 4
  %v2740 = vrot.slane %v2475, 6
  %v2741 = vsel %vm622, %v2739, %v2740
  %v2742 = vrot.slane %v2740, 4
  %v2743 = vrot.slane %v2476, 6
  %v2744 = vsel %vm622, %v2742, %v2743
  %v2745 = vrot.slane %v2477, 6
  %v2746 = vrot.slane %v2745, 4
  %v2747 = vrot.slane %v2478, 6
  %v2748 = vsel %vm622, %v2746, %v2747
  %v2749 = vrot.slane %v2747, 4
  %v2750 = vrot.slane %v2479, 6
  %v2751 = vsel %vm622, %v2749, %v2750
  %v2752 = vrot.slane %v2480, 6
  %v2753 = vrot.slane %v2752, 4
  %v2754 = vrot.slane %v2481, 6
  %v2755 = vsel %vm622, %v2753, %v2754
  %v2756 = vrot.slane %v2754, 4
  %v2757 = vrot.slane %v2482, 6
  %v2758 = vsel %vm622, %v2756, %v2757
  %v2759 = vrot.slane %v2483, 6
  %v2760 = vrot.slane %v2759, 4
  %v2761 = vrot.slane %v2484, 6
  %v2762 = vsel %vm622, %v2760, %v2761
  %v2763 = vrot.slane %v2761, 4
  %v2764 = vrot.slane %v2485, 6
  %v2765 = vsel %vm622, %v2763, %v2764
  %v2766 = vrot.slane %v2486, 6
  %v2767 = vrot.slane %v2766, 4
  %v2768 = vrot.slane %v2487, 6
  %v2769 = vsel %vm622, %v2767, %v2768
  %v2770 = vrot.slane %v2768, 4
  %v2771 = vrot.slane %v2488, 6
  %v2772 = vsel %vm622, %v2770, %v2771
  %v2773 = vrot.slane %v2489, 6
  %v2774 = vrot.slane %v2773, 4
  %v2775 = vrot.slane %v2490, 6
  %v2776 = vsel %vm622, %v2774, %v2775
  %v2777 = vrot.slane %v2775, 4
  %v2778 = vrot.slane %v2491, 6
  %v2779 = vsel %vm622, %v2777, %v2778
  %v2780 = vrot.slane %v2492, 6
  %v2781 = vrot.slane %v2780, 4
  %v2782 = vrot.slane %v2493, 6
  %v2783 = vsel %vm622, %v2781, %v2782
  %v2784 = vrot.slane %v2782, 4
  %v2785 = vrot.slane %v2494, 6
  %v2786 = vsel %vm622, %v2784, %v2785
  %v2787 = vrot.slane %v2495, 6
  %v2788 = vrot.slane %v2787, 4
  %v2789 = vrot.slane %v2496, 6
  %v2790 = vsel %vm622, %v2788, %v2789
  %v2791 = vrot.slane %v2789, 4
  %v2792 = vrot.slane %v2497, 6
  %v2793 = vsel %vm622, %v2791, %v2792
  %v2794 = vrot.slane %v2498, 6
  %v2795 = vrot.slane %v2794, 4
  %v2796 = vrot.slane %v2499, 6
  %v2797 = vsel %vm622, %v2795, %v2796
  %v2798 = vrot.slane %v2796, 4
  %v2799 = vrot.slane %v2500, 6
  %v2800 = vsel %vm622, %v2798, %v2799
  %v2801 = vrot.slane %v2501, 6
  %v2802 = vrot.slane %v2801, 4
  %v2803 = vrot.slane %v2502, 6
  %v2804 = vsel %vm622, %v2802, %v2803
  %v2805 = vrot.slane %v2803, 4
  %v2806 = vrot.slane %v2503, 6
  %v2807 = vsel %vm622, %v2805, %v2806
  %v2808 = vrot.slane %v2504, 6
  %v2809 = vrot.slane %v2808, 4
  %v2810 = vrot.slane %v2505, 6
  %v2811 = vsel %vm622, %v2809, %v2810
  %v2812 = vrot.slane %v2810, 4
  %v2813 = vrot.slane %v2506, 6
  %v2814 = vsel %vm622, %v2812, %v2813
  %v2815 = vrot.slane %v2507, 6
  %v2816 = vrot.slane %v2815, 4
  %v2817 = vrot.slane %v2508, 6
  %v2818 = vsel %vm622, %v2816, %v2817
  %v2819 = vrot.slane %v2817, 4
  %v2820 = vrot.slane %v2509, 6
  %v2821 = vsel %vm622, %v2819, %v2820
  %v2822 = vrot.slane %v2510, 6
  %v2823 = vrot.slane %v2822, 4
  %v2824 = vrot.slane %v2511, 6
  %v2825 = vsel %vm622, %v2823, %v2824
  %v2826 = vrot.slane %v2824, 4
  %v2827 = vrot.slane %v2512, 6
  %v2828 = vsel %vm622, %v2826, %v2827
  %v2829 = vrot.slane %v2513, 6
  %v2830 = vrot.slane %v2829, 4
  %v2831 = vrot.slane %v2514, 6
  %v2832 = vsel %vm622, %v2830, %v2831
  %v2833 = vrot.slane %v2831, 4
  %v2834 = vrot.slane %v2515, 6
  %v2835 = vsel %vm622, %v2833, %v2834
  %v2836 = vld [vmem:[%s2000 + $0x8] sm:$0xe]
  %v2837 = vld [vmem:[%s2000 + $0xc] sm:$0xf]
  %v2838 = vld [vmem:[%s2000 + $0x10] sm:$0x1]
  %v2839 = vld [vmem:[%s2000 + $0x1c] sm:$0xe]
  %v2840 = vld [vmem:[%s2000 + $0x20] sm:$0xf]
  %v2841 = vld [vmem:[%s2000 + $0x24] sm:$0x1]
  %v2842 = vld [vmem:[%s2000 + $0x30] sm:$0xe]
  %v2843 = vld [vmem:[%s2000 + $0x34] sm:$0xf]
  %v2844 = vld [vmem:[%s2000 + $0x38] sm:$0x1]
  %v2845 = vld [vmem:[%s2000 + $0x44] sm:$0xe]
  %v2846 = vld [vmem:[%s2000 + $0x48] sm:$0xf]
  %v2847 = vld [vmem:[%s2000 + $0x4c] sm:$0x1]
  %v2848 = vld [vmem:[%s2000 + $0x58] sm:$0xe]
  %v2849 = vld [vmem:[%s2000 + $0x5c] sm:$0xf]
  %v2850 = vld [vmem:[%s2000 + $0x60] sm:$0x1]
  %v2851 = vld [vmem:[%s2000 + $0x6c] sm:$0xe]
  %v2852 = vld [vmem:[%s2000 + $0x70] sm:$0xf]
  %v2853 = vld [vmem:[%s2000 + $0x74] sm:$0x1]
  %v2854 = vld [vmem:[%s2000 + $0x80] sm:$0xe]
  %v2855 = vld [vmem:[%s2000 + $0x84] sm:$0xf]
  %v2856 = vld [vmem:[%s2000 + $0x88] sm:$0x1]
  %v2857 = vld [vmem:[%s2000 + $0x94] sm:$0xe]
  %v2858 = vld [vmem:[%s2000 + $0x98] sm:$0xf]
  %v2859 = vld [vmem:[%s2000 + $0x9c] sm:$0x1]
  %v2860 = vld [vmem:[%s2000 + $0xa8] sm:$0xe]
  %v2861 = vld [vmem:[%s2000 + $0xac] sm:$0xf]
  %v2862 = vld [vmem:[%s2000 + $0xb0] sm:$0x1]
  %v2863 = vld [vmem:[%s2000 + $0xbc] sm:$0xe]
  %v2864 = vld [vmem:[%s2000 + $0xc0] sm:$0xf]
  %v2865 = vld [vmem:[%s2000 + $0xc4] sm:$0x1]
  %v2866 = vld [vmem:[%s2000 + $0xd0] sm:$0xe]
  %v2867 = vld [vmem:[%s2000 + $0xd4] sm:$0xf]
  %v2868 = vld [vmem:[%s2000 + $0xd8] sm:$0x1]
  %v2869 = vld [vmem:[%s2000 + $0xe4] sm:$0xe]
  %v2870 = vld [vmem:[%s2000 + $0xe8] sm:$0xf]
  %v2871 = vld [vmem:[%s2000 + $0xec] sm:$0x1]
  %v2872 = vld [vmem:[%s2000 + $0xf8] sm:$0xe]
  %v2873 = vld [vmem:[%s2000 + $0xfc] sm:$0xf]
  %v2874 = vld [vmem:[%s2000 + $0x100] sm:$0x1]
  %v2875 = vld [vmem:[%s2000 + $0x10c] sm:$0xe]
  %v2876 = vld [vmem:[%s2000 + $0x110] sm:$0xf]
  %v2877 = vld [vmem:[%s2000 + $0x114] sm:$0x1]
  %v2878 = vld [vmem:[%s2000 + $0x120] sm:$0xe]
  %v2879 = vld [vmem:[%s2000 + $0x124] sm:$0xf]
  %v2880 = vld [vmem:[%s2000 + $0x128] sm:$0x1]
  %v2881 = vld [vmem:[%s2000 + $0x134] sm:$0xe]
  %v2882 = vld [vmem:[%s2000 + $0x138] sm:$0xf]
  %v2883 = vld [vmem:[%s2000 + $0x13c] sm:$0x1]
  %v2884 = vld [vmem:[%s2000 + $0x328] sm:$0xe]
  %v2885 = vld [vmem:[%s2000 + $0x32c] sm:$0xf]
  %v2886 = vld [vmem:[%s2000 + $0x330] sm:$0x1]
  %v2887 = vld [vmem:[%s2000 + $0x33c] sm:$0xe]
  %v2888 = vld [vmem:[%s2000 + $0x340] sm:$0xf]
  %v2889 = vld [vmem:[%s2000 + $0x344] sm:$0x1]
  %v2890 = vld [vmem:[%s2000 + $0x350] sm:$0xe]
  %v2891 = vld [vmem:[%s2000 + $0x354] sm:$0xf]
  %v2892 = vld [vmem:[%s2000 + $0x358] sm:$0x1]
  %v2893 = vld [vmem:[%s2000 + $0x364] sm:$0xe]
  %v2894 = vld [vmem:[%s2000 + $0x368] sm:$0xf]
  %v2895 = vld [vmem:[%s2000 + $0x36c] sm:$0x1]
  %v2896 = vld [vmem:[%s2000 + $0x378] sm:$0xe]
  %v2897 = vld [vmem:[%s2000 + $0x37c] sm:$0xf]
  %v2898 = vld [vmem:[%s2000 + $0x380] sm:$0x1]
  %v2899 = vld [vmem:[%s2000 + $0x38c] sm:$0xe]
  %v2900 = vld [vmem:[%s2000 + $0x390] sm:$0xf]
  %v2901 = vld [vmem:[%s2000 + $0x394] sm:$0x1]
  %v2902 = vld [vmem:[%s2000 + $0x3a0] sm:$0xe]
  %v2903 = vld [vmem:[%s2000 + $0x3a4] sm:$0xf]
  %v2904 = vld [vmem:[%s2000 + $0x3a8] sm:$0x1]
  %v2905 = vld [vmem:[%s2000 + $0x3b4] sm:$0xe]
  %v2906 = vld [vmem:[%s2000 + $0x3b8] sm:$0xf]
  %v2907 = vld [vmem:[%s2000 + $0x3bc] sm:$0x1]
  %v2908 = vld [vmem:[%s2000 + $0x3c8] sm:$0xe]
  %v2909 = vld [vmem:[%s2000 + $0x3cc] sm:$0xf]
  %v2910 = vld [vmem:[%s2000 + $0x3d0] sm:$0x1]
  %v2911 = vld [vmem:[%s2000 + $0x3dc] sm:$0xe]
  %v2912 = vld [vmem:[%s2000 + $0x3e0] sm:$0xf]
  %v2913 = vld [vmem:[%s2000 + $0x3e4] sm:$0x1]
  %v2914 = vld [vmem:[%s2000 + $0x3f0] sm:$0xe]
  %v2915 = vld [vmem:[%s2000 + $0x3f4] sm:$0xf]
  %v2916 = vld [vmem:[%s2000 + $0x3f8] sm:$0x1]
  %v2917 = vld [vmem:[%s2000 + $0x404] sm:$0xe]
  %v2918 = vld [vmem:[%s2000 + $0x408] sm:$0xf]
  %v2919 = vld [vmem:[%s2000 + $0x40c] sm:$0x1]
  %v2920 = vld [vmem:[%s2000 + $0x418] sm:$0xe]
  %v2921 = vld [vmem:[%s2000 + $0x41c] sm:$0xf]
  %v2922 = vld [vmem:[%s2000 + $0x420] sm:$0x1]
  %v2923 = vld [vmem:[%s2000 + $0x42c] sm:$0xe]
  %v2924 = vld [vmem:[%s2000 + $0x430] sm:$0xf]
  %v2925 = vld [vmem:[%s2000 + $0x434] sm:$0x1]
  %v2926 = vld [vmem:[%s2000 + $0x440] sm:$0xe]
  %v2927 = vld [vmem:[%s2000 + $0x444] sm:$0xf]
  %v2928 = vld [vmem:[%s2000 + $0x448] sm:$0x1]
  %v2929 = vld [vmem:[%s2000 + $0x454] sm:$0xe]
  %v2930 = vld [vmem:[%s2000 + $0x458] sm:$0xf]
  %v2931 = vld [vmem:[%s2000 + $0x45c] sm:$0x1]
  %vm3028 = vcmask 1042432
  %vm3029 = vcmask 1046532
  %vm3030 = vmor %vm3028, %vm3029
  %v3031 = vrot.slane %v2836, 5
  %v3032 = vrot.slane %v3031, 4
  %v3033 = vrot.slane %v2837, 5
  %v3034 = vsel %vm3030, %v3032, %v3033
  %v3035 = vrot.slane %v3033, 4
  %v3036 = vrot.slane %v2838, 5
  %v3037 = vsel %vm3030, %v3035, %v3036
  %v3038 = vrot.slane %v2839, 5
  %v3039 = vrot.slane %v3038, 4
  %v3040 = vrot.slane %v2840, 5
  %v3041 = vsel %vm3030, %v3039, %v3040
  %v3042 = vrot.slane %v3040, 4
  %v3043 = vrot.slane %v2841, 5
  %v3044 = vsel %vm3030, %v3042, %v3043
  %v3045 = vrot.slane %v2842, 5
  %v3046 = vrot.slane %v3045, 4
  %v3047 = vrot.slane %v2843, 5
  %v3048 = vsel %vm3030, %v3046, %v3047
  %v3049 = vrot.slane %v3047, 4
  %v3050 = vrot.slane %v2844, 5
  %v3051 = vsel %vm3030, %v3049, %v3050
  %v3052 = vrot.slane %v2845, 5
  %v3053 = vrot.slane %v3052, 4
  %v3054 = vrot.slane %v2846, 5
  %v3055 = vsel %vm3030, %v3053, %v3054
  %v3056 = vrot.slane %v3054, 4
  %v3057 = vrot.slane %v2847, 5
  %v3058 = vsel %vm3030, %v3056, %v3057
  %v3059 = vrot.slane %v2848, 5
  %v3060 = vrot.slane %v3059, 4
  %v3061 = vrot.slane %v2849, 5
  %v3062 = vsel %vm3030, %v3060, %v3061
  %v3063 = vrot.slane %v3061, 4
  %v3064 = vrot.slane %v2850, 5
  %v3065 = vsel %vm3030, %v3063, %v3064
  %v3066 = vrot.slane %v2851, 5
  %v3067 = vrot.slane %v3066, 4
  %v3068 = vrot.slane %v2852, 5
  %v3069 = vsel %vm3030, %v3067, %v3068
  %v3070 = vrot.slane %v3068, 4
  %v3071 = vrot.slane %v2853, 5
  %v3072 = vsel %vm3030, %v3070, %v3071
  %v3073 = vrot.slane %v2854, 5
  %v3074 = vrot.slane %v3073, 4
  %v3075 = vrot.slane %v2855, 5
  %v3076 = vsel %vm3030, %v3074, %v3075
  %v3077 = vrot.slane %v3075, 4
  %v3078 = vrot.slane %v2856, 5
  %v3079 = vsel %vm3030, %v3077, %v3078
  %v3080 = vrot.slane %v2857, 5
  %v3081 = vrot.slane %v3080, 4
  %v3082 = vrot.slane %v2858, 5
  %v3083 = vsel %vm3030, %v3081, %v3082
  %v3084 = vrot.slane %v3082, 4
  %v3085 = vrot.slane %v2859, 5
  %v3086 = vsel %vm3030, %v3084, %v3085
  %v3087 = vrot.slane %v2860, 5
  %v3088 = vrot.slane %v3087, 4
  %v3089 = vrot.slane %v2861, 5
  %v3090 = vsel %vm3030, %v3088, %v3089
  %v3091 = vrot.slane %v3089, 4
  %v3092 = vrot.slane %v2862, 5
  %v3093 = vsel %vm3030, %v3091, %v3092
  %v3094 = vrot.slane %v2863, 5
  %v3095 = vrot.slane %v3094, 4
  %v3096 = vrot.slane %v2864, 5
  %v3097 = vsel %vm3030, %v3095, %v3096
  %v3098 = vrot.slane %v3096, 4
  %v3099 = vrot.slane %v2865, 5
  %v3100 = vsel %vm3030, %v3098, %v3099
  %v3101 = vrot.slane %v2866, 5
  %v3102 = vrot.slane %v3101, 4
  %v3103 = vrot.slane %v2867, 5
  %v3104 = vsel %vm3030, %v3102, %v3103
  %v3105 = vrot.slane %v3103, 4
  %v3106 = vrot.slane %v2868, 5
  %v3107 = vsel %vm3030, %v3105, %v3106
  %v3108 = vrot.slane %v2869, 5
  %v3109 = vrot.slane %v3108, 4
  %v3110 = vrot.slane %v2870, 5
  %v3111 = vsel %vm3030, %v3109, %v3110
  %v3112 = vrot.slane %v3110, 4
  %v3113 = vrot.slane %v2871, 5
  %v3114 = vsel %vm3030, %v3112, %v3113
  %v3115 = vrot.slane %v2872, 5
  %v3116 = vrot.slane %v3115, 4
  %v3117 = vrot.slane %v2873, 5
  %v3118 = vsel %vm3030, %v3116, %v3117
  %v3119 = vrot.slane %v3117, 4
  %v3120 = vrot.slane %v2874, 5
  %v3121 = vsel %vm3030, %v3119, %v3120
  %v3122 = vrot.slane %v2875, 5
  %v3123 = vrot.slane %v3122, 4
  %v3124 = vrot.slane %v2876, 5
  %v3125 = vsel %vm3030, %v3123, %v3124
  %v3126 = vrot.slane %v3124, 4
  %v3127 = vrot.slane %v2877, 5
  %v3128 = vsel %vm3030, %v3126, %v3127
  %v3129 = vrot.slane %v2878, 5
  %v3130 = vrot.slane %v3129, 4
  %v3131 = vrot.slane %v2879, 5
  %v3132 = vsel %vm3030, %v3130, %v3131
  %v3133 = vrot.slane %v3131, 4
  %v3134 = vrot.slane %v2880, 5
  %v3135 = vsel %vm3030, %v3133, %v3134
  %v3136 = vrot.slane %v2881, 5
  %v3137 = vrot.slane %v3136, 4
  %v3138 = vrot.slane %v2882, 5
  %v3139 = vsel %vm3030, %v3137, %v3138
  %v3140 = vrot.slane %v3138, 4
  %v3141 = vrot.slane %v2883, 5
  %v3142 = vsel %vm3030, %v3140, %v3141
  %v3143 = vrot.slane %v2884, 5
  %v3144 = vrot.slane %v3143, 4
  %v3145 = vrot.slane %v2885, 5
  %v3146 = vsel %vm3030, %v3144, %v3145
  %v3147 = vrot.slane %v3145, 4
  %v3148 = vrot.slane %v2886, 5
  %v3149 = vsel %vm3030, %v3147, %v3148
  %v3150 = vrot.slane %v2887, 5
  %v3151 = vrot.slane %v3150, 4
  %v3152 = vrot.slane %v2888, 5
  %v3153 = vsel %vm3030, %v3151, %v3152
  %v3154 = vrot.slane %v3152, 4
  %v3155 = vrot.slane %v2889, 5
  %v3156 = vsel %vm3030, %v3154, %v3155
  %v3157 = vrot.slane %v2890, 5
  %v3158 = vrot.slane %v3157, 4
  %v3159 = vrot.slane %v2891, 5
  %v3160 = vsel %vm3030, %v3158, %v3159
  %v3161 = vrot.slane %v3159, 4
  %v3162 = vrot.slane %v2892, 5
  %v3163 = vsel %vm3030, %v3161, %v3162
  %v3164 = vrot.slane %v2893, 5
  %v3165 = vrot.slane %v3164, 4
  %v3166 = vrot.slane %v2894, 5
  %v3167 = vsel %vm3030, %v3165, %v3166
  %v3168 = vrot.slane %v3166, 4
  %v3169 = vrot.slane %v2895, 5
  %v3170 = vsel %vm3030, %v3168, %v3169
  %v3171 = vrot.slane %v2896, 5
  %v3172 = vrot.slane %v3171, 4
  %v3173 = vrot.slane %v2897, 5
  %v3174 = vsel %vm3030, %v3172, %v3173
  %v3175 = vrot.slane %v3173, 4
  %v3176 = vrot.slane %v2898, 5
  %v3177 = vsel %vm3030, %v3175, %v3176
  %v3178 = vrot.slane %v2899, 5
  %v3179 = vrot.slane %v3178, 4
  %v3180 = vrot.slane %v2900, 5
  %v3181 = vsel %vm3030, %v3179, %v3180
  %v3182 = vrot.slane %v3180, 4
  %v3183 = vrot.slane %v2901, 5
  %v3184 = vsel %vm3030, %v3182, %v3183
  %v3185 = vrot.slane %v2902, 5
  %v3186 = vrot.slane %v3185, 4
  %v3187 = vrot.slane %v2903, 5
  %v3188 = vsel %vm3030, %v3186, %v3187
  %v3189 = vrot.slane %v3187, 4
  %v3190 = vrot.slane %v2904, 5
  %v3191 = vsel %vm3030, %v3189, %v3190
  %v3192 = vrot.slane %v2905, 5
  %v3193 = vrot.slane %v3192, 4
  %v3194 = vrot.slane %v2906, 5
  %v3195 = vsel %vm3030, %v3193, %v3194
  %v3196 = vrot.slane %v3194, 4
  %v3197 = vrot.slane %v2907, 5
  %v3198 = vsel %vm3030, %v3196, %v3197
  %v3199 = vrot.slane %v2908, 5
  %v3200 = vrot.slane %v3199, 4
  %v3201 = vrot.slane %v2909, 5
  %v3202 = vsel %vm3030, %v3200, %v3201
  %v3203 = vrot.slane %v3201, 4
  %v3204 = vrot.slane %v2910, 5
  %v3205 = vsel %vm3030, %v3203, %v3204
  %v3206 = vrot.slane %v2911, 5
  %v3207 = vrot.slane %v3206, 4
  %v3208 = vrot.slane %v2912, 5
  %v3209 = vsel %vm3030, %v3207, %v3208
  %v3210 = vrot.slane %v3208, 4
  %v3211 = vrot.slane %v2913, 5
  %v3212 = vsel %vm3030, %v3210, %v3211
  %v3213 = vrot.slane %v2914, 5
  %v3214 = vrot.slane %v3213, 4
  %v3215 = vrot.slane %v2915, 5
  %v3216 = vsel %vm3030, %v3214, %v3215
  %v3217 = vrot.slane %v3215, 4
  %v3218 = vrot.slane %v2916, 5
  %v3219 = vsel %vm3030, %v3217, %v3218
  %v3220 = vrot.slane %v2917, 5
  %v3221 = vrot.slane %v3220, 4
  %v3222 = vrot.slane %v2918, 5
  %v3223 = vsel %vm3030, %v3221, %v3222
  %v3224 = vrot.slane %v3222, 4
  %v3225 = vrot.slane %v2919, 5
  %v3226 = vsel %vm3030, %v3224, %v3225
  %v3227 = vrot.slane %v2920, 5
  %v3228 = vrot.slane %v3227, 4
  %v3229 = vrot.slane %v2921, 5
  %v3230 = vsel %vm3030, %v3228, %v3229
  %v3231 = vrot.slane %v3229, 4
  %v3232 = vrot.slane %v2922, 5
  %v3233 = vsel %vm3030, %v3231, %v3232
  %v3234 = vrot.slane %v2923, 5
  %v3235 = vrot.slane %v3234, 4
  %v3236 = vrot.slane %v2924, 5
  %v3237 = vsel %vm3030, %v3235, %v3236
  %v3238 = vrot.slane %v3236, 4
  %v3239 = vrot.slane %v2925, 5
  %v3240 = vsel %vm3030, %v3238, %v3239
  %v3241 = vrot.slane %v2926, 5
  %v3242 = vrot.slane %v3241, 4
  %v3243 = vrot.slane %v2927, 5
  %v3244 = vsel %vm3030, %v3242, %v3243
  %v3245 = vrot.slane %v3243, 4
  %v3246 = vrot.slane %v2928, 5
  %v3247 = vsel %vm3030, %v3245, %v3246
  %v3248 = vrot.slane %v2929, 5
  %v3249 = vrot.slane %v3248, 4
  %v3250 = vrot.slane %v2930, 5
  %v3251 = vsel %vm3030, %v3249, %v3250
  %v3252 = vrot.slane %v3250, 4
  %v3253 = vrot.slane %v2931, 5
  %v3254 = vsel %vm3030, %v3252, %v3253
  %v3255 = vld [vmem:[%s879] sm:$0x8]
  %v3256 = vld [vmem:[%s879 + $0x4] sm:$0xf]
  %v3257 = vld [vmem:[%s879 + $0x8] sm:$0x7]
  %v3258 = vld [vmem:[%s879 + $0x14] sm:$0x8]
  %v3259 = vld [vmem:[%s879 + $0x18] sm:$0xf]
  %v3260 = vld [vmem:[%s879 + $0x1c] sm:$0x7]
  %v3261 = vld [vmem:[%s879 + $0x28] sm:$0x8]
  %v3262 = vld [vmem:[%s879 + $0x2c] sm:$0xf]
  %v3263 = vld [vmem:[%s879 + $0x30] sm:$0x7]
  %v3264 = vld [vmem:[%s879 + $0x3c] sm:$0x8]
  %v3265 = vld [vmem:[%s879 + $0x40] sm:$0xf]
  %v3266 = vld [vmem:[%s879 + $0x44] sm:$0x7]
  %v3267 = vld [vmem:[%s879 + $0x50] sm:$0x8]
  %v3268 = vld [vmem:[%s879 + $0x54] sm:$0xf]
  %v3269 = vld [vmem:[%s879 + $0x58] sm:$0x7]
  %v3270 = vld [vmem:[%s879 + $0x64] sm:$0x8]
  %v3271 = vld [vmem:[%s879 + $0x68] sm:$0xf]
  %v3272 = vld [vmem:[%s879 + $0x6c] sm:$0x7]
  %v3273 = vld [vmem:[%s879 + $0x78] sm:$0x8]
  %v3274 = vld [vmem:[%s879 + $0x7c] sm:$0xf]
  %v3275 = vld [vmem:[%s879 + $0x80] sm:$0x7]
  %v3276 = vld [vmem:[%s879 + $0x8c] sm:$0x8]
  %v3277 = vld [vmem:[%s879 + $0x90] sm:$0xf]
  %v3278 = vld [vmem:[%s879 + $0x94] sm:$0x7]
  %v3279 = vld [vmem:[%s879 + $0xa0] sm:$0x8]
  %v3280 = vld [vmem:[%s879 + $0xa4] sm:$0xf]
  %v3281 = vld [vmem:[%s879 + $0xa8] sm:$0x7]
  %v3282 = vld [vmem:[%s879 + $0xb4] sm:$0x8]
  %v3283 = vld [vmem:[%s879 + $0xb8] sm:$0xf]
  %v3284 = vld [vmem:[%s879 + $0xbc] sm:$0x7]
  %v3285 = vld [vmem:[%s879 + $0xc8] sm:$0x8]
  %v3286 = vld [vmem:[%s879 + $0xcc] sm:$0xf]
  %v3287 = vld [vmem:[%s879 + $0xd0] sm:$0x7]
  %v3288 = vld [vmem:[%s879 + $0xdc] sm:$0x8]
  %v3289 = vld [vmem:[%s879 + $0xe0] sm:$0xf]
  %v3290 = vld [vmem:[%s879 + $0xe4] sm:$0x7]
  %v3291 = vld [vmem:[%s879 + $0xf0] sm:$0x8]
  %v3292 = vld [vmem:[%s879 + $0xf4] sm:$0xf]
  %v3293 = vld [vmem:[%s879 + $0xf8] sm:$0x7]
  %v3294 = vld [vmem:[%s879 + $0x104] sm:$0x8]
  %v3295 = vld [vmem:[%s879 + $0x108] sm:$0xf]
  %v3296 = vld [vmem:[%s879 + $0x10c] sm:$0x7]
  %v3297 = vld [vmem:[%s879 + $0x118] sm:$0x8]
  %v3298 = vld [vmem:[%s879 + $0x11c] sm:$0xf]
  %v3299 = vld [vmem:[%s879 + $0x120] sm:$0x7]
  %v3300 = vld [vmem:[%s879 + $0x12c] sm:$0x8]
  %v3301 = vld [vmem:[%s879 + $0x130] sm:$0xf]
  %v3302 = vld [vmem:[%s879 + $0x134] sm:$0x7]
  %v3303 = vld [vmem:[%s879 + $0x320] sm:$0x8]
  %v3304 = vld [vmem:[%s879 + $0x324] sm:$0xf]
  %v3305 = vld [vmem:[%s879 + $0x328] sm:$0x7]
  %v3306 = vld [vmem:[%s879 + $0x334] sm:$0x8]
  %v3307 = vld [vmem:[%s879 + $0x338] sm:$0xf]
  %v3308 = vld [vmem:[%s879 + $0x33c] sm:$0x7]
  %v3309 = vld [vmem:[%s879 + $0x348] sm:$0x8]
  %v3310 = vld [vmem:[%s879 + $0x34c] sm:$0xf]
  %v3311 = vld [vmem:[%s879 + $0x350] sm:$0x7]
  %v3312 = vld [vmem:[%s879 + $0x35c] sm:$0x8]
  %v3313 = vld [vmem:[%s879 + $0x360] sm:$0xf]
  %v3314 = vld [vmem:[%s879 + $0x364] sm:$0x7]
  %v3315 = vld [vmem:[%s879 + $0x370] sm:$0x8]
  %v3316 = vld [vmem:[%s879 + $0x374] sm:$0xf]
  %v3317 = vld [vmem:[%s879 + $0x378] sm:$0x7]
  %v3318 = vld [vmem:[%s879 + $0x384] sm:$0x8]
  %v3319 = vld [vmem:[%s879 + $0x388] sm:$0xf]
  %v3320 = vld [vmem:[%s879 + $0x38c] sm:$0x7]
  %v3321 = vld [vmem:[%s879 + $0x398] sm:$0x8]
  %v3322 = vld [vmem:[%s879 + $0x39c] sm:$0xf]
  %v3323 = vld [vmem:[%s879 + $0x3a0] sm:$0x7]
  %v3324 = vld [vmem:[%s879 + $0x3ac] sm:$0x8]
  %v3325 = vld [vmem:[%s879 + $0x3b0] sm:$0xf]
  %v3326 = vld [vmem:[%s879 + $0x3b4] sm:$0x7]
  %v3327 = vld [vmem:[%s879 + $0x3c0] sm:$0x8]
  %v3328 = vld [vmem:[%s879 + $0x3c4] sm:$0xf]
  %v3329 = vld [vmem:[%s879 + $0x3c8] sm:$0x7]
  %v3330 = vld [vmem:[%s879 + $0x3d4] sm:$0x8]
  %v3331 = vld [vmem:[%s879 + $0x3d8] sm:$0xf]
  %v3332 = vld [vmem:[%s879 + $0x3dc] sm:$0x7]
  %v3333 = vld [vmem:[%s879 + $0x3e8] sm:$0x8]
  %v3334 = vld [vmem:[%s879 + $0x3ec] sm:$0xf]
  %v3335 = vld [vmem:[%s879 + $0x3f0] sm:$0x7]
  %v3336 = vld [vmem:[%s879 + $0x3fc] sm:$0x8]
  %v3337 = vld [vmem:[%s879 + $0x400] sm:$0xf]
  %v3338 = vld [vmem:[%s879 + $0x404] sm:$0x7]
  %v3339 = vld [vmem:[%s879 + $0x410] sm:$0x8]
  %v3340 = vld [vmem:[%s879 + $0x414] sm:$0xf]
  %v3341 = vld [vmem:[%s879 + $0x418] sm:$0x7]
  %v3342 = vld [vmem:[%s879 + $0x424] sm:$0x8]
  %v3343 = vld [vmem:[%s879 + $0x428] sm:$0xf]
  %v3344 = vld [vmem:[%s879 + $0x42c] sm:$0x7]
  %v3345 = vld [vmem:[%s879 + $0x438] sm:$0x8]
  %v3346 = vld [vmem:[%s879 + $0x43c] sm:$0xf]
  %v3347 = vld [vmem:[%s879 + $0x440] sm:$0x7]
  %v3348 = vld [vmem:[%s879 + $0x44c] sm:$0x8]
  %v3349 = vld [vmem:[%s879 + $0x450] sm:$0xf]
  %v3350 = vld [vmem:[%s879 + $0x454] sm:$0x7]
  %v3447 = vrot.slane %v3255, 7
  %v3448 = vrot.slane %v3447, 4
  %v3449 = vrot.slane %v3256, 7
  %v3450 = vsel %vm2195, %v3448, %v3449
  %v3451 = vrot.slane %v3449, 4
  %v3452 = vrot.slane %v3257, 7
  %v3453 = vsel %vm2195, %v3451, %v3452
  %v3454 = vrot.slane %v3258, 7
  %v3455 = vrot.slane %v3454, 4
  %v3456 = vrot.slane %v3259, 7
  %v3457 = vsel %vm2195, %v3455, %v3456
  %v3458 = vrot.slane %v3456, 4
  %v3459 = vrot.slane %v3260, 7
  %v3460 = vsel %vm2195, %v3458, %v3459
  %v3461 = vrot.slane %v3261, 7
  %v3462 = vrot.slane %v3461, 4
  %v3463 = vrot.slane %v3262, 7
  %v3464 = vsel %vm2195, %v3462, %v3463
  %v3465 = vrot.slane %v3463, 4
  %v3466 = vrot.slane %v3263, 7
  %v3467 = vsel %vm2195, %v3465, %v3466
  %v3468 = vrot.slane %v3264, 7
  %v3469 = vrot.slane %v3468, 4
  %v3470 = vrot.slane %v3265, 7
  %v3471 = vsel %vm2195, %v3469, %v3470
  %v3472 = vrot.slane %v3470, 4
  %v3473 = vrot.slane %v3266, 7
  %v3474 = vsel %vm2195, %v3472, %v3473
  %v3475 = vrot.slane %v3267, 7
  %v3476 = vrot.slane %v3475, 4
  %v3477 = vrot.slane %v3268, 7
  %v3478 = vsel %vm2195, %v3476, %v3477
  %v3479 = vrot.slane %v3477, 4
  %v3480 = vrot.slane %v3269, 7
  %v3481 = vsel %vm2195, %v3479, %v3480
  %v3482 = vrot.slane %v3270, 7
  %v3483 = vrot.slane %v3482, 4
  %v3484 = vrot.slane %v3271, 7
  %v3485 = vsel %vm2195, %v3483, %v3484
  %v3486 = vrot.slane %v3484, 4
  %v3487 = vrot.slane %v3272, 7
  %v3488 = vsel %vm2195, %v3486, %v3487
  %v3489 = vrot.slane %v3273, 7
  %v3490 = vrot.slane %v3489, 4
  %v3491 = vrot.slane %v3274, 7
  %v3492 = vsel %vm2195, %v3490, %v3491
  %v3493 = vrot.slane %v3491, 4
  %v3494 = vrot.slane %v3275, 7
  %v3495 = vsel %vm2195, %v3493, %v3494
  %v3496 = vrot.slane %v3276, 7
  %v3497 = vrot.slane %v3496, 4
  %v3498 = vrot.slane %v3277, 7
  %v3499 = vsel %vm2195, %v3497, %v3498
  %v3500 = vrot.slane %v3498, 4
  %v3501 = vrot.slane %v3278, 7
  %v3502 = vsel %vm2195, %v3500, %v3501
  %v3503 = vrot.slane %v3279, 7
  %v3504 = vrot.slane %v3503, 4
  %v3505 = vrot.slane %v3280, 7
  %v3506 = vsel %vm2195, %v3504, %v3505
  %v3507 = vrot.slane %v3505, 4
  %v3508 = vrot.slane %v3281, 7
  %v3509 = vsel %vm2195, %v3507, %v3508
  %v3510 = vrot.slane %v3282, 7
  %v3511 = vrot.slane %v3510, 4
  %v3512 = vrot.slane %v3283, 7
  %v3513 = vsel %vm2195, %v3511, %v3512
  %v3514 = vrot.slane %v3512, 4
  %v3515 = vrot.slane %v3284, 7
  %v3516 = vsel %vm2195, %v3514, %v3515
  %v3517 = vrot.slane %v3285, 7
  %v3518 = vrot.slane %v3517, 4
  %v3519 = vrot.slane %v3286, 7
  %v3520 = vsel %vm2195, %v3518, %v3519
  %v3521 = vrot.slane %v3519, 4
  %v3522 = vrot.slane %v3287, 7
  %v3523 = vsel %vm2195, %v3521, %v3522
  %v3524 = vrot.slane %v3288, 7
  %v3525 = vrot.slane %v3524, 4
  %v3526 = vrot.slane %v3289, 7
  %v3527 = vsel %vm2195, %v3525, %v3526
  %v3528 = vrot.slane %v3526, 4
  %v3529 = vrot.slane %v3290, 7
  %v3530 = vsel %vm2195, %v3528, %v3529
  %v3531 = vrot.slane %v3291, 7
  %v3532 = vrot.slane %v3531, 4
  %v3533 = vrot.slane %v3292, 7
  %v3534 = vsel %vm2195, %v3532, %v3533
  %v3535 = vrot.slane %v3533, 4
  %v3536 = vrot.slane %v3293, 7
  %v3537 = vsel %vm2195, %v3535, %v3536
  %v3538 = vrot.slane %v3294, 7
  %v3539 = vrot.slane %v3538, 4
  %v3540 = vrot.slane %v3295, 7
  %v3541 = vsel %vm2195, %v3539, %v3540
  %v3542 = vrot.slane %v3540, 4
  %v3543 = vrot.slane %v3296, 7
  %v3544 = vsel %vm2195, %v3542, %v3543
  %v3545 = vrot.slane %v3297, 7
  %v3546 = vrot.slane %v3545, 4
  %v3547 = vrot.slane %v3298, 7
  %v3548 = vsel %vm2195, %v3546, %v3547
  %v3549 = vrot.slane %v3547, 4
  %v3550 = vrot.slane %v3299, 7
  %v3551 = vsel %vm2195, %v3549, %v3550
  %v3552 = vrot.slane %v3300, 7
  %v3553 = vrot.slane %v3552, 4
  %v3554 = vrot.slane %v3301, 7
  %v3555 = vsel %vm2195, %v3553, %v3554
  %v3556 = vrot.slane %v3554, 4
  %v3557 = vrot.slane %v3302, 7
  %v3558 = vsel %vm2195, %v3556, %v3557
  %v3559 = vrot.slane %v3303, 7
  %v3560 = vrot.slane %v3559, 4
  %v3561 = vrot.slane %v3304, 7
  %v3562 = vsel %vm2195, %v3560, %v3561
  %v3563 = vrot.slane %v3561, 4
  %v3564 = vrot.slane %v3305, 7
  %v3565 = vsel %vm2195, %v3563, %v3564
  %v3566 = vrot.slane %v3306, 7
  %v3567 = vrot.slane %v3566, 4
  %v3568 = vrot.slane %v3307, 7
  %v3569 = vsel %vm2195, %v3567, %v3568
  %v3570 = vrot.slane %v3568, 4
  %v3571 = vrot.slane %v3308, 7
  %v3572 = vsel %vm2195, %v3570, %v3571
  %v3573 = vrot.slane %v3309, 7
  %v3574 = vrot.slane %v3573, 4
  %v3575 = vrot.slane %v3310, 7
  %v3576 = vsel %vm2195, %v3574, %v3575
  %v3577 = vrot.slane %v3575, 4
  %v3578 = vrot.slane %v3311, 7
  %v3579 = vsel %vm2195, %v3577, %v3578
  %v3580 = vrot.slane %v3312, 7
  %v3581 = vrot.slane %v3580, 4
  %v3582 = vrot.slane %v3313, 7
  %v3583 = vsel %vm2195, %v3581, %v3582
  %v3584 = vrot.slane %v3582, 4
  %v3585 = vrot.slane %v3314, 7
  %v3586 = vsel %vm2195, %v3584, %v3585
  %v3587 = vrot.slane %v3315, 7
  %v3588 = vrot.slane %v3587, 4
  %v3589 = vrot.slane %v3316, 7
  %v3590 = vsel %vm2195, %v3588, %v3589
  %v3591 = vrot.slane %v3589, 4
  %v3592 = vrot.slane %v3317, 7
  %v3593 = vsel %vm2195, %v3591, %v3592
  %v3594 = vrot.slane %v3318, 7
  %v3595 = vrot.slane %v3594, 4
  %v3596 = vrot.slane %v3319, 7
  %v3597 = vsel %vm2195, %v3595, %v3596
  %v3598 = vrot.slane %v3596, 4
  %v3599 = vrot.slane %v3320, 7
  %v3600 = vsel %vm2195, %v3598, %v3599
  %v3601 = vrot.slane %v3321, 7
  %v3602 = vrot.slane %v3601, 4
  %v3603 = vrot.slane %v3322, 7
  %v3604 = vsel %vm2195, %v3602, %v3603
  %v3605 = vrot.slane %v3603, 4
  %v3606 = vrot.slane %v3323, 7
  %v3607 = vsel %vm2195, %v3605, %v3606
  %v3608 = vrot.slane %v3324, 7
  %v3609 = vrot.slane %v3608, 4
  %v3610 = vrot.slane %v3325, 7
  %v3611 = vsel %vm2195, %v3609, %v3610
  %v3612 = vrot.slane %v3610, 4
  %v3613 = vrot.slane %v3326, 7
  %v3614 = vsel %vm2195, %v3612, %v3613
  %v3615 = vrot.slane %v3327, 7
  %v3616 = vrot.slane %v3615, 4
  %v3617 = vrot.slane %v3328, 7
  %v3618 = vsel %vm2195, %v3616, %v3617
  %v3619 = vrot.slane %v3617, 4
  %v3620 = vrot.slane %v3329, 7
  %v3621 = vsel %vm2195, %v3619, %v3620
  %v3622 = vrot.slane %v3330, 7
  %v3623 = vrot.slane %v3622, 4
  %v3624 = vrot.slane %v3331, 7
  %v3625 = vsel %vm2195, %v3623, %v3624
  %v3626 = vrot.slane %v3624, 4
  %v3627 = vrot.slane %v3332, 7
  %v3628 = vsel %vm2195, %v3626, %v3627
  %v3629 = vrot.slane %v3333, 7
  %v3630 = vrot.slane %v3629, 4
  %v3631 = vrot.slane %v3334, 7
  %v3632 = vsel %vm2195, %v3630, %v3631
  %v3633 = vrot.slane %v3631, 4
  %v3634 = vrot.slane %v3335, 7
  %v3635 = vsel %vm2195, %v3633, %v3634
  %v3636 = vrot.slane %v3336, 7
  %v3637 = vrot.slane %v3636, 4
  %v3638 = vrot.slane %v3337, 7
  %v3639 = vsel %vm2195, %v3637, %v3638
  %v3640 = vrot.slane %v3638, 4
  %v3641 = vrot.slane %v3338, 7
  %v3642 = vsel %vm2195, %v3640, %v3641
  %v3643 = vrot.slane %v3339, 7
  %v3644 = vrot.slane %v3643, 4
  %v3645 = vrot.slane %v3340, 7
  %v3646 = vsel %vm2195, %v3644, %v3645
  %v3647 = vrot.slane %v3645, 4
  %v3648 = vrot.slane %v3341, 7
  %v3649 = vsel %vm2195, %v3647, %v3648
  %v3650 = vrot.slane %v3342, 7
  %v3651 = vrot.slane %v3650, 4
  %v3652 = vrot.slane %v3343, 7
  %v3653 = vsel %vm2195, %v3651, %v3652
  %v3654 = vrot.slane %v3652, 4
  %v3655 = vrot.slane %v3344, 7
  %v3656 = vsel %vm2195, %v3654, %v3655
  %v3657 = vrot.slane %v3345, 7
  %v3658 = vrot.slane %v3657, 4
  %v3659 = vrot.slane %v3346, 7
  %v3660 = vsel %vm2195, %v3658, %v3659
  %v3661 = vrot.slane %v3659, 4
  %v3662 = vrot.slane %v3347, 7
  %v3663 = vsel %vm2195, %v3661, %v3662
  %v3664 = vrot.slane %v3348, 7
  %v3665 = vrot.slane %v3664, 4
  %v3666 = vrot.slane %v3349, 7
  %v3667 = vsel %vm2195, %v3665, %v3666
  %v3668 = vrot.slane %v3666, 4
  %v3669 = vrot.slane %v3350, 7
  %v3670 = vsel %vm2195, %v3668, %v3669
  %v3671 = vld [vmem:[%s879 + $0x8] sm:$0xe]
  %v3672 = vld [vmem:[%s879 + $0xc] sm:$0xf]
  %v3673 = vld [vmem:[%s879 + $0x10] sm:$0x1]
  %v3674 = vld [vmem:[%s879 + $0x1c] sm:$0xe]
  %v3675 = vld [vmem:[%s879 + $0x20] sm:$0xf]
  %v3676 = vld [vmem:[%s879 + $0x24] sm:$0x1]
  %v3677 = vld [vmem:[%s879 + $0x30] sm:$0xe]
  %v3678 = vld [vmem:[%s879 + $0x34] sm:$0xf]
  %v3679 = vld [vmem:[%s879 + $0x38] sm:$0x1]
  %v3680 = vld [vmem:[%s879 + $0x44] sm:$0xe]
  %v3681 = vld [vmem:[%s879 + $0x48] sm:$0xf]
  %v3682 = vld [vmem:[%s879 + $0x4c] sm:$0x1]
  %v3683 = vld [vmem:[%s879 + $0x58] sm:$0xe]
  %v3684 = vld [vmem:[%s879 + $0x5c] sm:$0xf]
  %v3685 = vld [vmem:[%s879 + $0x60] sm:$0x1]
  %v3686 = vld [vmem:[%s879 + $0x6c] sm:$0xe]
  %v3687 = vld [vmem:[%s879 + $0x70] sm:$0xf]
  %v3688 = vld [vmem:[%s879 + $0x74] sm:$0x1]
  %v3689 = vld [vmem:[%s879 + $0x80] sm:$0xe]
  %v3690 = vld [vmem:[%s879 + $0x84] sm:$0xf]
  %v3691 = vld [vmem:[%s879 + $0x88] sm:$0x1]
  %v3692 = vld [vmem:[%s879 + $0x94] sm:$0xe]
  %v3693 = vld [vmem:[%s879 + $0x98] sm:$0xf]
  %v3694 = vld [vmem:[%s879 + $0x9c] sm:$0x1]
  %v3695 = vld [vmem:[%s879 + $0xa8] sm:$0xe]
  %v3696 = vld [vmem:[%s879 + $0xac] sm:$0xf]
  %v3697 = vld [vmem:[%s879 + $0xb0] sm:$0x1]
  %v3698 = vld [vmem:[%s879 + $0xbc] sm:$0xe]
  %v3699 = vld [vmem:[%s879 + $0xc0] sm:$0xf]
  %v3700 = vld [vmem:[%s879 + $0xc4] sm:$0x1]
  %v3701 = vld [vmem:[%s879 + $0xd0] sm:$0xe]
  %v3702 = vld [vmem:[%s879 + $0xd4] sm:$0xf]
  %v3703 = vld [vmem:[%s879 + $0xd8] sm:$0x1]
  %v3704 = vld [vmem:[%s879 + $0xe4] sm:$0xe]
  %v3705 = vld [vmem:[%s879 + $0xe8] sm:$0xf]
  %v3706 = vld [vmem:[%s879 + $0xec] sm:$0x1]
  %v3707 = vld [vmem:[%s879 + $0xf8] sm:$0xe]
  %v3708 = vld [vmem:[%s879 + $0xfc] sm:$0xf]
  %v3709 = vld [vmem:[%s879 + $0x100] sm:$0x1]
  %v3710 = vld [vmem:[%s879 + $0x10c] sm:$0xe]
  %v3711 = vld [vmem:[%s879 + $0x110] sm:$0xf]
  %v3712 = vld [vmem:[%s879 + $0x114] sm:$0x1]
  %v3713 = vld [vmem:[%s879 + $0x120] sm:$0xe]
  %v3714 = vld [vmem:[%s879 + $0x124] sm:$0xf]
  %v3715 = vld [vmem:[%s879 + $0x128] sm:$0x1]
  %v3716 = vld [vmem:[%s879 + $0x134] sm:$0xe]
  %v3717 = vld [vmem:[%s879 + $0x138] sm:$0xf]
  %v3718 = vld [vmem:[%s879 + $0x13c] sm:$0x1]
  %v3719 = vld [vmem:[%s879 + $0x328] sm:$0xe]
  %v3720 = vld [vmem:[%s879 + $0x32c] sm:$0xf]
  %v3721 = vld [vmem:[%s879 + $0x330] sm:$0x1]
  %v3722 = vld [vmem:[%s879 + $0x33c] sm:$0xe]
  %v3723 = vld [vmem:[%s879 + $0x340] sm:$0xf]
  %v3724 = vld [vmem:[%s879 + $0x344] sm:$0x1]
  %v3725 = vld [vmem:[%s879 + $0x350] sm:$0xe]
  %v3726 = vld [vmem:[%s879 + $0x354] sm:$0xf]
  %v3727 = vld [vmem:[%s879 + $0x358] sm:$0x1]
  %v3728 = vld [vmem:[%s879 + $0x364] sm:$0xe]
  %v3729 = vld [vmem:[%s879 + $0x368] sm:$0xf]
  %v3730 = vld [vmem:[%s879 + $0x36c] sm:$0x1]
  %v3731 = vld [vmem:[%s879 + $0x378] sm:$0xe]
  %v3732 = vld [vmem:[%s879 + $0x37c] sm:$0xf]
  %v3733 = vld [vmem:[%s879 + $0x380] sm:$0x1]
  %v3734 = vld [vmem:[%s879 + $0x38c] sm:$0xe]
  %v3735 = vld [vmem:[%s879 + $0x390] sm:$0xf]
  %v3736 = vld [vmem:[%s879 + $0x394] sm:$0x1]
  %v3737 = vld [vmem:[%s879 + $0x3a0] sm:$0xe]
  %v3738 = vld [vmem:[%s879 + $0x3a4] sm:$0xf]
  %v3739 = vld [vmem:[%s879 + $0x3a8] sm:$0x1]
  %v3740 = vld [vmem:[%s879 + $0x3b4] sm:$0xe]
  %v3741 = vld [vmem:[%s879 + $0x3b8] sm:$0xf]
  %v3742 = vld [vmem:[%s879 + $0x3bc] sm:$0x1]
  %v3743 = vld [vmem:[%s879 + $0x3c8] sm:$0xe]
  %v3744 = vld [vmem:[%s879 + $0x3cc] sm:$0xf]
  %v3745 = vld [vmem:[%s879 + $0x3d0] sm:$0x1]
  %v3746 = vld [vmem:[%s879 + $0x3dc] sm:$0xe]
  %v3747 = vld [vmem:[%s879 + $0x3e0] sm:$0xf]
  %v3748 = vld [vmem:[%s879 + $0x3e4] sm:$0x1]
  %v3749 = vld [vmem:[%s879 + $0x3f0] sm:$0xe]
  %v3750 = vld [vmem:[%s879 + $0x3f4] sm:$0xf]
  %v3751 = vld [vmem:[%s879 + $0x3f8] sm:$0x1]
  %v3752 = vld [vmem:[%s879 + $0x404] sm:$0xe]
  %v3753 = vld [vmem:[%s879 + $0x408] sm:$0xf]
  %v3754 = vld [vmem:[%s879 + $0x40c] sm:$0x1]
  %v3755 = vld [vmem:[%s879 + $0x418] sm:$0xe]
  %v3756 = vld [vmem:[%s879 + $0x41c] sm:$0xf]
  %v3757 = vld [vmem:[%s879 + $0x420] sm:$0x1]
  %v3758 = vld [vmem:[%s879 + $0x42c] sm:$0xe]
  %v3759 = vld [vmem:[%s879 + $0x430] sm:$0xf]
  %v3760 = vld [vmem:[%s879 + $0x434] sm:$0x1]
  %v3761 = vld [vmem:[%s879 + $0x440] sm:$0xe]
  %v3762 = vld [vmem:[%s879 + $0x444] sm:$0xf]
  %v3763 = vld [vmem:[%s879 + $0x448] sm:$0x1]
  %v3764 = vld [vmem:[%s879 + $0x454] sm:$0xe]
  %v3765 = vld [vmem:[%s879 + $0x458] sm:$0xf]
  %v3766 = vld [vmem:[%s879 + $0x45c] sm:$0x1]
  %v3863 = vrot.slane %v3671, 5
  %v3864 = vrot.slane %v3863, 4
  %v3865 = vrot.slane %v3672, 5
  %v3866 = vsel %vm3030, %v3864, %v3865
  %v3867 = vrot.slane %v3865, 4
  %v3868 = vrot.slane %v3673, 5
  %v3869 = vsel %vm3030, %v3867, %v3868
  %v3870 = vrot.slane %v3674, 5
  %v3871 = vrot.slane %v3870, 4
  %v3872 = vrot.slane %v3675, 5
  %v3873 = vsel %vm3030, %v3871, %v3872
  %v3874 = vrot.slane %v3872, 4
  %v3875 = vrot.slane %v3676, 5
  %v3876 = vsel %vm3030, %v3874, %v3875
  %v3877 = vrot.slane %v3677, 5
  %v3878 = vrot.slane %v3877, 4
  %v3879 = vrot.slane %v3678, 5
  %v3880 = vsel %vm3030, %v3878, %v3879
  %v3881 = vrot.slane %v3879, 4
  %v3882 = vrot.slane %v3679, 5
  %v3883 = vsel %vm3030, %v3881, %v3882
  %v3884 = vrot.slane %v3680, 5
  %v3885 = vrot.slane %v3884, 4
  %v3886 = vrot.slane %v3681, 5
  %v3887 = vsel %vm3030, %v3885, %v3886
  %v3888 = vrot.slane %v3886, 4
  %v3889 = vrot.slane %v3682, 5
  %v3890 = vsel %vm3030, %v3888, %v3889
  %v3891 = vrot.slane %v3683, 5
  %v3892 = vrot.slane %v3891, 4
  %v3893 = vrot.slane %v3684, 5
  %v3894 = vsel %vm3030, %v3892, %v3893
  %v3895 = vrot.slane %v3893, 4
  %v3896 = vrot.slane %v3685, 5
  %v3897 = vsel %vm3030, %v3895, %v3896
  %v3898 = vrot.slane %v3686, 5
  %v3899 = vrot.slane %v3898, 4
  %v3900 = vrot.slane %v3687, 5
  %v3901 = vsel %vm3030, %v3899, %v3900
  %v3902 = vrot.slane %v3900, 4
  %v3903 = vrot.slane %v3688, 5
  %v3904 = vsel %vm3030, %v3902, %v3903
  %v3905 = vrot.slane %v3689, 5
  %v3906 = vrot.slane %v3905, 4
  %v3907 = vrot.slane %v3690, 5
  %v3908 = vsel %vm3030, %v3906, %v3907
  %v3909 = vrot.slane %v3907, 4
  %v3910 = vrot.slane %v3691, 5
  %v3911 = vsel %vm3030, %v3909, %v3910
  %v3912 = vrot.slane %v3692, 5
  %v3913 = vrot.slane %v3912, 4
  %v3914 = vrot.slane %v3693, 5
  %v3915 = vsel %vm3030, %v3913, %v3914
  %v3916 = vrot.slane %v3914, 4
  %v3917 = vrot.slane %v3694, 5
  %v3918 = vsel %vm3030, %v3916, %v3917
  %v3919 = vrot.slane %v3695, 5
  %v3920 = vrot.slane %v3919, 4
  %v3921 = vrot.slane %v3696, 5
  %v3922 = vsel %vm3030, %v3920, %v3921
  %v3923 = vrot.slane %v3921, 4
  %v3924 = vrot.slane %v3697, 5
  %v3925 = vsel %vm3030, %v3923, %v3924
  %v3926 = vrot.slane %v3698, 5
  %v3927 = vrot.slane %v3926, 4
  %v3928 = vrot.slane %v3699, 5
  %v3929 = vsel %vm3030, %v3927, %v3928
  %v3930 = vrot.slane %v3928, 4
  %v3931 = vrot.slane %v3700, 5
  %v3932 = vsel %vm3030, %v3930, %v3931
  %v3933 = vrot.slane %v3701, 5
  %v3934 = vrot.slane %v3933, 4
  %v3935 = vrot.slane %v3702, 5
  %v3936 = vsel %vm3030, %v3934, %v3935
  %v3937 = vrot.slane %v3935, 4
  %v3938 = vrot.slane %v3703, 5
  %v3939 = vsel %vm3030, %v3937, %v3938
  %v3940 = vrot.slane %v3704, 5
  %v3941 = vrot.slane %v3940, 4
  %v3942 = vrot.slane %v3705, 5
  %v3943 = vsel %vm3030, %v3941, %v3942
  %v3944 = vrot.slane %v3942, 4
  %v3945 = vrot.slane %v3706, 5
  %v3946 = vsel %vm3030, %v3944, %v3945
  %v3947 = vrot.slane %v3707, 5
  %v3948 = vrot.slane %v3947, 4
  %v3949 = vrot.slane %v3708, 5
  %v3950 = vsel %vm3030, %v3948, %v3949
  %v3951 = vrot.slane %v3949, 4
  %v3952 = vrot.slane %v3709, 5
  %v3953 = vsel %vm3030, %v3951, %v3952
  %v3954 = vrot.slane %v3710, 5
  %v3955 = vrot.slane %v3954, 4
  %v3956 = vrot.slane %v3711, 5
  %v3957 = vsel %vm3030, %v3955, %v3956
  %v3958 = vrot.slane %v3956, 4
  %v3959 = vrot.slane %v3712, 5
  %v3960 = vsel %vm3030, %v3958, %v3959
  %v3961 = vrot.slane %v3713, 5
  %v3962 = vrot.slane %v3961, 4
  %v3963 = vrot.slane %v3714, 5
  %v3964 = vsel %vm3030, %v3962, %v3963
  %v3965 = vrot.slane %v3963, 4
  %v3966 = vrot.slane %v3715, 5
  %v3967 = vsel %vm3030, %v3965, %v3966
  %v3968 = vrot.slane %v3716, 5
  %v3969 = vrot.slane %v3968, 4
  %v3970 = vrot.slane %v3717, 5
  %v3971 = vsel %vm3030, %v3969, %v3970
  %v3972 = vrot.slane %v3970, 4
  %v3973 = vrot.slane %v3718, 5
  %v3974 = vsel %vm3030, %v3972, %v3973
  %v3975 = vrot.slane %v3719, 5
  %v3976 = vrot.slane %v3975, 4
  %v3977 = vrot.slane %v3720, 5
  %v3978 = vsel %vm3030, %v3976, %v3977
  %v3979 = vrot.slane %v3977, 4
  %v3980 = vrot.slane %v3721, 5
  %v3981 = vsel %vm3030, %v3979, %v3980
  %v3982 = vrot.slane %v3722, 5
  %v3983 = vrot.slane %v3982, 4
  %v3984 = vrot.slane %v3723, 5
  %v3985 = vsel %vm3030, %v3983, %v3984
  %v3986 = vrot.slane %v3984, 4
  %v3987 = vrot.slane %v3724, 5
  %v3988 = vsel %vm3030, %v3986, %v3987
  %v3989 = vrot.slane %v3725, 5
  %v3990 = vrot.slane %v3989, 4
  %v3991 = vrot.slane %v3726, 5
  %v3992 = vsel %vm3030, %v3990, %v3991
  %v3993 = vrot.slane %v3991, 4
  %v3994 = vrot.slane %v3727, 5
  %v3995 = vsel %vm3030, %v3993, %v3994
  %v3996 = vrot.slane %v3728, 5
  %v3997 = vrot.slane %v3996, 4
  %v3998 = vrot.slane %v3729, 5
  %v3999 = vsel %vm3030, %v3997, %v3998
  %v4000 = vrot.slane %v3998, 4
  %v4001 = vrot.slane %v3730, 5
  %v4002 = vsel %vm3030, %v4000, %v4001
  %v4003 = vrot.slane %v3731, 5
  %v4004 = vrot.slane %v4003, 4
  %v4005 = vrot.slane %v3732, 5
  %v4006 = vsel %vm3030, %v4004, %v4005
  %v4007 = vrot.slane %v4005, 4
  %v4008 = vrot.slane %v3733, 5
  %v4009 = vsel %vm3030, %v4007, %v4008
  %v4010 = vrot.slane %v3734, 5
  %v4011 = vrot.slane %v4010, 4
  %v4012 = vrot.slane %v3735, 5
  %v4013 = vsel %vm3030, %v4011, %v4012
  %v4014 = vrot.slane %v4012, 4
  %v4015 = vrot.slane %v3736, 5
  %v4016 = vsel %vm3030, %v4014, %v4015
  %v4017 = vrot.slane %v3737, 5
  %v4018 = vrot.slane %v4017, 4
  %v4019 = vrot.slane %v3738, 5
  %v4020 = vsel %vm3030, %v4018, %v4019
  %v4021 = vrot.slane %v4019, 4
  %v4022 = vrot.slane %v3739, 5
  %v4023 = vsel %vm3030, %v4021, %v4022
  %v4024 = vrot.slane %v3740, 5
  %v4025 = vrot.slane %v4024, 4
  %v4026 = vrot.slane %v3741, 5
  %v4027 = vsel %vm3030, %v4025, %v4026
  %v4028 = vrot.slane %v4026, 4
  %v4029 = vrot.slane %v3742, 5
  %v4030 = vsel %vm3030, %v4028, %v4029
  %v4031 = vrot.slane %v3743, 5
  %v4032 = vrot.slane %v4031, 4
  %v4033 = vrot.slane %v3744, 5
  %v4034 = vsel %vm3030, %v4032, %v4033
  %v4035 = vrot.slane %v4033, 4
  %v4036 = vrot.slane %v3745, 5
  %v4037 = vsel %vm3030, %v4035, %v4036
  %v4038 = vrot.slane %v3746, 5
  %v4039 = vrot.slane %v4038, 4
  %v4040 = vrot.slane %v3747, 5
  %v4041 = vsel %vm3030, %v4039, %v4040
  %v4042 = vrot.slane %v4040, 4
  %v4043 = vrot.slane %v3748, 5
  %v4044 = vsel %vm3030, %v4042, %v4043
  %v4045 = vrot.slane %v3749, 5
  %v4046 = vrot.slane %v4045, 4
  %v4047 = vrot.slane %v3750, 5
  %v4048 = vsel %vm3030, %v4046, %v4047
  %v4049 = vrot.slane %v4047, 4
  %v4050 = vrot.slane %v3751, 5
  %v4051 = vsel %vm3030, %v4049, %v4050
  %v4052 = vrot.slane %v3752, 5
  %v4053 = vrot.slane %v4052, 4
  %v4054 = vrot.slane %v3753, 5
  %v4055 = vsel %vm3030, %v4053, %v4054
  %v4056 = vrot.slane %v4054, 4
  %v4057 = vrot.slane %v3754, 5
  %v4058 = vsel %vm3030, %v4056, %v4057
  %v4059 = vrot.slane %v3755, 5
  %v4060 = vrot.slane %v4059, 4
  %v4061 = vrot.slane %v3756, 5
  %v4062 = vsel %vm3030, %v4060, %v4061
  %v4063 = vrot.slane %v4061, 4
  %v4064 = vrot.slane %v3757, 5
  %v4065 = vsel %vm3030, %v4063, %v4064
  %v4066 = vrot.slane %v3758, 5
  %v4067 = vrot.slane %v4066, 4
  %v4068 = vrot.slane %v3759, 5
  %v4069 = vsel %vm3030, %v4067, %v4068
  %v4070 = vrot.slane %v4068, 4
  %v4071 = vrot.slane %v3760, 5
  %v4072 = vsel %vm3030, %v4070, %v4071
  %v4073 = vrot.slane %v3761, 5
  %v4074 = vrot.slane %v4073, 4
  %v4075 = vrot.slane %v3762, 5
  %v4076 = vsel %vm3030, %v4074, %v4075
  %v4077 = vrot.slane %v4075, 4
  %v4078 = vrot.slane %v3763, 5
  %v4079 = vsel %vm3030, %v4077, %v4078
  %v4080 = vrot.slane %v3764, 5
  %v4081 = vrot.slane %v4080, 4
  %v4082 = vrot.slane %v3765, 5
  %v4083 = vsel %vm3030, %v4081, %v4082
  %v4084 = vrot.slane %v4082, 4
  %v4085 = vrot.slane %v3766, 5
  %v4086 = vsel %vm3030, %v4084, %v4085
  %s4087 = scalar_lea.vmem [#allocation2], 360
  %v4088 = vld [vmem:[%s4087] sm:$0x8]
  %v4089 = vld [vmem:[%s4087 + $0x4] sm:$0xf]
  %v4090 = vld [vmem:[%s4087 + $0x8] sm:$0x7]
  %v4091 = vld [vmem:[%s4087 + $0x14] sm:$0x8]
  %v4092 = vld [vmem:[%s4087 + $0x18] sm:$0xf]
  %v4093 = vld [vmem:[%s4087 + $0x1c] sm:$0x7]
  %v4094 = vld [vmem:[%s4087 + $0x28] sm:$0x8]
  %v4095 = vld [vmem:[%s4087 + $0x2c] sm:$0xf]
  %v4096 = vld [vmem:[%s4087 + $0x30] sm:$0x7]
  %v4097 = vld [vmem:[%s4087 + $0x3c] sm:$0x8]
  %v4098 = vld [vmem:[%s4087 + $0x40] sm:$0xf]
  %v4099 = vld [vmem:[%s4087 + $0x44] sm:$0x7]
  %v4100 = vld [vmem:[%s4087 + $0x50] sm:$0x8]
  %v4101 = vld [vmem:[%s4087 + $0x54] sm:$0xf]
  %v4102 = vld [vmem:[%s4087 + $0x58] sm:$0x7]
  %v4103 = vld [vmem:[%s4087 + $0x64] sm:$0x8]
  %v4104 = vld [vmem:[%s4087 + $0x68] sm:$0xf]
  %v4105 = vld [vmem:[%s4087 + $0x6c] sm:$0x7]
  %v4106 = vld [vmem:[%s4087 + $0x78] sm:$0x8]
  %v4107 = vld [vmem:[%s4087 + $0x7c] sm:$0xf]
  %v4108 = vld [vmem:[%s4087 + $0x80] sm:$0x7]
  %v4109 = vld [vmem:[%s4087 + $0x8c] sm:$0x8]
  %v4110 = vld [vmem:[%s4087 + $0x90] sm:$0xf]
  %v4111 = vld [vmem:[%s4087 + $0x94] sm:$0x7]
  %v4112 = vld [vmem:[%s4087 + $0xa0] sm:$0x8]
  %v4113 = vld [vmem:[%s4087 + $0xa4] sm:$0xf]
  %v4114 = vld [vmem:[%s4087 + $0xa8] sm:$0x7]
  %v4115 = vld [vmem:[%s4087 + $0xb4] sm:$0x8]
  %v4116 = vld [vmem:[%s4087 + $0xb8] sm:$0xf]
  %v4117 = vld [vmem:[%s4087 + $0xbc] sm:$0x7]
  %v4118 = vld [vmem:[%s4087 + $0xc8] sm:$0x8]
  %v4119 = vld [vmem:[%s4087 + $0xcc] sm:$0xf]
  %v4120 = vld [vmem:[%s4087 + $0xd0] sm:$0x7]
  %v4121 = vld [vmem:[%s4087 + $0xdc] sm:$0x8]
  %v4122 = vld [vmem:[%s4087 + $0xe0] sm:$0xf]
  %v4123 = vld [vmem:[%s4087 + $0xe4] sm:$0x7]
  %v4124 = vld [vmem:[%s4087 + $0xf0] sm:$0x8]
  %v4125 = vld [vmem:[%s4087 + $0xf4] sm:$0xf]
  %v4126 = vld [vmem:[%s4087 + $0xf8] sm:$0x7]
  %v4127 = vld [vmem:[%s4087 + $0x104] sm:$0x8]
  %v4128 = vld [vmem:[%s4087 + $0x108] sm:$0xf]
  %v4129 = vld [vmem:[%s4087 + $0x10c] sm:$0x7]
  %v4130 = vld [vmem:[%s4087 + $0x118] sm:$0x8]
  %v4131 = vld [vmem:[%s4087 + $0x11c] sm:$0xf]
  %v4132 = vld [vmem:[%s4087 + $0x120] sm:$0x7]
  %v4133 = vld [vmem:[%s4087 + $0x12c] sm:$0x8]
  %v4134 = vld [vmem:[%s4087 + $0x130] sm:$0xf]
  %v4135 = vld [vmem:[%s4087 + $0x134] sm:$0x7]
  %v4136 = vld [vmem:[%s4087 + $0x320] sm:$0x8]
  %v4137 = vld [vmem:[%s4087 + $0x324] sm:$0xf]
  %v4138 = vld [vmem:[%s4087 + $0x328] sm:$0x7]
  %v4139 = vld [vmem:[%s4087 + $0x334] sm:$0x8]
  %v4140 = vld [vmem:[%s4087 + $0x338] sm:$0xf]
  %v4141 = vld [vmem:[%s4087 + $0x33c] sm:$0x7]
  %v4142 = vld [vmem:[%s4087 + $0x348] sm:$0x8]
  %v4143 = vld [vmem:[%s4087 + $0x34c] sm:$0xf]
  %v4144 = vld [vmem:[%s4087 + $0x350] sm:$0x7]
  %v4145 = vld [vmem:[%s4087 + $0x35c] sm:$0x8]
  %v4146 = vld [vmem:[%s4087 + $0x360] sm:$0xf]
  %v4147 = vld [vmem:[%s4087 + $0x364] sm:$0x7]
  %v4148 = vld [vmem:[%s4087 + $0x370] sm:$0x8]
  %v4149 = vld [vmem:[%s4087 + $0x374] sm:$0xf]
  %v4150 = vld [vmem:[%s4087 + $0x378] sm:$0x7]
  %v4151 = vld [vmem:[%s4087 + $0x384] sm:$0x8]
  %v4152 = vld [vmem:[%s4087 + $0x388] sm:$0xf]
  %v4153 = vld [vmem:[%s4087 + $0x38c] sm:$0x7]
  %v4154 = vld [vmem:[%s4087 + $0x398] sm:$0x8]
  %v4155 = vld [vmem:[%s4087 + $0x39c] sm:$0xf]
  %v4156 = vld [vmem:[%s4087 + $0x3a0] sm:$0x7]
  %v4157 = vld [vmem:[%s4087 + $0x3ac] sm:$0x8]
  %v4158 = vld [vmem:[%s4087 + $0x3b0] sm:$0xf]
  %v4159 = vld [vmem:[%s4087 + $0x3b4] sm:$0x7]
  %v4160 = vld [vmem:[%s4087 + $0x3c0] sm:$0x8]
  %v4161 = vld [vmem:[%s4087 + $0x3c4] sm:$0xf]
  %v4162 = vld [vmem:[%s4087 + $0x3c8] sm:$0x7]
  %v4163 = vld [vmem:[%s4087 + $0x3d4] sm:$0x8]
  %v4164 = vld [vmem:[%s4087 + $0x3d8] sm:$0xf]
  %v4165 = vld [vmem:[%s4087 + $0x3dc] sm:$0x7]
  %v4166 = vld [vmem:[%s4087 + $0x3e8] sm:$0x8]
  %v4167 = vld [vmem:[%s4087 + $0x3ec] sm:$0xf]
  %v4168 = vld [vmem:[%s4087 + $0x3f0] sm:$0x7]
  %v4169 = vld [vmem:[%s4087 + $0x3fc] sm:$0x8]
  %v4170 = vld [vmem:[%s4087 + $0x400] sm:$0xf]
  %v4171 = vld [vmem:[%s4087 + $0x404] sm:$0x7]
  %v4172 = vld [vmem:[%s4087 + $0x410] sm:$0x8]
  %v4173 = vld [vmem:[%s4087 + $0x414] sm:$0xf]
  %v4174 = vld [vmem:[%s4087 + $0x418] sm:$0x7]
  %v4175 = vld [vmem:[%s4087 + $0x424] sm:$0x8]
  %v4176 = vld [vmem:[%s4087 + $0x428] sm:$0xf]
  %v4177 = vld [vmem:[%s4087 + $0x42c] sm:$0x7]
  %v4178 = vld [vmem:[%s4087 + $0x438] sm:$0x8]
  %v4179 = vld [vmem:[%s4087 + $0x43c] sm:$0xf]
  %v4180 = vld [vmem:[%s4087 + $0x440] sm:$0x7]
  %v4181 = vld [vmem:[%s4087 + $0x44c] sm:$0x8]
  %v4182 = vld [vmem:[%s4087 + $0x450] sm:$0xf]
  %v4183 = vld [vmem:[%s4087 + $0x454] sm:$0x7]
  %v4280 = vrot.slane %v4088, 7
  %v4281 = vrot.slane %v4280, 4
  %v4282 = vrot.slane %v4089, 7
  %v4283 = vsel %vm2195, %v4281, %v4282
  %v4284 = vrot.slane %v4282, 4
  %v4285 = vrot.slane %v4090, 7
  %v4286 = vsel %vm2195, %v4284, %v4285
  %v4287 = vrot.slane %v4091, 7
  %v4288 = vrot.slane %v4287, 4
  %v4289 = vrot.slane %v4092, 7
  %v4290 = vsel %vm2195, %v4288, %v4289
  %v4291 = vrot.slane %v4289, 4
  %v4292 = vrot.slane %v4093, 7
  %v4293 = vsel %vm2195, %v4291, %v4292
  %v4294 = vrot.slane %v4094, 7
  %v4295 = vrot.slane %v4294, 4
  %v4296 = vrot.slane %v4095, 7
  %v4297 = vsel %vm2195, %v4295, %v4296
  %v4298 = vrot.slane %v4296, 4
  %v4299 = vrot.slane %v4096, 7
  %v4300 = vsel %vm2195, %v4298, %v4299
  %v4301 = vrot.slane %v4097, 7
  %v4302 = vrot.slane %v4301, 4
  %v4303 = vrot.slane %v4098, 7
  %v4304 = vsel %vm2195, %v4302, %v4303
  %v4305 = vrot.slane %v4303, 4
  %v4306 = vrot.slane %v4099, 7
  %v4307 = vsel %vm2195, %v4305, %v4306
  %v4308 = vrot.slane %v4100, 7
  %v4309 = vrot.slane %v4308, 4
  %v4310 = vrot.slane %v4101, 7
  %v4311 = vsel %vm2195, %v4309, %v4310
  %v4312 = vrot.slane %v4310, 4
  %v4313 = vrot.slane %v4102, 7
  %v4314 = vsel %vm2195, %v4312, %v4313
  %v4315 = vrot.slane %v4103, 7
  %v4316 = vrot.slane %v4315, 4
  %v4317 = vrot.slane %v4104, 7
  %v4318 = vsel %vm2195, %v4316, %v4317
  %v4319 = vrot.slane %v4317, 4
  %v4320 = vrot.slane %v4105, 7
  %v4321 = vsel %vm2195, %v4319, %v4320
  %v4322 = vrot.slane %v4106, 7
  %v4323 = vrot.slane %v4322, 4
  %v4324 = vrot.slane %v4107, 7
  %v4325 = vsel %vm2195, %v4323, %v4324
  %v4326 = vrot.slane %v4324, 4
  %v4327 = vrot.slane %v4108, 7
  %v4328 = vsel %vm2195, %v4326, %v4327
  %v4329 = vrot.slane %v4109, 7
  %v4330 = vrot.slane %v4329, 4
  %v4331 = vrot.slane %v4110, 7
  %v4332 = vsel %vm2195, %v4330, %v4331
  %v4333 = vrot.slane %v4331, 4
  %v4334 = vrot.slane %v4111, 7
  %v4335 = vsel %vm2195, %v4333, %v4334
  %v4336 = vrot.slane %v4112, 7
  %v4337 = vrot.slane %v4336, 4
  %v4338 = vrot.slane %v4113, 7
  %v4339 = vsel %vm2195, %v4337, %v4338
  %v4340 = vrot.slane %v4338, 4
  %v4341 = vrot.slane %v4114, 7
  %v4342 = vsel %vm2195, %v4340, %v4341
  %v4343 = vrot.slane %v4115, 7
  %v4344 = vrot.slane %v4343, 4
  %v4345 = vrot.slane %v4116, 7
  %v4346 = vsel %vm2195, %v4344, %v4345
  %v4347 = vrot.slane %v4345, 4
  %v4348 = vrot.slane %v4117, 7
  %v4349 = vsel %vm2195, %v4347, %v4348
  %v4350 = vrot.slane %v4118, 7
  %v4351 = vrot.slane %v4350, 4
  %v4352 = vrot.slane %v4119, 7
  %v4353 = vsel %vm2195, %v4351, %v4352
  %v4354 = vrot.slane %v4352, 4
  %v4355 = vrot.slane %v4120, 7
  %v4356 = vsel %vm2195, %v4354, %v4355
  %v4357 = vrot.slane %v4121, 7
  %v4358 = vrot.slane %v4357, 4
  %v4359 = vrot.slane %v4122, 7
  %v4360 = vsel %vm2195, %v4358, %v4359
  %v4361 = vrot.slane %v4359, 4
  %v4362 = vrot.slane %v4123, 7
  %v4363 = vsel %vm2195, %v4361, %v4362
  %v4364 = vrot.slane %v4124, 7
  %v4365 = vrot.slane %v4364, 4
  %v4366 = vrot.slane %v4125, 7
  %v4367 = vsel %vm2195, %v4365, %v4366
  %v4368 = vrot.slane %v4366, 4
  %v4369 = vrot.slane %v4126, 7
  %v4370 = vsel %vm2195, %v4368, %v4369
  %v4371 = vrot.slane %v4127, 7
  %v4372 = vrot.slane %v4371, 4
  %v4373 = vrot.slane %v4128, 7
  %v4374 = vsel %vm2195, %v4372, %v4373
  %v4375 = vrot.slane %v4373, 4
  %v4376 = vrot.slane %v4129, 7
  %v4377 = vsel %vm2195, %v4375, %v4376
  %v4378 = vrot.slane %v4130, 7
  %v4379 = vrot.slane %v4378, 4
  %v4380 = vrot.slane %v4131, 7
  %v4381 = vsel %vm2195, %v4379, %v4380
  %v4382 = vrot.slane %v4380, 4
  %v4383 = vrot.slane %v4132, 7
  %v4384 = vsel %vm2195, %v4382, %v4383
  %v4385 = vrot.slane %v4133, 7
  %v4386 = vrot.slane %v4385, 4
  %v4387 = vrot.slane %v4134, 7
  %v4388 = vsel %vm2195, %v4386, %v4387
  %v4389 = vrot.slane %v4387, 4
  %v4390 = vrot.slane %v4135, 7
  %v4391 = vsel %vm2195, %v4389, %v4390
  %v4392 = vrot.slane %v4136, 7
  %v4393 = vrot.slane %v4392, 4
  %v4394 = vrot.slane %v4137, 7
  %v4395 = vsel %vm2195, %v4393, %v4394
  %v4396 = vrot.slane %v4394, 4
  %v4397 = vrot.slane %v4138, 7
  %v4398 = vsel %vm2195, %v4396, %v4397
  %v4399 = vrot.slane %v4139, 7
  %v4400 = vrot.slane %v4399, 4
  %v4401 = vrot.slane %v4140, 7
  %v4402 = vsel %vm2195, %v4400, %v4401
  %v4403 = vrot.slane %v4401, 4
  %v4404 = vrot.slane %v4141, 7
  %v4405 = vsel %vm2195, %v4403, %v4404
  %v4406 = vrot.slane %v4142, 7
  %v4407 = vrot.slane %v4406, 4
  %v4408 = vrot.slane %v4143, 7
  %v4409 = vsel %vm2195, %v4407, %v4408
  %v4410 = vrot.slane %v4408, 4
  %v4411 = vrot.slane %v4144, 7
  %v4412 = vsel %vm2195, %v4410, %v4411
  %v4413 = vrot.slane %v4145, 7
  %v4414 = vrot.slane %v4413, 4
  %v4415 = vrot.slane %v4146, 7
  %v4416 = vsel %vm2195, %v4414, %v4415
  %v4417 = vrot.slane %v4415, 4
  %v4418 = vrot.slane %v4147, 7
  %v4419 = vsel %vm2195, %v4417, %v4418
  %v4420 = vrot.slane %v4148, 7
  %v4421 = vrot.slane %v4420, 4
  %v4422 = vrot.slane %v4149, 7
  %v4423 = vsel %vm2195, %v4421, %v4422
  %v4424 = vrot.slane %v4422, 4
  %v4425 = vrot.slane %v4150, 7
  %v4426 = vsel %vm2195, %v4424, %v4425
  %v4427 = vrot.slane %v4151, 7
  %v4428 = vrot.slane %v4427, 4
  %v4429 = vrot.slane %v4152, 7
  %v4430 = vsel %vm2195, %v4428, %v4429
  %v4431 = vrot.slane %v4429, 4
  %v4432 = vrot.slane %v4153, 7
  %v4433 = vsel %vm2195, %v4431, %v4432
  %v4434 = vrot.slane %v4154, 7
  %v4435 = vrot.slane %v4434, 4
  %v4436 = vrot.slane %v4155, 7
  %v4437 = vsel %vm2195, %v4435, %v4436
  %v4438 = vrot.slane %v4436, 4
  %v4439 = vrot.slane %v4156, 7
  %v4440 = vsel %vm2195, %v4438, %v4439
  %v4441 = vrot.slane %v4157, 7
  %v4442 = vrot.slane %v4441, 4
  %v4443 = vrot.slane %v4158, 7
  %v4444 = vsel %vm2195, %v4442, %v4443
  %v4445 = vrot.slane %v4443, 4
  %v4446 = vrot.slane %v4159, 7
  %v4447 = vsel %vm2195, %v4445, %v4446
  %v4448 = vrot.slane %v4160, 7
  %v4449 = vrot.slane %v4448, 4
  %v4450 = vrot.slane %v4161, 7
  %v4451 = vsel %vm2195, %v4449, %v4450
  %v4452 = vrot.slane %v4450, 4
  %v4453 = vrot.slane %v4162, 7
  %v4454 = vsel %vm2195, %v4452, %v4453
  %v4455 = vrot.slane %v4163, 7
  %v4456 = vrot.slane %v4455, 4
  %v4457 = vrot.slane %v4164, 7
  %v4458 = vsel %vm2195, %v4456, %v4457
  %v4459 = vrot.slane %v4457, 4
  %v4460 = vrot.slane %v4165, 7
  %v4461 = vsel %vm2195, %v4459, %v4460
  %v4462 = vrot.slane %v4166, 7
  %v4463 = vrot.slane %v4462, 4
  %v4464 = vrot.slane %v4167, 7
  %v4465 = vsel %vm2195, %v4463, %v4464
  %v4466 = vrot.slane %v4464, 4
  %v4467 = vrot.slane %v4168, 7
  %v4468 = vsel %vm2195, %v4466, %v4467
  %v4469 = vrot.slane %v4169, 7
  %v4470 = vrot.slane %v4469, 4
  %v4471 = vrot.slane %v4170, 7
  %v4472 = vsel %vm2195, %v4470, %v4471
  %v4473 = vrot.slane %v4471, 4
  %v4474 = vrot.slane %v4171, 7
  %v4475 = vsel %vm2195, %v4473, %v4474
  %v4476 = vrot.slane %v4172, 7
  %v4477 = vrot.slane %v4476, 4
  %v4478 = vrot.slane %v4173, 7
  %v4479 = vsel %vm2195, %v4477, %v4478
  %v4480 = vrot.slane %v4478, 4
  %v4481 = vrot.slane %v4174, 7
  %v4482 = vsel %vm2195, %v4480, %v4481
  %v4483 = vrot.slane %v4175, 7
  %v4484 = vrot.slane %v4483, 4
  %v4485 = vrot.slane %v4176, 7
  %v4486 = vsel %vm2195, %v4484, %v4485
  %v4487 = vrot.slane %v4485, 4
  %v4488 = vrot.slane %v4177, 7
  %v4489 = vsel %vm2195, %v4487, %v4488
  %v4490 = vrot.slane %v4178, 7
  %v4491 = vrot.slane %v4490, 4
  %v4492 = vrot.slane %v4179, 7
  %v4493 = vsel %vm2195, %v4491, %v4492
  %v4494 = vrot.slane %v4492, 4
  %v4495 = vrot.slane %v4180, 7
  %v4496 = vsel %vm2195, %v4494, %v4495
  %v4497 = vrot.slane %v4181, 7
  %v4498 = vrot.slane %v4497, 4
  %v4499 = vrot.slane %v4182, 7
  %v4500 = vsel %vm2195, %v4498, %v4499
  %v4501 = vrot.slane %v4499, 4
  %v4502 = vrot.slane %v4183, 7
  %v4503 = vsel %vm2195, %v4501, %v4502
  %v4504 = vld [vmem:[%s4087 + $0x4] sm:$0xc]
  %v4505 = vld [vmem:[%s4087 + $0x8] sm:$0xf]
  %v4506 = vld [vmem:[%s4087 + $0xc] sm:$0x3]
  %v4507 = vld [vmem:[%s4087 + $0x18] sm:$0xc]
  %v4508 = vld [vmem:[%s4087 + $0x1c] sm:$0xf]
  %v4509 = vld [vmem:[%s4087 + $0x20] sm:$0x3]
  %v4510 = vld [vmem:[%s4087 + $0x2c] sm:$0xc]
  %v4511 = vld [vmem:[%s4087 + $0x30] sm:$0xf]
  %v4512 = vld [vmem:[%s4087 + $0x34] sm:$0x3]
  %v4513 = vld [vmem:[%s4087 + $0x40] sm:$0xc]
  %v4514 = vld [vmem:[%s4087 + $0x44] sm:$0xf]
  %v4515 = vld [vmem:[%s4087 + $0x48] sm:$0x3]
  %v4516 = vld [vmem:[%s4087 + $0x54] sm:$0xc]
  %v4517 = vld [vmem:[%s4087 + $0x58] sm:$0xf]
  %v4518 = vld [vmem:[%s4087 + $0x5c] sm:$0x3]
  %v4519 = vld [vmem:[%s4087 + $0x68] sm:$0xc]
  %v4520 = vld [vmem:[%s4087 + $0x6c] sm:$0xf]
  %v4521 = vld [vmem:[%s4087 + $0x70] sm:$0x3]
  %v4522 = vld [vmem:[%s4087 + $0x7c] sm:$0xc]
  %v4523 = vld [vmem:[%s4087 + $0x80] sm:$0xf]
  %v4524 = vld [vmem:[%s4087 + $0x84] sm:$0x3]
  %v4525 = vld [vmem:[%s4087 + $0x90] sm:$0xc]
  %v4526 = vld [vmem:[%s4087 + $0x94] sm:$0xf]
  %v4527 = vld [vmem:[%s4087 + $0x98] sm:$0x3]
  %v4528 = vld [vmem:[%s4087 + $0xa4] sm:$0xc]
  %v4529 = vld [vmem:[%s4087 + $0xa8] sm:$0xf]
  %v4530 = vld [vmem:[%s4087 + $0xac] sm:$0x3]
  %v4531 = vld [vmem:[%s4087 + $0xb8] sm:$0xc]
  %v4532 = vld [vmem:[%s4087 + $0xbc] sm:$0xf]
  %v4533 = vld [vmem:[%s4087 + $0xc0] sm:$0x3]
  %v4534 = vld [vmem:[%s4087 + $0xcc] sm:$0xc]
  %v4535 = vld [vmem:[%s4087 + $0xd0] sm:$0xf]
  %v4536 = vld [vmem:[%s4087 + $0xd4] sm:$0x3]
  %v4537 = vld [vmem:[%s4087 + $0xe0] sm:$0xc]
  %v4538 = vld [vmem:[%s4087 + $0xe4] sm:$0xf]
  %v4539 = vld [vmem:[%s4087 + $0xe8] sm:$0x3]
  %v4540 = vld [vmem:[%s4087 + $0xf4] sm:$0xc]
  %v4541 = vld [vmem:[%s4087 + $0xf8] sm:$0xf]
  %v4542 = vld [vmem:[%s4087 + $0xfc] sm:$0x3]
  %v4543 = vld [vmem:[%s4087 + $0x108] sm:$0xc]
  %v4544 = vld [vmem:[%s4087 + $0x10c] sm:$0xf]
  %v4545 = vld [vmem:[%s4087 + $0x110] sm:$0x3]
  %v4546 = vld [vmem:[%s4087 + $0x11c] sm:$0xc]
  %v4547 = vld [vmem:[%s4087 + $0x120] sm:$0xf]
  %v4548 = vld [vmem:[%s4087 + $0x124] sm:$0x3]
  %v4549 = vld [vmem:[%s4087 + $0x130] sm:$0xc]
  %v4550 = vld [vmem:[%s4087 + $0x134] sm:$0xf]
  %v4551 = vld [vmem:[%s4087 + $0x138] sm:$0x3]
  %v4552 = vld [vmem:[%s4087 + $0x324] sm:$0xc]
  %v4553 = vld [vmem:[%s4087 + $0x328] sm:$0xf]
  %v4554 = vld [vmem:[%s4087 + $0x32c] sm:$0x3]
  %v4555 = vld [vmem:[%s4087 + $0x338] sm:$0xc]
  %v4556 = vld [vmem:[%s4087 + $0x33c] sm:$0xf]
  %v4557 = vld [vmem:[%s4087 + $0x340] sm:$0x3]
  %v4558 = vld [vmem:[%s4087 + $0x34c] sm:$0xc]
  %v4559 = vld [vmem:[%s4087 + $0x350] sm:$0xf]
  %v4560 = vld [vmem:[%s4087 + $0x354] sm:$0x3]
  %v4561 = vld [vmem:[%s4087 + $0x360] sm:$0xc]
  %v4562 = vld [vmem:[%s4087 + $0x364] sm:$0xf]
  %v4563 = vld [vmem:[%s4087 + $0x368] sm:$0x3]
  %v4564 = vld [vmem:[%s4087 + $0x374] sm:$0xc]
  %v4565 = vld [vmem:[%s4087 + $0x378] sm:$0xf]
  %v4566 = vld [vmem:[%s4087 + $0x37c] sm:$0x3]
  %v4567 = vld [vmem:[%s4087 + $0x388] sm:$0xc]
  %v4568 = vld [vmem:[%s4087 + $0x38c] sm:$0xf]
  %v4569 = vld [vmem:[%s4087 + $0x390] sm:$0x3]
  %v4570 = vld [vmem:[%s4087 + $0x39c] sm:$0xc]
  %v4571 = vld [vmem:[%s4087 + $0x3a0] sm:$0xf]
  %v4572 = vld [vmem:[%s4087 + $0x3a4] sm:$0x3]
  %v4573 = vld [vmem:[%s4087 + $0x3b0] sm:$0xc]
  %v4574 = vld [vmem:[%s4087 + $0x3b4] sm:$0xf]
  %v4575 = vld [vmem:[%s4087 + $0x3b8] sm:$0x3]
  %v4576 = vld [vmem:[%s4087 + $0x3c4] sm:$0xc]
  %v4577 = vld [vmem:[%s4087 + $0x3c8] sm:$0xf]
  %v4578 = vld [vmem:[%s4087 + $0x3cc] sm:$0x3]
  %v4579 = vld [vmem:[%s4087 + $0x3d8] sm:$0xc]
  %v4580 = vld [vmem:[%s4087 + $0x3dc] sm:$0xf]
  %v4581 = vld [vmem:[%s4087 + $0x3e0] sm:$0x3]
  %v4582 = vld [vmem:[%s4087 + $0x3ec] sm:$0xc]
  %v4583 = vld [vmem:[%s4087 + $0x3f0] sm:$0xf]
  %v4584 = vld [vmem:[%s4087 + $0x3f4] sm:$0x3]
  %v4585 = vld [vmem:[%s4087 + $0x400] sm:$0xc]
  %v4586 = vld [vmem:[%s4087 + $0x404] sm:$0xf]
  %v4587 = vld [vmem:[%s4087 + $0x408] sm:$0x3]
  %v4588 = vld [vmem:[%s4087 + $0x414] sm:$0xc]
  %v4589 = vld [vmem:[%s4087 + $0x418] sm:$0xf]
  %v4590 = vld [vmem:[%s4087 + $0x41c] sm:$0x3]
  %v4591 = vld [vmem:[%s4087 + $0x428] sm:$0xc]
  %v4592 = vld [vmem:[%s4087 + $0x42c] sm:$0xf]
  %v4593 = vld [vmem:[%s4087 + $0x430] sm:$0x3]
  %v4594 = vld [vmem:[%s4087 + $0x43c] sm:$0xc]
  %v4595 = vld [vmem:[%s4087 + $0x440] sm:$0xf]
  %v4596 = vld [vmem:[%s4087 + $0x444] sm:$0x3]
  %v4597 = vld [vmem:[%s4087 + $0x450] sm:$0xc]
  %v4598 = vld [vmem:[%s4087 + $0x454] sm:$0xf]
  %v4599 = vld [vmem:[%s4087 + $0x458] sm:$0x3]
  %v4696 = vrot.slane %v4504, 6
  %v4697 = vrot.slane %v4696, 4
  %v4698 = vrot.slane %v4505, 6
  %v4699 = vsel %vm622, %v4697, %v4698
  %v4700 = vrot.slane %v4698, 4
  %v4701 = vrot.slane %v4506, 6
  %v4702 = vsel %vm622, %v4700, %v4701
  %v4703 = vrot.slane %v4507, 6
  %v4704 = vrot.slane %v4703, 4
  %v4705 = vrot.slane %v4508, 6
  %v4706 = vsel %vm622, %v4704, %v4705
  %v4707 = vrot.slane %v4705, 4
  %v4708 = vrot.slane %v4509, 6
  %v4709 = vsel %vm622, %v4707, %v4708
  %v4710 = vrot.slane %v4510, 6
  %v4711 = vrot.slane %v4710, 4
  %v4712 = vrot.slane %v4511, 6
  %v4713 = vsel %vm622, %v4711, %v4712
  %v4714 = vrot.slane %v4712, 4
  %v4715 = vrot.slane %v4512, 6
  %v4716 = vsel %vm622, %v4714, %v4715
  %v4717 = vrot.slane %v4513, 6
  %v4718 = vrot.slane %v4717, 4
  %v4719 = vrot.slane %v4514, 6
  %v4720 = vsel %vm622, %v4718, %v4719
  %v4721 = vrot.slane %v4719, 4
  %v4722 = vrot.slane %v4515, 6
  %v4723 = vsel %vm622, %v4721, %v4722
  %v4724 = vrot.slane %v4516, 6
  %v4725 = vrot.slane %v4724, 4
  %v4726 = vrot.slane %v4517, 6
  %v4727 = vsel %vm622, %v4725, %v4726
  %v4728 = vrot.slane %v4726, 4
  %v4729 = vrot.slane %v4518, 6
  %v4730 = vsel %vm622, %v4728, %v4729
  %v4731 = vrot.slane %v4519, 6
  %v4732 = vrot.slane %v4731, 4
  %v4733 = vrot.slane %v4520, 6
  %v4734 = vsel %vm622, %v4732, %v4733
  %v4735 = vrot.slane %v4733, 4
  %v4736 = vrot.slane %v4521, 6
  %v4737 = vsel %vm622, %v4735, %v4736
  %v4738 = vrot.slane %v4522, 6
  %v4739 = vrot.slane %v4738, 4
  %v4740 = vrot.slane %v4523, 6
  %v4741 = vsel %vm622, %v4739, %v4740
  %v4742 = vrot.slane %v4740, 4
  %v4743 = vrot.slane %v4524, 6
  %v4744 = vsel %vm622, %v4742, %v4743
  %v4745 = vrot.slane %v4525, 6
  %v4746 = vrot.slane %v4745, 4
  %v4747 = vrot.slane %v4526, 6
  %v4748 = vsel %vm622, %v4746, %v4747
  %v4749 = vrot.slane %v4747, 4
  %v4750 = vrot.slane %v4527, 6
  %v4751 = vsel %vm622, %v4749, %v4750
  %v4752 = vrot.slane %v4528, 6
  %v4753 = vrot.slane %v4752, 4
  %v4754 = vrot.slane %v4529, 6
  %v4755 = vsel %vm622, %v4753, %v4754
  %v4756 = vrot.slane %v4754, 4
  %v4757 = vrot.slane %v4530, 6
  %v4758 = vsel %vm622, %v4756, %v4757
  %v4759 = vrot.slane %v4531, 6
  %v4760 = vrot.slane %v4759, 4
  %v4761 = vrot.slane %v4532, 6
  %v4762 = vsel %vm622, %v4760, %v4761
  %v4763 = vrot.slane %v4761, 4
  %v4764 = vrot.slane %v4533, 6
  %v4765 = vsel %vm622, %v4763, %v4764
  %v4766 = vrot.slane %v4534, 6
  %v4767 = vrot.slane %v4766, 4
  %v4768 = vrot.slane %v4535, 6
  %v4769 = vsel %vm622, %v4767, %v4768
  %v4770 = vrot.slane %v4768, 4
  %v4771 = vrot.slane %v4536, 6
  %v4772 = vsel %vm622, %v4770, %v4771
  %v4773 = vrot.slane %v4537, 6
  %v4774 = vrot.slane %v4773, 4
  %v4775 = vrot.slane %v4538, 6
  %v4776 = vsel %vm622, %v4774, %v4775
  %v4777 = vrot.slane %v4775, 4
  %v4778 = vrot.slane %v4539, 6
  %v4779 = vsel %vm622, %v4777, %v4778
  %v4780 = vrot.slane %v4540, 6
  %v4781 = vrot.slane %v4780, 4
  %v4782 = vrot.slane %v4541, 6
  %v4783 = vsel %vm622, %v4781, %v4782
  %v4784 = vrot.slane %v4782, 4
  %v4785 = vrot.slane %v4542, 6
  %v4786 = vsel %vm622, %v4784, %v4785
  %v4787 = vrot.slane %v4543, 6
  %v4788 = vrot.slane %v4787, 4
  %v4789 = vrot.slane %v4544, 6
  %v4790 = vsel %vm622, %v4788, %v4789
  %v4791 = vrot.slane %v4789, 4
  %v4792 = vrot.slane %v4545, 6
  %v4793 = vsel %vm622, %v4791, %v4792
  %v4794 = vrot.slane %v4546, 6
  %v4795 = vrot.slane %v4794, 4
  %v4796 = vrot.slane %v4547, 6
  %v4797 = vsel %vm622, %v4795, %v4796
  %v4798 = vrot.slane %v4796, 4
  %v4799 = vrot.slane %v4548, 6
  %v4800 = vsel %vm622, %v4798, %v4799
  %v4801 = vrot.slane %v4549, 6
  %v4802 = vrot.slane %v4801, 4
  %v4803 = vrot.slane %v4550, 6
  %v4804 = vsel %vm622, %v4802, %v4803
  %v4805 = vrot.slane %v4803, 4
  %v4806 = vrot.slane %v4551, 6
  %v4807 = vsel %vm622, %v4805, %v4806
  %v4808 = vrot.slane %v4552, 6
  %v4809 = vrot.slane %v4808, 4
  %v4810 = vrot.slane %v4553, 6
  %v4811 = vsel %vm622, %v4809, %v4810
  %v4812 = vrot.slane %v4810, 4
  %v4813 = vrot.slane %v4554, 6
  %v4814 = vsel %vm622, %v4812, %v4813
  %v4815 = vrot.slane %v4555, 6
  %v4816 = vrot.slane %v4815, 4
  %v4817 = vrot.slane %v4556, 6
  %v4818 = vsel %vm622, %v4816, %v4817
  %v4819 = vrot.slane %v4817, 4
  %v4820 = vrot.slane %v4557, 6
  %v4821 = vsel %vm622, %v4819, %v4820
  %v4822 = vrot.slane %v4558, 6
  %v4823 = vrot.slane %v4822, 4
  %v4824 = vrot.slane %v4559, 6
  %v4825 = vsel %vm622, %v4823, %v4824
  %v4826 = vrot.slane %v4824, 4
  %v4827 = vrot.slane %v4560, 6
  %v4828 = vsel %vm622, %v4826, %v4827
  %v4829 = vrot.slane %v4561, 6
  %v4830 = vrot.slane %v4829, 4
  %v4831 = vrot.slane %v4562, 6
  %v4832 = vsel %vm622, %v4830, %v4831
  %v4833 = vrot.slane %v4831, 4
  %v4834 = vrot.slane %v4563, 6
  %v4835 = vsel %vm622, %v4833, %v4834
  %v4836 = vrot.slane %v4564, 6
  %v4837 = vrot.slane %v4836, 4
  %v4838 = vrot.slane %v4565, 6
  %v4839 = vsel %vm622, %v4837, %v4838
  %v4840 = vrot.slane %v4838, 4
  %v4841 = vrot.slane %v4566, 6
  %v4842 = vsel %vm622, %v4840, %v4841
  %v4843 = vrot.slane %v4567, 6
  %v4844 = vrot.slane %v4843, 4
  %v4845 = vrot.slane %v4568, 6
  %v4846 = vsel %vm622, %v4844, %v4845
  %v4847 = vrot.slane %v4845, 4
  %v4848 = vrot.slane %v4569, 6
  %v4849 = vsel %vm622, %v4847, %v4848
  %v4850 = vrot.slane %v4570, 6
  %v4851 = vrot.slane %v4850, 4
  %v4852 = vrot.slane %v4571, 6
  %v4853 = vsel %vm622, %v4851, %v4852
  %v4854 = vrot.slane %v4852, 4
  %v4855 = vrot.slane %v4572, 6
  %v4856 = vsel %vm622, %v4854, %v4855
  %v4857 = vrot.slane %v4573, 6
  %v4858 = vrot.slane %v4857, 4
  %v4859 = vrot.slane %v4574, 6
  %v4860 = vsel %vm622, %v4858, %v4859
  %v4861 = vrot.slane %v4859, 4
  %v4862 = vrot.slane %v4575, 6
  %v4863 = vsel %vm622, %v4861, %v4862
  %v4864 = vrot.slane %v4576, 6
  %v4865 = vrot.slane %v4864, 4
  %v4866 = vrot.slane %v4577, 6
  %v4867 = vsel %vm622, %v4865, %v4866
  %v4868 = vrot.slane %v4866, 4
  %v4869 = vrot.slane %v4578, 6
  %v4870 = vsel %vm622, %v4868, %v4869
  %v4871 = vrot.slane %v4579, 6
  %v4872 = vrot.slane %v4871, 4
  %v4873 = vrot.slane %v4580, 6
  %v4874 = vsel %vm622, %v4872, %v4873
  %v4875 = vrot.slane %v4873, 4
  %v4876 = vrot.slane %v4581, 6
  %v4877 = vsel %vm622, %v4875, %v4876
  %v4878 = vrot.slane %v4582, 6
  %v4879 = vrot.slane %v4878, 4
  %v4880 = vrot.slane %v4583, 6
  %v4881 = vsel %vm622, %v4879, %v4880
  %v4882 = vrot.slane %v4880, 4
  %v4883 = vrot.slane %v4584, 6
  %v4884 = vsel %vm622, %v4882, %v4883
  %v4885 = vrot.slane %v4585, 6
  %v4886 = vrot.slane %v4885, 4
  %v4887 = vrot.slane %v4586, 6
  %v4888 = vsel %vm622, %v4886, %v4887
  %v4889 = vrot.slane %v4887, 4
  %v4890 = vrot.slane %v4587, 6
  %v4891 = vsel %vm622, %v4889, %v4890
  %v4892 = vrot.slane %v4588, 6
  %v4893 = vrot.slane %v4892, 4
  %v4894 = vrot.slane %v4589, 6
  %v4895 = vsel %vm622, %v4893, %v4894
  %v4896 = vrot.slane %v4894, 4
  %v4897 = vrot.slane %v4590, 6
  %v4898 = vsel %vm622, %v4896, %v4897
  %v4899 = vrot.slane %v4591, 6
  %v4900 = vrot.slane %v4899, 4
  %v4901 = vrot.slane %v4592, 6
  %v4902 = vsel %vm622, %v4900, %v4901
  %v4903 = vrot.slane %v4901, 4
  %v4904 = vrot.slane %v4593, 6
  %v4905 = vsel %vm622, %v4903, %v4904
  %v4906 = vrot.slane %v4594, 6
  %v4907 = vrot.slane %v4906, 4
  %v4908 = vrot.slane %v4595, 6
  %v4909 = vsel %vm622, %v4907, %v4908
  %v4910 = vrot.slane %v4908, 4
  %v4911 = vrot.slane %v4596, 6
  %v4912 = vsel %vm622, %v4910, %v4911
  %v4913 = vrot.slane %v4597, 6
  %v4914 = vrot.slane %v4913, 4
  %v4915 = vrot.slane %v4598, 6
  %v4916 = vsel %vm622, %v4914, %v4915
  %v4917 = vrot.slane %v4915, 4
  %v4918 = vrot.slane %v4599, 6
  %v4919 = vsel %vm622, %v4917, %v4918
  %v4920 = vld [vmem:[%s4087 + $0x8] sm:$0xe]
  %v4921 = vld [vmem:[%s4087 + $0xc] sm:$0xf]
  %v4922 = vld [vmem:[%s4087 + $0x10] sm:$0x1]
  %v4923 = vld [vmem:[%s4087 + $0x1c] sm:$0xe]
  %v4924 = vld [vmem:[%s4087 + $0x20] sm:$0xf]
  %v4925 = vld [vmem:[%s4087 + $0x24] sm:$0x1]
  %v4926 = vld [vmem:[%s4087 + $0x30] sm:$0xe]
  %v4927 = vld [vmem:[%s4087 + $0x34] sm:$0xf]
  %v4928 = vld [vmem:[%s4087 + $0x38] sm:$0x1]
  %v4929 = vld [vmem:[%s4087 + $0x44] sm:$0xe]
  %v4930 = vld [vmem:[%s4087 + $0x48] sm:$0xf]
  %v4931 = vld [vmem:[%s4087 + $0x4c] sm:$0x1]
  %v4932 = vld [vmem:[%s4087 + $0x58] sm:$0xe]
  %v4933 = vld [vmem:[%s4087 + $0x5c] sm:$0xf]
  %v4934 = vld [vmem:[%s4087 + $0x60] sm:$0x1]
  %v4935 = vld [vmem:[%s4087 + $0x6c] sm:$0xe]
  %v4936 = vld [vmem:[%s4087 + $0x70] sm:$0xf]
  %v4937 = vld [vmem:[%s4087 + $0x74] sm:$0x1]
  %v4938 = vld [vmem:[%s4087 + $0x80] sm:$0xe]
  %v4939 = vld [vmem:[%s4087 + $0x84] sm:$0xf]
  %v4940 = vld [vmem:[%s4087 + $0x88] sm:$0x1]
  %v4941 = vld [vmem:[%s4087 + $0x94] sm:$0xe]
  %v4942 = vld [vmem:[%s4087 + $0x98] sm:$0xf]
  %v4943 = vld [vmem:[%s4087 + $0x9c] sm:$0x1]
  %v4944 = vld [vmem:[%s4087 + $0xa8] sm:$0xe]
  %v4945 = vld [vmem:[%s4087 + $0xac] sm:$0xf]
  %v4946 = vld [vmem:[%s4087 + $0xb0] sm:$0x1]
  %v4947 = vld [vmem:[%s4087 + $0xbc] sm:$0xe]
  %v4948 = vld [vmem:[%s4087 + $0xc0] sm:$0xf]
  %v4949 = vld [vmem:[%s4087 + $0xc4] sm:$0x1]
  %v4950 = vld [vmem:[%s4087 + $0xd0] sm:$0xe]
  %v4951 = vld [vmem:[%s4087 + $0xd4] sm:$0xf]
  %v4952 = vld [vmem:[%s4087 + $0xd8] sm:$0x1]
  %v4953 = vld [vmem:[%s4087 + $0xe4] sm:$0xe]
  %v4954 = vld [vmem:[%s4087 + $0xe8] sm:$0xf]
  %v4955 = vld [vmem:[%s4087 + $0xec] sm:$0x1]
  %v4956 = vld [vmem:[%s4087 + $0xf8] sm:$0xe]
  %v4957 = vld [vmem:[%s4087 + $0xfc] sm:$0xf]
  %v4958 = vld [vmem:[%s4087 + $0x100] sm:$0x1]
  %v4959 = vld [vmem:[%s4087 + $0x10c] sm:$0xe]
  %v4960 = vld [vmem:[%s4087 + $0x110] sm:$0xf]
  %v4961 = vld [vmem:[%s4087 + $0x114] sm:$0x1]
  %v4962 = vld [vmem:[%s4087 + $0x120] sm:$0xe]
  %v4963 = vld [vmem:[%s4087 + $0x124] sm:$0xf]
  %v4964 = vld [vmem:[%s4087 + $0x128] sm:$0x1]
  %v4965 = vld [vmem:[%s4087 + $0x134] sm:$0xe]
  %v4966 = vld [vmem:[%s4087 + $0x138] sm:$0xf]
  %v4967 = vld [vmem:[%s4087 + $0x13c] sm:$0x1]
  %v4968 = vld [vmem:[%s4087 + $0x328] sm:$0xe]
  %v4969 = vld [vmem:[%s4087 + $0x32c] sm:$0xf]
  %v4970 = vld [vmem:[%s4087 + $0x330] sm:$0x1]
  %v4971 = vld [vmem:[%s4087 + $0x33c] sm:$0xe]
  %v4972 = vld [vmem:[%s4087 + $0x340] sm:$0xf]
  %v4973 = vld [vmem:[%s4087 + $0x344] sm:$0x1]
  %v4974 = vld [vmem:[%s4087 + $0x350] sm:$0xe]
  %v4975 = vld [vmem:[%s4087 + $0x354] sm:$0xf]
  %v4976 = vld [vmem:[%s4087 + $0x358] sm:$0x1]
  %v4977 = vld [vmem:[%s4087 + $0x364] sm:$0xe]
  %v4978 = vld [vmem:[%s4087 + $0x368] sm:$0xf]
  %v4979 = vld [vmem:[%s4087 + $0x36c] sm:$0x1]
  %v4980 = vld [vmem:[%s4087 + $0x378] sm:$0xe]
  %v4981 = vld [vmem:[%s4087 + $0x37c] sm:$0xf]
  %v4982 = vld [vmem:[%s4087 + $0x380] sm:$0x1]
  %v4983 = vld [vmem:[%s4087 + $0x38c] sm:$0xe]
  %v4984 = vld [vmem:[%s4087 + $0x390] sm:$0xf]
  %v4985 = vld [vmem:[%s4087 + $0x394] sm:$0x1]
  %v4986 = vld [vmem:[%s4087 + $0x3a0] sm:$0xe]
  %v4987 = vld [vmem:[%s4087 + $0x3a4] sm:$0xf]
  %v4988 = vld [vmem:[%s4087 + $0x3a8] sm:$0x1]
  %v4989 = vld [vmem:[%s4087 + $0x3b4] sm:$0xe]
  %v4990 = vld [vmem:[%s4087 + $0x3b8] sm:$0xf]
  %v4991 = vld [vmem:[%s4087 + $0x3bc] sm:$0x1]
  %v4992 = vld [vmem:[%s4087 + $0x3c8] sm:$0xe]
  %v4993 = vld [vmem:[%s4087 + $0x3cc] sm:$0xf]
  %v4994 = vld [vmem:[%s4087 + $0x3d0] sm:$0x1]
  %v4995 = vld [vmem:[%s4087 + $0x3dc] sm:$0xe]
  %v4996 = vld [vmem:[%s4087 + $0x3e0] sm:$0xf]
  %v4997 = vld [vmem:[%s4087 + $0x3e4] sm:$0x1]
  %v4998 = vld [vmem:[%s4087 + $0x3f0] sm:$0xe]
  %v4999 = vld [vmem:[%s4087 + $0x3f4] sm:$0xf]
  %v5000 = vld [vmem:[%s4087 + $0x3f8] sm:$0x1]
  %v5001 = vld [vmem:[%s4087 + $0x404] sm:$0xe]
  %v5002 = vld [vmem:[%s4087 + $0x408] sm:$0xf]
  %v5003 = vld [vmem:[%s4087 + $0x40c] sm:$0x1]
  %v5004 = vld [vmem:[%s4087 + $0x418] sm:$0xe]
  %v5005 = vld [vmem:[%s4087 + $0x41c] sm:$0xf]
  %v5006 = vld [vmem:[%s4087 + $0x420] sm:$0x1]
  %v5007 = vld [vmem:[%s4087 + $0x42c] sm:$0xe]
  %v5008 = vld [vmem:[%s4087 + $0x430] sm:$0xf]
  %v5009 = vld [vmem:[%s4087 + $0x434] sm:$0x1]
  %v5010 = vld [vmem:[%s4087 + $0x440] sm:$0xe]
  %v5011 = vld [vmem:[%s4087 + $0x444] sm:$0xf]
  %v5012 = vld [vmem:[%s4087 + $0x448] sm:$0x1]
  %v5013 = vld [vmem:[%s4087 + $0x454] sm:$0xe]
  %v5014 = vld [vmem:[%s4087 + $0x458] sm:$0xf]
  %v5015 = vld [vmem:[%s4087 + $0x45c] sm:$0x1]
  %v5112 = vrot.slane %v4920, 5
  %v5113 = vrot.slane %v5112, 4
  %v5114 = vrot.slane %v4921, 5
  %v5115 = vsel %vm3030, %v5113, %v5114
  %v5116 = vrot.slane %v5114, 4
  %v5117 = vrot.slane %v4922, 5
  %v5118 = vsel %vm3030, %v5116, %v5117
  %v5119 = vrot.slane %v4923, 5
  %v5120 = vrot.slane %v5119, 4
  %v5121 = vrot.slane %v4924, 5
  %v5122 = vsel %vm3030, %v5120, %v5121
  %v5123 = vrot.slane %v5121, 4
  %v5124 = vrot.slane %v4925, 5
  %v5125 = vsel %vm3030, %v5123, %v5124
  %v5126 = vrot.slane %v4926, 5
  %v5127 = vrot.slane %v5126, 4
  %v5128 = vrot.slane %v4927, 5
  %v5129 = vsel %vm3030, %v5127, %v5128
  %v5130 = vrot.slane %v5128, 4
  %v5131 = vrot.slane %v4928, 5
  %v5132 = vsel %vm3030, %v5130, %v5131
  %v5133 = vrot.slane %v4929, 5
  %v5134 = vrot.slane %v5133, 4
  %v5135 = vrot.slane %v4930, 5
  %v5136 = vsel %vm3030, %v5134, %v5135
  %v5137 = vrot.slane %v5135, 4
  %v5138 = vrot.slane %v4931, 5
  %v5139 = vsel %vm3030, %v5137, %v5138
  %v5140 = vrot.slane %v4932, 5
  %v5141 = vrot.slane %v5140, 4
  %v5142 = vrot.slane %v4933, 5
  %v5143 = vsel %vm3030, %v5141, %v5142
  %v5144 = vrot.slane %v5142, 4
  %v5145 = vrot.slane %v4934, 5
  %v5146 = vsel %vm3030, %v5144, %v5145
  %v5147 = vrot.slane %v4935, 5
  %v5148 = vrot.slane %v5147, 4
  %v5149 = vrot.slane %v4936, 5
  %v5150 = vsel %vm3030, %v5148, %v5149
  %v5151 = vrot.slane %v5149, 4
  %v5152 = vrot.slane %v4937, 5
  %v5153 = vsel %vm3030, %v5151, %v5152
  %v5154 = vrot.slane %v4938, 5
  %v5155 = vrot.slane %v5154, 4
  %v5156 = vrot.slane %v4939, 5
  %v5157 = vsel %vm3030, %v5155, %v5156
  %v5158 = vrot.slane %v5156, 4
  %v5159 = vrot.slane %v4940, 5
  %v5160 = vsel %vm3030, %v5158, %v5159
  %v5161 = vrot.slane %v4941, 5
  %v5162 = vrot.slane %v5161, 4
  %v5163 = vrot.slane %v4942, 5
  %v5164 = vsel %vm3030, %v5162, %v5163
  %v5165 = vrot.slane %v5163, 4
  %v5166 = vrot.slane %v4943, 5
  %v5167 = vsel %vm3030, %v5165, %v5166
  %v5168 = vrot.slane %v4944, 5
  %v5169 = vrot.slane %v5168, 4
  %v5170 = vrot.slane %v4945, 5
  %v5171 = vsel %vm3030, %v5169, %v5170
  %v5172 = vrot.slane %v5170, 4
  %v5173 = vrot.slane %v4946, 5
  %v5174 = vsel %vm3030, %v5172, %v5173
  %v5175 = vrot.slane %v4947, 5
  %v5176 = vrot.slane %v5175, 4
  %v5177 = vrot.slane %v4948, 5
  %v5178 = vsel %vm3030, %v5176, %v5177
  %v5179 = vrot.slane %v5177, 4
  %v5180 = vrot.slane %v4949, 5
  %v5181 = vsel %vm3030, %v5179, %v5180
  %v5182 = vrot.slane %v4950, 5
  %v5183 = vrot.slane %v5182, 4
  %v5184 = vrot.slane %v4951, 5
  %v5185 = vsel %vm3030, %v5183, %v5184
  %v5186 = vrot.slane %v5184, 4
  %v5187 = vrot.slane %v4952, 5
  %v5188 = vsel %vm3030, %v5186, %v5187
  %v5189 = vrot.slane %v4953, 5
  %v5190 = vrot.slane %v5189, 4
  %v5191 = vrot.slane %v4954, 5
  %v5192 = vsel %vm3030, %v5190, %v5191
  %v5193 = vrot.slane %v5191, 4
  %v5194 = vrot.slane %v4955, 5
  %v5195 = vsel %vm3030, %v5193, %v5194
  %v5196 = vrot.slane %v4956, 5
  %v5197 = vrot.slane %v5196, 4
  %v5198 = vrot.slane %v4957, 5
  %v5199 = vsel %vm3030, %v5197, %v5198
  %v5200 = vrot.slane %v5198, 4
  %v5201 = vrot.slane %v4958, 5
  %v5202 = vsel %vm3030, %v5200, %v5201
  %v5203 = vrot.slane %v4959, 5
  %v5204 = vrot.slane %v5203, 4
  %v5205 = vrot.slane %v4960, 5
  %v5206 = vsel %vm3030, %v5204, %v5205
  %v5207 = vrot.slane %v5205, 4
  %v5208 = vrot.slane %v4961, 5
  %v5209 = vsel %vm3030, %v5207, %v5208
  %v5210 = vrot.slane %v4962, 5
  %v5211 = vrot.slane %v5210, 4
  %v5212 = vrot.slane %v4963, 5
  %v5213 = vsel %vm3030, %v5211, %v5212
  %v5214 = vrot.slane %v5212, 4
  %v5215 = vrot.slane %v4964, 5
  %v5216 = vsel %vm3030, %v5214, %v5215
  %v5217 = vrot.slane %v4965, 5
  %v5218 = vrot.slane %v5217, 4
  %v5219 = vrot.slane %v4966, 5
  %v5220 = vsel %vm3030, %v5218, %v5219
  %v5221 = vrot.slane %v5219, 4
  %v5222 = vrot.slane %v4967, 5
  %v5223 = vsel %vm3030, %v5221, %v5222
  %v5224 = vrot.slane %v4968, 5
  %v5225 = vrot.slane %v5224, 4
  %v5226 = vrot.slane %v4969, 5
  %v5227 = vsel %vm3030, %v5225, %v5226
  %v5228 = vrot.slane %v5226, 4
  %v5229 = vrot.slane %v4970, 5
  %v5230 = vsel %vm3030, %v5228, %v5229
  %v5231 = vrot.slane %v4971, 5
  %v5232 = vrot.slane %v5231, 4
  %v5233 = vrot.slane %v4972, 5
  %v5234 = vsel %vm3030, %v5232, %v5233
  %v5235 = vrot.slane %v5233, 4
  %v5236 = vrot.slane %v4973, 5
  %v5237 = vsel %vm3030, %v5235, %v5236
  %v5238 = vrot.slane %v4974, 5
  %v5239 = vrot.slane %v5238, 4
  %v5240 = vrot.slane %v4975, 5
  %v5241 = vsel %vm3030, %v5239, %v5240
  %v5242 = vrot.slane %v5240, 4
  %v5243 = vrot.slane %v4976, 5
  %v5244 = vsel %vm3030, %v5242, %v5243
  %v5245 = vrot.slane %v4977, 5
  %v5246 = vrot.slane %v5245, 4
  %v5247 = vrot.slane %v4978, 5
  %v5248 = vsel %vm3030, %v5246, %v5247
  %v5249 = vrot.slane %v5247, 4
  %v5250 = vrot.slane %v4979, 5
  %v5251 = vsel %vm3030, %v5249, %v5250
  %v5252 = vrot.slane %v4980, 5
  %v5253 = vrot.slane %v5252, 4
  %v5254 = vrot.slane %v4981, 5
  %v5255 = vsel %vm3030, %v5253, %v5254
  %v5256 = vrot.slane %v5254, 4
  %v5257 = vrot.slane %v4982, 5
  %v5258 = vsel %vm3030, %v5256, %v5257
  %v5259 = vrot.slane %v4983, 5
  %v5260 = vrot.slane %v5259, 4
  %v5261 = vrot.slane %v4984, 5
  %v5262 = vsel %vm3030, %v5260, %v5261
  %v5263 = vrot.slane %v5261, 4
  %v5264 = vrot.slane %v4985, 5
  %v5265 = vsel %vm3030, %v5263, %v5264
  %v5266 = vrot.slane %v4986, 5
  %v5267 = vrot.slane %v5266, 4
  %v5268 = vrot.slane %v4987, 5
  %v5269 = vsel %vm3030, %v5267, %v5268
  %v5270 = vrot.slane %v5268, 4
  %v5271 = vrot.slane %v4988, 5
  %v5272 = vsel %vm3030, %v5270, %v5271
  %v5273 = vrot.slane %v4989, 5
  %v5274 = vrot.slane %v5273, 4
  %v5275 = vrot.slane %v4990, 5
  %v5276 = vsel %vm3030, %v5274, %v5275
  %v5277 = vrot.slane %v5275, 4
  %v5278 = vrot.slane %v4991, 5
  %v5279 = vsel %vm3030, %v5277, %v5278
  %v5280 = vrot.slane %v4992, 5
  %v5281 = vrot.slane %v5280, 4
  %v5282 = vrot.slane %v4993, 5
  %v5283 = vsel %vm3030, %v5281, %v5282
  %v5284 = vrot.slane %v5282, 4
  %v5285 = vrot.slane %v4994, 5
  %v5286 = vsel %vm3030, %v5284, %v5285
  %v5287 = vrot.slane %v4995, 5
  %v5288 = vrot.slane %v5287, 4
  %v5289 = vrot.slane %v4996, 5
  %v5290 = vsel %vm3030, %v5288, %v5289
  %v5291 = vrot.slane %v5289, 4
  %v5292 = vrot.slane %v4997, 5
  %v5293 = vsel %vm3030, %v5291, %v5292
  %v5294 = vrot.slane %v4998, 5
  %v5295 = vrot.slane %v5294, 4
  %v5296 = vrot.slane %v4999, 5
  %v5297 = vsel %vm3030, %v5295, %v5296
  %v5298 = vrot.slane %v5296, 4
  %v5299 = vrot.slane %v5000, 5
  %v5300 = vsel %vm3030, %v5298, %v5299
  %v5301 = vrot.slane %v5001, 5
  %v5302 = vrot.slane %v5301, 4
  %v5303 = vrot.slane %v5002, 5
  %v5304 = vsel %vm3030, %v5302, %v5303
  %v5305 = vrot.slane %v5303, 4
  %v5306 = vrot.slane %v5003, 5
  %v5307 = vsel %vm3030, %v5305, %v5306
  %v5308 = vrot.slane %v5004, 5
  %v5309 = vrot.slane %v5308, 4
  %v5310 = vrot.slane %v5005, 5
  %v5311 = vsel %vm3030, %v5309, %v5310
  %v5312 = vrot.slane %v5310, 4
  %v5313 = vrot.slane %v5006, 5
  %v5314 = vsel %vm3030, %v5312, %v5313
  %v5315 = vrot.slane %v5007, 5
  %v5316 = vrot.slane %v5315, 4
  %v5317 = vrot.slane %v5008, 5
  %v5318 = vsel %vm3030, %v5316, %v5317
  %v5319 = vrot.slane %v5317, 4
  %v5320 = vrot.slane %v5009, 5
  %v5321 = vsel %vm3030, %v5319, %v5320
  %v5322 = vrot.slane %v5010, 5
  %v5323 = vrot.slane %v5322, 4
  %v5324 = vrot.slane %v5011, 5
  %v5325 = vsel %vm3030, %v5323, %v5324
  %v5326 = vrot.slane %v5324, 4
  %v5327 = vrot.slane %v5012, 5
  %v5328 = vsel %vm3030, %v5326, %v5327
  %v5329 = vrot.slane %v5013, 5
  %v5330 = vrot.slane %v5329, 4
  %v5331 = vrot.slane %v5014, 5
  %v5332 = vsel %vm3030, %v5330, %v5331
  %v5333 = vrot.slane %v5331, 4
  %v5334 = vrot.slane %v5015, 5
  %v5335 = vsel %vm3030, %v5333, %v5334
  %v5336 = vunpack.c.l.b16 %v2199
  %v5337 = vunpack.c.l.b16 %v2202
  %v5338 = vunpack.c.l.b16 %v2206
  %v5339 = vunpack.c.l.b16 %v2209
  %v5340 = vunpack.c.l.b16 %v2213
  %v5341 = vunpack.c.l.b16 %v2216
  %v5342 = vunpack.c.l.b16 %v2220
  %v5343 = vunpack.c.l.b16 %v2223
  %v5344 = vunpack.c.l.b16 %v2227
  %v5345 = vunpack.c.l.b16 %v2230
  %v5346 = vunpack.c.l.b16 %v2234
  %v5347 = vunpack.c.l.b16 %v2237
  %v5348 = vunpack.c.l.b16 %v2241
  %v5349 = vunpack.c.l.b16 %v2244
  %v5350 = vunpack.c.l.b16 %v2248
  %v5351 = vunpack.c.l.b16 %v2251
  %v5352 = vunpack.c.l.b16 %v2255
  %v5353 = vunpack.c.l.b16 %v2258
  %v5354 = vunpack.c.l.b16 %v2262
  %v5355 = vunpack.c.l.b16 %v2265
  %v5356 = vunpack.c.l.b16 %v2269
  %v5357 = vunpack.c.l.b16 %v2272
  %v5358 = vunpack.c.l.b16 %v2276
  %v5359 = vunpack.c.l.b16 %v2279
  %v5360 = vunpack.c.l.b16 %v2283
  %v5361 = vunpack.c.l.b16 %v2286
  %v5362 = vunpack.c.l.b16 %v2290
  %v5363 = vunpack.c.l.b16 %v2293
  %v5364 = vunpack.c.l.b16 %v2297
  %v5365 = vunpack.c.l.b16 %v2300
  %v5366 = vunpack.c.l.b16 %v2304
  %v5367 = vunpack.c.l.b16 %v2307
  %v5368 = vunpack.c.l.b16 %v2311
  %v5369 = vunpack.c.l.b16 %v2314
  %v5370 = vunpack.c.l.b16 %v2318
  %v5371 = vunpack.c.l.b16 %v2321
  %v5372 = vunpack.c.l.b16 %v2325
  %v5373 = vunpack.c.l.b16 %v2328
  %v5374 = vunpack.c.l.b16 %v2332
  %v5375 = vunpack.c.l.b16 %v2335
  %v5376 = vunpack.c.l.b16 %v2339
  %v5377 = vunpack.c.l.b16 %v2342
  %v5378 = vunpack.c.l.b16 %v2346
  %v5379 = vunpack.c.l.b16 %v2349
  %v5380 = vunpack.c.l.b16 %v2353
  %v5381 = vunpack.c.l.b16 %v2356
  %v5382 = vunpack.c.l.b16 %v2360
  %v5383 = vunpack.c.l.b16 %v2363
  %v5384 = vunpack.c.l.b16 %v2367
  %v5385 = vunpack.c.l.b16 %v2370
  %v5386 = vunpack.c.l.b16 %v2374
  %v5387 = vunpack.c.l.b16 %v2377
  %v5388 = vunpack.c.l.b16 %v2381
  %v5389 = vunpack.c.l.b16 %v2384
  %v5390 = vunpack.c.l.b16 %v2388
  %v5391 = vunpack.c.l.b16 %v2391
  %v5392 = vunpack.c.l.b16 %v2395
  %v5393 = vunpack.c.l.b16 %v2398
  %v5394 = vunpack.c.l.b16 %v2402
  %v5395 = vunpack.c.l.b16 %v2405
  %v5396 = vunpack.c.l.b16 %v2409
  %v5397 = vunpack.c.l.b16 %v2412
  %v5398 = vunpack.c.l.b16 %v2416
  %v5399 = vunpack.c.l.b16 %v2419
  %v5400 = vpack.c.b16 %v5337, %v5336
  %v5401 = vpack.c.b16 %v5339, %v5338
  %v5402 = vpack.c.b16 %v5341, %v5340
  %v5403 = vpack.c.b16 %v5343, %v5342
  %v5404 = vpack.c.b16 %v5345, %v5344
  %v5405 = vpack.c.b16 %v5347, %v5346
  %v5406 = vpack.c.b16 %v5349, %v5348
  %v5407 = vpack.c.b16 %v5351, %v5350
  %v5408 = vpack.c.b16 %v5353, %v5352
  %v5409 = vpack.c.b16 %v5355, %v5354
  %v5410 = vpack.c.b16 %v5357, %v5356
  %v5411 = vpack.c.b16 %v5359, %v5358
  %v5412 = vpack.c.b16 %v5361, %v5360
  %v5413 = vpack.c.b16 %v5363, %v5362
  %v5414 = vpack.c.b16 %v5365, %v5364
  %v5415 = vpack.c.b16 %v5367, %v5366
  %v5416 = vpack.c.b16 %v5369, %v5368
  %v5417 = vpack.c.b16 %v5371, %v5370
  %v5418 = vpack.c.b16 %v5373, %v5372
  %v5419 = vpack.c.b16 %v5375, %v5374
  %v5420 = vpack.c.b16 %v5377, %v5376
  %v5421 = vpack.c.b16 %v5379, %v5378
  %v5422 = vpack.c.b16 %v5381, %v5380
  %v5423 = vpack.c.b16 %v5383, %v5382
  %v5424 = vpack.c.b16 %v5385, %v5384
  %v5425 = vpack.c.b16 %v5387, %v5386
  %v5426 = vpack.c.b16 %v5389, %v5388
  %v5427 = vpack.c.b16 %v5391, %v5390
  %v5428 = vpack.c.b16 %v5393, %v5392
  %v5429 = vpack.c.b16 %v5395, %v5394
  %v5430 = vpack.c.b16 %v5397, %v5396
  %v5431 = vpack.c.b16 %v5399, %v5398
  %v5432 = vunpack.c.l.b16 %v2615
  %v5433 = vunpack.c.l.b16 %v2618
  %v5434 = vunpack.c.l.b16 %v2622
  %v5435 = vunpack.c.l.b16 %v2625
  %v5436 = vunpack.c.l.b16 %v2629
  %v5437 = vunpack.c.l.b16 %v2632
  %v5438 = vunpack.c.l.b16 %v2636
  %v5439 = vunpack.c.l.b16 %v2639
  %v5440 = vunpack.c.l.b16 %v2643
  %v5441 = vunpack.c.l.b16 %v2646
  %v5442 = vunpack.c.l.b16 %v2650
  %v5443 = vunpack.c.l.b16 %v2653
  %v5444 = vunpack.c.l.b16 %v2657
  %v5445 = vunpack.c.l.b16 %v2660
  %v5446 = vunpack.c.l.b16 %v2664
  %v5447 = vunpack.c.l.b16 %v2667
  %v5448 = vunpack.c.l.b16 %v2671
  %v5449 = vunpack.c.l.b16 %v2674
  %v5450 = vunpack.c.l.b16 %v2678
  %v5451 = vunpack.c.l.b16 %v2681
  %v5452 = vunpack.c.l.b16 %v2685
  %v5453 = vunpack.c.l.b16 %v2688
  %v5454 = vunpack.c.l.b16 %v2692
  %v5455 = vunpack.c.l.b16 %v2695
  %v5456 = vunpack.c.l.b16 %v2699
  %v5457 = vunpack.c.l.b16 %v2702
  %v5458 = vunpack.c.l.b16 %v2706
  %v5459 = vunpack.c.l.b16 %v2709
  %v5460 = vunpack.c.l.b16 %v2713
  %v5461 = vunpack.c.l.b16 %v2716
  %v5462 = vunpack.c.l.b16 %v2720
  %v5463 = vunpack.c.l.b16 %v2723
  %v5464 = vunpack.c.l.b16 %v2727
  %v5465 = vunpack.c.l.b16 %v2730
  %v5466 = vunpack.c.l.b16 %v2734
  %v5467 = vunpack.c.l.b16 %v2737
  %v5468 = vunpack.c.l.b16 %v2741
  %v5469 = vunpack.c.l.b16 %v2744
  %v5470 = vunpack.c.l.b16 %v2748
  %v5471 = vunpack.c.l.b16 %v2751
  %v5472 = vunpack.c.l.b16 %v2755
  %v5473 = vunpack.c.l.b16 %v2758
  %v5474 = vunpack.c.l.b16 %v2762
  %v5475 = vunpack.c.l.b16 %v2765
  %v5476 = vunpack.c.l.b16 %v2769
  %v5477 = vunpack.c.l.b16 %v2772
  %v5478 = vunpack.c.l.b16 %v2776
  %v5479 = vunpack.c.l.b16 %v2779
  %v5480 = vunpack.c.l.b16 %v2783
  %v5481 = vunpack.c.l.b16 %v2786
  %v5482 = vunpack.c.l.b16 %v2790
  %v5483 = vunpack.c.l.b16 %v2793
  %v5484 = vunpack.c.l.b16 %v2797
  %v5485 = vunpack.c.l.b16 %v2800
  %v5486 = vunpack.c.l.b16 %v2804
  %v5487 = vunpack.c.l.b16 %v2807
  %v5488 = vunpack.c.l.b16 %v2811
  %v5489 = vunpack.c.l.b16 %v2814
  %v5490 = vunpack.c.l.b16 %v2818
  %v5491 = vunpack.c.l.b16 %v2821
  %v5492 = vunpack.c.l.b16 %v2825
  %v5493 = vunpack.c.l.b16 %v2828
  %v5494 = vunpack.c.l.b16 %v2832
  %v5495 = vunpack.c.l.b16 %v2835
  %v5496 = vpack.c.b16 %v5433, %v5432
  %v5497 = vpack.c.b16 %v5435, %v5434
  %v5498 = vpack.c.b16 %v5437, %v5436
  %v5499 = vpack.c.b16 %v5439, %v5438
  %v5500 = vpack.c.b16 %v5441, %v5440
  %v5501 = vpack.c.b16 %v5443, %v5442
  %v5502 = vpack.c.b16 %v5445, %v5444
  %v5503 = vpack.c.b16 %v5447, %v5446
  %v5504 = vpack.c.b16 %v5449, %v5448
  %v5505 = vpack.c.b16 %v5451, %v5450
  %v5506 = vpack.c.b16 %v5453, %v5452
  %v5507 = vpack.c.b16 %v5455, %v5454
  %v5508 = vpack.c.b16 %v5457, %v5456
  %v5509 = vpack.c.b16 %v5459, %v5458
  %v5510 = vpack.c.b16 %v5461, %v5460
  %v5511 = vpack.c.b16 %v5463, %v5462
  %v5512 = vpack.c.b16 %v5465, %v5464
  %v5513 = vpack.c.b16 %v5467, %v5466
  %v5514 = vpack.c.b16 %v5469, %v5468
  %v5515 = vpack.c.b16 %v5471, %v5470
  %v5516 = vpack.c.b16 %v5473, %v5472
  %v5517 = vpack.c.b16 %v5475, %v5474
  %v5518 = vpack.c.b16 %v5477, %v5476
  %v5519 = vpack.c.b16 %v5479, %v5478
  %v5520 = vpack.c.b16 %v5481, %v5480
  %v5521 = vpack.c.b16 %v5483, %v5482
  %v5522 = vpack.c.b16 %v5485, %v5484
  %v5523 = vpack.c.b16 %v5487, %v5486
  %v5524 = vpack.c.b16 %v5489, %v5488
  %v5525 = vpack.c.b16 %v5491, %v5490
  %v5526 = vpack.c.b16 %v5493, %v5492
  %v5527 = vpack.c.b16 %v5495, %v5494
  %5528 = vrot.lane.b32.xlu0 %v5496, 16
  %v5529 = vpop.permute.xlu0 %5528
  %5530 = vrot.lane.b32.xlu0 %v5497, 16
  %v5531 = vpop.permute.xlu0 %5530
  %5532 = vrot.lane.b32.xlu0 %v5498, 16
  %v5533 = vpop.permute.xlu0 %5532
  %5534 = vrot.lane.b32.xlu0 %v5499, 16
  %v5535 = vpop.permute.xlu0 %5534
  %5536 = vrot.lane.b32.xlu0 %v5500, 16
  %v5537 = vpop.permute.xlu0 %5536
  %5538 = vrot.lane.b32.xlu0 %v5501, 16
  %v5539 = vpop.permute.xlu0 %5538
  %5540 = vrot.lane.b32.xlu0 %v5502, 16
  %v5541 = vpop.permute.xlu0 %5540
  %5542 = vrot.lane.b32.xlu0 %v5503, 16
  %v5543 = vpop.permute.xlu0 %5542
  %5544 = vrot.lane.b32.xlu0 %v5504, 16
  %v5545 = vpop.permute.xlu0 %5544
  %5546 = vrot.lane.b32.xlu0 %v5505, 16
  %v5547 = vpop.permute.xlu0 %5546
  %5548 = vrot.lane.b32.xlu0 %v5506, 16
  %v5549 = vpop.permute.xlu0 %5548
  %5550 = vrot.lane.b32.xlu0 %v5507, 16
  %v5551 = vpop.permute.xlu0 %5550
  %5552 = vrot.lane.b32.xlu0 %v5508, 16
  %v5553 = vpop.permute.xlu0 %5552
  %5554 = vrot.lane.b32.xlu0 %v5509, 16
  %v5555 = vpop.permute.xlu0 %5554
  %5556 = vrot.lane.b32.xlu0 %v5510, 16
  %v5557 = vpop.permute.xlu0 %5556
  %5558 = vrot.lane.b32.xlu0 %v5511, 16
  %v5559 = vpop.permute.xlu0 %5558
  %5560 = vrot.lane.b32.xlu0 %v5512, 16
  %v5561 = vpop.permute.xlu0 %5560
  %5562 = vrot.lane.b32.xlu0 %v5513, 16
  %v5563 = vpop.permute.xlu0 %5562
  %5564 = vrot.lane.b32.xlu0 %v5514, 16
  %v5565 = vpop.permute.xlu0 %5564
  %5566 = vrot.lane.b32.xlu0 %v5515, 16
  %v5567 = vpop.permute.xlu0 %5566
  %5568 = vrot.lane.b32.xlu0 %v5516, 16
  %v5569 = vpop.permute.xlu0 %5568
  %5570 = vrot.lane.b32.xlu0 %v5517, 16
  %v5571 = vpop.permute.xlu0 %5570
  %5572 = vrot.lane.b32.xlu0 %v5518, 16
  %v5573 = vpop.permute.xlu0 %5572
  %5574 = vrot.lane.b32.xlu0 %v5519, 16
  %v5575 = vpop.permute.xlu0 %5574
  %5576 = vrot.lane.b32.xlu0 %v5520, 16
  %v5577 = vpop.permute.xlu0 %5576
  %5578 = vrot.lane.b32.xlu0 %v5521, 16
  %v5579 = vpop.permute.xlu0 %5578
  %5580 = vrot.lane.b32.xlu0 %v5522, 16
  %v5581 = vpop.permute.xlu0 %5580
  %5582 = vrot.lane.b32.xlu0 %v5523, 16
  %v5583 = vpop.permute.xlu0 %5582
  %5584 = vrot.lane.b32.xlu0 %v5524, 16
  %v5585 = vpop.permute.xlu0 %5584
  %5586 = vrot.lane.b32.xlu0 %v5525, 16
  %v5587 = vpop.permute.xlu0 %5586
  %5588 = vrot.lane.b32.xlu0 %v5526, 16
  %v5589 = vpop.permute.xlu0 %5588
  %5590 = vrot.lane.b32.xlu0 %v5527, 16
  %v5591 = vpop.permute.xlu0 %5590
  %v5592 = vunpack.c.l.b16 %v3034
  %v5593 = vunpack.c.l.b16 %v3037
  %v5594 = vunpack.c.l.b16 %v3041
  %v5595 = vunpack.c.l.b16 %v3044
  %v5596 = vunpack.c.l.b16 %v3048
  %v5597 = vunpack.c.l.b16 %v3051
  %v5598 = vunpack.c.l.b16 %v3055
  %v5599 = vunpack.c.l.b16 %v3058
  %v5600 = vunpack.c.l.b16 %v3062
  %v5601 = vunpack.c.l.b16 %v3065
  %v5602 = vunpack.c.l.b16 %v3069
  %v5603 = vunpack.c.l.b16 %v3072
  %v5604 = vunpack.c.l.b16 %v3076
  %v5605 = vunpack.c.l.b16 %v3079
  %v5606 = vunpack.c.l.b16 %v3083
  %v5607 = vunpack.c.l.b16 %v3086
  %v5608 = vunpack.c.l.b16 %v3090
  %v5609 = vunpack.c.l.b16 %v3093
  %v5610 = vunpack.c.l.b16 %v3097
  %v5611 = vunpack.c.l.b16 %v3100
  %v5612 = vunpack.c.l.b16 %v3104
  %v5613 = vunpack.c.l.b16 %v3107
  %v5614 = vunpack.c.l.b16 %v3111
  %v5615 = vunpack.c.l.b16 %v3114
  %v5616 = vunpack.c.l.b16 %v3118
  %v5617 = vunpack.c.l.b16 %v3121
  %v5618 = vunpack.c.l.b16 %v3125
  %v5619 = vunpack.c.l.b16 %v3128
  %v5620 = vunpack.c.l.b16 %v3132
  %v5621 = vunpack.c.l.b16 %v3135
  %v5622 = vunpack.c.l.b16 %v3139
  %v5623 = vunpack.c.l.b16 %v3142
  %v5624 = vunpack.c.l.b16 %v3146
  %v5625 = vunpack.c.l.b16 %v3149
  %v5626 = vunpack.c.l.b16 %v3153
  %v5627 = vunpack.c.l.b16 %v3156
  %v5628 = vunpack.c.l.b16 %v3160
  %v5629 = vunpack.c.l.b16 %v3163
  %v5630 = vunpack.c.l.b16 %v3167
  %v5631 = vunpack.c.l.b16 %v3170
  %v5632 = vunpack.c.l.b16 %v3174
  %v5633 = vunpack.c.l.b16 %v3177
  %v5634 = vunpack.c.l.b16 %v3181
  %v5635 = vunpack.c.l.b16 %v3184
  %v5636 = vunpack.c.l.b16 %v3188
  %v5637 = vunpack.c.l.b16 %v3191
  %v5638 = vunpack.c.l.b16 %v3195
  %v5639 = vunpack.c.l.b16 %v3198
  %v5640 = vunpack.c.l.b16 %v3202
  %v5641 = vunpack.c.l.b16 %v3205
  %v5642 = vunpack.c.l.b16 %v3209
  %v5643 = vunpack.c.l.b16 %v3212
  %v5644 = vunpack.c.l.b16 %v3216
  %v5645 = vunpack.c.l.b16 %v3219
  %v5646 = vunpack.c.l.b16 %v3223
  %v5647 = vunpack.c.l.b16 %v3226
  %v5648 = vunpack.c.l.b16 %v3230
  %v5649 = vunpack.c.l.b16 %v3233
  %v5650 = vunpack.c.l.b16 %v3237
  %v5651 = vunpack.c.l.b16 %v3240
  %v5652 = vunpack.c.l.b16 %v3244
  %v5653 = vunpack.c.l.b16 %v3247
  %v5654 = vunpack.c.l.b16 %v3251
  %v5655 = vunpack.c.l.b16 %v3254
  %v5656 = vpack.c.b16 %v5593, %v5592
  %v5657 = vpack.c.b16 %v5595, %v5594
  %v5658 = vpack.c.b16 %v5597, %v5596
  %v5659 = vpack.c.b16 %v5599, %v5598
  %v5660 = vpack.c.b16 %v5601, %v5600
  %v5661 = vpack.c.b16 %v5603, %v5602
  %v5662 = vpack.c.b16 %v5605, %v5604
  %v5663 = vpack.c.b16 %v5607, %v5606
  %v5664 = vpack.c.b16 %v5609, %v5608
  %v5665 = vpack.c.b16 %v5611, %v5610
  %v5666 = vpack.c.b16 %v5613, %v5612
  %v5667 = vpack.c.b16 %v5615, %v5614
  %v5668 = vpack.c.b16 %v5617, %v5616
  %v5669 = vpack.c.b16 %v5619, %v5618
  %v5670 = vpack.c.b16 %v5621, %v5620
  %v5671 = vpack.c.b16 %v5623, %v5622
  %v5672 = vpack.c.b16 %v5625, %v5624
  %v5673 = vpack.c.b16 %v5627, %v5626
  %v5674 = vpack.c.b16 %v5629, %v5628
  %v5675 = vpack.c.b16 %v5631, %v5630
  %v5676 = vpack.c.b16 %v5633, %v5632
  %v5677 = vpack.c.b16 %v5635, %v5634
  %v5678 = vpack.c.b16 %v5637, %v5636
  %v5679 = vpack.c.b16 %v5639, %v5638
  %v5680 = vpack.c.b16 %v5641, %v5640
  %v5681 = vpack.c.b16 %v5643, %v5642
  %v5682 = vpack.c.b16 %v5645, %v5644
  %v5683 = vpack.c.b16 %v5647, %v5646
  %v5684 = vpack.c.b16 %v5649, %v5648
  %v5685 = vpack.c.b16 %v5651, %v5650
  %v5686 = vpack.c.b16 %v5653, %v5652
  %v5687 = vpack.c.b16 %v5655, %v5654
  %5688 = vrot.lane.b32.xlu0 %v5656, 32
  %v5689 = vpop.permute.xlu0 %5688
  %5690 = vrot.lane.b32.xlu0 %v5657, 32
  %v5691 = vpop.permute.xlu0 %5690
  %5692 = vrot.lane.b32.xlu0 %v5658, 32
  %v5693 = vpop.permute.xlu0 %5692
  %5694 = vrot.lane.b32.xlu0 %v5659, 32
  %v5695 = vpop.permute.xlu0 %5694
  %5696 = vrot.lane.b32.xlu0 %v5660, 32
  %v5697 = vpop.permute.xlu0 %5696
  %5698 = vrot.lane.b32.xlu0 %v5661, 32
  %v5699 = vpop.permute.xlu0 %5698
  %5700 = vrot.lane.b32.xlu0 %v5662, 32
  %v5701 = vpop.permute.xlu0 %5700
  %5702 = vrot.lane.b32.xlu0 %v5663, 32
  %v5703 = vpop.permute.xlu0 %5702
  %5704 = vrot.lane.b32.xlu0 %v5664, 32
  %v5705 = vpop.permute.xlu0 %5704
  %5706 = vrot.lane.b32.xlu0 %v5665, 32
  %v5707 = vpop.permute.xlu0 %5706
  %5708 = vrot.lane.b32.xlu0 %v5666, 32
  %v5709 = vpop.permute.xlu0 %5708
  %5710 = vrot.lane.b32.xlu0 %v5667, 32
  %v5711 = vpop.permute.xlu0 %5710
  %5712 = vrot.lane.b32.xlu0 %v5668, 32
  %v5713 = vpop.permute.xlu0 %5712
  %5714 = vrot.lane.b32.xlu0 %v5669, 32
  %v5715 = vpop.permute.xlu0 %5714
  %5716 = vrot.lane.b32.xlu0 %v5670, 32
  %v5717 = vpop.permute.xlu0 %5716
  %5718 = vrot.lane.b32.xlu0 %v5671, 32
  %v5719 = vpop.permute.xlu0 %5718
  %5720 = vrot.lane.b32.xlu0 %v5672, 32
  %v5721 = vpop.permute.xlu0 %5720
  %5722 = vrot.lane.b32.xlu0 %v5673, 32
  %v5723 = vpop.permute.xlu0 %5722
  %5724 = vrot.lane.b32.xlu0 %v5674, 32
  %v5725 = vpop.permute.xlu0 %5724
  %5726 = vrot.lane.b32.xlu0 %v5675, 32
  %v5727 = vpop.permute.xlu0 %5726
  %5728 = vrot.lane.b32.xlu0 %v5676, 32
  %v5729 = vpop.permute.xlu0 %5728
  %5730 = vrot.lane.b32.xlu0 %v5677, 32
  %v5731 = vpop.permute.xlu0 %5730
  %5732 = vrot.lane.b32.xlu0 %v5678, 32
  %v5733 = vpop.permute.xlu0 %5732
  %5734 = vrot.lane.b32.xlu0 %v5679, 32
  %v5735 = vpop.permute.xlu0 %5734
  %5736 = vrot.lane.b32.xlu0 %v5680, 32
  %v5737 = vpop.permute.xlu0 %5736
  %5738 = vrot.lane.b32.xlu0 %v5681, 32
  %v5739 = vpop.permute.xlu0 %5738
  %5740 = vrot.lane.b32.xlu0 %v5682, 32
  %v5741 = vpop.permute.xlu0 %5740
  %5742 = vrot.lane.b32.xlu0 %v5683, 32
  %v5743 = vpop.permute.xlu0 %5742
  %5744 = vrot.lane.b32.xlu0 %v5684, 32
  %v5745 = vpop.permute.xlu0 %5744
  %5746 = vrot.lane.b32.xlu0 %v5685, 32
  %v5747 = vpop.permute.xlu0 %5746
  %5748 = vrot.lane.b32.xlu0 %v5686, 32
  %v5749 = vpop.permute.xlu0 %5748
  %5750 = vrot.lane.b32.xlu0 %v5687, 32
  %v5751 = vpop.permute.xlu0 %5750
  %v5752 = vunpack.c.l.b16 %v3450
  %v5753 = vunpack.c.l.b16 %v3453
  %v5754 = vunpack.c.l.b16 %v3457
  %v5755 = vunpack.c.l.b16 %v3460
  %v5756 = vunpack.c.l.b16 %v3464
  %v5757 = vunpack.c.l.b16 %v3467
  %v5758 = vunpack.c.l.b16 %v3471
  %v5759 = vunpack.c.l.b16 %v3474
  %v5760 = vunpack.c.l.b16 %v3478
  %v5761 = vunpack.c.l.b16 %v3481
  %v5762 = vunpack.c.l.b16 %v3485
  %v5763 = vunpack.c.l.b16 %v3488
  %v5764 = vunpack.c.l.b16 %v3492
  %v5765 = vunpack.c.l.b16 %v3495
  %v5766 = vunpack.c.l.b16 %v3499
  %v5767 = vunpack.c.l.b16 %v3502
  %v5768 = vunpack.c.l.b16 %v3506
  %v5769 = vunpack.c.l.b16 %v3509
  %v5770 = vunpack.c.l.b16 %v3513
  %v5771 = vunpack.c.l.b16 %v3516
  %v5772 = vunpack.c.l.b16 %v3520
  %v5773 = vunpack.c.l.b16 %v3523
  %v5774 = vunpack.c.l.b16 %v3527
  %v5775 = vunpack.c.l.b16 %v3530
  %v5776 = vunpack.c.l.b16 %v3534
  %v5777 = vunpack.c.l.b16 %v3537
  %v5778 = vunpack.c.l.b16 %v3541
  %v5779 = vunpack.c.l.b16 %v3544
  %v5780 = vunpack.c.l.b16 %v3548
  %v5781 = vunpack.c.l.b16 %v3551
  %v5782 = vunpack.c.l.b16 %v3555
  %v5783 = vunpack.c.l.b16 %v3558
  %v5784 = vunpack.c.l.b16 %v3562
  %v5785 = vunpack.c.l.b16 %v3565
  %v5786 = vunpack.c.l.b16 %v3569
  %v5787 = vunpack.c.l.b16 %v3572
  %v5788 = vunpack.c.l.b16 %v3576
  %v5789 = vunpack.c.l.b16 %v3579
  %v5790 = vunpack.c.l.b16 %v3583
  %v5791 = vunpack.c.l.b16 %v3586
  %v5792 = vunpack.c.l.b16 %v3590
  %v5793 = vunpack.c.l.b16 %v3593
  %v5794 = vunpack.c.l.b16 %v3597
  %v5795 = vunpack.c.l.b16 %v3600
  %v5796 = vunpack.c.l.b16 %v3604
  %v5797 = vunpack.c.l.b16 %v3607
  %v5798 = vunpack.c.l.b16 %v3611
  %v5799 = vunpack.c.l.b16 %v3614
  %v5800 = vunpack.c.l.b16 %v3618
  %v5801 = vunpack.c.l.b16 %v3621
  %v5802 = vunpack.c.l.b16 %v3625
  %v5803 = vunpack.c.l.b16 %v3628
  %v5804 = vunpack.c.l.b16 %v3632
  %v5805 = vunpack.c.l.b16 %v3635
  %v5806 = vunpack.c.l.b16 %v3639
  %v5807 = vunpack.c.l.b16 %v3642
  %v5808 = vunpack.c.l.b16 %v3646
  %v5809 = vunpack.c.l.b16 %v3649
  %v5810 = vunpack.c.l.b16 %v3653
  %v5811 = vunpack.c.l.b16 %v3656
  %v5812 = vunpack.c.l.b16 %v3660
  %v5813 = vunpack.c.l.b16 %v3663
  %v5814 = vunpack.c.l.b16 %v3667
  %v5815 = vunpack.c.l.b16 %v3670
  %v5816 = vpack.c.b16 %v5753, %v5752
  %v5817 = vpack.c.b16 %v5755, %v5754
  %v5818 = vpack.c.b16 %v5757, %v5756
  %v5819 = vpack.c.b16 %v5759, %v5758
  %v5820 = vpack.c.b16 %v5761, %v5760
  %v5821 = vpack.c.b16 %v5763, %v5762
  %v5822 = vpack.c.b16 %v5765, %v5764
  %v5823 = vpack.c.b16 %v5767, %v5766
  %v5824 = vpack.c.b16 %v5769, %v5768
  %v5825 = vpack.c.b16 %v5771, %v5770
  %v5826 = vpack.c.b16 %v5773, %v5772
  %v5827 = vpack.c.b16 %v5775, %v5774
  %v5828 = vpack.c.b16 %v5777, %v5776
  %v5829 = vpack.c.b16 %v5779, %v5778
  %v5830 = vpack.c.b16 %v5781, %v5780
  %v5831 = vpack.c.b16 %v5783, %v5782
  %v5832 = vpack.c.b16 %v5785, %v5784
  %v5833 = vpack.c.b16 %v5787, %v5786
  %v5834 = vpack.c.b16 %v5789, %v5788
  %v5835 = vpack.c.b16 %v5791, %v5790
  %v5836 = vpack.c.b16 %v5793, %v5792
  %v5837 = vpack.c.b16 %v5795, %v5794
  %v5838 = vpack.c.b16 %v5797, %v5796
  %v5839 = vpack.c.b16 %v5799, %v5798
  %v5840 = vpack.c.b16 %v5801, %v5800
  %v5841 = vpack.c.b16 %v5803, %v5802
  %v5842 = vpack.c.b16 %v5805, %v5804
  %v5843 = vpack.c.b16 %v5807, %v5806
  %v5844 = vpack.c.b16 %v5809, %v5808
  %v5845 = vpack.c.b16 %v5811, %v5810
  %v5846 = vpack.c.b16 %v5813, %v5812
  %v5847 = vpack.c.b16 %v5815, %v5814
  %5848 = vrot.lane.b32.xlu0 %v5816, 48
  %v5849 = vpop.permute.xlu0 %5848
  %5850 = vrot.lane.b32.xlu0 %v5817, 48
  %v5851 = vpop.permute.xlu0 %5850
  %5852 = vrot.lane.b32.xlu0 %v5818, 48
  %v5853 = vpop.permute.xlu0 %5852
  %5854 = vrot.lane.b32.xlu0 %v5819, 48
  %v5855 = vpop.permute.xlu0 %5854
  %5856 = vrot.lane.b32.xlu0 %v5820, 48
  %v5857 = vpop.permute.xlu0 %5856
  %5858 = vrot.lane.b32.xlu0 %v5821, 48
  %v5859 = vpop.permute.xlu0 %5858
  %5860 = vrot.lane.b32.xlu0 %v5822, 48
  %v5861 = vpop.permute.xlu0 %5860
  %5862 = vrot.lane.b32.xlu0 %v5823, 48
  %v5863 = vpop.permute.xlu0 %5862
  %5864 = vrot.lane.b32.xlu0 %v5824, 48
  %v5865 = vpop.permute.xlu0 %5864
  %5866 = vrot.lane.b32.xlu0 %v5825, 48
  %v5867 = vpop.permute.xlu0 %5866
  %5868 = vrot.lane.b32.xlu0 %v5826, 48
  %v5869 = vpop.permute.xlu0 %5868
  %5870 = vrot.lane.b32.xlu0 %v5827, 48
  %v5871 = vpop.permute.xlu0 %5870
  %5872 = vrot.lane.b32.xlu0 %v5828, 48
  %v5873 = vpop.permute.xlu0 %5872
  %5874 = vrot.lane.b32.xlu0 %v5829, 48
  %v5875 = vpop.permute.xlu0 %5874
  %5876 = vrot.lane.b32.xlu0 %v5830, 48
  %v5877 = vpop.permute.xlu0 %5876
  %5878 = vrot.lane.b32.xlu0 %v5831, 48
  %v5879 = vpop.permute.xlu0 %5878
  %5880 = vrot.lane.b32.xlu0 %v5832, 48
  %v5881 = vpop.permute.xlu0 %5880
  %5882 = vrot.lane.b32.xlu0 %v5833, 48
  %v5883 = vpop.permute.xlu0 %5882
  %5884 = vrot.lane.b32.xlu0 %v5834, 48
  %v5885 = vpop.permute.xlu0 %5884
  %5886 = vrot.lane.b32.xlu0 %v5835, 48
  %v5887 = vpop.permute.xlu0 %5886
  %5888 = vrot.lane.b32.xlu0 %v5836, 48
  %v5889 = vpop.permute.xlu0 %5888
  %5890 = vrot.lane.b32.xlu0 %v5837, 48
  %v5891 = vpop.permute.xlu0 %5890
  %5892 = vrot.lane.b32.xlu0 %v5838, 48
  %v5893 = vpop.permute.xlu0 %5892
  %5894 = vrot.lane.b32.xlu0 %v5839, 48
  %v5895 = vpop.permute.xlu0 %5894
  %5896 = vrot.lane.b32.xlu0 %v5840, 48
  %v5897 = vpop.permute.xlu0 %5896
  %5898 = vrot.lane.b32.xlu0 %v5841, 48
  %v5899 = vpop.permute.xlu0 %5898
  %5900 = vrot.lane.b32.xlu0 %v5842, 48
  %v5901 = vpop.permute.xlu0 %5900
  %5902 = vrot.lane.b32.xlu0 %v5843, 48
  %v5903 = vpop.permute.xlu0 %5902
  %5904 = vrot.lane.b32.xlu0 %v5844, 48
  %v5905 = vpop.permute.xlu0 %5904
  %5906 = vrot.lane.b32.xlu0 %v5845, 48
  %v5907 = vpop.permute.xlu0 %5906
  %5908 = vrot.lane.b32.xlu0 %v5846, 48
  %v5909 = vpop.permute.xlu0 %5908
  %5910 = vrot.lane.b32.xlu0 %v5847, 48
  %v5911 = vpop.permute.xlu0 %5910
  %5912 = vrot.lane.b32.xlu0 %v1697, 64
  %v5913 = vpop.permute.xlu0 %5912
  %5914 = vrot.lane.b32.xlu0 %v1698, 64
  %v5915 = vpop.permute.xlu0 %5914
  %5916 = vrot.lane.b32.xlu0 %v1699, 64
  %v5917 = vpop.permute.xlu0 %5916
  %5918 = vrot.lane.b32.xlu0 %v1700, 64
  %v5919 = vpop.permute.xlu0 %5918
  %5920 = vrot.lane.b32.xlu0 %v1701, 64
  %v5921 = vpop.permute.xlu0 %5920
  %5922 = vrot.lane.b32.xlu0 %v1702, 64
  %v5923 = vpop.permute.xlu0 %5922
  %5924 = vrot.lane.b32.xlu0 %v1703, 64
  %v5925 = vpop.permute.xlu0 %5924
  %5926 = vrot.lane.b32.xlu0 %v1704, 64
  %v5927 = vpop.permute.xlu0 %5926
  %5928 = vrot.lane.b32.xlu0 %v1705, 64
  %v5929 = vpop.permute.xlu0 %5928
  %5930 = vrot.lane.b32.xlu0 %v1706, 64
  %v5931 = vpop.permute.xlu0 %5930
  %5932 = vrot.lane.b32.xlu0 %v1707, 64
  %v5933 = vpop.permute.xlu0 %5932
  %5934 = vrot.lane.b32.xlu0 %v1708, 64
  %v5935 = vpop.permute.xlu0 %5934
  %5936 = vrot.lane.b32.xlu0 %v1709, 64
  %v5937 = vpop.permute.xlu0 %5936
  %5938 = vrot.lane.b32.xlu0 %v1710, 64
  %v5939 = vpop.permute.xlu0 %5938
  %5940 = vrot.lane.b32.xlu0 %v1711, 64
  %v5941 = vpop.permute.xlu0 %5940
  %5942 = vrot.lane.b32.xlu0 %v1712, 64
  %v5943 = vpop.permute.xlu0 %5942
  %5944 = vrot.lane.b32.xlu0 %v1713, 64
  %v5945 = vpop.permute.xlu0 %5944
  %5946 = vrot.lane.b32.xlu0 %v1714, 64
  %v5947 = vpop.permute.xlu0 %5946
  %5948 = vrot.lane.b32.xlu0 %v1715, 64
  %v5949 = vpop.permute.xlu0 %5948
  %5950 = vrot.lane.b32.xlu0 %v1716, 64
  %v5951 = vpop.permute.xlu0 %5950
  %5952 = vrot.lane.b32.xlu0 %v1717, 64
  %v5953 = vpop.permute.xlu0 %5952
  %5954 = vrot.lane.b32.xlu0 %v1718, 64
  %v5955 = vpop.permute.xlu0 %5954
  %5956 = vrot.lane.b32.xlu0 %v1719, 64
  %v5957 = vpop.permute.xlu0 %5956
  %5958 = vrot.lane.b32.xlu0 %v1720, 64
  %v5959 = vpop.permute.xlu0 %5958
  %5960 = vrot.lane.b32.xlu0 %v1721, 64
  %v5961 = vpop.permute.xlu0 %5960
  %5962 = vrot.lane.b32.xlu0 %v1722, 64
  %v5963 = vpop.permute.xlu0 %5962
  %5964 = vrot.lane.b32.xlu0 %v1723, 64
  %v5965 = vpop.permute.xlu0 %5964
  %5966 = vrot.lane.b32.xlu0 %v1724, 64
  %v5967 = vpop.permute.xlu0 %5966
  %5968 = vrot.lane.b32.xlu0 %v1725, 64
  %v5969 = vpop.permute.xlu0 %5968
  %5970 = vrot.lane.b32.xlu0 %v1726, 64
  %v5971 = vpop.permute.xlu0 %5970
  %5972 = vrot.lane.b32.xlu0 %v1727, 64
  %v5973 = vpop.permute.xlu0 %5972
  %5974 = vrot.lane.b32.xlu0 %v1728, 64
  %v5975 = vpop.permute.xlu0 %5974
  %v5976 = vunpack.c.l.b16 %v3866
  %v5977 = vunpack.c.l.b16 %v3869
  %v5978 = vunpack.c.l.b16 %v3873
  %v5979 = vunpack.c.l.b16 %v3876
  %v5980 = vunpack.c.l.b16 %v3880
  %v5981 = vunpack.c.l.b16 %v3883
  %v5982 = vunpack.c.l.b16 %v3887
  %v5983 = vunpack.c.l.b16 %v3890
  %v5984 = vunpack.c.l.b16 %v3894
  %v5985 = vunpack.c.l.b16 %v3897
  %v5986 = vunpack.c.l.b16 %v3901
  %v5987 = vunpack.c.l.b16 %v3904
  %v5988 = vunpack.c.l.b16 %v3908
  %v5989 = vunpack.c.l.b16 %v3911
  %v5990 = vunpack.c.l.b16 %v3915
  %v5991 = vunpack.c.l.b16 %v3918
  %v5992 = vunpack.c.l.b16 %v3922
  %v5993 = vunpack.c.l.b16 %v3925
  %v5994 = vunpack.c.l.b16 %v3929
  %v5995 = vunpack.c.l.b16 %v3932
  %v5996 = vunpack.c.l.b16 %v3936
  %v5997 = vunpack.c.l.b16 %v3939
  %v5998 = vunpack.c.l.b16 %v3943
  %v5999 = vunpack.c.l.b16 %v3946
  %v6000 = vunpack.c.l.b16 %v3950
  %v6001 = vunpack.c.l.b16 %v3953
  %v6002 = vunpack.c.l.b16 %v3957
  %v6003 = vunpack.c.l.b16 %v3960
  %v6004 = vunpack.c.l.b16 %v3964
  %v6005 = vunpack.c.l.b16 %v3967
  %v6006 = vunpack.c.l.b16 %v3971
  %v6007 = vunpack.c.l.b16 %v3974
  %v6008 = vunpack.c.l.b16 %v3978
  %v6009 = vunpack.c.l.b16 %v3981
  %v6010 = vunpack.c.l.b16 %v3985
  %v6011 = vunpack.c.l.b16 %v3988
  %v6012 = vunpack.c.l.b16 %v3992
  %v6013 = vunpack.c.l.b16 %v3995
  %v6014 = vunpack.c.l.b16 %v3999
  %v6015 = vunpack.c.l.b16 %v4002
  %v6016 = vunpack.c.l.b16 %v4006
  %v6017 = vunpack.c.l.b16 %v4009
  %v6018 = vunpack.c.l.b16 %v4013
  %v6019 = vunpack.c.l.b16 %v4016
  %v6020 = vunpack.c.l.b16 %v4020
  %v6021 = vunpack.c.l.b16 %v4023
  %v6022 = vunpack.c.l.b16 %v4027
  %v6023 = vunpack.c.l.b16 %v4030
  %v6024 = vunpack.c.l.b16 %v4034
  %v6025 = vunpack.c.l.b16 %v4037
  %v6026 = vunpack.c.l.b16 %v4041
  %v6027 = vunpack.c.l.b16 %v4044
  %v6028 = vunpack.c.l.b16 %v4048
  %v6029 = vunpack.c.l.b16 %v4051
  %v6030 = vunpack.c.l.b16 %v4055
  %v6031 = vunpack.c.l.b16 %v4058
  %v6032 = vunpack.c.l.b16 %v4062
  %v6033 = vunpack.c.l.b16 %v4065
  %v6034 = vunpack.c.l.b16 %v4069
  %v6035 = vunpack.c.l.b16 %v4072
  %v6036 = vunpack.c.l.b16 %v4076
  %v6037 = vunpack.c.l.b16 %v4079
  %v6038 = vunpack.c.l.b16 %v4083
  %v6039 = vunpack.c.l.b16 %v4086
  %v6040 = vpack.c.b16 %v5977, %v5976
  %v6041 = vpack.c.b16 %v5979, %v5978
  %v6042 = vpack.c.b16 %v5981, %v5980
  %v6043 = vpack.c.b16 %v5983, %v5982
  %v6044 = vpack.c.b16 %v5985, %v5984
  %v6045 = vpack.c.b16 %v5987, %v5986
  %v6046 = vpack.c.b16 %v5989, %v5988
  %v6047 = vpack.c.b16 %v5991, %v5990
  %v6048 = vpack.c.b16 %v5993, %v5992
  %v6049 = vpack.c.b16 %v5995, %v5994
  %v6050 = vpack.c.b16 %v5997, %v5996
  %v6051 = vpack.c.b16 %v5999, %v5998
  %v6052 = vpack.c.b16 %v6001, %v6000
  %v6053 = vpack.c.b16 %v6003, %v6002
  %v6054 = vpack.c.b16 %v6005, %v6004
  %v6055 = vpack.c.b16 %v6007, %v6006
  %v6056 = vpack.c.b16 %v6009, %v6008
  %v6057 = vpack.c.b16 %v6011, %v6010
  %v6058 = vpack.c.b16 %v6013, %v6012
  %v6059 = vpack.c.b16 %v6015, %v6014
  %v6060 = vpack.c.b16 %v6017, %v6016
  %v6061 = vpack.c.b16 %v6019, %v6018
  %v6062 = vpack.c.b16 %v6021, %v6020
  %v6063 = vpack.c.b16 %v6023, %v6022
  %v6064 = vpack.c.b16 %v6025, %v6024
  %v6065 = vpack.c.b16 %v6027, %v6026
  %v6066 = vpack.c.b16 %v6029, %v6028
  %v6067 = vpack.c.b16 %v6031, %v6030
  %v6068 = vpack.c.b16 %v6033, %v6032
  %v6069 = vpack.c.b16 %v6035, %v6034
  %v6070 = vpack.c.b16 %v6037, %v6036
  %v6071 = vpack.c.b16 %v6039, %v6038
  %6072 = vrot.lane.b32.xlu0 %v6040, 80
  %v6073 = vpop.permute.xlu0 %6072
  %6074 = vrot.lane.b32.xlu0 %v6041, 80
  %v6075 = vpop.permute.xlu0 %6074
  %6076 = vrot.lane.b32.xlu0 %v6042, 80
  %v6077 = vpop.permute.xlu0 %6076
  %6078 = vrot.lane.b32.xlu0 %v6043, 80
  %v6079 = vpop.permute.xlu0 %6078
  %6080 = vrot.lane.b32.xlu0 %v6044, 80
  %v6081 = vpop.permute.xlu0 %6080
  %6082 = vrot.lane.b32.xlu0 %v6045, 80
  %v6083 = vpop.permute.xlu0 %6082
  %6084 = vrot.lane.b32.xlu0 %v6046, 80
  %v6085 = vpop.permute.xlu0 %6084
  %6086 = vrot.lane.b32.xlu0 %v6047, 80
  %v6087 = vpop.permute.xlu0 %6086
  %6088 = vrot.lane.b32.xlu0 %v6048, 80
  %v6089 = vpop.permute.xlu0 %6088
  %6090 = vrot.lane.b32.xlu0 %v6049, 80
  %v6091 = vpop.permute.xlu0 %6090
  %6092 = vrot.lane.b32.xlu0 %v6050, 80
  %v6093 = vpop.permute.xlu0 %6092
  %6094 = vrot.lane.b32.xlu0 %v6051, 80
  %v6095 = vpop.permute.xlu0 %6094
  %6096 = vrot.lane.b32.xlu0 %v6052, 80
  %v6097 = vpop.permute.xlu0 %6096
  %6098 = vrot.lane.b32.xlu0 %v6053, 80
  %v6099 = vpop.permute.xlu0 %6098
  %6100 = vrot.lane.b32.xlu0 %v6054, 80
  %v6101 = vpop.permute.xlu0 %6100
  %6102 = vrot.lane.b32.xlu0 %v6055, 80
  %v6103 = vpop.permute.xlu0 %6102
  %6104 = vrot.lane.b32.xlu0 %v6056, 80
  %v6105 = vpop.permute.xlu0 %6104
  %6106 = vrot.lane.b32.xlu0 %v6057, 80
  %v6107 = vpop.permute.xlu0 %6106
  %6108 = vrot.lane.b32.xlu0 %v6058, 80
  %v6109 = vpop.permute.xlu0 %6108
  %6110 = vrot.lane.b32.xlu0 %v6059, 80
  %v6111 = vpop.permute.xlu0 %6110
  %6112 = vrot.lane.b32.xlu0 %v6060, 80
  %v6113 = vpop.permute.xlu0 %6112
  %6114 = vrot.lane.b32.xlu0 %v6061, 80
  %v6115 = vpop.permute.xlu0 %6114
  %6116 = vrot.lane.b32.xlu0 %v6062, 80
  %v6117 = vpop.permute.xlu0 %6116
  %6118 = vrot.lane.b32.xlu0 %v6063, 80
  %v6119 = vpop.permute.xlu0 %6118
  %6120 = vrot.lane.b32.xlu0 %v6064, 80
  %v6121 = vpop.permute.xlu0 %6120
  %6122 = vrot.lane.b32.xlu0 %v6065, 80
  %v6123 = vpop.permute.xlu0 %6122
  %6124 = vrot.lane.b32.xlu0 %v6066, 80
  %v6125 = vpop.permute.xlu0 %6124
  %6126 = vrot.lane.b32.xlu0 %v6067, 80
  %v6127 = vpop.permute.xlu0 %6126
  %6128 = vrot.lane.b32.xlu0 %v6068, 80
  %v6129 = vpop.permute.xlu0 %6128
  %6130 = vrot.lane.b32.xlu0 %v6069, 80
  %v6131 = vpop.permute.xlu0 %6130
  %6132 = vrot.lane.b32.xlu0 %v6070, 80
  %v6133 = vpop.permute.xlu0 %6132
  %6134 = vrot.lane.b32.xlu0 %v6071, 80
  %v6135 = vpop.permute.xlu0 %6134
  %v6136 = vunpack.c.l.b16 %v4283
  %v6137 = vunpack.c.l.b16 %v4286
  %v6138 = vunpack.c.l.b16 %v4290
  %v6139 = vunpack.c.l.b16 %v4293
  %v6140 = vunpack.c.l.b16 %v4297
  %v6141 = vunpack.c.l.b16 %v4300
  %v6142 = vunpack.c.l.b16 %v4304
  %v6143 = vunpack.c.l.b16 %v4307
  %v6144 = vunpack.c.l.b16 %v4311
  %v6145 = vunpack.c.l.b16 %v4314
  %v6146 = vunpack.c.l.b16 %v4318
  %v6147 = vunpack.c.l.b16 %v4321
  %v6148 = vunpack.c.l.b16 %v4325
  %v6149 = vunpack.c.l.b16 %v4328
  %v6150 = vunpack.c.l.b16 %v4332
  %v6151 = vunpack.c.l.b16 %v4335
  %v6152 = vunpack.c.l.b16 %v4339
  %v6153 = vunpack.c.l.b16 %v4342
  %v6154 = vunpack.c.l.b16 %v4346
  %v6155 = vunpack.c.l.b16 %v4349
  %v6156 = vunpack.c.l.b16 %v4353
  %v6157 = vunpack.c.l.b16 %v4356
  %v6158 = vunpack.c.l.b16 %v4360
  %v6159 = vunpack.c.l.b16 %v4363
  %v6160 = vunpack.c.l.b16 %v4367
  %v6161 = vunpack.c.l.b16 %v4370
  %v6162 = vunpack.c.l.b16 %v4374
  %v6163 = vunpack.c.l.b16 %v4377
  %v6164 = vunpack.c.l.b16 %v4381
  %v6165 = vunpack.c.l.b16 %v4384
  %v6166 = vunpack.c.l.b16 %v4388
  %v6167 = vunpack.c.l.b16 %v4391
  %v6168 = vunpack.c.l.b16 %v4395
  %v6169 = vunpack.c.l.b16 %v4398
  %v6170 = vunpack.c.l.b16 %v4402
  %v6171 = vunpack.c.l.b16 %v4405
  %v6172 = vunpack.c.l.b16 %v4409
  %v6173 = vunpack.c.l.b16 %v4412
  %v6174 = vunpack.c.l.b16 %v4416
  %v6175 = vunpack.c.l.b16 %v4419
  %v6176 = vunpack.c.l.b16 %v4423
  %v6177 = vunpack.c.l.b16 %v4426
  %v6178 = vunpack.c.l.b16 %v4430
  %v6179 = vunpack.c.l.b16 %v4433
  %v6180 = vunpack.c.l.b16 %v4437
  %v6181 = vunpack.c.l.b16 %v4440
  %v6182 = vunpack.c.l.b16 %v4444
  %v6183 = vunpack.c.l.b16 %v4447
  %v6184 = vunpack.c.l.b16 %v4451
  %v6185 = vunpack.c.l.b16 %v4454
  %v6186 = vunpack.c.l.b16 %v4458
  %v6187 = vunpack.c.l.b16 %v4461
  %v6188 = vunpack.c.l.b16 %v4465
  %v6189 = vunpack.c.l.b16 %v4468
  %v6190 = vunpack.c.l.b16 %v4472
  %v6191 = vunpack.c.l.b16 %v4475
  %v6192 = vunpack.c.l.b16 %v4479
  %v6193 = vunpack.c.l.b16 %v4482
  %v6194 = vunpack.c.l.b16 %v4486
  %v6195 = vunpack.c.l.b16 %v4489
  %v6196 = vunpack.c.l.b16 %v4493
  %v6197 = vunpack.c.l.b16 %v4496
  %v6198 = vunpack.c.l.b16 %v4500
  %v6199 = vunpack.c.l.b16 %v4503
  %v6200 = vpack.c.b16 %v6137, %v6136
  %v6201 = vpack.c.b16 %v6139, %v6138
  %v6202 = vpack.c.b16 %v6141, %v6140
  %v6203 = vpack.c.b16 %v6143, %v6142
  %v6204 = vpack.c.b16 %v6145, %v6144
  %v6205 = vpack.c.b16 %v6147, %v6146
  %v6206 = vpack.c.b16 %v6149, %v6148
  %v6207 = vpack.c.b16 %v6151, %v6150
  %v6208 = vpack.c.b16 %v6153, %v6152
  %v6209 = vpack.c.b16 %v6155, %v6154
  %v6210 = vpack.c.b16 %v6157, %v6156
  %v6211 = vpack.c.b16 %v6159, %v6158
  %v6212 = vpack.c.b16 %v6161, %v6160
  %v6213 = vpack.c.b16 %v6163, %v6162
  %v6214 = vpack.c.b16 %v6165, %v6164
  %v6215 = vpack.c.b16 %v6167, %v6166
  %v6216 = vpack.c.b16 %v6169, %v6168
  %v6217 = vpack.c.b16 %v6171, %v6170
  %v6218 = vpack.c.b16 %v6173, %v6172
  %v6219 = vpack.c.b16 %v6175, %v6174
  %v6220 = vpack.c.b16 %v6177, %v6176
  %v6221 = vpack.c.b16 %v6179, %v6178
  %v6222 = vpack.c.b16 %v6181, %v6180
  %v6223 = vpack.c.b16 %v6183, %v6182
  %v6224 = vpack.c.b16 %v6185, %v6184
  %v6225 = vpack.c.b16 %v6187, %v6186
  %v6226 = vpack.c.b16 %v6189, %v6188
  %v6227 = vpack.c.b16 %v6191, %v6190
  %v6228 = vpack.c.b16 %v6193, %v6192
  %v6229 = vpack.c.b16 %v6195, %v6194
  %v6230 = vpack.c.b16 %v6197, %v6196
  %v6231 = vpack.c.b16 %v6199, %v6198
  %6232 = vrot.lane.b32.xlu0 %v6200, 96
  %v6233 = vpop.permute.xlu0 %6232
  %6234 = vrot.lane.b32.xlu0 %v6201, 96
  %v6235 = vpop.permute.xlu0 %6234
  %6236 = vrot.lane.b32.xlu0 %v6202, 96
  %v6237 = vpop.permute.xlu0 %6236
  %6238 = vrot.lane.b32.xlu0 %v6203, 96
  %v6239 = vpop.permute.xlu0 %6238
  %6240 = vrot.lane.b32.xlu0 %v6204, 96
  %v6241 = vpop.permute.xlu0 %6240
  %6242 = vrot.lane.b32.xlu0 %v6205, 96
  %v6243 = vpop.permute.xlu0 %6242
  %6244 = vrot.lane.b32.xlu0 %v6206, 96
  %v6245 = vpop.permute.xlu0 %6244
  %6246 = vrot.lane.b32.xlu0 %v6207, 96
  %v6247 = vpop.permute.xlu0 %6246
  %6248 = vrot.lane.b32.xlu0 %v6208, 96
  %v6249 = vpop.permute.xlu0 %6248
  %6250 = vrot.lane.b32.xlu0 %v6209, 96
  %v6251 = vpop.permute.xlu0 %6250
  %6252 = vrot.lane.b32.xlu0 %v6210, 96
  %v6253 = vpop.permute.xlu0 %6252
  %6254 = vrot.lane.b32.xlu0 %v6211, 96
  %v6255 = vpop.permute.xlu0 %6254
  %6256 = vrot.lane.b32.xlu0 %v6212, 96
  %v6257 = vpop.permute.xlu0 %6256
  %6258 = vrot.lane.b32.xlu0 %v6213, 96
  %v6259 = vpop.permute.xlu0 %6258
  %6260 = vrot.lane.b32.xlu0 %v6214, 96
  %v6261 = vpop.permute.xlu0 %6260
  %6262 = vrot.lane.b32.xlu0 %v6215, 96
  %v6263 = vpop.permute.xlu0 %6262
  %6264 = vrot.lane.b32.xlu0 %v6216, 96
  %v6265 = vpop.permute.xlu0 %6264
  %6266 = vrot.lane.b32.xlu0 %v6217, 96
  %v6267 = vpop.permute.xlu0 %6266
  %6268 = vrot.lane.b32.xlu0 %v6218, 96
  %v6269 = vpop.permute.xlu0 %6268
  %6270 = vrot.lane.b32.xlu0 %v6219, 96
  %v6271 = vpop.permute.xlu0 %6270
  %6272 = vrot.lane.b32.xlu0 %v6220, 96
  %v6273 = vpop.permute.xlu0 %6272
  %6274 = vrot.lane.b32.xlu0 %v6221, 96
  %v6275 = vpop.permute.xlu0 %6274
  %6276 = vrot.lane.b32.xlu0 %v6222, 96
  %v6277 = vpop.permute.xlu0 %6276
  %6278 = vrot.lane.b32.xlu0 %v6223, 96
  %v6279 = vpop.permute.xlu0 %6278
  %6280 = vrot.lane.b32.xlu0 %v6224, 96
  %v6281 = vpop.permute.xlu0 %6280
  %6282 = vrot.lane.b32.xlu0 %v6225, 96
  %v6283 = vpop.permute.xlu0 %6282
  %6284 = vrot.lane.b32.xlu0 %v6226, 96
  %v6285 = vpop.permute.xlu0 %6284
  %6286 = vrot.lane.b32.xlu0 %v6227, 96
  %v6287 = vpop.permute.xlu0 %6286
  %6288 = vrot.lane.b32.xlu0 %v6228, 96
  %v6289 = vpop.permute.xlu0 %6288
  %6290 = vrot.lane.b32.xlu0 %v6229, 96
  %v6291 = vpop.permute.xlu0 %6290
  %6292 = vrot.lane.b32.xlu0 %v6230, 96
  %v6293 = vpop.permute.xlu0 %6292
  %6294 = vrot.lane.b32.xlu0 %v6231, 96
  %v6295 = vpop.permute.xlu0 %6294
  %v6296 = vunpack.c.l.b16 %v4699
  %v6297 = vunpack.c.l.b16 %v4702
  %v6298 = vunpack.c.l.b16 %v4706
  %v6299 = vunpack.c.l.b16 %v4709
  %v6300 = vunpack.c.l.b16 %v4713
  %v6301 = vunpack.c.l.b16 %v4716
  %v6302 = vunpack.c.l.b16 %v4720
  %v6303 = vunpack.c.l.b16 %v4723
  %v6304 = vunpack.c.l.b16 %v4727
  %v6305 = vunpack.c.l.b16 %v4730
  %v6306 = vunpack.c.l.b16 %v4734
  %v6307 = vunpack.c.l.b16 %v4737
  %v6308 = vunpack.c.l.b16 %v4741
  %v6309 = vunpack.c.l.b16 %v4744
  %v6310 = vunpack.c.l.b16 %v4748
  %v6311 = vunpack.c.l.b16 %v4751
  %v6312 = vunpack.c.l.b16 %v4755
  %v6313 = vunpack.c.l.b16 %v4758
  %v6314 = vunpack.c.l.b16 %v4762
  %v6315 = vunpack.c.l.b16 %v4765
  %v6316 = vunpack.c.l.b16 %v4769
  %v6317 = vunpack.c.l.b16 %v4772
  %v6318 = vunpack.c.l.b16 %v4776
  %v6319 = vunpack.c.l.b16 %v4779
  %v6320 = vunpack.c.l.b16 %v4783
  %v6321 = vunpack.c.l.b16 %v4786
  %v6322 = vunpack.c.l.b16 %v4790
  %v6323 = vunpack.c.l.b16 %v4793
  %v6324 = vunpack.c.l.b16 %v4797
  %v6325 = vunpack.c.l.b16 %v4800
  %v6326 = vunpack.c.l.b16 %v4804
  %v6327 = vunpack.c.l.b16 %v4807
  %v6328 = vunpack.c.l.b16 %v4811
  %v6329 = vunpack.c.l.b16 %v4814
  %v6330 = vunpack.c.l.b16 %v4818
  %v6331 = vunpack.c.l.b16 %v4821
  %v6332 = vunpack.c.l.b16 %v4825
  %v6333 = vunpack.c.l.b16 %v4828
  %v6334 = vunpack.c.l.b16 %v4832
  %v6335 = vunpack.c.l.b16 %v4835
  %v6336 = vunpack.c.l.b16 %v4839
  %v6337 = vunpack.c.l.b16 %v4842
  %v6338 = vunpack.c.l.b16 %v4846
  %v6339 = vunpack.c.l.b16 %v4849
  %v6340 = vunpack.c.l.b16 %v4853
  %v6341 = vunpack.c.l.b16 %v4856
  %v6342 = vunpack.c.l.b16 %v4860
  %v6343 = vunpack.c.l.b16 %v4863
  %v6344 = vunpack.c.l.b16 %v4867
  %v6345 = vunpack.c.l.b16 %v4870
  %v6346 = vunpack.c.l.b16 %v4874
  %v6347 = vunpack.c.l.b16 %v4877
  %v6348 = vunpack.c.l.b16 %v4881
  %v6349 = vunpack.c.l.b16 %v4884
  %v6350 = vunpack.c.l.b16 %v4888
  %v6351 = vunpack.c.l.b16 %v4891
  %v6352 = vunpack.c.l.b16 %v4895
  %v6353 = vunpack.c.l.b16 %v4898
  %v6354 = vunpack.c.l.b16 %v4902
  %v6355 = vunpack.c.l.b16 %v4905
  %v6356 = vunpack.c.l.b16 %v4909
  %v6357 = vunpack.c.l.b16 %v4912
  %v6358 = vunpack.c.l.b16 %v4916
  %v6359 = vunpack.c.l.b16 %v4919
  %v6360 = vpack.c.b16 %v6297, %v6296
  %v6361 = vpack.c.b16 %v6299, %v6298
  %v6362 = vpack.c.b16 %v6301, %v6300
  %v6363 = vpack.c.b16 %v6303, %v6302
  %v6364 = vpack.c.b16 %v6305, %v6304
  %v6365 = vpack.c.b16 %v6307, %v6306
  %v6366 = vpack.c.b16 %v6309, %v6308
  %v6367 = vpack.c.b16 %v6311, %v6310
  %v6368 = vpack.c.b16 %v6313, %v6312
  %v6369 = vpack.c.b16 %v6315, %v6314
  %v6370 = vpack.c.b16 %v6317, %v6316
  %v6371 = vpack.c.b16 %v6319, %v6318
  %v6372 = vpack.c.b16 %v6321, %v6320
  %v6373 = vpack.c.b16 %v6323, %v6322
  %v6374 = vpack.c.b16 %v6325, %v6324
  %v6375 = vpack.c.b16 %v6327, %v6326
  %v6376 = vpack.c.b16 %v6329, %v6328
  %v6377 = vpack.c.b16 %v6331, %v6330
  %v6378 = vpack.c.b16 %v6333, %v6332
  %v6379 = vpack.c.b16 %v6335, %v6334
  %v6380 = vpack.c.b16 %v6337, %v6336
  %v6381 = vpack.c.b16 %v6339, %v6338
  %v6382 = vpack.c.b16 %v6341, %v6340
  %v6383 = vpack.c.b16 %v6343, %v6342
  %v6384 = vpack.c.b16 %v6345, %v6344
  %v6385 = vpack.c.b16 %v6347, %v6346
  %v6386 = vpack.c.b16 %v6349, %v6348
  %v6387 = vpack.c.b16 %v6351, %v6350
  %v6388 = vpack.c.b16 %v6353, %v6352
  %v6389 = vpack.c.b16 %v6355, %v6354
  %v6390 = vpack.c.b16 %v6357, %v6356
  %v6391 = vpack.c.b16 %v6359, %v6358
  %6392 = vrot.lane.b32.xlu0 %v6360, 112
  %v6393 = vpop.permute.xlu0 %6392
  %6394 = vrot.lane.b32.xlu0 %v6361, 112
  %v6395 = vpop.permute.xlu0 %6394
  %6396 = vrot.lane.b32.xlu0 %v6362, 112
  %v6397 = vpop.permute.xlu0 %6396
  %6398 = vrot.lane.b32.xlu0 %v6363, 112
  %v6399 = vpop.permute.xlu0 %6398
  %6400 = vrot.lane.b32.xlu0 %v6364, 112
  %v6401 = vpop.permute.xlu0 %6400
  %6402 = vrot.lane.b32.xlu0 %v6365, 112
  %v6403 = vpop.permute.xlu0 %6402
  %6404 = vrot.lane.b32.xlu0 %v6366, 112
  %v6405 = vpop.permute.xlu0 %6404
  %6406 = vrot.lane.b32.xlu0 %v6367, 112
  %v6407 = vpop.permute.xlu0 %6406
  %6408 = vrot.lane.b32.xlu0 %v6368, 112
  %v6409 = vpop.permute.xlu0 %6408
  %6410 = vrot.lane.b32.xlu0 %v6369, 112
  %v6411 = vpop.permute.xlu0 %6410
  %6412 = vrot.lane.b32.xlu0 %v6370, 112
  %v6413 = vpop.permute.xlu0 %6412
  %6414 = vrot.lane.b32.xlu0 %v6371, 112
  %v6415 = vpop.permute.xlu0 %6414
  %6416 = vrot.lane.b32.xlu0 %v6372, 112
  %v6417 = vpop.permute.xlu0 %6416
  %6418 = vrot.lane.b32.xlu0 %v6373, 112
  %v6419 = vpop.permute.xlu0 %6418
  %6420 = vrot.lane.b32.xlu0 %v6374, 112
  %v6421 = vpop.permute.xlu0 %6420
  %6422 = vrot.lane.b32.xlu0 %v6375, 112
  %v6423 = vpop.permute.xlu0 %6422
  %6424 = vrot.lane.b32.xlu0 %v6376, 112
  %v6425 = vpop.permute.xlu0 %6424
  %6426 = vrot.lane.b32.xlu0 %v6377, 112
  %v6427 = vpop.permute.xlu0 %6426
  %6428 = vrot.lane.b32.xlu0 %v6378, 112
  %v6429 = vpop.permute.xlu0 %6428
  %6430 = vrot.lane.b32.xlu0 %v6379, 112
  %v6431 = vpop.permute.xlu0 %6430
  %6432 = vrot.lane.b32.xlu0 %v6380, 112
  %v6433 = vpop.permute.xlu0 %6432
  %6434 = vrot.lane.b32.xlu0 %v6381, 112
  %v6435 = vpop.permute.xlu0 %6434
  %6436 = vrot.lane.b32.xlu0 %v6382, 112
  %v6437 = vpop.permute.xlu0 %6436
  %6438 = vrot.lane.b32.xlu0 %v6383, 112
  %v6439 = vpop.permute.xlu0 %6438
  %6440 = vrot.lane.b32.xlu0 %v6384, 112
  %v6441 = vpop.permute.xlu0 %6440
  %6442 = vrot.lane.b32.xlu0 %v6385, 112
  %v6443 = vpop.permute.xlu0 %6442
  %6444 = vrot.lane.b32.xlu0 %v6386, 112
  %v6445 = vpop.permute.xlu0 %6444
  %6446 = vrot.lane.b32.xlu0 %v6387, 112
  %v6447 = vpop.permute.xlu0 %6446
  %6448 = vrot.lane.b32.xlu0 %v6388, 112
  %v6449 = vpop.permute.xlu0 %6448
  %6450 = vrot.lane.b32.xlu0 %v6389, 112
  %v6451 = vpop.permute.xlu0 %6450
  %6452 = vrot.lane.b32.xlu0 %v6390, 112
  %v6453 = vpop.permute.xlu0 %6452
  %6454 = vrot.lane.b32.xlu0 %v6391, 112
  %v6455 = vpop.permute.xlu0 %6454
  %v6456 = vunpack.c.l.b16 %v5115
  %v6457 = vunpack.c.l.b16 %v5118
  %v6458 = vunpack.c.l.b16 %v5122
  %v6459 = vunpack.c.l.b16 %v5125
  %v6460 = vunpack.c.l.b16 %v5129
  %v6461 = vunpack.c.l.b16 %v5132
  %v6462 = vunpack.c.l.b16 %v5136
  %v6463 = vunpack.c.l.b16 %v5139
  %v6464 = vunpack.c.l.b16 %v5143
  %v6465 = vunpack.c.l.b16 %v5146
  %v6466 = vunpack.c.l.b16 %v5150
  %v6467 = vunpack.c.l.b16 %v5153
  %v6468 = vunpack.c.l.b16 %v5157
  %v6469 = vunpack.c.l.b16 %v5160
  %v6470 = vunpack.c.l.b16 %v5164
  %v6471 = vunpack.c.l.b16 %v5167
  %v6472 = vunpack.c.l.b16 %v5171
  %v6473 = vunpack.c.l.b16 %v5174
  %v6474 = vunpack.c.l.b16 %v5178
  %v6475 = vunpack.c.l.b16 %v5181
  %v6476 = vunpack.c.l.b16 %v5185
  %v6477 = vunpack.c.l.b16 %v5188
  %v6478 = vunpack.c.l.b16 %v5192
  %v6479 = vunpack.c.l.b16 %v5195
  %v6480 = vunpack.c.l.b16 %v5199
  %v6481 = vunpack.c.l.b16 %v5202
  %v6482 = vunpack.c.l.b16 %v5206
  %v6483 = vunpack.c.l.b16 %v5209
  %v6484 = vunpack.c.l.b16 %v5213
  %v6485 = vunpack.c.l.b16 %v5216
  %v6486 = vunpack.c.l.b16 %v5220
  %v6487 = vunpack.c.l.b16 %v5223
  %v6488 = vunpack.c.l.b16 %v5227
  %v6489 = vunpack.c.l.b16 %v5230
  %v6490 = vunpack.c.l.b16 %v5234
  %v6491 = vunpack.c.l.b16 %v5237
  %v6492 = vunpack.c.l.b16 %v5241
  %v6493 = vunpack.c.l.b16 %v5244
  %v6494 = vunpack.c.l.b16 %v5248
  %v6495 = vunpack.c.l.b16 %v5251
  %v6496 = vunpack.c.l.b16 %v5255
  %v6497 = vunpack.c.l.b16 %v5258
  %v6498 = vunpack.c.l.b16 %v5262
  %v6499 = vunpack.c.l.b16 %v5265
  %v6500 = vunpack.c.l.b16 %v5269
  %v6501 = vunpack.c.l.b16 %v5272
  %v6502 = vunpack.c.l.b16 %v5276
  %v6503 = vunpack.c.l.b16 %v5279
  %v6504 = vunpack.c.l.b16 %v5283
  %v6505 = vunpack.c.l.b16 %v5286
  %v6506 = vunpack.c.l.b16 %v5290
  %v6507 = vunpack.c.l.b16 %v5293
  %v6508 = vunpack.c.l.b16 %v5297
  %v6509 = vunpack.c.l.b16 %v5300
  %v6510 = vunpack.c.l.b16 %v5304
  %v6511 = vunpack.c.l.b16 %v5307
  %v6512 = vunpack.c.l.b16 %v5311
  %v6513 = vunpack.c.l.b16 %v5314
  %v6514 = vunpack.c.l.b16 %v5318
  %v6515 = vunpack.c.l.b16 %v5321
  %v6516 = vunpack.c.l.b16 %v5325
  %v6517 = vunpack.c.l.b16 %v5328
  %v6518 = vunpack.c.l.b16 %v5332
  %v6519 = vunpack.c.l.b16 %v5335
  %v6520 = vpack.c.b16 %v6457, %v6456
  %v6521 = vpack.c.b16 %v6459, %v6458
  %v6522 = vpack.c.b16 %v6461, %v6460
  %v6523 = vpack.c.b16 %v6463, %v6462
  %v6524 = vpack.c.b16 %v6465, %v6464
  %v6525 = vpack.c.b16 %v6467, %v6466
  %v6526 = vpack.c.b16 %v6469, %v6468
  %v6527 = vpack.c.b16 %v6471, %v6470
  %v6528 = vpack.c.b16 %v6473, %v6472
  %v6529 = vpack.c.b16 %v6475, %v6474
  %v6530 = vpack.c.b16 %v6477, %v6476
  %v6531 = vpack.c.b16 %v6479, %v6478
  %v6532 = vpack.c.b16 %v6481, %v6480
  %v6533 = vpack.c.b16 %v6483, %v6482
  %v6534 = vpack.c.b16 %v6485, %v6484
  %v6535 = vpack.c.b16 %v6487, %v6486
  %v6536 = vpack.c.b16 %v6489, %v6488
  %v6537 = vpack.c.b16 %v6491, %v6490
  %v6538 = vpack.c.b16 %v6493, %v6492
  %v6539 = vpack.c.b16 %v6495, %v6494
  %v6540 = vpack.c.b16 %v6497, %v6496
  %v6541 = vpack.c.b16 %v6499, %v6498
  %v6542 = vpack.c.b16 %v6501, %v6500
  %v6543 = vpack.c.b16 %v6503, %v6502
  %v6544 = vpack.c.b16 %v6505, %v6504
  %v6545 = vpack.c.b16 %v6507, %v6506
  %v6546 = vpack.c.b16 %v6509, %v6508
  %v6547 = vpack.c.b16 %v6511, %v6510
  %v6548 = vpack.c.b16 %v6513, %v6512
  %v6549 = vpack.c.b16 %v6515, %v6514
  %v6550 = vpack.c.b16 %v6517, %v6516
  %v6551 = vpack.c.b16 %v6519, %v6518
  %v6554 = vsel %vm1010, %v5400, %v5529
  %v6557 = vsel %vm1010, %v5401, %v5531
  %v6560 = vsel %vm1010, %v5402, %v5533
  %v6563 = vsel %vm1010, %v5403, %v5535
  %v6566 = vsel %vm1010, %v5404, %v5537
  %v6569 = vsel %vm1010, %v5405, %v5539
  %v6572 = vsel %vm1010, %v5406, %v5541
  %v6575 = vsel %vm1010, %v5407, %v5543
  %v6578 = vsel %vm1010, %v5408, %v5545
  %v6581 = vsel %vm1010, %v5409, %v5547
  %v6584 = vsel %vm1010, %v5410, %v5549
  %v6587 = vsel %vm1010, %v5411, %v5551
  %v6590 = vsel %vm1010, %v5412, %v5553
  %v6593 = vsel %vm1010, %v5413, %v5555
  %v6596 = vsel %vm1010, %v5414, %v5557
  %v6599 = vsel %vm1010, %v5415, %v5559
  %v6602 = vsel %vm1010, %v5416, %v5561
  %v6605 = vsel %vm1010, %v5417, %v5563
  %v6608 = vsel %vm1010, %v5418, %v5565
  %v6611 = vsel %vm1010, %v5419, %v5567
  %v6614 = vsel %vm1010, %v5420, %v5569
  %v6617 = vsel %vm1010, %v5421, %v5571
  %v6620 = vsel %vm1010, %v5422, %v5573
  %v6623 = vsel %vm1010, %v5423, %v5575
  %v6626 = vsel %vm1010, %v5424, %v5577
  %v6629 = vsel %vm1010, %v5425, %v5579
  %v6632 = vsel %vm1010, %v5426, %v5581
  %v6635 = vsel %vm1010, %v5427, %v5583
  %v6638 = vsel %vm1010, %v5428, %v5585
  %v6641 = vsel %vm1010, %v5429, %v5587
  %v6644 = vsel %vm1010, %v5430, %v5589
  %v6647 = vsel %vm1010, %v5431, %v5591
  %vm6648 = vcmask 261120
  %v6650 = vsel %vm6648, %v6554, %v5689
  %v6652 = vsel %vm6648, %v6557, %v5691
  %v6654 = vsel %vm6648, %v6560, %v5693
  %v6656 = vsel %vm6648, %v6563, %v5695
  %v6658 = vsel %vm6648, %v6566, %v5697
  %v6660 = vsel %vm6648, %v6569, %v5699
  %v6662 = vsel %vm6648, %v6572, %v5701
  %v6664 = vsel %vm6648, %v6575, %v5703
  %v6666 = vsel %vm6648, %v6578, %v5705
  %v6668 = vsel %vm6648, %v6581, %v5707
  %v6670 = vsel %vm6648, %v6584, %v5709
  %v6672 = vsel %vm6648, %v6587, %v5711
  %v6674 = vsel %vm6648, %v6590, %v5713
  %v6676 = vsel %vm6648, %v6593, %v5715
  %v6678 = vsel %vm6648, %v6596, %v5717
  %v6680 = vsel %vm6648, %v6599, %v5719
  %v6682 = vsel %vm6648, %v6602, %v5721
  %v6684 = vsel %vm6648, %v6605, %v5723
  %v6686 = vsel %vm6648, %v6608, %v5725
  %v6688 = vsel %vm6648, %v6611, %v5727
  %v6690 = vsel %vm6648, %v6614, %v5729
  %v6692 = vsel %vm6648, %v6617, %v5731
  %v6694 = vsel %vm6648, %v6620, %v5733
  %v6696 = vsel %vm6648, %v6623, %v5735
  %v6698 = vsel %vm6648, %v6626, %v5737
  %v6700 = vsel %vm6648, %v6629, %v5739
  %v6702 = vsel %vm6648, %v6632, %v5741
  %v6704 = vsel %vm6648, %v6635, %v5743
  %v6706 = vsel %vm6648, %v6638, %v5745
  %v6708 = vsel %vm6648, %v6641, %v5747
  %v6710 = vsel %vm6648, %v6644, %v5749
  %v6712 = vsel %vm6648, %v6647, %v5751
  %vm6713 = vcmask 392192
  %v6715 = vsel %vm6713, %v6650, %v5849
  %v6717 = vsel %vm6713, %v6652, %v5851
  %v6719 = vsel %vm6713, %v6654, %v5853
  %v6721 = vsel %vm6713, %v6656, %v5855
  %v6723 = vsel %vm6713, %v6658, %v5857
  %v6725 = vsel %vm6713, %v6660, %v5859
  %v6727 = vsel %vm6713, %v6662, %v5861
  %v6729 = vsel %vm6713, %v6664, %v5863
  %v6731 = vsel %vm6713, %v6666, %v5865
  %v6733 = vsel %vm6713, %v6668, %v5867
  %v6735 = vsel %vm6713, %v6670, %v5869
  %v6737 = vsel %vm6713, %v6672, %v5871
  %v6739 = vsel %vm6713, %v6674, %v5873
  %v6741 = vsel %vm6713, %v6676, %v5875
  %v6743 = vsel %vm6713, %v6678, %v5877
  %v6745 = vsel %vm6713, %v6680, %v5879
  %v6747 = vsel %vm6713, %v6682, %v5881
  %v6749 = vsel %vm6713, %v6684, %v5883
  %v6751 = vsel %vm6713, %v6686, %v5885
  %v6753 = vsel %vm6713, %v6688, %v5887
  %v6755 = vsel %vm6713, %v6690, %v5889
  %v6757 = vsel %vm6713, %v6692, %v5891
  %v6759 = vsel %vm6713, %v6694, %v5893
  %v6761 = vsel %vm6713, %v6696, %v5895
  %v6763 = vsel %vm6713, %v6698, %v5897
  %v6765 = vsel %vm6713, %v6700, %v5899
  %v6767 = vsel %vm6713, %v6702, %v5901
  %v6769 = vsel %vm6713, %v6704, %v5903
  %v6771 = vsel %vm6713, %v6706, %v5905
  %v6773 = vsel %vm6713, %v6708, %v5907
  %v6775 = vsel %vm6713, %v6710, %v5909
  %v6777 = vsel %vm6713, %v6712, %v5911
  %vm6778 = vcmask 523264
  %v6780 = vsel %vm6778, %v6715, %v5913
  %v6782 = vsel %vm6778, %v6717, %v5915
  %v6784 = vsel %vm6778, %v6719, %v5917
  %v6786 = vsel %vm6778, %v6721, %v5919
  %v6788 = vsel %vm6778, %v6723, %v5921
  %v6790 = vsel %vm6778, %v6725, %v5923
  %v6792 = vsel %vm6778, %v6727, %v5925
  %v6794 = vsel %vm6778, %v6729, %v5927
  %v6796 = vsel %vm6778, %v6731, %v5929
  %v6798 = vsel %vm6778, %v6733, %v5931
  %v6800 = vsel %vm6778, %v6735, %v5933
  %v6802 = vsel %vm6778, %v6737, %v5935
  %v6804 = vsel %vm6778, %v6739, %v5937
  %v6806 = vsel %vm6778, %v6741, %v5939
  %v6808 = vsel %vm6778, %v6743, %v5941
  %v6810 = vsel %vm6778, %v6745, %v5943
  %v6812 = vsel %vm6778, %v6747, %v5945
  %v6814 = vsel %vm6778, %v6749, %v5947
  %v6816 = vsel %vm6778, %v6751, %v5949
  %v6818 = vsel %vm6778, %v6753, %v5951
  %v6820 = vsel %vm6778, %v6755, %v5953
  %v6822 = vsel %vm6778, %v6757, %v5955
  %v6824 = vsel %vm6778, %v6759, %v5957
  %v6826 = vsel %vm6778, %v6761, %v5959
  %v6828 = vsel %vm6778, %v6763, %v5961
  %v6830 = vsel %vm6778, %v6765, %v5963
  %v6832 = vsel %vm6778, %v6767, %v5965
  %v6834 = vsel %vm6778, %v6769, %v5967
  %v6836 = vsel %vm6778, %v6771, %v5969
  %v6838 = vsel %vm6778, %v6773, %v5971
  %v6840 = vsel %vm6778, %v6775, %v5973
  %v6842 = vsel %vm6778, %v6777, %v5975
  %vm6843 = vcmask 654336
  %v6845 = vsel %vm6843, %v6780, %v6073
  %v6847 = vsel %vm6843, %v6782, %v6075
  %v6849 = vsel %vm6843, %v6784, %v6077
  %v6851 = vsel %vm6843, %v6786, %v6079
  %v6853 = vsel %vm6843, %v6788, %v6081
  %v6855 = vsel %vm6843, %v6790, %v6083
  %v6857 = vsel %vm6843, %v6792, %v6085
  %v6859 = vsel %vm6843, %v6794, %v6087
  %v6861 = vsel %vm6843, %v6796, %v6089
  %v6863 = vsel %vm6843, %v6798, %v6091
  %v6865 = vsel %vm6843, %v6800, %v6093
  %v6867 = vsel %vm6843, %v6802, %v6095
  %v6869 = vsel %vm6843, %v6804, %v6097
  %v6871 = vsel %vm6843, %v6806, %v6099
  %v6873 = vsel %vm6843, %v6808, %v6101
  %v6875 = vsel %vm6843, %v6810, %v6103
  %v6877 = vsel %vm6843, %v6812, %v6105
  %v6879 = vsel %vm6843, %v6814, %v6107
  %v6881 = vsel %vm6843, %v6816, %v6109
  %v6883 = vsel %vm6843, %v6818, %v6111
  %v6885 = vsel %vm6843, %v6820, %v6113
  %v6887 = vsel %vm6843, %v6822, %v6115
  %v6889 = vsel %vm6843, %v6824, %v6117
  %v6891 = vsel %vm6843, %v6826, %v6119
  %v6893 = vsel %vm6843, %v6828, %v6121
  %v6895 = vsel %vm6843, %v6830, %v6123
  %v6897 = vsel %vm6843, %v6832, %v6125
  %v6899 = vsel %vm6843, %v6834, %v6127
  %v6901 = vsel %vm6843, %v6836, %v6129
  %v6903 = vsel %vm6843, %v6838, %v6131
  %v6905 = vsel %vm6843, %v6840, %v6133
  %v6907 = vsel %vm6843, %v6842, %v6135
  %vm6908 = vcmask 785408
  %v6910 = vsel %vm6908, %v6845, %v6233
  %v6912 = vsel %vm6908, %v6847, %v6235
  %v6914 = vsel %vm6908, %v6849, %v6237
  %v6916 = vsel %vm6908, %v6851, %v6239
  %v6918 = vsel %vm6908, %v6853, %v6241
  %v6920 = vsel %vm6908, %v6855, %v6243
  %v6922 = vsel %vm6908, %v6857, %v6245
  %v6924 = vsel %vm6908, %v6859, %v6247
  %v6926 = vsel %vm6908, %v6861, %v6249
  %v6928 = vsel %vm6908, %v6863, %v6251
  %v6930 = vsel %vm6908, %v6865, %v6253
  %v6932 = vsel %vm6908, %v6867, %v6255
  %v6934 = vsel %vm6908, %v6869, %v6257
  %v6936 = vsel %vm6908, %v6871, %v6259
  %v6938 = vsel %vm6908, %v6873, %v6261
  %v6940 = vsel %vm6908, %v6875, %v6263
  %v6942 = vsel %vm6908, %v6877, %v6265
  %v6944 = vsel %vm6908, %v6879, %v6267
  %v6946 = vsel %vm6908, %v6881, %v6269
  %v6948 = vsel %vm6908, %v6883, %v6271
  %v6950 = vsel %vm6908, %v6885, %v6273
  %v6952 = vsel %vm6908, %v6887, %v6275
  %v6954 = vsel %vm6908, %v6889, %v6277
  %v6956 = vsel %vm6908, %v6891, %v6279
  %v6958 = vsel %vm6908, %v6893, %v6281
  %v6960 = vsel %vm6908, %v6895, %v6283
  %v6962 = vsel %vm6908, %v6897, %v6285
  %v6964 = vsel %vm6908, %v6899, %v6287
  %v6966 = vsel %vm6908, %v6901, %v6289
  %v6968 = vsel %vm6908, %v6903, %v6291
  %v6970 = vsel %vm6908, %v6905, %v6293
  %v6972 = vsel %vm6908, %v6907, %v6295
  %vm6973 = vcmask 916480
  %v6975 = vsel %vm6973, %v6910, %v6393
  %v6978 = vsel %vm6973, %v6912, %v6395
  %v6981 = vsel %vm6973, %v6914, %v6397
  %v6984 = vsel %vm6973, %v6916, %v6399
  %v6987 = vsel %vm6973, %v6918, %v6401
  %v6990 = vsel %vm6973, %v6920, %v6403
  %v6993 = vsel %vm6973, %v6922, %v6405
  %v6996 = vsel %vm6973, %v6924, %v6407
  %v6999 = vsel %vm6973, %v6926, %v6409
  %v7002 = vsel %vm6973, %v6928, %v6411
  %v7005 = vsel %vm6973, %v6930, %v6413
  %v7008 = vsel %vm6973, %v6932, %v6415
  %v7011 = vsel %vm6973, %v6934, %v6417
  %v7014 = vsel %vm6973, %v6936, %v6419
  %v7017 = vsel %vm6973, %v6938, %v6421
  %v7020 = vsel %vm6973, %v6940, %v6423
  %v7023 = vsel %vm6973, %v6942, %v6425
  %v7026 = vsel %vm6973, %v6944, %v6427
  %v7029 = vsel %vm6973, %v6946, %v6429
  %v7032 = vsel %vm6973, %v6948, %v6431
  %v7035 = vsel %vm6973, %v6950, %v6433
  %v7038 = vsel %vm6973, %v6952, %v6435
  %v7041 = vsel %vm6973, %v6954, %v6437
  %v7044 = vsel %vm6973, %v6956, %v6439
  %v7047 = vsel %vm6973, %v6958, %v6441
  %v7050 = vsel %vm6973, %v6960, %v6443
  %v7053 = vsel %vm6973, %v6962, %v6445
  %v7056 = vsel %vm6973, %v6964, %v6447
  %v7059 = vsel %vm6973, %v6966, %v6449
  %v7062 = vsel %vm6973, %v6968, %v6451
  %v7065 = vsel %vm6973, %v6970, %v6453
  %v7068 = vsel %vm6973, %v6972, %v6455
  %v7070 = vld [vmem:[%s5] sm:$0xf]
  %v7071 = vld [vmem:[%s5 + $0x4] sm:$0xf]
  %v7072 = vld [vmem:[%s5 + $0x8] sm:$0xf]
  %v7073 = vld [vmem:[%s5 + $0xc] sm:$0xf]
  %v7074 = vld [vmem:[%s5 + $0x10] sm:$0xf]
  %v7075 = vld [vmem:[%s5 + $0x14] sm:$0xf]
  %v7076 = vld [vmem:[%s5 + $0x18] sm:$0xf]
  %v7077 = vld [vmem:[%s5 + $0x1c] sm:$0xf]
  %v7078 = vld [vmem:[%s5 + $0x20] sm:$0xf]
  %v7079 = vld [vmem:[%s5 + $0x24] sm:$0xf]
  %v7080 = vld [vmem:[%s5 + $0x28] sm:$0xf]
  %v7081 = vld [vmem:[%s5 + $0x2c] sm:$0xf]
  %v7082 = vld [vmem:[%s5 + $0x30] sm:$0xf]
  %v7083 = vld [vmem:[%s5 + $0x34] sm:$0xf]
  %v7084 = vld [vmem:[%s5 + $0x38] sm:$0xf]
  %v7085 = vld [vmem:[%s5 + $0x3c] sm:$0xf]
  %v7086 = vld [vmem:[%s5 + $0x40] sm:$0xf]
  %v7087 = vld [vmem:[%s5 + $0x44] sm:$0xf]
  %v7106 = vunpack.c.l.b16 %v7070
  %v7107 = vunpack.c.l.b16 %v7071
  %v7108 = vunpack.c.l.b16 %v7072
  %v7109 = vunpack.c.l.b16 %v7073
  %v7110 = vunpack.c.l.b16 %v7074
  %v7111 = vunpack.c.l.b16 %v7075
  %v7112 = vunpack.c.l.b16 %v7076
  %v7113 = vunpack.c.l.b16 %v7077
  %v7114 = vunpack.c.l.b16 %v7078
  %v7115 = vunpack.c.l.b16 %v7079
  %v7116 = vunpack.c.l.b16 %v7080
  %v7117 = vunpack.c.l.b16 %v7081
  %v7118 = vunpack.c.l.b16 %v7082
  %v7119 = vunpack.c.l.b16 %v7083
  %v7120 = vunpack.c.l.b16 %v7084
  %v7121 = vunpack.c.l.b16 %v7085
  %v7122 = vunpack.c.l.b16 %v7086
  %v7123 = vunpack.c.l.b16 %v7087
  %v7124 = vpack.c.b16 %v7107, %v7106
  %v7125 = vpack.c.b16 %v7109, %v7108
  %v7126 = vpack.c.b16 %v7111, %v7110
  %v7127 = vpack.c.b16 %v7113, %v7112
  %v7128 = vpack.c.b16 %v7115, %v7114
  %v7129 = vpack.c.b16 %v7117, %v7116
  %v7130 = vpack.c.b16 %v7119, %v7118
  %v7131 = vpack.c.b16 %v7121, %v7120
  %v7132 = vpack.c.b16 %v7123, %v7122
  %v7143 = vsel %vm1010, %v6520, 0
  %v7146 = vsel %vm1010, %v6521, 0
  %v7149 = vsel %vm1010, %v6522, 0
  %v7152 = vsel %vm1010, %v6523, 0
  %v7155 = vsel %vm1010, %v6524, 0
  %v7158 = vsel %vm1010, %v6525, 0
  %v7161 = vsel %vm1010, %v6526, 0
  %v7164 = vsel %vm1010, %v6527, 0
  %v7167 = vsel %vm1010, %v6528, 0
  %v7170 = vsel %vm1010, %v6529, 0
  %v7173 = vsel %vm1010, %v6530, 0
  %v7176 = vsel %vm1010, %v6531, 0
  %v7179 = vsel %vm1010, %v6532, 0
  %v7182 = vsel %vm1010, %v6533, 0
  %v7185 = vsel %vm1010, %v6534, 0
  %v7188 = vsel %vm1010, %v6535, 0
  %v7191 = vsel %vm1010, %v6536, 0
  %v7194 = vsel %vm1010, %v6537, 0
  %v7197 = vsel %vm1010, %v6538, 0
  %v7200 = vsel %vm1010, %v6539, 0
  %v7203 = vsel %vm1010, %v6540, 0
  %v7206 = vsel %vm1010, %v6541, 0
  %v7209 = vsel %vm1010, %v6542, 0
  %v7212 = vsel %vm1010, %v6543, 0
  %v7215 = vsel %vm1010, %v6544, 0
  %v7218 = vsel %vm1010, %v6545, 0
  %v7221 = vsel %vm1010, %v6546, 0
  %v7224 = vsel %vm1010, %v6547, 0
  %v7227 = vsel %vm1010, %v6548, 0
  %v7230 = vsel %vm1010, %v6549, 0
  %v7233 = vsel %vm1010, %v6550, 0
  %v7236 = vsel %vm1010, %v6551, 0
  %7238 = vmatpush.bf16.msra.mxu0 %v7131
  %7239 = vmatpush.bf16.msra.mxu0 %v7130
  %7240 = vmatpush.bf16.msra.mxu0 %v7129
  %7241 = vmatpush.bf16.msra.mxu0 %v7128
  %7242 = vmatpush.bf16.msra.mxu0 %v7127
  %7243 = vmatpush.bf16.msra.mxu0 %v7126
  %7244 = vmatpush.bf16.msra.mxu0 %v7125
  %7245 = vmatpush.bf16.msra.mxu0 %v7124
  %7246 = vmatmul.bf16.gmra.mxu0 %v6975
  %v7247 = vpop.f32.mrf.mxu0
  %v7248 = vadd.f32 0.0, %v7247
  %v7249 = vpop.f32.mrf.mxu0
  %v7250 = vadd.f32 0.0, %v7249
  %7251 = vmatmul.bf16.gmra.mxu0 %v6978
  %v7252 = vpop.f32.mrf.mxu0
  %v7253 = vadd.f32 0.0, %v7252
  %v7254 = vpop.f32.mrf.mxu0
  %v7255 = vadd.f32 0.0, %v7254
  %7256 = vmatmul.bf16.gmra.mxu0 %v6981
  %v7257 = vpop.f32.mrf.mxu0
  %v7258 = vadd.f32 0.0, %v7257
  %v7259 = vpop.f32.mrf.mxu0
  %v7260 = vadd.f32 0.0, %v7259
  %7261 = vmatmul.bf16.gmra.mxu0 %v6984
  %v7262 = vpop.f32.mrf.mxu0
  %v7263 = vadd.f32 0.0, %v7262
  %v7264 = vpop.f32.mrf.mxu0
  %v7265 = vadd.f32 0.0, %v7264
  %7266 = vmatmul.bf16.gmra.mxu0 %v6987
  %v7267 = vpop.f32.mrf.mxu0
  %v7268 = vadd.f32 0.0, %v7267
  %v7269 = vpop.f32.mrf.mxu0
  %v7270 = vadd.f32 0.0, %v7269
  %7271 = vmatmul.bf16.gmra.mxu0 %v6990
  %v7272 = vpop.f32.mrf.mxu0
  %v7273 = vadd.f32 0.0, %v7272
  %v7274 = vpop.f32.mrf.mxu0
  %v7275 = vadd.f32 0.0, %v7274
  %7276 = vmatmul.bf16.gmra.mxu0 %v6993
  %v7277 = vpop.f32.mrf.mxu0
  %v7278 = vadd.f32 0.0, %v7277
  %v7279 = vpop.f32.mrf.mxu0
  %v7280 = vadd.f32 0.0, %v7279
  %7281 = vmatmul.bf16.gmra.mxu0 %v6996
  %v7282 = vpop.f32.mrf.mxu0
  %v7283 = vadd.f32 0.0, %v7282
  %v7284 = vpop.f32.mrf.mxu0
  %v7285 = vadd.f32 0.0, %v7284
  %7286 = vmatmul.bf16.gmra.mxu0 %v6999
  %v7287 = vpop.f32.mrf.mxu0
  %v7288 = vadd.f32 0.0, %v7287
  %v7289 = vpop.f32.mrf.mxu0
  %v7290 = vadd.f32 0.0, %v7289
  %7291 = vmatmul.bf16.gmra.mxu0 %v7002
  %v7292 = vpop.f32.mrf.mxu0
  %v7293 = vadd.f32 0.0, %v7292
  %v7294 = vpop.f32.mrf.mxu0
  %v7295 = vadd.f32 0.0, %v7294
  %7296 = vmatmul.bf16.gmra.mxu0 %v7005
  %v7297 = vpop.f32.mrf.mxu0
  %v7298 = vadd.f32 0.0, %v7297
  %v7299 = vpop.f32.mrf.mxu0
  %v7300 = vadd.f32 0.0, %v7299
  %7301 = vmatmul.bf16.gmra.mxu0 %v7008
  %v7302 = vpop.f32.mrf.mxu0
  %v7303 = vadd.f32 0.0, %v7302
  %v7304 = vpop.f32.mrf.mxu0
  %v7305 = vadd.f32 0.0, %v7304
  %7306 = vmatmul.bf16.gmra.mxu0 %v7011
  %v7307 = vpop.f32.mrf.mxu0
  %v7308 = vadd.f32 0.0, %v7307
  %v7309 = vpop.f32.mrf.mxu0
  %v7310 = vadd.f32 0.0, %v7309
  %7311 = vmatmul.bf16.gmra.mxu0 %v7014
  %v7312 = vpop.f32.mrf.mxu0
  %v7313 = vadd.f32 0.0, %v7312
  %v7314 = vpop.f32.mrf.mxu0
  %v7315 = vadd.f32 0.0, %v7314
  %7316 = vmatmul.bf16.gmra.mxu0 %v7017
  %v7317 = vpop.f32.mrf.mxu0
  %v7318 = vadd.f32 0.0, %v7317
  %v7319 = vpop.f32.mrf.mxu0
  %v7320 = vadd.f32 0.0, %v7319
  %7321 = vmatmul.bf16.gmra.mxu0 %v7020
  %v7322 = vpop.f32.mrf.mxu0
  %v7323 = vadd.f32 0.0, %v7322
  %v7324 = vpop.f32.mrf.mxu0
  %v7325 = vadd.f32 0.0, %v7324
  %7326 = vmatmul.bf16.gmra.mxu0 %v7023
  %v7327 = vpop.f32.mrf.mxu0
  %v7328 = vadd.f32 0.0, %v7327
  %v7329 = vpop.f32.mrf.mxu0
  %v7330 = vadd.f32 0.0, %v7329
  %7331 = vmatmul.bf16.gmra.mxu0 %v7026
  %v7332 = vpop.f32.mrf.mxu0
  %v7333 = vadd.f32 0.0, %v7332
  %v7334 = vpop.f32.mrf.mxu0
  %v7335 = vadd.f32 0.0, %v7334
  %7336 = vmatmul.bf16.gmra.mxu0 %v7029
  %v7337 = vpop.f32.mrf.mxu0
  %v7338 = vadd.f32 0.0, %v7337
  %v7339 = vpop.f32.mrf.mxu0
  %v7340 = vadd.f32 0.0, %v7339
  %7341 = vmatmul.bf16.gmra.mxu0 %v7032
  %v7342 = vpop.f32.mrf.mxu0
  %v7343 = vadd.f32 0.0, %v7342
  %v7344 = vpop.f32.mrf.mxu0
  %v7345 = vadd.f32 0.0, %v7344
  %7346 = vmatmul.bf16.gmra.mxu0 %v7035
  %v7347 = vpop.f32.mrf.mxu0
  %v7348 = vadd.f32 0.0, %v7347
  %v7349 = vpop.f32.mrf.mxu0
  %v7350 = vadd.f32 0.0, %v7349
  %7351 = vmatmul.bf16.gmra.mxu0 %v7038
  %v7352 = vpop.f32.mrf.mxu0
  %v7353 = vadd.f32 0.0, %v7352
  %v7354 = vpop.f32.mrf.mxu0
  %v7355 = vadd.f32 0.0, %v7354
  %7356 = vmatmul.bf16.gmra.mxu0 %v7041
  %v7357 = vpop.f32.mrf.mxu0
  %v7358 = vadd.f32 0.0, %v7357
  %v7359 = vpop.f32.mrf.mxu0
  %v7360 = vadd.f32 0.0, %v7359
  %7361 = vmatmul.bf16.gmra.mxu0 %v7044
  %v7362 = vpop.f32.mrf.mxu0
  %v7363 = vadd.f32 0.0, %v7362
  %v7364 = vpop.f32.mrf.mxu0
  %v7365 = vadd.f32 0.0, %v7364
  %7366 = vmatmul.bf16.gmra.mxu0 %v7047
  %v7367 = vpop.f32.mrf.mxu0
  %v7368 = vadd.f32 0.0, %v7367
  %v7369 = vpop.f32.mrf.mxu0
  %v7370 = vadd.f32 0.0, %v7369
  %7371 = vmatmul.bf16.gmra.mxu0 %v7050
  %v7372 = vpop.f32.mrf.mxu0
  %v7373 = vadd.f32 0.0, %v7372
  %v7374 = vpop.f32.mrf.mxu0
  %v7375 = vadd.f32 0.0, %v7374
  %7376 = vmatmul.bf16.gmra.mxu0 %v7053
  %v7377 = vpop.f32.mrf.mxu0
  %v7378 = vadd.f32 0.0, %v7377
  %v7379 = vpop.f32.mrf.mxu0
  %v7380 = vadd.f32 0.0, %v7379
  %7381 = vmatmul.bf16.gmra.mxu0 %v7056
  %v7382 = vpop.f32.mrf.mxu0
  %v7383 = vadd.f32 0.0, %v7382
  %v7384 = vpop.f32.mrf.mxu0
  %v7385 = vadd.f32 0.0, %v7384
  %7386 = vmatmul.bf16.gmra.mxu0 %v7059
  %v7387 = vpop.f32.mrf.mxu0
  %v7388 = vadd.f32 0.0, %v7387
  %v7389 = vpop.f32.mrf.mxu0
  %v7390 = vadd.f32 0.0, %v7389
  %7391 = vmatmul.bf16.gmra.mxu0 %v7062
  %v7392 = vpop.f32.mrf.mxu0
  %v7393 = vadd.f32 0.0, %v7392
  %v7394 = vpop.f32.mrf.mxu0
  %v7395 = vadd.f32 0.0, %v7394
  %7396 = vmatmul.bf16.gmra.mxu0 %v7065
  %v7397 = vpop.f32.mrf.mxu0
  %v7398 = vadd.f32 0.0, %v7397
  %v7399 = vpop.f32.mrf.mxu0
  %v7400 = vadd.f32 0.0, %v7399
  %7401 = vmatmul.bf16.gmra.mxu0 %v7068
  %v7402 = vpop.f32.mrf.mxu0
  %v7403 = vadd.f32 0.0, %v7402
  %v7404 = vpop.f32.mrf.mxu0
  %v7405 = vadd.f32 0.0, %v7404
  %7406 = vdwg.mxu0
  %7407 = vmatpush.bf16.msra.mxu0 0
  %7408 = vmatpush.bf16.msra.mxu0 0
  %7409 = vmatpush.bf16.msra.mxu0 0
  %7410 = vmatpush.bf16.msra.mxu0 0
  %7411 = vmatpush.bf16.msra.mxu0 0
  %7412 = vmatpush.bf16.msra.mxu0 0
  %7413 = vmatpush.bf16.msra.mxu0 0
  %7414 = vmatpush.bf16.msra.mxu0 %v7132
  %7415 = vmatmul.bf16.gmra.mxu0 %v7143
  %v7416 = vpop.f32.mrf.mxu0
  %v7417 = vadd.f32 %v7248, %v7416
  %v7418 = vpop.f32.mrf.mxu0
  %v7419 = vadd.f32 %v7250, %v7418
  %7420 = vmatmul.bf16.gmra.mxu0 %v7146
  %v7421 = vpop.f32.mrf.mxu0
  %v7422 = vadd.f32 %v7253, %v7421
  %v7423 = vpop.f32.mrf.mxu0
  %v7424 = vadd.f32 %v7255, %v7423
  %7425 = vmatmul.bf16.gmra.mxu0 %v7149
  %v7426 = vpop.f32.mrf.mxu0
  %v7427 = vadd.f32 %v7258, %v7426
  %v7428 = vpop.f32.mrf.mxu0
  %v7429 = vadd.f32 %v7260, %v7428
  %7430 = vmatmul.bf16.gmra.mxu0 %v7152
  %v7431 = vpop.f32.mrf.mxu0
  %v7432 = vadd.f32 %v7263, %v7431
  %v7433 = vpop.f32.mrf.mxu0
  %v7434 = vadd.f32 %v7265, %v7433
  %7435 = vmatmul.bf16.gmra.mxu0 %v7155
  %v7436 = vpop.f32.mrf.mxu0
  %v7437 = vadd.f32 %v7268, %v7436
  %v7438 = vpop.f32.mrf.mxu0
  %v7439 = vadd.f32 %v7270, %v7438
  %7440 = vmatmul.bf16.gmra.mxu0 %v7158
  %v7441 = vpop.f32.mrf.mxu0
  %v7442 = vadd.f32 %v7273, %v7441
  %v7443 = vpop.f32.mrf.mxu0
  %v7444 = vadd.f32 %v7275, %v7443
  %7445 = vmatmul.bf16.gmra.mxu0 %v7161
  %v7446 = vpop.f32.mrf.mxu0
  %v7447 = vadd.f32 %v7278, %v7446
  %v7448 = vpop.f32.mrf.mxu0
  %v7449 = vadd.f32 %v7280, %v7448
  %7450 = vmatmul.bf16.gmra.mxu0 %v7164
  %v7451 = vpop.f32.mrf.mxu0
  %v7452 = vadd.f32 %v7283, %v7451
  %v7453 = vpop.f32.mrf.mxu0
  %v7454 = vadd.f32 %v7285, %v7453
  %7455 = vmatmul.bf16.gmra.mxu0 %v7167
  %v7456 = vpop.f32.mrf.mxu0
  %v7457 = vadd.f32 %v7288, %v7456
  %v7458 = vpop.f32.mrf.mxu0
  %v7459 = vadd.f32 %v7290, %v7458
  %7460 = vmatmul.bf16.gmra.mxu0 %v7170
  %v7461 = vpop.f32.mrf.mxu0
  %v7462 = vadd.f32 %v7293, %v7461
  %v7463 = vpop.f32.mrf.mxu0
  %v7464 = vadd.f32 %v7295, %v7463
  %7465 = vmatmul.bf16.gmra.mxu0 %v7173
  %v7466 = vpop.f32.mrf.mxu0
  %v7467 = vadd.f32 %v7298, %v7466
  %v7468 = vpop.f32.mrf.mxu0
  %v7469 = vadd.f32 %v7300, %v7468
  %7470 = vmatmul.bf16.gmra.mxu0 %v7176
  %v7471 = vpop.f32.mrf.mxu0
  %v7472 = vadd.f32 %v7303, %v7471
  %v7473 = vpop.f32.mrf.mxu0
  %v7474 = vadd.f32 %v7305, %v7473
  %7475 = vmatmul.bf16.gmra.mxu0 %v7179
  %v7476 = vpop.f32.mrf.mxu0
  %v7477 = vadd.f32 %v7308, %v7476
  %v7478 = vpop.f32.mrf.mxu0
  %v7479 = vadd.f32 %v7310, %v7478
  %7480 = vmatmul.bf16.gmra.mxu0 %v7182
  %v7481 = vpop.f32.mrf.mxu0
  %v7482 = vadd.f32 %v7313, %v7481
  %v7483 = vpop.f32.mrf.mxu0
  %v7484 = vadd.f32 %v7315, %v7483
  %7485 = vmatmul.bf16.gmra.mxu0 %v7185
  %v7486 = vpop.f32.mrf.mxu0
  %v7487 = vadd.f32 %v7318, %v7486
  %v7488 = vpop.f32.mrf.mxu0
  %v7489 = vadd.f32 %v7320, %v7488
  %7490 = vmatmul.bf16.gmra.mxu0 %v7188
  %v7491 = vpop.f32.mrf.mxu0
  %v7492 = vadd.f32 %v7323, %v7491
  %v7493 = vpop.f32.mrf.mxu0
  %v7494 = vadd.f32 %v7325, %v7493
  %7495 = vmatmul.bf16.gmra.mxu0 %v7191
  %v7496 = vpop.f32.mrf.mxu0
  %v7497 = vadd.f32 %v7328, %v7496
  %v7498 = vpop.f32.mrf.mxu0
  %v7499 = vadd.f32 %v7330, %v7498
  %7500 = vmatmul.bf16.gmra.mxu0 %v7194
  %v7501 = vpop.f32.mrf.mxu0
  %v7502 = vadd.f32 %v7333, %v7501
  %v7503 = vpop.f32.mrf.mxu0
  %v7504 = vadd.f32 %v7335, %v7503
  %7505 = vmatmul.bf16.gmra.mxu0 %v7197
  %v7506 = vpop.f32.mrf.mxu0
  %v7507 = vadd.f32 %v7338, %v7506
  %v7508 = vpop.f32.mrf.mxu0
  %v7509 = vadd.f32 %v7340, %v7508
  %7510 = vmatmul.bf16.gmra.mxu0 %v7200
  %v7511 = vpop.f32.mrf.mxu0
  %v7512 = vadd.f32 %v7343, %v7511
  %v7513 = vpop.f32.mrf.mxu0
  %v7514 = vadd.f32 %v7345, %v7513
  %7515 = vmatmul.bf16.gmra.mxu0 %v7203
  %v7516 = vpop.f32.mrf.mxu0
  %v7517 = vadd.f32 %v7348, %v7516
  %v7518 = vpop.f32.mrf.mxu0
  %v7519 = vadd.f32 %v7350, %v7518
  %7520 = vmatmul.bf16.gmra.mxu0 %v7206
  %v7521 = vpop.f32.mrf.mxu0
  %v7522 = vadd.f32 %v7353, %v7521
  %v7523 = vpop.f32.mrf.mxu0
  %v7524 = vadd.f32 %v7355, %v7523
  %7525 = vmatmul.bf16.gmra.mxu0 %v7209
  %v7526 = vpop.f32.mrf.mxu0
  %v7527 = vadd.f32 %v7358, %v7526
  %v7528 = vpop.f32.mrf.mxu0
  %v7529 = vadd.f32 %v7360, %v7528
  %7530 = vmatmul.bf16.gmra.mxu0 %v7212
  %v7531 = vpop.f32.mrf.mxu0
  %v7532 = vadd.f32 %v7363, %v7531
  %v7533 = vpop.f32.mrf.mxu0
  %v7534 = vadd.f32 %v7365, %v7533
  %7535 = vmatmul.bf16.gmra.mxu0 %v7215
  %v7536 = vpop.f32.mrf.mxu0
  %v7537 = vadd.f32 %v7368, %v7536
  %v7538 = vpop.f32.mrf.mxu0
  %v7539 = vadd.f32 %v7370, %v7538
  %7540 = vmatmul.bf16.gmra.mxu0 %v7218
  %v7541 = vpop.f32.mrf.mxu0
  %v7542 = vadd.f32 %v7373, %v7541
  %v7543 = vpop.f32.mrf.mxu0
  %v7544 = vadd.f32 %v7375, %v7543
  %7545 = vmatmul.bf16.gmra.mxu0 %v7221
  %v7546 = vpop.f32.mrf.mxu0
  %v7547 = vadd.f32 %v7378, %v7546
  %v7548 = vpop.f32.mrf.mxu0
  %v7549 = vadd.f32 %v7380, %v7548
  %7550 = vmatmul.bf16.gmra.mxu0 %v7224
  %v7551 = vpop.f32.mrf.mxu0
  %v7552 = vadd.f32 %v7383, %v7551
  %v7553 = vpop.f32.mrf.mxu0
  %v7554 = vadd.f32 %v7385, %v7553
  %7555 = vmatmul.bf16.gmra.mxu0 %v7227
  %v7556 = vpop.f32.mrf.mxu0
  %v7557 = vadd.f32 %v7388, %v7556
  %v7558 = vpop.f32.mrf.mxu0
  %v7559 = vadd.f32 %v7390, %v7558
  %7560 = vmatmul.bf16.gmra.mxu0 %v7230
  %v7561 = vpop.f32.mrf.mxu0
  %v7562 = vadd.f32 %v7393, %v7561
  %v7563 = vpop.f32.mrf.mxu0
  %v7564 = vadd.f32 %v7395, %v7563
  %7565 = vmatmul.bf16.gmra.mxu0 %v7233
  %v7566 = vpop.f32.mrf.mxu0
  %v7567 = vadd.f32 %v7398, %v7566
  %v7568 = vpop.f32.mrf.mxu0
  %v7569 = vadd.f32 %v7400, %v7568
  %7570 = vmatmul.bf16.gmra.mxu0 %v7236
  %v7571 = vpop.f32.mrf.mxu0
  %v7572 = vadd.f32 %v7403, %v7571
  %v7573 = vpop.f32.mrf.mxu0
  %v7574 = vadd.f32 %v7405, %v7573
  %7575 = vdwg.mxu0
  %v7576 = vld [vmem:[#allocation2] sm:$0xf]
  %v7577 = vld [vmem:[#allocation2 + $0x4] sm:$0xf]
  %v7578 = vld [vmem:[#allocation2 + $0x14] sm:$0xf]
  %v7579 = vld [vmem:[#allocation2 + $0x18] sm:$0xf]
  %v7580 = vld [vmem:[#allocation2 + $0x28] sm:$0xf]
  %v7581 = vld [vmem:[#allocation2 + $0x2c] sm:$0xf]
  %v7582 = vld [vmem:[#allocation2 + $0x3c] sm:$0xf]
  %v7583 = vld [vmem:[#allocation2 + $0x40] sm:$0xf]
  %v7584 = vld [vmem:[#allocation2 + $0x50] sm:$0xf]
  %v7585 = vld [vmem:[#allocation2 + $0x54] sm:$0xf]
  %v7586 = vld [vmem:[#allocation2 + $0x64] sm:$0xf]
  %v7587 = vld [vmem:[#allocation2 + $0x68] sm:$0xf]
  %v7588 = vld [vmem:[#allocation2 + $0x78] sm:$0xf]
  %v7589 = vld [vmem:[#allocation2 + $0x7c] sm:$0xf]
  %v7590 = vld [vmem:[#allocation2 + $0x8c] sm:$0xf]
  %v7591 = vld [vmem:[#allocation2 + $0x90] sm:$0xf]
  %v7592 = vld [vmem:[#allocation2 + $0xa0] sm:$0xf]
  %v7593 = vld [vmem:[#allocation2 + $0xa4] sm:$0xf]
  %v7594 = vld [vmem:[#allocation2 + $0xb4] sm:$0xf]
  %v7595 = vld [vmem:[#allocation2 + $0xb8] sm:$0xf]
  %v7596 = vld [vmem:[#allocation2 + $0xc8] sm:$0xf]
  %v7597 = vld [vmem:[#allocation2 + $0xcc] sm:$0xf]
  %v7598 = vld [vmem:[#allocation2 + $0xdc] sm:$0xf]
  %v7599 = vld [vmem:[#allocation2 + $0xe0] sm:$0xf]
  %v7600 = vld [vmem:[#allocation2 + $0xf0] sm:$0xf]
  %v7601 = vld [vmem:[#allocation2 + $0xf4] sm:$0xf]
  %v7602 = vld [vmem:[#allocation2 + $0x104] sm:$0xf]
  %v7603 = vld [vmem:[#allocation2 + $0x108] sm:$0xf]
  %v7604 = vld [vmem:[#allocation2 + $0x118] sm:$0xf]
  %v7605 = vld [vmem:[#allocation2 + $0x11c] sm:$0xf]
  %v7606 = vld [vmem:[#allocation2 + $0x12c] sm:$0xf]
  %v7607 = vld [vmem:[#allocation2 + $0x130] sm:$0xf]
  %v7608 = vld [vmem:[#allocation2 + $0x320] sm:$0xf]
  %v7609 = vld [vmem:[#allocation2 + $0x324] sm:$0xf]
  %v7610 = vld [vmem:[#allocation2 + $0x334] sm:$0xf]
  %v7611 = vld [vmem:[#allocation2 + $0x338] sm:$0xf]
  %v7612 = vld [vmem:[#allocation2 + $0x348] sm:$0xf]
  %v7613 = vld [vmem:[#allocation2 + $0x34c] sm:$0xf]
  %v7614 = vld [vmem:[#allocation2 + $0x35c] sm:$0xf]
  %v7615 = vld [vmem:[#allocation2 + $0x360] sm:$0xf]
  %v7616 = vld [vmem:[#allocation2 + $0x370] sm:$0xf]
  %v7617 = vld [vmem:[#allocation2 + $0x374] sm:$0xf]
  %v7618 = vld [vmem:[#allocation2 + $0x384] sm:$0xf]
  %v7619 = vld [vmem:[#allocation2 + $0x388] sm:$0xf]
  %v7620 = vld [vmem:[#allocation2 + $0x398] sm:$0xf]
  %v7621 = vld [vmem:[#allocation2 + $0x39c] sm:$0xf]
  %v7622 = vld [vmem:[#allocation2 + $0x3ac] sm:$0xf]
  %v7623 = vld [vmem:[#allocation2 + $0x3b0] sm:$0xf]
  %v7624 = vld [vmem:[#allocation2 + $0x3c0] sm:$0xf]
  %v7625 = vld [vmem:[#allocation2 + $0x3c4] sm:$0xf]
  %v7626 = vld [vmem:[#allocation2 + $0x3d4] sm:$0xf]
  %v7627 = vld [vmem:[#allocation2 + $0x3d8] sm:$0xf]
  %v7628 = vld [vmem:[#allocation2 + $0x3e8] sm:$0xf]
  %v7629 = vld [vmem:[#allocation2 + $0x3ec] sm:$0xf]
  %v7630 = vld [vmem:[#allocation2 + $0x3fc] sm:$0xf]
  %v7631 = vld [vmem:[#allocation2 + $0x400] sm:$0xf]
  %v7632 = vld [vmem:[#allocation2 + $0x410] sm:$0xf]
  %v7633 = vld [vmem:[#allocation2 + $0x414] sm:$0xf]
  %v7634 = vld [vmem:[#allocation2 + $0x424] sm:$0xf]
  %v7635 = vld [vmem:[#allocation2 + $0x428] sm:$0xf]
  %v7636 = vld [vmem:[#allocation2 + $0x438] sm:$0xf]
  %v7637 = vld [vmem:[#allocation2 + $0x43c] sm:$0xf]
  %v7638 = vld [vmem:[#allocation2 + $0x44c] sm:$0xf]
  %v7639 = vld [vmem:[#allocation2 + $0x450] sm:$0xf]
  %v7640 = vld [vmem:[#allocation2 + $0x4] sm:$0xc]
  %v7641 = vld [vmem:[#allocation2 + $0x8] sm:$0xf]
  %v7642 = vld [vmem:[#allocation2 + $0xc] sm:$0x3]
  %v7643 = vld [vmem:[#allocation2 + $0x18] sm:$0xc]
  %v7644 = vld [vmem:[#allocation2 + $0x1c] sm:$0xf]
  %v7645 = vld [vmem:[#allocation2 + $0x20] sm:$0x3]
  %v7646 = vld [vmem:[#allocation2 + $0x2c] sm:$0xc]
  %v7647 = vld [vmem:[#allocation2 + $0x30] sm:$0xf]
  %v7648 = vld [vmem:[#allocation2 + $0x34] sm:$0x3]
  %v7649 = vld [vmem:[#allocation2 + $0x40] sm:$0xc]
  %v7650 = vld [vmem:[#allocation2 + $0x44] sm:$0xf]
  %v7651 = vld [vmem:[#allocation2 + $0x48] sm:$0x3]
  %v7652 = vld [vmem:[#allocation2 + $0x54] sm:$0xc]
  %v7653 = vld [vmem:[#allocation2 + $0x58] sm:$0xf]
  %v7654 = vld [vmem:[#allocation2 + $0x5c] sm:$0x3]
  %v7655 = vld [vmem:[#allocation2 + $0x68] sm:$0xc]
  %v7656 = vld [vmem:[#allocation2 + $0x6c] sm:$0xf]
  %v7657 = vld [vmem:[#allocation2 + $0x70] sm:$0x3]
  %v7658 = vld [vmem:[#allocation2 + $0x7c] sm:$0xc]
  %v7659 = vld [vmem:[#allocation2 + $0x80] sm:$0xf]
  %v7660 = vld [vmem:[#allocation2 + $0x84] sm:$0x3]
  %v7661 = vld [vmem:[#allocation2 + $0x90] sm:$0xc]
  %v7662 = vld [vmem:[#allocation2 + $0x94] sm:$0xf]
  %v7663 = vld [vmem:[#allocation2 + $0x98] sm:$0x3]
  %v7664 = vld [vmem:[#allocation2 + $0xa4] sm:$0xc]
  %v7665 = vld [vmem:[#allocation2 + $0xa8] sm:$0xf]
  %v7666 = vld [vmem:[#allocation2 + $0xac] sm:$0x3]
  %v7667 = vld [vmem:[#allocation2 + $0xb8] sm:$0xc]
  %v7668 = vld [vmem:[#allocation2 + $0xbc] sm:$0xf]
  %v7669 = vld [vmem:[#allocation2 + $0xc0] sm:$0x3]
  %v7670 = vld [vmem:[#allocation2 + $0xcc] sm:$0xc]
  %v7671 = vld [vmem:[#allocation2 + $0xd0] sm:$0xf]
  %v7672 = vld [vmem:[#allocation2 + $0xd4] sm:$0x3]
  %v7673 = vld [vmem:[#allocation2 + $0xe0] sm:$0xc]
  %v7674 = vld [vmem:[#allocation2 + $0xe4] sm:$0xf]
  %v7675 = vld [vmem:[#allocation2 + $0xe8] sm:$0x3]
  %v7676 = vld [vmem:[#allocation2 + $0xf4] sm:$0xc]
  %v7677 = vld [vmem:[#allocation2 + $0xf8] sm:$0xf]
  %v7678 = vld [vmem:[#allocation2 + $0xfc] sm:$0x3]
  %v7679 = vld [vmem:[#allocation2 + $0x108] sm:$0xc]
  %v7680 = vld [vmem:[#allocation2 + $0x10c] sm:$0xf]
  %v7681 = vld [vmem:[#allocation2 + $0x110] sm:$0x3]
  %v7682 = vld [vmem:[#allocation2 + $0x11c] sm:$0xc]
  %v7683 = vld [vmem:[#allocation2 + $0x120] sm:$0xf]
  %v7684 = vld [vmem:[#allocation2 + $0x124] sm:$0x3]
  %v7685 = vld [vmem:[#allocation2 + $0x130] sm:$0xc]
  %v7686 = vld [vmem:[#allocation2 + $0x134] sm:$0xf]
  %v7687 = vld [vmem:[#allocation2 + $0x138] sm:$0x3]
  %v7688 = vld [vmem:[#allocation2 + $0x324] sm:$0xc]
  %v7689 = vld [vmem:[#allocation2 + $0x328] sm:$0xf]
  %v7690 = vld [vmem:[#allocation2 + $0x32c] sm:$0x3]
  %v7691 = vld [vmem:[#allocation2 + $0x338] sm:$0xc]
  %v7692 = vld [vmem:[#allocation2 + $0x33c] sm:$0xf]
  %v7693 = vld [vmem:[#allocation2 + $0x340] sm:$0x3]
  %v7694 = vld [vmem:[#allocation2 + $0x34c] sm:$0xc]
  %v7695 = vld [vmem:[#allocation2 + $0x350] sm:$0xf]
  %v7696 = vld [vmem:[#allocation2 + $0x354] sm:$0x3]
  %v7697 = vld [vmem:[#allocation2 + $0x360] sm:$0xc]
  %v7698 = vld [vmem:[#allocation2 + $0x364] sm:$0xf]
  %v7699 = vld [vmem:[#allocation2 + $0x368] sm:$0x3]
  %v7700 = vld [vmem:[#allocation2 + $0x374] sm:$0xc]
  %v7701 = vld [vmem:[#allocation2 + $0x378] sm:$0xf]
  %v7702 = vld [vmem:[#allocation2 + $0x37c] sm:$0x3]
  %v7703 = vld [vmem:[#allocation2 + $0x388] sm:$0xc]
  %v7704 = vld [vmem:[#allocation2 + $0x38c] sm:$0xf]
  %v7705 = vld [vmem:[#allocation2 + $0x390] sm:$0x3]
  %v7706 = vld [vmem:[#allocation2 + $0x39c] sm:$0xc]
  %v7707 = vld [vmem:[#allocation2 + $0x3a0] sm:$0xf]
  %v7708 = vld [vmem:[#allocation2 + $0x3a4] sm:$0x3]
  %v7709 = vld [vmem:[#allocation2 + $0x3b0] sm:$0xc]
  %v7710 = vld [vmem:[#allocation2 + $0x3b4] sm:$0xf]
  %v7711 = vld [vmem:[#allocation2 + $0x3b8] sm:$0x3]
  %v7712 = vld [vmem:[#allocation2 + $0x3c4] sm:$0xc]
  %v7713 = vld [vmem:[#allocation2 + $0x3c8] sm:$0xf]
  %v7714 = vld [vmem:[#allocation2 + $0x3cc] sm:$0x3]
  %v7715 = vld [vmem:[#allocation2 + $0x3d8] sm:$0xc]
  %v7716 = vld [vmem:[#allocation2 + $0x3dc] sm:$0xf]
  %v7717 = vld [vmem:[#allocation2 + $0x3e0] sm:$0x3]
  %v7718 = vld [vmem:[#allocation2 + $0x3ec] sm:$0xc]
  %v7719 = vld [vmem:[#allocation2 + $0x3f0] sm:$0xf]
  %v7720 = vld [vmem:[#allocation2 + $0x3f4] sm:$0x3]
  %v7721 = vld [vmem:[#allocation2 + $0x400] sm:$0xc]
  %v7722 = vld [vmem:[#allocation2 + $0x404] sm:$0xf]
  %v7723 = vld [vmem:[#allocation2 + $0x408] sm:$0x3]
  %v7724 = vld [vmem:[#allocation2 + $0x414] sm:$0xc]
  %v7725 = vld [vmem:[#allocation2 + $0x418] sm:$0xf]
  %v7726 = vld [vmem:[#allocation2 + $0x41c] sm:$0x3]
  %v7727 = vld [vmem:[#allocation2 + $0x428] sm:$0xc]
  %v7728 = vld [vmem:[#allocation2 + $0x42c] sm:$0xf]
  %v7729 = vld [vmem:[#allocation2 + $0x430] sm:$0x3]
  %v7730 = vld [vmem:[#allocation2 + $0x43c] sm:$0xc]
  %v7731 = vld [vmem:[#allocation2 + $0x440] sm:$0xf]
  %v7732 = vld [vmem:[#allocation2 + $0x444] sm:$0x3]
  %v7733 = vld [vmem:[#allocation2 + $0x450] sm:$0xc]
  %v7734 = vld [vmem:[#allocation2 + $0x454] sm:$0xf]
  %v7735 = vld [vmem:[#allocation2 + $0x458] sm:$0x3]
  %v7832 = vrot.slane %v7640, 6
  %v7833 = vrot.slane %v7832, 4
  %v7834 = vrot.slane %v7641, 6
  %v7835 = vsel %vm622, %v7833, %v7834
  %v7836 = vrot.slane %v7834, 4
  %v7837 = vrot.slane %v7642, 6
  %v7838 = vsel %vm622, %v7836, %v7837
  %v7839 = vrot.slane %v7643, 6
  %v7840 = vrot.slane %v7839, 4
  %v7841 = vrot.slane %v7644, 6
  %v7842 = vsel %vm622, %v7840, %v7841
  %v7843 = vrot.slane %v7841, 4
  %v7844 = vrot.slane %v7645, 6
  %v7845 = vsel %vm622, %v7843, %v7844
  %v7846 = vrot.slane %v7646, 6
  %v7847 = vrot.slane %v7846, 4
  %v7848 = vrot.slane %v7647, 6
  %v7849 = vsel %vm622, %v7847, %v7848
  %v7850 = vrot.slane %v7848, 4
  %v7851 = vrot.slane %v7648, 6
  %v7852 = vsel %vm622, %v7850, %v7851
  %v7853 = vrot.slane %v7649, 6
  %v7854 = vrot.slane %v7853, 4
  %v7855 = vrot.slane %v7650, 6
  %v7856 = vsel %vm622, %v7854, %v7855
  %v7857 = vrot.slane %v7855, 4
  %v7858 = vrot.slane %v7651, 6
  %v7859 = vsel %vm622, %v7857, %v7858
  %v7860 = vrot.slane %v7652, 6
  %v7861 = vrot.slane %v7860, 4
  %v7862 = vrot.slane %v7653, 6
  %v7863 = vsel %vm622, %v7861, %v7862
  %v7864 = vrot.slane %v7862, 4
  %v7865 = vrot.slane %v7654, 6
  %v7866 = vsel %vm622, %v7864, %v7865
  %v7867 = vrot.slane %v7655, 6
  %v7868 = vrot.slane %v7867, 4
  %v7869 = vrot.slane %v7656, 6
  %v7870 = vsel %vm622, %v7868, %v7869
  %v7871 = vrot.slane %v7869, 4
  %v7872 = vrot.slane %v7657, 6
  %v7873 = vsel %vm622, %v7871, %v7872
  %v7874 = vrot.slane %v7658, 6
  %v7875 = vrot.slane %v7874, 4
  %v7876 = vrot.slane %v7659, 6
  %v7877 = vsel %vm622, %v7875, %v7876
  %v7878 = vrot.slane %v7876, 4
  %v7879 = vrot.slane %v7660, 6
  %v7880 = vsel %vm622, %v7878, %v7879
  %v7881 = vrot.slane %v7661, 6
  %v7882 = vrot.slane %v7881, 4
  %v7883 = vrot.slane %v7662, 6
  %v7884 = vsel %vm622, %v7882, %v7883
  %v7885 = vrot.slane %v7883, 4
  %v7886 = vrot.slane %v7663, 6
  %v7887 = vsel %vm622, %v7885, %v7886
  %v7888 = vrot.slane %v7664, 6
  %v7889 = vrot.slane %v7888, 4
  %v7890 = vrot.slane %v7665, 6
  %v7891 = vsel %vm622, %v7889, %v7890
  %v7892 = vrot.slane %v7890, 4
  %v7893 = vrot.slane %v7666, 6
  %v7894 = vsel %vm622, %v7892, %v7893
  %v7895 = vrot.slane %v7667, 6
  %v7896 = vrot.slane %v7895, 4
  %v7897 = vrot.slane %v7668, 6
  %v7898 = vsel %vm622, %v7896, %v7897
  %v7899 = vrot.slane %v7897, 4
  %v7900 = vrot.slane %v7669, 6
  %v7901 = vsel %vm622, %v7899, %v7900
  %v7902 = vrot.slane %v7670, 6
  %v7903 = vrot.slane %v7902, 4
  %v7904 = vrot.slane %v7671, 6
  %v7905 = vsel %vm622, %v7903, %v7904
  %v7906 = vrot.slane %v7904, 4
  %v7907 = vrot.slane %v7672, 6
  %v7908 = vsel %vm622, %v7906, %v7907
  %v7909 = vrot.slane %v7673, 6
  %v7910 = vrot.slane %v7909, 4
  %v7911 = vrot.slane %v7674, 6
  %v7912 = vsel %vm622, %v7910, %v7911
  %v7913 = vrot.slane %v7911, 4
  %v7914 = vrot.slane %v7675, 6
  %v7915 = vsel %vm622, %v7913, %v7914
  %v7916 = vrot.slane %v7676, 6
  %v7917 = vrot.slane %v7916, 4
  %v7918 = vrot.slane %v7677, 6
  %v7919 = vsel %vm622, %v7917, %v7918
  %v7920 = vrot.slane %v7918, 4
  %v7921 = vrot.slane %v7678, 6
  %v7922 = vsel %vm622, %v7920, %v7921
  %v7923 = vrot.slane %v7679, 6
  %v7924 = vrot.slane %v7923, 4
  %v7925 = vrot.slane %v7680, 6
  %v7926 = vsel %vm622, %v7924, %v7925
  %v7927 = vrot.slane %v7925, 4
  %v7928 = vrot.slane %v7681, 6
  %v7929 = vsel %vm622, %v7927, %v7928
  %v7930 = vrot.slane %v7682, 6
  %v7931 = vrot.slane %v7930, 4
  %v7932 = vrot.slane %v7683, 6
  %v7933 = vsel %vm622, %v7931, %v7932
  %v7934 = vrot.slane %v7932, 4
  %v7935 = vrot.slane %v7684, 6
  %v7936 = vsel %vm622, %v7934, %v7935
  %v7937 = vrot.slane %v7685, 6
  %v7938 = vrot.slane %v7937, 4
  %v7939 = vrot.slane %v7686, 6
  %v7940 = vsel %vm622, %v7938, %v7939
  %v7941 = vrot.slane %v7939, 4
  %v7942 = vrot.slane %v7687, 6
  %v7943 = vsel %vm622, %v7941, %v7942
  %v7944 = vrot.slane %v7688, 6
  %v7945 = vrot.slane %v7944, 4
  %v7946 = vrot.slane %v7689, 6
  %v7947 = vsel %vm622, %v7945, %v7946
  %v7948 = vrot.slane %v7946, 4
  %v7949 = vrot.slane %v7690, 6
  %v7950 = vsel %vm622, %v7948, %v7949
  %v7951 = vrot.slane %v7691, 6
  %v7952 = vrot.slane %v7951, 4
  %v7953 = vrot.slane %v7692, 6
  %v7954 = vsel %vm622, %v7952, %v7953
  %v7955 = vrot.slane %v7953, 4
  %v7956 = vrot.slane %v7693, 6
  %v7957 = vsel %vm622, %v7955, %v7956
  %v7958 = vrot.slane %v7694, 6
  %v7959 = vrot.slane %v7958, 4
  %v7960 = vrot.slane %v7695, 6
  %v7961 = vsel %vm622, %v7959, %v7960
  %v7962 = vrot.slane %v7960, 4
  %v7963 = vrot.slane %v7696, 6
  %v7964 = vsel %vm622, %v7962, %v7963
  %v7965 = vrot.slane %v7697, 6
  %v7966 = vrot.slane %v7965, 4
  %v7967 = vrot.slane %v7698, 6
  %v7968 = vsel %vm622, %v7966, %v7967
  %v7969 = vrot.slane %v7967, 4
  %v7970 = vrot.slane %v7699, 6
  %v7971 = vsel %vm622, %v7969, %v7970
  %v7972 = vrot.slane %v7700, 6
  %v7973 = vrot.slane %v7972, 4
  %v7974 = vrot.slane %v7701, 6
  %v7975 = vsel %vm622, %v7973, %v7974
  %v7976 = vrot.slane %v7974, 4
  %v7977 = vrot.slane %v7702, 6
  %v7978 = vsel %vm622, %v7976, %v7977
  %v7979 = vrot.slane %v7703, 6
  %v7980 = vrot.slane %v7979, 4
  %v7981 = vrot.slane %v7704, 6
  %v7982 = vsel %vm622, %v7980, %v7981
  %v7983 = vrot.slane %v7981, 4
  %v7984 = vrot.slane %v7705, 6
  %v7985 = vsel %vm622, %v7983, %v7984
  %v7986 = vrot.slane %v7706, 6
  %v7987 = vrot.slane %v7986, 4
  %v7988 = vrot.slane %v7707, 6
  %v7989 = vsel %vm622, %v7987, %v7988
  %v7990 = vrot.slane %v7988, 4
  %v7991 = vrot.slane %v7708, 6
  %v7992 = vsel %vm622, %v7990, %v7991
  %v7993 = vrot.slane %v7709, 6
  %v7994 = vrot.slane %v7993, 4
  %v7995 = vrot.slane %v7710, 6
  %v7996 = vsel %vm622, %v7994, %v7995
  %v7997 = vrot.slane %v7995, 4
  %v7998 = vrot.slane %v7711, 6
  %v7999 = vsel %vm622, %v7997, %v7998
  %v8000 = vrot.slane %v7712, 6
  %v8001 = vrot.slane %v8000, 4
  %v8002 = vrot.slane %v7713, 6
  %v8003 = vsel %vm622, %v8001, %v8002
  %v8004 = vrot.slane %v8002, 4
  %v8005 = vrot.slane %v7714, 6
  %v8006 = vsel %vm622, %v8004, %v8005
  %v8007 = vrot.slane %v7715, 6
  %v8008 = vrot.slane %v8007, 4
  %v8009 = vrot.slane %v7716, 6
  %v8010 = vsel %vm622, %v8008, %v8009
  %v8011 = vrot.slane %v8009, 4
  %v8012 = vrot.slane %v7717, 6
  %v8013 = vsel %vm622, %v8011, %v8012
  %v8014 = vrot.slane %v7718, 6
  %v8015 = vrot.slane %v8014, 4
  %v8016 = vrot.slane %v7719, 6
  %v8017 = vsel %vm622, %v8015, %v8016
  %v8018 = vrot.slane %v8016, 4
  %v8019 = vrot.slane %v7720, 6
  %v8020 = vsel %vm622, %v8018, %v8019
  %v8021 = vrot.slane %v7721, 6
  %v8022 = vrot.slane %v8021, 4
  %v8023 = vrot.slane %v7722, 6
  %v8024 = vsel %vm622, %v8022, %v8023
  %v8025 = vrot.slane %v8023, 4
  %v8026 = vrot.slane %v7723, 6
  %v8027 = vsel %vm622, %v8025, %v8026
  %v8028 = vrot.slane %v7724, 6
  %v8029 = vrot.slane %v8028, 4
  %v8030 = vrot.slane %v7725, 6
  %v8031 = vsel %vm622, %v8029, %v8030
  %v8032 = vrot.slane %v8030, 4
  %v8033 = vrot.slane %v7726, 6
  %v8034 = vsel %vm622, %v8032, %v8033
  %v8035 = vrot.slane %v7727, 6
  %v8036 = vrot.slane %v8035, 4
  %v8037 = vrot.slane %v7728, 6
  %v8038 = vsel %vm622, %v8036, %v8037
  %v8039 = vrot.slane %v8037, 4
  %v8040 = vrot.slane %v7729, 6
  %v8041 = vsel %vm622, %v8039, %v8040
  %v8042 = vrot.slane %v7730, 6
  %v8043 = vrot.slane %v8042, 4
  %v8044 = vrot.slane %v7731, 6
  %v8045 = vsel %vm622, %v8043, %v8044
  %v8046 = vrot.slane %v8044, 4
  %v8047 = vrot.slane %v7732, 6
  %v8048 = vsel %vm622, %v8046, %v8047
  %v8049 = vrot.slane %v7733, 6
  %v8050 = vrot.slane %v8049, 4
  %v8051 = vrot.slane %v7734, 6
  %v8052 = vsel %vm622, %v8050, %v8051
  %v8053 = vrot.slane %v8051, 4
  %v8054 = vrot.slane %v7735, 6
  %v8055 = vsel %vm622, %v8053, %v8054
  %v8056 = vld [vmem:[#allocation2 + $0xc] sm:$0xf]
  %v8057 = vld [vmem:[#allocation2 + $0x10] sm:$0xf]
  %v8058 = vld [vmem:[#allocation2 + $0x20] sm:$0xf]
  %v8059 = vld [vmem:[#allocation2 + $0x24] sm:$0xf]
  %v8060 = vld [vmem:[#allocation2 + $0x34] sm:$0xf]
  %v8061 = vld [vmem:[#allocation2 + $0x38] sm:$0xf]
  %v8062 = vld [vmem:[#allocation2 + $0x48] sm:$0xf]
  %v8063 = vld [vmem:[#allocation2 + $0x4c] sm:$0xf]
  %v8064 = vld [vmem:[#allocation2 + $0x5c] sm:$0xf]
  %v8065 = vld [vmem:[#allocation2 + $0x60] sm:$0xf]
  %v8066 = vld [vmem:[#allocation2 + $0x70] sm:$0xf]
  %v8067 = vld [vmem:[#allocation2 + $0x74] sm:$0xf]
  %v8068 = vld [vmem:[#allocation2 + $0x84] sm:$0xf]
  %v8069 = vld [vmem:[#allocation2 + $0x88] sm:$0xf]
  %v8070 = vld [vmem:[#allocation2 + $0x98] sm:$0xf]
  %v8071 = vld [vmem:[#allocation2 + $0x9c] sm:$0xf]
  %v8072 = vld [vmem:[#allocation2 + $0xac] sm:$0xf]
  %v8073 = vld [vmem:[#allocation2 + $0xb0] sm:$0xf]
  %v8074 = vld [vmem:[#allocation2 + $0xc0] sm:$0xf]
  %v8075 = vld [vmem:[#allocation2 + $0xc4] sm:$0xf]
  %v8076 = vld [vmem:[#allocation2 + $0xd4] sm:$0xf]
  %v8077 = vld [vmem:[#allocation2 + $0xd8] sm:$0xf]
  %v8078 = vld [vmem:[#allocation2 + $0xe8] sm:$0xf]
  %v8079 = vld [vmem:[#allocation2 + $0xec] sm:$0xf]
  %v8080 = vld [vmem:[#allocation2 + $0xfc] sm:$0xf]
  %v8081 = vld [vmem:[#allocation2 + $0x100] sm:$0xf]
  %v8082 = vld [vmem:[#allocation2 + $0x110] sm:$0xf]
  %v8083 = vld [vmem:[#allocation2 + $0x114] sm:$0xf]
  %v8084 = vld [vmem:[#allocation2 + $0x124] sm:$0xf]
  %v8085 = vld [vmem:[#allocation2 + $0x128] sm:$0xf]
  %v8086 = vld [vmem:[#allocation2 + $0x138] sm:$0xf]
  %v8087 = vld [vmem:[#allocation2 + $0x13c] sm:$0xf]
  %v8088 = vld [vmem:[#allocation2 + $0x32c] sm:$0xf]
  %v8089 = vld [vmem:[#allocation2 + $0x330] sm:$0xf]
  %v8090 = vld [vmem:[#allocation2 + $0x340] sm:$0xf]
  %v8091 = vld [vmem:[#allocation2 + $0x344] sm:$0xf]
  %v8092 = vld [vmem:[#allocation2 + $0x354] sm:$0xf]
  %v8093 = vld [vmem:[#allocation2 + $0x358] sm:$0xf]
  %v8094 = vld [vmem:[#allocation2 + $0x368] sm:$0xf]
  %v8095 = vld [vmem:[#allocation2 + $0x36c] sm:$0xf]
  %v8096 = vld [vmem:[#allocation2 + $0x37c] sm:$0xf]
  %v8097 = vld [vmem:[#allocation2 + $0x380] sm:$0xf]
  %v8098 = vld [vmem:[#allocation2 + $0x390] sm:$0xf]
  %v8099 = vld [vmem:[#allocation2 + $0x394] sm:$0xf]
  %v8100 = vld [vmem:[#allocation2 + $0x3a4] sm:$0xf]
  %v8101 = vld [vmem:[#allocation2 + $0x3a8] sm:$0xf]
  %v8102 = vld [vmem:[#allocation2 + $0x3b8] sm:$0xf]
  %v8103 = vld [vmem:[#allocation2 + $0x3bc] sm:$0xf]
  %v8104 = vld [vmem:[#allocation2 + $0x3cc] sm:$0xf]
  %v8105 = vld [vmem:[#allocation2 + $0x3d0] sm:$0xf]
  %v8106 = vld [vmem:[#allocation2 + $0x3e0] sm:$0xf]
  %v8107 = vld [vmem:[#allocation2 + $0x3e4] sm:$0xf]
  %v8108 = vld [vmem:[#allocation2 + $0x3f4] sm:$0xf]
  %v8109 = vld [vmem:[#allocation2 + $0x3f8] sm:$0xf]
  %v8110 = vld [vmem:[#allocation2 + $0x408] sm:$0xf]
  %v8111 = vld [vmem:[#allocation2 + $0x40c] sm:$0xf]
  %v8112 = vld [vmem:[#allocation2 + $0x41c] sm:$0xf]
  %v8113 = vld [vmem:[#allocation2 + $0x420] sm:$0xf]
  %v8114 = vld [vmem:[#allocation2 + $0x430] sm:$0xf]
  %v8115 = vld [vmem:[#allocation2 + $0x434] sm:$0xf]
  %v8116 = vld [vmem:[#allocation2 + $0x444] sm:$0xf]
  %v8117 = vld [vmem:[#allocation2 + $0x448] sm:$0xf]
  %v8118 = vld [vmem:[#allocation2 + $0x458] sm:$0xf]
  %v8119 = vld [vmem:[#allocation2 + $0x45c] sm:$0xf]
  %v8120 = vld [vmem:[%s879] sm:$0xf]
  %v8121 = vld [vmem:[%s879 + $0x4] sm:$0xf]
  %v8122 = vld [vmem:[%s879 + $0x14] sm:$0xf]
  %v8123 = vld [vmem:[%s879 + $0x18] sm:$0xf]
  %v8124 = vld [vmem:[%s879 + $0x28] sm:$0xf]
  %v8125 = vld [vmem:[%s879 + $0x2c] sm:$0xf]
  %v8126 = vld [vmem:[%s879 + $0x3c] sm:$0xf]
  %v8127 = vld [vmem:[%s879 + $0x40] sm:$0xf]
  %v8128 = vld [vmem:[%s879 + $0x50] sm:$0xf]
  %v8129 = vld [vmem:[%s879 + $0x54] sm:$0xf]
  %v8130 = vld [vmem:[%s879 + $0x64] sm:$0xf]
  %v8131 = vld [vmem:[%s879 + $0x68] sm:$0xf]
  %v8132 = vld [vmem:[%s879 + $0x78] sm:$0xf]
  %v8133 = vld [vmem:[%s879 + $0x7c] sm:$0xf]
  %v8134 = vld [vmem:[%s879 + $0x8c] sm:$0xf]
  %v8135 = vld [vmem:[%s879 + $0x90] sm:$0xf]
  %v8136 = vld [vmem:[%s879 + $0xa0] sm:$0xf]
  %v8137 = vld [vmem:[%s879 + $0xa4] sm:$0xf]
  %v8138 = vld [vmem:[%s879 + $0xb4] sm:$0xf]
  %v8139 = vld [vmem:[%s879 + $0xb8] sm:$0xf]
  %v8140 = vld [vmem:[%s879 + $0xc8] sm:$0xf]
  %v8141 = vld [vmem:[%s879 + $0xcc] sm:$0xf]
  %v8142 = vld [vmem:[%s879 + $0xdc] sm:$0xf]
  %v8143 = vld [vmem:[%s879 + $0xe0] sm:$0xf]
  %v8144 = vld [vmem:[%s879 + $0xf0] sm:$0xf]
  %v8145 = vld [vmem:[%s879 + $0xf4] sm:$0xf]
  %v8146 = vld [vmem:[%s879 + $0x104] sm:$0xf]
  %v8147 = vld [vmem:[%s879 + $0x108] sm:$0xf]
  %v8148 = vld [vmem:[%s879 + $0x118] sm:$0xf]
  %v8149 = vld [vmem:[%s879 + $0x11c] sm:$0xf]
  %v8150 = vld [vmem:[%s879 + $0x12c] sm:$0xf]
  %v8151 = vld [vmem:[%s879 + $0x130] sm:$0xf]
  %v8152 = vld [vmem:[%s879 + $0x320] sm:$0xf]
  %v8153 = vld [vmem:[%s879 + $0x324] sm:$0xf]
  %v8154 = vld [vmem:[%s879 + $0x334] sm:$0xf]
  %v8155 = vld [vmem:[%s879 + $0x338] sm:$0xf]
  %v8156 = vld [vmem:[%s879 + $0x348] sm:$0xf]
  %v8157 = vld [vmem:[%s879 + $0x34c] sm:$0xf]
  %v8158 = vld [vmem:[%s879 + $0x35c] sm:$0xf]
  %v8159 = vld [vmem:[%s879 + $0x360] sm:$0xf]
  %v8160 = vld [vmem:[%s879 + $0x370] sm:$0xf]
  %v8161 = vld [vmem:[%s879 + $0x374] sm:$0xf]
  %v8162 = vld [vmem:[%s879 + $0x384] sm:$0xf]
  %v8163 = vld [vmem:[%s879 + $0x388] sm:$0xf]
  %v8164 = vld [vmem:[%s879 + $0x398] sm:$0xf]
  %v8165 = vld [vmem:[%s879 + $0x39c] sm:$0xf]
  %v8166 = vld [vmem:[%s879 + $0x3ac] sm:$0xf]
  %v8167 = vld [vmem:[%s879 + $0x3b0] sm:$0xf]
  %v8168 = vld [vmem:[%s879 + $0x3c0] sm:$0xf]
  %v8169 = vld [vmem:[%s879 + $0x3c4] sm:$0xf]
  %v8170 = vld [vmem:[%s879 + $0x3d4] sm:$0xf]
  %v8171 = vld [vmem:[%s879 + $0x3d8] sm:$0xf]
  %v8172 = vld [vmem:[%s879 + $0x3e8] sm:$0xf]
  %v8173 = vld [vmem:[%s879 + $0x3ec] sm:$0xf]
  %v8174 = vld [vmem:[%s879 + $0x3fc] sm:$0xf]
  %v8175 = vld [vmem:[%s879 + $0x400] sm:$0xf]
  %v8176 = vld [vmem:[%s879 + $0x410] sm:$0xf]
  %v8177 = vld [vmem:[%s879 + $0x414] sm:$0xf]
  %v8178 = vld [vmem:[%s879 + $0x424] sm:$0xf]
  %v8179 = vld [vmem:[%s879 + $0x428] sm:$0xf]
  %v8180 = vld [vmem:[%s879 + $0x438] sm:$0xf]
  %v8181 = vld [vmem:[%s879 + $0x43c] sm:$0xf]
  %v8182 = vld [vmem:[%s879 + $0x44c] sm:$0xf]
  %v8183 = vld [vmem:[%s879 + $0x450] sm:$0xf]
  %v8184 = vld [vmem:[%s879 + $0x10] sm:$0xf]
  %v8185 = vld [vmem:[%s879 + $0x24] sm:$0xf]
  %v8186 = vld [vmem:[%s879 + $0x38] sm:$0xf]
  %v8187 = vld [vmem:[%s879 + $0x4c] sm:$0xf]
  %v8188 = vld [vmem:[%s879 + $0x60] sm:$0xf]
  %v8189 = vld [vmem:[%s879 + $0x74] sm:$0xf]
  %v8190 = vld [vmem:[%s879 + $0x88] sm:$0xf]
  %v8191 = vld [vmem:[%s879 + $0x9c] sm:$0xf]
  %v8192 = vld [vmem:[%s879 + $0xb0] sm:$0xf]
  %v8193 = vld [vmem:[%s879 + $0xc4] sm:$0xf]
  %v8194 = vld [vmem:[%s879 + $0xd8] sm:$0xf]
  %v8195 = vld [vmem:[%s879 + $0xec] sm:$0xf]
  %v8196 = vld [vmem:[%s879 + $0x100] sm:$0xf]
  %v8197 = vld [vmem:[%s879 + $0x114] sm:$0xf]
  %v8198 = vld [vmem:[%s879 + $0x128] sm:$0xf]
  %v8199 = vld [vmem:[%s879 + $0x13c] sm:$0xf]
  %v8200 = vld [vmem:[%s879 + $0x330] sm:$0xf]
  %v8201 = vld [vmem:[%s879 + $0x344] sm:$0xf]
  %v8202 = vld [vmem:[%s879 + $0x358] sm:$0xf]
  %v8203 = vld [vmem:[%s879 + $0x36c] sm:$0xf]
  %v8204 = vld [vmem:[%s879 + $0x380] sm:$0xf]
  %v8205 = vld [vmem:[%s879 + $0x394] sm:$0xf]
  %v8206 = vld [vmem:[%s879 + $0x3a8] sm:$0xf]
  %v8207 = vld [vmem:[%s879 + $0x3bc] sm:$0xf]
  %v8208 = vld [vmem:[%s879 + $0x3d0] sm:$0xf]
  %v8209 = vld [vmem:[%s879 + $0x3e4] sm:$0xf]
  %v8210 = vld [vmem:[%s879 + $0x3f8] sm:$0xf]
  %v8211 = vld [vmem:[%s879 + $0x40c] sm:$0xf]
  %v8212 = vld [vmem:[%s879 + $0x420] sm:$0xf]
  %v8213 = vld [vmem:[%s879 + $0x434] sm:$0xf]
  %v8214 = vld [vmem:[%s879 + $0x448] sm:$0xf]
  %v8215 = vld [vmem:[%s879 + $0x45c] sm:$0xf]
  %s8216 = scalar_lea.vmem [#allocation2], 480
  %v8217 = vld [vmem:[%s8216] sm:$0xf]
  %v8218 = vld [vmem:[%s8216 + $0x4] sm:$0xf]
  %v8219 = vld [vmem:[%s8216 + $0x14] sm:$0xf]
  %v8220 = vld [vmem:[%s8216 + $0x18] sm:$0xf]
  %v8221 = vld [vmem:[%s8216 + $0x28] sm:$0xf]
  %v8222 = vld [vmem:[%s8216 + $0x2c] sm:$0xf]
  %v8223 = vld [vmem:[%s8216 + $0x3c] sm:$0xf]
  %v8224 = vld [vmem:[%s8216 + $0x40] sm:$0xf]
  %v8225 = vld [vmem:[%s8216 + $0x50] sm:$0xf]
  %v8226 = vld [vmem:[%s8216 + $0x54] sm:$0xf]
  %v8227 = vld [vmem:[%s8216 + $0x64] sm:$0xf]
  %v8228 = vld [vmem:[%s8216 + $0x68] sm:$0xf]
  %v8229 = vld [vmem:[%s8216 + $0x78] sm:$0xf]
  %v8230 = vld [vmem:[%s8216 + $0x7c] sm:$0xf]
  %v8231 = vld [vmem:[%s8216 + $0x8c] sm:$0xf]
  %v8232 = vld [vmem:[%s8216 + $0x90] sm:$0xf]
  %v8233 = vld [vmem:[%s8216 + $0xa0] sm:$0xf]
  %v8234 = vld [vmem:[%s8216 + $0xa4] sm:$0xf]
  %v8235 = vld [vmem:[%s8216 + $0xb4] sm:$0xf]
  %v8236 = vld [vmem:[%s8216 + $0xb8] sm:$0xf]
  %v8237 = vld [vmem:[%s8216 + $0xc8] sm:$0xf]
  %v8238 = vld [vmem:[%s8216 + $0xcc] sm:$0xf]
  %v8239 = vld [vmem:[%s8216 + $0xdc] sm:$0xf]
  %v8240 = vld [vmem:[%s8216 + $0xe0] sm:$0xf]
  %v8241 = vld [vmem:[%s8216 + $0xf0] sm:$0xf]
  %v8242 = vld [vmem:[%s8216 + $0xf4] sm:$0xf]
  %v8243 = vld [vmem:[%s8216 + $0x104] sm:$0xf]
  %v8244 = vld [vmem:[%s8216 + $0x108] sm:$0xf]
  %v8245 = vld [vmem:[%s8216 + $0x118] sm:$0xf]
  %v8246 = vld [vmem:[%s8216 + $0x11c] sm:$0xf]
  %v8247 = vld [vmem:[%s8216 + $0x12c] sm:$0xf]
  %v8248 = vld [vmem:[%s8216 + $0x130] sm:$0xf]
  %v8249 = vld [vmem:[%s8216 + $0x320] sm:$0xf]
  %v8250 = vld [vmem:[%s8216 + $0x324] sm:$0xf]
  %v8251 = vld [vmem:[%s8216 + $0x334] sm:$0xf]
  %v8252 = vld [vmem:[%s8216 + $0x338] sm:$0xf]
  %v8253 = vld [vmem:[%s8216 + $0x348] sm:$0xf]
  %v8254 = vld [vmem:[%s8216 + $0x34c] sm:$0xf]
  %v8255 = vld [vmem:[%s8216 + $0x35c] sm:$0xf]
  %v8256 = vld [vmem:[%s8216 + $0x360] sm:$0xf]
  %v8257 = vld [vmem:[%s8216 + $0x370] sm:$0xf]
  %v8258 = vld [vmem:[%s8216 + $0x374] sm:$0xf]
  %v8259 = vld [vmem:[%s8216 + $0x384] sm:$0xf]
  %v8260 = vld [vmem:[%s8216 + $0x388] sm:$0xf]
  %v8261 = vld [vmem:[%s8216 + $0x398] sm:$0xf]
  %v8262 = vld [vmem:[%s8216 + $0x39c] sm:$0xf]
  %v8263 = vld [vmem:[%s8216 + $0x3ac] sm:$0xf]
  %v8264 = vld [vmem:[%s8216 + $0x3b0] sm:$0xf]
  %v8265 = vld [vmem:[%s8216 + $0x3c0] sm:$0xf]
  %v8266 = vld [vmem:[%s8216 + $0x3c4] sm:$0xf]
  %v8267 = vld [vmem:[%s8216 + $0x3d4] sm:$0xf]
  %v8268 = vld [vmem:[%s8216 + $0x3d8] sm:$0xf]
  %v8269 = vld [vmem:[%s8216 + $0x3e8] sm:$0xf]
  %v8270 = vld [vmem:[%s8216 + $0x3ec] sm:$0xf]
  %v8271 = vld [vmem:[%s8216 + $0x3fc] sm:$0xf]
  %v8272 = vld [vmem:[%s8216 + $0x400] sm:$0xf]
  %v8273 = vld [vmem:[%s8216 + $0x410] sm:$0xf]
  %v8274 = vld [vmem:[%s8216 + $0x414] sm:$0xf]
  %v8275 = vld [vmem:[%s8216 + $0x424] sm:$0xf]
  %v8276 = vld [vmem:[%s8216 + $0x428] sm:$0xf]
  %v8277 = vld [vmem:[%s8216 + $0x438] sm:$0xf]
  %v8278 = vld [vmem:[%s8216 + $0x43c] sm:$0xf]
  %v8279 = vld [vmem:[%s8216 + $0x44c] sm:$0xf]
  %v8280 = vld [vmem:[%s8216 + $0x450] sm:$0xf]
  %v8281 = vld [vmem:[%s8216 + $0x4] sm:$0xc]
  %v8282 = vld [vmem:[%s8216 + $0x8] sm:$0xf]
  %v8283 = vld [vmem:[%s8216 + $0xc] sm:$0x3]
  %v8284 = vld [vmem:[%s8216 + $0x18] sm:$0xc]
  %v8285 = vld [vmem:[%s8216 + $0x1c] sm:$0xf]
  %v8286 = vld [vmem:[%s8216 + $0x20] sm:$0x3]
  %v8287 = vld [vmem:[%s8216 + $0x2c] sm:$0xc]
  %v8288 = vld [vmem:[%s8216 + $0x30] sm:$0xf]
  %v8289 = vld [vmem:[%s8216 + $0x34] sm:$0x3]
  %v8290 = vld [vmem:[%s8216 + $0x40] sm:$0xc]
  %v8291 = vld [vmem:[%s8216 + $0x44] sm:$0xf]
  %v8292 = vld [vmem:[%s8216 + $0x48] sm:$0x3]
  %v8293 = vld [vmem:[%s8216 + $0x54] sm:$0xc]
  %v8294 = vld [vmem:[%s8216 + $0x58] sm:$0xf]
  %v8295 = vld [vmem:[%s8216 + $0x5c] sm:$0x3]
  %v8296 = vld [vmem:[%s8216 + $0x68] sm:$0xc]
  %v8297 = vld [vmem:[%s8216 + $0x6c] sm:$0xf]
  %v8298 = vld [vmem:[%s8216 + $0x70] sm:$0x3]
  %v8299 = vld [vmem:[%s8216 + $0x7c] sm:$0xc]
  %v8300 = vld [vmem:[%s8216 + $0x80] sm:$0xf]
  %v8301 = vld [vmem:[%s8216 + $0x84] sm:$0x3]
  %v8302 = vld [vmem:[%s8216 + $0x90] sm:$0xc]
  %v8303 = vld [vmem:[%s8216 + $0x94] sm:$0xf]
  %v8304 = vld [vmem:[%s8216 + $0x98] sm:$0x3]
  %v8305 = vld [vmem:[%s8216 + $0xa4] sm:$0xc]
  %v8306 = vld [vmem:[%s8216 + $0xa8] sm:$0xf]
  %v8307 = vld [vmem:[%s8216 + $0xac] sm:$0x3]
  %v8308 = vld [vmem:[%s8216 + $0xb8] sm:$0xc]
  %v8309 = vld [vmem:[%s8216 + $0xbc] sm:$0xf]
  %v8310 = vld [vmem:[%s8216 + $0xc0] sm:$0x3]
  %v8311 = vld [vmem:[%s8216 + $0xcc] sm:$0xc]
  %v8312 = vld [vmem:[%s8216 + $0xd0] sm:$0xf]
  %v8313 = vld [vmem:[%s8216 + $0xd4] sm:$0x3]
  %v8314 = vld [vmem:[%s8216 + $0xe0] sm:$0xc]
  %v8315 = vld [vmem:[%s8216 + $0xe4] sm:$0xf]
  %v8316 = vld [vmem:[%s8216 + $0xe8] sm:$0x3]
  %v8317 = vld [vmem:[%s8216 + $0xf4] sm:$0xc]
  %v8318 = vld [vmem:[%s8216 + $0xf8] sm:$0xf]
  %v8319 = vld [vmem:[%s8216 + $0xfc] sm:$0x3]
  %v8320 = vld [vmem:[%s8216 + $0x108] sm:$0xc]
  %v8321 = vld [vmem:[%s8216 + $0x10c] sm:$0xf]
  %v8322 = vld [vmem:[%s8216 + $0x110] sm:$0x3]
  %v8323 = vld [vmem:[%s8216 + $0x11c] sm:$0xc]
  %v8324 = vld [vmem:[%s8216 + $0x120] sm:$0xf]
  %v8325 = vld [vmem:[%s8216 + $0x124] sm:$0x3]
  %v8326 = vld [vmem:[%s8216 + $0x130] sm:$0xc]
  %v8327 = vld [vmem:[%s8216 + $0x134] sm:$0xf]
  %v8328 = vld [vmem:[%s8216 + $0x138] sm:$0x3]
  %v8329 = vld [vmem:[%s8216 + $0x324] sm:$0xc]
  %v8330 = vld [vmem:[%s8216 + $0x328] sm:$0xf]
  %v8331 = vld [vmem:[%s8216 + $0x32c] sm:$0x3]
  %v8332 = vld [vmem:[%s8216 + $0x338] sm:$0xc]
  %v8333 = vld [vmem:[%s8216 + $0x33c] sm:$0xf]
  %v8334 = vld [vmem:[%s8216 + $0x340] sm:$0x3]
  %v8335 = vld [vmem:[%s8216 + $0x34c] sm:$0xc]
  %v8336 = vld [vmem:[%s8216 + $0x350] sm:$0xf]
  %v8337 = vld [vmem:[%s8216 + $0x354] sm:$0x3]
  %v8338 = vld [vmem:[%s8216 + $0x360] sm:$0xc]
  %v8339 = vld [vmem:[%s8216 + $0x364] sm:$0xf]
  %v8340 = vld [vmem:[%s8216 + $0x368] sm:$0x3]
  %v8341 = vld [vmem:[%s8216 + $0x374] sm:$0xc]
  %v8342 = vld [vmem:[%s8216 + $0x378] sm:$0xf]
  %v8343 = vld [vmem:[%s8216 + $0x37c] sm:$0x3]
  %v8344 = vld [vmem:[%s8216 + $0x388] sm:$0xc]
  %v8345 = vld [vmem:[%s8216 + $0x38c] sm:$0xf]
  %v8346 = vld [vmem:[%s8216 + $0x390] sm:$0x3]
  %v8347 = vld [vmem:[%s8216 + $0x39c] sm:$0xc]
  %v8348 = vld [vmem:[%s8216 + $0x3a0] sm:$0xf]
  %v8349 = vld [vmem:[%s8216 + $0x3a4] sm:$0x3]
  %v8350 = vld [vmem:[%s8216 + $0x3b0] sm:$0xc]
  %v8351 = vld [vmem:[%s8216 + $0x3b4] sm:$0xf]
  %v8352 = vld [vmem:[%s8216 + $0x3b8] sm:$0x3]
  %v8353 = vld [vmem:[%s8216 + $0x3c4] sm:$0xc]
  %v8354 = vld [vmem:[%s8216 + $0x3c8] sm:$0xf]
  %v8355 = vld [vmem:[%s8216 + $0x3cc] sm:$0x3]
  %v8356 = vld [vmem:[%s8216 + $0x3d8] sm:$0xc]
  %v8357 = vld [vmem:[%s8216 + $0x3dc] sm:$0xf]
  %v8358 = vld [vmem:[%s8216 + $0x3e0] sm:$0x3]
  %v8359 = vld [vmem:[%s8216 + $0x3ec] sm:$0xc]
  %v8360 = vld [vmem:[%s8216 + $0x3f0] sm:$0xf]
  %v8361 = vld [vmem:[%s8216 + $0x3f4] sm:$0x3]
  %v8362 = vld [vmem:[%s8216 + $0x400] sm:$0xc]
  %v8363 = vld [vmem:[%s8216 + $0x404] sm:$0xf]
  %v8364 = vld [vmem:[%s8216 + $0x408] sm:$0x3]
  %v8365 = vld [vmem:[%s8216 + $0x414] sm:$0xc]
  %v8366 = vld [vmem:[%s8216 + $0x418] sm:$0xf]
  %v8367 = vld [vmem:[%s8216 + $0x41c] sm:$0x3]
  %v8368 = vld [vmem:[%s8216 + $0x428] sm:$0xc]
  %v8369 = vld [vmem:[%s8216 + $0x42c] sm:$0xf]
  %v8370 = vld [vmem:[%s8216 + $0x430] sm:$0x3]
  %v8371 = vld [vmem:[%s8216 + $0x43c] sm:$0xc]
  %v8372 = vld [vmem:[%s8216 + $0x440] sm:$0xf]
  %v8373 = vld [vmem:[%s8216 + $0x444] sm:$0x3]
  %v8374 = vld [vmem:[%s8216 + $0x450] sm:$0xc]
  %v8375 = vld [vmem:[%s8216 + $0x454] sm:$0xf]
  %v8376 = vld [vmem:[%s8216 + $0x458] sm:$0x3]
  %v8473 = vrot.slane %v8281, 6
  %v8474 = vrot.slane %v8473, 4
  %v8475 = vrot.slane %v8282, 6
  %v8476 = vsel %vm622, %v8474, %v8475
  %v8477 = vrot.slane %v8475, 4
  %v8478 = vrot.slane %v8283, 6
  %v8479 = vsel %vm622, %v8477, %v8478
  %v8480 = vrot.slane %v8284, 6
  %v8481 = vrot.slane %v8480, 4
  %v8482 = vrot.slane %v8285, 6
  %v8483 = vsel %vm622, %v8481, %v8482
  %v8484 = vrot.slane %v8482, 4
  %v8485 = vrot.slane %v8286, 6
  %v8486 = vsel %vm622, %v8484, %v8485
  %v8487 = vrot.slane %v8287, 6
  %v8488 = vrot.slane %v8487, 4
  %v8489 = vrot.slane %v8288, 6
  %v8490 = vsel %vm622, %v8488, %v8489
  %v8491 = vrot.slane %v8489, 4
  %v8492 = vrot.slane %v8289, 6
  %v8493 = vsel %vm622, %v8491, %v8492
  %v8494 = vrot.slane %v8290, 6
  %v8495 = vrot.slane %v8494, 4
  %v8496 = vrot.slane %v8291, 6
  %v8497 = vsel %vm622, %v8495, %v8496
  %v8498 = vrot.slane %v8496, 4
  %v8499 = vrot.slane %v8292, 6
  %v8500 = vsel %vm622, %v8498, %v8499
  %v8501 = vrot.slane %v8293, 6
  %v8502 = vrot.slane %v8501, 4
  %v8503 = vrot.slane %v8294, 6
  %v8504 = vsel %vm622, %v8502, %v8503
  %v8505 = vrot.slane %v8503, 4
  %v8506 = vrot.slane %v8295, 6
  %v8507 = vsel %vm622, %v8505, %v8506
  %v8508 = vrot.slane %v8296, 6
  %v8509 = vrot.slane %v8508, 4
  %v8510 = vrot.slane %v8297, 6
  %v8511 = vsel %vm622, %v8509, %v8510
  %v8512 = vrot.slane %v8510, 4
  %v8513 = vrot.slane %v8298, 6
  %v8514 = vsel %vm622, %v8512, %v8513
  %v8515 = vrot.slane %v8299, 6
  %v8516 = vrot.slane %v8515, 4
  %v8517 = vrot.slane %v8300, 6
  %v8518 = vsel %vm622, %v8516, %v8517
  %v8519 = vrot.slane %v8517, 4
  %v8520 = vrot.slane %v8301, 6
  %v8521 = vsel %vm622, %v8519, %v8520
  %v8522 = vrot.slane %v8302, 6
  %v8523 = vrot.slane %v8522, 4
  %v8524 = vrot.slane %v8303, 6
  %v8525 = vsel %vm622, %v8523, %v8524
  %v8526 = vrot.slane %v8524, 4
  %v8527 = vrot.slane %v8304, 6
  %v8528 = vsel %vm622, %v8526, %v8527
  %v8529 = vrot.slane %v8305, 6
  %v8530 = vrot.slane %v8529, 4
  %v8531 = vrot.slane %v8306, 6
  %v8532 = vsel %vm622, %v8530, %v8531
  %v8533 = vrot.slane %v8531, 4
  %v8534 = vrot.slane %v8307, 6
  %v8535 = vsel %vm622, %v8533, %v8534
  %v8536 = vrot.slane %v8308, 6
  %v8537 = vrot.slane %v8536, 4
  %v8538 = vrot.slane %v8309, 6
  %v8539 = vsel %vm622, %v8537, %v8538
  %v8540 = vrot.slane %v8538, 4
  %v8541 = vrot.slane %v8310, 6
  %v8542 = vsel %vm622, %v8540, %v8541
  %v8543 = vrot.slane %v8311, 6
  %v8544 = vrot.slane %v8543, 4
  %v8545 = vrot.slane %v8312, 6
  %v8546 = vsel %vm622, %v8544, %v8545
  %v8547 = vrot.slane %v8545, 4
  %v8548 = vrot.slane %v8313, 6
  %v8549 = vsel %vm622, %v8547, %v8548
  %v8550 = vrot.slane %v8314, 6
  %v8551 = vrot.slane %v8550, 4
  %v8552 = vrot.slane %v8315, 6
  %v8553 = vsel %vm622, %v8551, %v8552
  %v8554 = vrot.slane %v8552, 4
  %v8555 = vrot.slane %v8316, 6
  %v8556 = vsel %vm622, %v8554, %v8555
  %v8557 = vrot.slane %v8317, 6
  %v8558 = vrot.slane %v8557, 4
  %v8559 = vrot.slane %v8318, 6
  %v8560 = vsel %vm622, %v8558, %v8559
  %v8561 = vrot.slane %v8559, 4
  %v8562 = vrot.slane %v8319, 6
  %v8563 = vsel %vm622, %v8561, %v8562
  %v8564 = vrot.slane %v8320, 6
  %v8565 = vrot.slane %v8564, 4
  %v8566 = vrot.slane %v8321, 6
  %v8567 = vsel %vm622, %v8565, %v8566
  %v8568 = vrot.slane %v8566, 4
  %v8569 = vrot.slane %v8322, 6
  %v8570 = vsel %vm622, %v8568, %v8569
  %v8571 = vrot.slane %v8323, 6
  %v8572 = vrot.slane %v8571, 4
  %v8573 = vrot.slane %v8324, 6
  %v8574 = vsel %vm622, %v8572, %v8573
  %v8575 = vrot.slane %v8573, 4
  %v8576 = vrot.slane %v8325, 6
  %v8577 = vsel %vm622, %v8575, %v8576
  %v8578 = vrot.slane %v8326, 6
  %v8579 = vrot.slane %v8578, 4
  %v8580 = vrot.slane %v8327, 6
  %v8581 = vsel %vm622, %v8579, %v8580
  %v8582 = vrot.slane %v8580, 4
  %v8583 = vrot.slane %v8328, 6
  %v8584 = vsel %vm622, %v8582, %v8583
  %v8585 = vrot.slane %v8329, 6
  %v8586 = vrot.slane %v8585, 4
  %v8587 = vrot.slane %v8330, 6
  %v8588 = vsel %vm622, %v8586, %v8587
  %v8589 = vrot.slane %v8587, 4
  %v8590 = vrot.slane %v8331, 6
  %v8591 = vsel %vm622, %v8589, %v8590
  %v8592 = vrot.slane %v8332, 6
  %v8593 = vrot.slane %v8592, 4
  %v8594 = vrot.slane %v8333, 6
  %v8595 = vsel %vm622, %v8593, %v8594
  %v8596 = vrot.slane %v8594, 4
  %v8597 = vrot.slane %v8334, 6
  %v8598 = vsel %vm622, %v8596, %v8597
  %v8599 = vrot.slane %v8335, 6
  %v8600 = vrot.slane %v8599, 4
  %v8601 = vrot.slane %v8336, 6
  %v8602 = vsel %vm622, %v8600, %v8601
  %v8603 = vrot.slane %v8601, 4
  %v8604 = vrot.slane %v8337, 6
  %v8605 = vsel %vm622, %v8603, %v8604
  %v8606 = vrot.slane %v8338, 6
  %v8607 = vrot.slane %v8606, 4
  %v8608 = vrot.slane %v8339, 6
  %v8609 = vsel %vm622, %v8607, %v8608
  %v8610 = vrot.slane %v8608, 4
  %v8611 = vrot.slane %v8340, 6
  %v8612 = vsel %vm622, %v8610, %v8611
  %v8613 = vrot.slane %v8341, 6
  %v8614 = vrot.slane %v8613, 4
  %v8615 = vrot.slane %v8342, 6
  %v8616 = vsel %vm622, %v8614, %v8615
  %v8617 = vrot.slane %v8615, 4
  %v8618 = vrot.slane %v8343, 6
  %v8619 = vsel %vm622, %v8617, %v8618
  %v8620 = vrot.slane %v8344, 6
  %v8621 = vrot.slane %v8620, 4
  %v8622 = vrot.slane %v8345, 6
  %v8623 = vsel %vm622, %v8621, %v8622
  %v8624 = vrot.slane %v8622, 4
  %v8625 = vrot.slane %v8346, 6
  %v8626 = vsel %vm622, %v8624, %v8625
  %v8627 = vrot.slane %v8347, 6
  %v8628 = vrot.slane %v8627, 4
  %v8629 = vrot.slane %v8348, 6
  %v8630 = vsel %vm622, %v8628, %v8629
  %v8631 = vrot.slane %v8629, 4
  %v8632 = vrot.slane %v8349, 6
  %v8633 = vsel %vm622, %v8631, %v8632
  %v8634 = vrot.slane %v8350, 6
  %v8635 = vrot.slane %v8634, 4
  %v8636 = vrot.slane %v8351, 6
  %v8637 = vsel %vm622, %v8635, %v8636
  %v8638 = vrot.slane %v8636, 4
  %v8639 = vrot.slane %v8352, 6
  %v8640 = vsel %vm622, %v8638, %v8639
  %v8641 = vrot.slane %v8353, 6
  %v8642 = vrot.slane %v8641, 4
  %v8643 = vrot.slane %v8354, 6
  %v8644 = vsel %vm622, %v8642, %v8643
  %v8645 = vrot.slane %v8643, 4
  %v8646 = vrot.slane %v8355, 6
  %v8647 = vsel %vm622, %v8645, %v8646
  %v8648 = vrot.slane %v8356, 6
  %v8649 = vrot.slane %v8648, 4
  %v8650 = vrot.slane %v8357, 6
  %v8651 = vsel %vm622, %v8649, %v8650
  %v8652 = vrot.slane %v8650, 4
  %v8653 = vrot.slane %v8358, 6
  %v8654 = vsel %vm622, %v8652, %v8653
  %v8655 = vrot.slane %v8359, 6
  %v8656 = vrot.slane %v8655, 4
  %v8657 = vrot.slane %v8360, 6
  %v8658 = vsel %vm622, %v8656, %v8657
  %v8659 = vrot.slane %v8657, 4
  %v8660 = vrot.slane %v8361, 6
  %v8661 = vsel %vm622, %v8659, %v8660
  %v8662 = vrot.slane %v8362, 6
  %v8663 = vrot.slane %v8662, 4
  %v8664 = vrot.slane %v8363, 6
  %v8665 = vsel %vm622, %v8663, %v8664
  %v8666 = vrot.slane %v8664, 4
  %v8667 = vrot.slane %v8364, 6
  %v8668 = vsel %vm622, %v8666, %v8667
  %v8669 = vrot.slane %v8365, 6
  %v8670 = vrot.slane %v8669, 4
  %v8671 = vrot.slane %v8366, 6
  %v8672 = vsel %vm622, %v8670, %v8671
  %v8673 = vrot.slane %v8671, 4
  %v8674 = vrot.slane %v8367, 6
  %v8675 = vsel %vm622, %v8673, %v8674
  %v8676 = vrot.slane %v8368, 6
  %v8677 = vrot.slane %v8676, 4
  %v8678 = vrot.slane %v8369, 6
  %v8679 = vsel %vm622, %v8677, %v8678
  %v8680 = vrot.slane %v8678, 4
  %v8681 = vrot.slane %v8370, 6
  %v8682 = vsel %vm622, %v8680, %v8681
  %v8683 = vrot.slane %v8371, 6
  %v8684 = vrot.slane %v8683, 4
  %v8685 = vrot.slane %v8372, 6
  %v8686 = vsel %vm622, %v8684, %v8685
  %v8687 = vrot.slane %v8685, 4
  %v8688 = vrot.slane %v8373, 6
  %v8689 = vsel %vm622, %v8687, %v8688
  %v8690 = vrot.slane %v8374, 6
  %v8691 = vrot.slane %v8690, 4
  %v8692 = vrot.slane %v8375, 6
  %v8693 = vsel %vm622, %v8691, %v8692
  %v8694 = vrot.slane %v8692, 4
  %v8695 = vrot.slane %v8376, 6
  %v8696 = vsel %vm622, %v8694, %v8695
  %v8697 = vld [vmem:[%s8216 + $0xc] sm:$0xf]
  %v8698 = vld [vmem:[%s8216 + $0x10] sm:$0xf]
  %v8699 = vld [vmem:[%s8216 + $0x20] sm:$0xf]
  %v8700 = vld [vmem:[%s8216 + $0x24] sm:$0xf]
  %v8701 = vld [vmem:[%s8216 + $0x34] sm:$0xf]
  %v8702 = vld [vmem:[%s8216 + $0x38] sm:$0xf]
  %v8703 = vld [vmem:[%s8216 + $0x48] sm:$0xf]
  %v8704 = vld [vmem:[%s8216 + $0x4c] sm:$0xf]
  %v8705 = vld [vmem:[%s8216 + $0x5c] sm:$0xf]
  %v8706 = vld [vmem:[%s8216 + $0x60] sm:$0xf]
  %v8707 = vld [vmem:[%s8216 + $0x70] sm:$0xf]
  %v8708 = vld [vmem:[%s8216 + $0x74] sm:$0xf]
  %v8709 = vld [vmem:[%s8216 + $0x84] sm:$0xf]
  %v8710 = vld [vmem:[%s8216 + $0x88] sm:$0xf]
  %v8711 = vld [vmem:[%s8216 + $0x98] sm:$0xf]
  %v8712 = vld [vmem:[%s8216 + $0x9c] sm:$0xf]
  %v8713 = vld [vmem:[%s8216 + $0xac] sm:$0xf]
  %v8714 = vld [vmem:[%s8216 + $0xb0] sm:$0xf]
  %v8715 = vld [vmem:[%s8216 + $0xc0] sm:$0xf]
  %v8716 = vld [vmem:[%s8216 + $0xc4] sm:$0xf]
  %v8717 = vld [vmem:[%s8216 + $0xd4] sm:$0xf]
  %v8718 = vld [vmem:[%s8216 + $0xd8] sm:$0xf]
  %v8719 = vld [vmem:[%s8216 + $0xe8] sm:$0xf]
  %v8720 = vld [vmem:[%s8216 + $0xec] sm:$0xf]
  %v8721 = vld [vmem:[%s8216 + $0xfc] sm:$0xf]
  %v8722 = vld [vmem:[%s8216 + $0x100] sm:$0xf]
  %v8723 = vld [vmem:[%s8216 + $0x110] sm:$0xf]
  %v8724 = vld [vmem:[%s8216 + $0x114] sm:$0xf]
  %v8725 = vld [vmem:[%s8216 + $0x124] sm:$0xf]
  %v8726 = vld [vmem:[%s8216 + $0x128] sm:$0xf]
  %v8727 = vld [vmem:[%s8216 + $0x138] sm:$0xf]
  %v8728 = vld [vmem:[%s8216 + $0x13c] sm:$0xf]
  %v8729 = vld [vmem:[%s8216 + $0x32c] sm:$0xf]
  %v8730 = vld [vmem:[%s8216 + $0x330] sm:$0xf]
  %v8731 = vld [vmem:[%s8216 + $0x340] sm:$0xf]
  %v8732 = vld [vmem:[%s8216 + $0x344] sm:$0xf]
  %v8733 = vld [vmem:[%s8216 + $0x354] sm:$0xf]
  %v8734 = vld [vmem:[%s8216 + $0x358] sm:$0xf]
  %v8735 = vld [vmem:[%s8216 + $0x368] sm:$0xf]
  %v8736 = vld [vmem:[%s8216 + $0x36c] sm:$0xf]
  %v8737 = vld [vmem:[%s8216 + $0x37c] sm:$0xf]
  %v8738 = vld [vmem:[%s8216 + $0x380] sm:$0xf]
  %v8739 = vld [vmem:[%s8216 + $0x390] sm:$0xf]
  %v8740 = vld [vmem:[%s8216 + $0x394] sm:$0xf]
  %v8741 = vld [vmem:[%s8216 + $0x3a4] sm:$0xf]
  %v8742 = vld [vmem:[%s8216 + $0x3a8] sm:$0xf]
  %v8743 = vld [vmem:[%s8216 + $0x3b8] sm:$0xf]
  %v8744 = vld [vmem:[%s8216 + $0x3bc] sm:$0xf]
  %v8745 = vld [vmem:[%s8216 + $0x3cc] sm:$0xf]
  %v8746 = vld [vmem:[%s8216 + $0x3d0] sm:$0xf]
  %v8747 = vld [vmem:[%s8216 + $0x3e0] sm:$0xf]
  %v8748 = vld [vmem:[%s8216 + $0x3e4] sm:$0xf]
  %v8749 = vld [vmem:[%s8216 + $0x3f4] sm:$0xf]
  %v8750 = vld [vmem:[%s8216 + $0x3f8] sm:$0xf]
  %v8751 = vld [vmem:[%s8216 + $0x408] sm:$0xf]
  %v8752 = vld [vmem:[%s8216 + $0x40c] sm:$0xf]
  %v8753 = vld [vmem:[%s8216 + $0x41c] sm:$0xf]
  %v8754 = vld [vmem:[%s8216 + $0x420] sm:$0xf]
  %v8755 = vld [vmem:[%s8216 + $0x430] sm:$0xf]
  %v8756 = vld [vmem:[%s8216 + $0x434] sm:$0xf]
  %v8757 = vld [vmem:[%s8216 + $0x444] sm:$0xf]
  %v8758 = vld [vmem:[%s8216 + $0x448] sm:$0xf]
  %v8759 = vld [vmem:[%s8216 + $0x458] sm:$0xf]
  %v8760 = vld [vmem:[%s8216 + $0x45c] sm:$0xf]
  %v8825 = vunpack.c.l.b16 %v7576
  %v8826 = vunpack.c.l.b16 %v7577
  %v8827 = vunpack.c.l.b16 %v7578
  %v8828 = vunpack.c.l.b16 %v7579
  %v8829 = vunpack.c.l.b16 %v7580
  %v8830 = vunpack.c.l.b16 %v7581
  %v8831 = vunpack.c.l.b16 %v7582
  %v8832 = vunpack.c.l.b16 %v7583
  %v8833 = vunpack.c.l.b16 %v7584
  %v8834 = vunpack.c.l.b16 %v7585
  %v8835 = vunpack.c.l.b16 %v7586
  %v8836 = vunpack.c.l.b16 %v7587
  %v8837 = vunpack.c.l.b16 %v7588
  %v8838 = vunpack.c.l.b16 %v7589
  %v8839 = vunpack.c.l.b16 %v7590
  %v8840 = vunpack.c.l.b16 %v7591
  %v8841 = vunpack.c.l.b16 %v7592
  %v8842 = vunpack.c.l.b16 %v7593
  %v8843 = vunpack.c.l.b16 %v7594
  %v8844 = vunpack.c.l.b16 %v7595
  %v8845 = vunpack.c.l.b16 %v7596
  %v8846 = vunpack.c.l.b16 %v7597
  %v8847 = vunpack.c.l.b16 %v7598
  %v8848 = vunpack.c.l.b16 %v7599
  %v8849 = vunpack.c.l.b16 %v7600
  %v8850 = vunpack.c.l.b16 %v7601
  %v8851 = vunpack.c.l.b16 %v7602
  %v8852 = vunpack.c.l.b16 %v7603
  %v8853 = vunpack.c.l.b16 %v7604
  %v8854 = vunpack.c.l.b16 %v7605
  %v8855 = vunpack.c.l.b16 %v7606
  %v8856 = vunpack.c.l.b16 %v7607
  %v8857 = vunpack.c.l.b16 %v7608
  %v8858 = vunpack.c.l.b16 %v7609
  %v8859 = vunpack.c.l.b16 %v7610
  %v8860 = vunpack.c.l.b16 %v7611
  %v8861 = vunpack.c.l.b16 %v7612
  %v8862 = vunpack.c.l.b16 %v7613
  %v8863 = vunpack.c.l.b16 %v7614
  %v8864 = vunpack.c.l.b16 %v7615
  %v8865 = vunpack.c.l.b16 %v7616
  %v8866 = vunpack.c.l.b16 %v7617
  %v8867 = vunpack.c.l.b16 %v7618
  %v8868 = vunpack.c.l.b16 %v7619
  %v8869 = vunpack.c.l.b16 %v7620
  %v8870 = vunpack.c.l.b16 %v7621
  %v8871 = vunpack.c.l.b16 %v7622
  %v8872 = vunpack.c.l.b16 %v7623
  %v8873 = vunpack.c.l.b16 %v7624
  %v8874 = vunpack.c.l.b16 %v7625
  %v8875 = vunpack.c.l.b16 %v7626
  %v8876 = vunpack.c.l.b16 %v7627
  %v8877 = vunpack.c.l.b16 %v7628
  %v8878 = vunpack.c.l.b16 %v7629
  %v8879 = vunpack.c.l.b16 %v7630
  %v8880 = vunpack.c.l.b16 %v7631
  %v8881 = vunpack.c.l.b16 %v7632
  %v8882 = vunpack.c.l.b16 %v7633
  %v8883 = vunpack.c.l.b16 %v7634
  %v8884 = vunpack.c.l.b16 %v7635
  %v8885 = vunpack.c.l.b16 %v7636
  %v8886 = vunpack.c.l.b16 %v7637
  %v8887 = vunpack.c.l.b16 %v7638
  %v8888 = vunpack.c.l.b16 %v7639
  %v8889 = vpack.c.b16 %v8826, %v8825
  %v8890 = vpack.c.b16 %v8828, %v8827
  %v8891 = vpack.c.b16 %v8830, %v8829
  %v8892 = vpack.c.b16 %v8832, %v8831
  %v8893 = vpack.c.b16 %v8834, %v8833
  %v8894 = vpack.c.b16 %v8836, %v8835
  %v8895 = vpack.c.b16 %v8838, %v8837
  %v8896 = vpack.c.b16 %v8840, %v8839
  %v8897 = vpack.c.b16 %v8842, %v8841
  %v8898 = vpack.c.b16 %v8844, %v8843
  %v8899 = vpack.c.b16 %v8846, %v8845
  %v8900 = vpack.c.b16 %v8848, %v8847
  %v8901 = vpack.c.b16 %v8850, %v8849
  %v8902 = vpack.c.b16 %v8852, %v8851
  %v8903 = vpack.c.b16 %v8854, %v8853
  %v8904 = vpack.c.b16 %v8856, %v8855
  %v8905 = vpack.c.b16 %v8858, %v8857
  %v8906 = vpack.c.b16 %v8860, %v8859
  %v8907 = vpack.c.b16 %v8862, %v8861
  %v8908 = vpack.c.b16 %v8864, %v8863
  %v8909 = vpack.c.b16 %v8866, %v8865
  %v8910 = vpack.c.b16 %v8868, %v8867
  %v8911 = vpack.c.b16 %v8870, %v8869
  %v8912 = vpack.c.b16 %v8872, %v8871
  %v8913 = vpack.c.b16 %v8874, %v8873
  %v8914 = vpack.c.b16 %v8876, %v8875
  %v8915 = vpack.c.b16 %v8878, %v8877
  %v8916 = vpack.c.b16 %v8880, %v8879
  %v8917 = vpack.c.b16 %v8882, %v8881
  %v8918 = vpack.c.b16 %v8884, %v8883
  %v8919 = vpack.c.b16 %v8886, %v8885
  %v8920 = vpack.c.b16 %v8888, %v8887
  %v8921 = vunpack.c.l.b16 %v7835
  %v8922 = vunpack.c.l.b16 %v7838
  %v8923 = vunpack.c.l.b16 %v7842
  %v8924 = vunpack.c.l.b16 %v7845
  %v8925 = vunpack.c.l.b16 %v7849
  %v8926 = vunpack.c.l.b16 %v7852
  %v8927 = vunpack.c.l.b16 %v7856
  %v8928 = vunpack.c.l.b16 %v7859
  %v8929 = vunpack.c.l.b16 %v7863
  %v8930 = vunpack.c.l.b16 %v7866
  %v8931 = vunpack.c.l.b16 %v7870
  %v8932 = vunpack.c.l.b16 %v7873
  %v8933 = vunpack.c.l.b16 %v7877
  %v8934 = vunpack.c.l.b16 %v7880
  %v8935 = vunpack.c.l.b16 %v7884
  %v8936 = vunpack.c.l.b16 %v7887
  %v8937 = vunpack.c.l.b16 %v7891
  %v8938 = vunpack.c.l.b16 %v7894
  %v8939 = vunpack.c.l.b16 %v7898
  %v8940 = vunpack.c.l.b16 %v7901
  %v8941 = vunpack.c.l.b16 %v7905
  %v8942 = vunpack.c.l.b16 %v7908
  %v8943 = vunpack.c.l.b16 %v7912
  %v8944 = vunpack.c.l.b16 %v7915
  %v8945 = vunpack.c.l.b16 %v7919
  %v8946 = vunpack.c.l.b16 %v7922
  %v8947 = vunpack.c.l.b16 %v7926
  %v8948 = vunpack.c.l.b16 %v7929
  %v8949 = vunpack.c.l.b16 %v7933
  %v8950 = vunpack.c.l.b16 %v7936
  %v8951 = vunpack.c.l.b16 %v7940
  %v8952 = vunpack.c.l.b16 %v7943
  %v8953 = vunpack.c.l.b16 %v7947
  %v8954 = vunpack.c.l.b16 %v7950
  %v8955 = vunpack.c.l.b16 %v7954
  %v8956 = vunpack.c.l.b16 %v7957
  %v8957 = vunpack.c.l.b16 %v7961
  %v8958 = vunpack.c.l.b16 %v7964
  %v8959 = vunpack.c.l.b16 %v7968
  %v8960 = vunpack.c.l.b16 %v7971
  %v8961 = vunpack.c.l.b16 %v7975
  %v8962 = vunpack.c.l.b16 %v7978
  %v8963 = vunpack.c.l.b16 %v7982
  %v8964 = vunpack.c.l.b16 %v7985
  %v8965 = vunpack.c.l.b16 %v7989
  %v8966 = vunpack.c.l.b16 %v7992
  %v8967 = vunpack.c.l.b16 %v7996
  %v8968 = vunpack.c.l.b16 %v7999
  %v8969 = vunpack.c.l.b16 %v8003
  %v8970 = vunpack.c.l.b16 %v8006
  %v8971 = vunpack.c.l.b16 %v8010
  %v8972 = vunpack.c.l.b16 %v8013
  %v8973 = vunpack.c.l.b16 %v8017
  %v8974 = vunpack.c.l.b16 %v8020
  %v8975 = vunpack.c.l.b16 %v8024
  %v8976 = vunpack.c.l.b16 %v8027
  %v8977 = vunpack.c.l.b16 %v8031
  %v8978 = vunpack.c.l.b16 %v8034
  %v8979 = vunpack.c.l.b16 %v8038
  %v8980 = vunpack.c.l.b16 %v8041
  %v8981 = vunpack.c.l.b16 %v8045
  %v8982 = vunpack.c.l.b16 %v8048
  %v8983 = vunpack.c.l.b16 %v8052
  %v8984 = vunpack.c.l.b16 %v8055
  %v8985 = vpack.c.b16 %v8922, %v8921
  %v8986 = vpack.c.b16 %v8924, %v8923
  %v8987 = vpack.c.b16 %v8926, %v8925
  %v8988 = vpack.c.b16 %v8928, %v8927
  %v8989 = vpack.c.b16 %v8930, %v8929
  %v8990 = vpack.c.b16 %v8932, %v8931
  %v8991 = vpack.c.b16 %v8934, %v8933
  %v8992 = vpack.c.b16 %v8936, %v8935
  %v8993 = vpack.c.b16 %v8938, %v8937
  %v8994 = vpack.c.b16 %v8940, %v8939
  %v8995 = vpack.c.b16 %v8942, %v8941
  %v8996 = vpack.c.b16 %v8944, %v8943
  %v8997 = vpack.c.b16 %v8946, %v8945
  %v8998 = vpack.c.b16 %v8948, %v8947
  %v8999 = vpack.c.b16 %v8950, %v8949
  %v9000 = vpack.c.b16 %v8952, %v8951
  %v9001 = vpack.c.b16 %v8954, %v8953
  %v9002 = vpack.c.b16 %v8956, %v8955
  %v9003 = vpack.c.b16 %v8958, %v8957
  %v9004 = vpack.c.b16 %v8960, %v8959
  %v9005 = vpack.c.b16 %v8962, %v8961
  %v9006 = vpack.c.b16 %v8964, %v8963
  %v9007 = vpack.c.b16 %v8966, %v8965
  %v9008 = vpack.c.b16 %v8968, %v8967
  %v9009 = vpack.c.b16 %v8970, %v8969
  %v9010 = vpack.c.b16 %v8972, %v8971
  %v9011 = vpack.c.b16 %v8974, %v8973
  %v9012 = vpack.c.b16 %v8976, %v8975
  %v9013 = vpack.c.b16 %v8978, %v8977
  %v9014 = vpack.c.b16 %v8980, %v8979
  %v9015 = vpack.c.b16 %v8982, %v8981
  %v9016 = vpack.c.b16 %v8984, %v8983
  %9017 = vrot.lane.b32.xlu0 %v8985, 16
  %v9018 = vpop.permute.xlu0 %9017
  %9019 = vrot.lane.b32.xlu0 %v8986, 16
  %v9020 = vpop.permute.xlu0 %9019
  %9021 = vrot.lane.b32.xlu0 %v8987, 16
  %v9022 = vpop.permute.xlu0 %9021
  %9023 = vrot.lane.b32.xlu0 %v8988, 16
  %v9024 = vpop.permute.xlu0 %9023
  %9025 = vrot.lane.b32.xlu0 %v8989, 16
  %v9026 = vpop.permute.xlu0 %9025
  %9027 = vrot.lane.b32.xlu0 %v8990, 16
  %v9028 = vpop.permute.xlu0 %9027
  %9029 = vrot.lane.b32.xlu0 %v8991, 16
  %v9030 = vpop.permute.xlu0 %9029
  %9031 = vrot.lane.b32.xlu0 %v8992, 16
  %v9032 = vpop.permute.xlu0 %9031
  %9033 = vrot.lane.b32.xlu0 %v8993, 16
  %v9034 = vpop.permute.xlu0 %9033
  %9035 = vrot.lane.b32.xlu0 %v8994, 16
  %v9036 = vpop.permute.xlu0 %9035
  %9037 = vrot.lane.b32.xlu0 %v8995, 16
  %v9038 = vpop.permute.xlu0 %9037
  %9039 = vrot.lane.b32.xlu0 %v8996, 16
  %v9040 = vpop.permute.xlu0 %9039
  %9041 = vrot.lane.b32.xlu0 %v8997, 16
  %v9042 = vpop.permute.xlu0 %9041
  %9043 = vrot.lane.b32.xlu0 %v8998, 16
  %v9044 = vpop.permute.xlu0 %9043
  %9045 = vrot.lane.b32.xlu0 %v8999, 16
  %v9046 = vpop.permute.xlu0 %9045
  %9047 = vrot.lane.b32.xlu0 %v9000, 16
  %v9048 = vpop.permute.xlu0 %9047
  %9049 = vrot.lane.b32.xlu0 %v9001, 16
  %v9050 = vpop.permute.xlu0 %9049
  %9051 = vrot.lane.b32.xlu0 %v9002, 16
  %v9052 = vpop.permute.xlu0 %9051
  %9053 = vrot.lane.b32.xlu0 %v9003, 16
  %v9054 = vpop.permute.xlu0 %9053
  %9055 = vrot.lane.b32.xlu0 %v9004, 16
  %v9056 = vpop.permute.xlu0 %9055
  %9057 = vrot.lane.b32.xlu0 %v9005, 16
  %v9058 = vpop.permute.xlu0 %9057
  %9059 = vrot.lane.b32.xlu0 %v9006, 16
  %v9060 = vpop.permute.xlu0 %9059
  %9061 = vrot.lane.b32.xlu0 %v9007, 16
  %v9062 = vpop.permute.xlu0 %9061
  %9063 = vrot.lane.b32.xlu0 %v9008, 16
  %v9064 = vpop.permute.xlu0 %9063
  %9065 = vrot.lane.b32.xlu0 %v9009, 16
  %v9066 = vpop.permute.xlu0 %9065
  %9067 = vrot.lane.b32.xlu0 %v9010, 16
  %v9068 = vpop.permute.xlu0 %9067
  %9069 = vrot.lane.b32.xlu0 %v9011, 16
  %v9070 = vpop.permute.xlu0 %9069
  %9071 = vrot.lane.b32.xlu0 %v9012, 16
  %v9072 = vpop.permute.xlu0 %9071
  %9073 = vrot.lane.b32.xlu0 %v9013, 16
  %v9074 = vpop.permute.xlu0 %9073
  %9075 = vrot.lane.b32.xlu0 %v9014, 16
  %v9076 = vpop.permute.xlu0 %9075
  %9077 = vrot.lane.b32.xlu0 %v9015, 16
  %v9078 = vpop.permute.xlu0 %9077
  %9079 = vrot.lane.b32.xlu0 %v9016, 16
  %v9080 = vpop.permute.xlu0 %9079
  %v9145 = vunpack.c.l.b16 %v8056
  %v9146 = vunpack.c.l.b16 %v8057
  %v9147 = vunpack.c.l.b16 %v8058
  %v9148 = vunpack.c.l.b16 %v8059
  %v9149 = vunpack.c.l.b16 %v8060
  %v9150 = vunpack.c.l.b16 %v8061
  %v9151 = vunpack.c.l.b16 %v8062
  %v9152 = vunpack.c.l.b16 %v8063
  %v9153 = vunpack.c.l.b16 %v8064
  %v9154 = vunpack.c.l.b16 %v8065
  %v9155 = vunpack.c.l.b16 %v8066
  %v9156 = vunpack.c.l.b16 %v8067
  %v9157 = vunpack.c.l.b16 %v8068
  %v9158 = vunpack.c.l.b16 %v8069
  %v9159 = vunpack.c.l.b16 %v8070
  %v9160 = vunpack.c.l.b16 %v8071
  %v9161 = vunpack.c.l.b16 %v8072
  %v9162 = vunpack.c.l.b16 %v8073
  %v9163 = vunpack.c.l.b16 %v8074
  %v9164 = vunpack.c.l.b16 %v8075
  %v9165 = vunpack.c.l.b16 %v8076
  %v9166 = vunpack.c.l.b16 %v8077
  %v9167 = vunpack.c.l.b16 %v8078
  %v9168 = vunpack.c.l.b16 %v8079
  %v9169 = vunpack.c.l.b16 %v8080
  %v9170 = vunpack.c.l.b16 %v8081
  %v9171 = vunpack.c.l.b16 %v8082
  %v9172 = vunpack.c.l.b16 %v8083
  %v9173 = vunpack.c.l.b16 %v8084
  %v9174 = vunpack.c.l.b16 %v8085
  %v9175 = vunpack.c.l.b16 %v8086
  %v9176 = vunpack.c.l.b16 %v8087
  %v9177 = vunpack.c.l.b16 %v8088
  %v9178 = vunpack.c.l.b16 %v8089
  %v9179 = vunpack.c.l.b16 %v8090
  %v9180 = vunpack.c.l.b16 %v8091
  %v9181 = vunpack.c.l.b16 %v8092
  %v9182 = vunpack.c.l.b16 %v8093
  %v9183 = vunpack.c.l.b16 %v8094
  %v9184 = vunpack.c.l.b16 %v8095
  %v9185 = vunpack.c.l.b16 %v8096
  %v9186 = vunpack.c.l.b16 %v8097
  %v9187 = vunpack.c.l.b16 %v8098
  %v9188 = vunpack.c.l.b16 %v8099
  %v9189 = vunpack.c.l.b16 %v8100
  %v9190 = vunpack.c.l.b16 %v8101
  %v9191 = vunpack.c.l.b16 %v8102
  %v9192 = vunpack.c.l.b16 %v8103
  %v9193 = vunpack.c.l.b16 %v8104
  %v9194 = vunpack.c.l.b16 %v8105
  %v9195 = vunpack.c.l.b16 %v8106
  %v9196 = vunpack.c.l.b16 %v8107
  %v9197 = vunpack.c.l.b16 %v8108
  %v9198 = vunpack.c.l.b16 %v8109
  %v9199 = vunpack.c.l.b16 %v8110
  %v9200 = vunpack.c.l.b16 %v8111
  %v9201 = vunpack.c.l.b16 %v8112
  %v9202 = vunpack.c.l.b16 %v8113
  %v9203 = vunpack.c.l.b16 %v8114
  %v9204 = vunpack.c.l.b16 %v8115
  %v9205 = vunpack.c.l.b16 %v8116
  %v9206 = vunpack.c.l.b16 %v8117
  %v9207 = vunpack.c.l.b16 %v8118
  %v9208 = vunpack.c.l.b16 %v8119
  %v9209 = vpack.c.b16 %v9146, %v9145
  %v9210 = vpack.c.b16 %v9148, %v9147
  %v9211 = vpack.c.b16 %v9150, %v9149
  %v9212 = vpack.c.b16 %v9152, %v9151
  %v9213 = vpack.c.b16 %v9154, %v9153
  %v9214 = vpack.c.b16 %v9156, %v9155
  %v9215 = vpack.c.b16 %v9158, %v9157
  %v9216 = vpack.c.b16 %v9160, %v9159
  %v9217 = vpack.c.b16 %v9162, %v9161
  %v9218 = vpack.c.b16 %v9164, %v9163
  %v9219 = vpack.c.b16 %v9166, %v9165
  %v9220 = vpack.c.b16 %v9168, %v9167
  %v9221 = vpack.c.b16 %v9170, %v9169
  %v9222 = vpack.c.b16 %v9172, %v9171
  %v9223 = vpack.c.b16 %v9174, %v9173
  %v9224 = vpack.c.b16 %v9176, %v9175
  %v9225 = vpack.c.b16 %v9178, %v9177
  %v9226 = vpack.c.b16 %v9180, %v9179
  %v9227 = vpack.c.b16 %v9182, %v9181
  %v9228 = vpack.c.b16 %v9184, %v9183
  %v9229 = vpack.c.b16 %v9186, %v9185
  %v9230 = vpack.c.b16 %v9188, %v9187
  %v9231 = vpack.c.b16 %v9190, %v9189
  %v9232 = vpack.c.b16 %v9192, %v9191
  %v9233 = vpack.c.b16 %v9194, %v9193
  %v9234 = vpack.c.b16 %v9196, %v9195
  %v9235 = vpack.c.b16 %v9198, %v9197
  %v9236 = vpack.c.b16 %v9200, %v9199
  %v9237 = vpack.c.b16 %v9202, %v9201
  %v9238 = vpack.c.b16 %v9204, %v9203
  %v9239 = vpack.c.b16 %v9206, %v9205
  %v9240 = vpack.c.b16 %v9208, %v9207
  %9241 = vrot.lane.b32.xlu0 %v9209, 32
  %v9242 = vpop.permute.xlu0 %9241
  %9243 = vrot.lane.b32.xlu0 %v9210, 32
  %v9244 = vpop.permute.xlu0 %9243
  %9245 = vrot.lane.b32.xlu0 %v9211, 32
  %v9246 = vpop.permute.xlu0 %9245
  %9247 = vrot.lane.b32.xlu0 %v9212, 32
  %v9248 = vpop.permute.xlu0 %9247
  %9249 = vrot.lane.b32.xlu0 %v9213, 32
  %v9250 = vpop.permute.xlu0 %9249
  %9251 = vrot.lane.b32.xlu0 %v9214, 32
  %v9252 = vpop.permute.xlu0 %9251
  %9253 = vrot.lane.b32.xlu0 %v9215, 32
  %v9254 = vpop.permute.xlu0 %9253
  %9255 = vrot.lane.b32.xlu0 %v9216, 32
  %v9256 = vpop.permute.xlu0 %9255
  %9257 = vrot.lane.b32.xlu0 %v9217, 32
  %v9258 = vpop.permute.xlu0 %9257
  %9259 = vrot.lane.b32.xlu0 %v9218, 32
  %v9260 = vpop.permute.xlu0 %9259
  %9261 = vrot.lane.b32.xlu0 %v9219, 32
  %v9262 = vpop.permute.xlu0 %9261
  %9263 = vrot.lane.b32.xlu0 %v9220, 32
  %v9264 = vpop.permute.xlu0 %9263
  %9265 = vrot.lane.b32.xlu0 %v9221, 32
  %v9266 = vpop.permute.xlu0 %9265
  %9267 = vrot.lane.b32.xlu0 %v9222, 32
  %v9268 = vpop.permute.xlu0 %9267
  %9269 = vrot.lane.b32.xlu0 %v9223, 32
  %v9270 = vpop.permute.xlu0 %9269
  %9271 = vrot.lane.b32.xlu0 %v9224, 32
  %v9272 = vpop.permute.xlu0 %9271
  %9273 = vrot.lane.b32.xlu0 %v9225, 32
  %v9274 = vpop.permute.xlu0 %9273
  %9275 = vrot.lane.b32.xlu0 %v9226, 32
  %v9276 = vpop.permute.xlu0 %9275
  %9277 = vrot.lane.b32.xlu0 %v9227, 32
  %v9278 = vpop.permute.xlu0 %9277
  %9279 = vrot.lane.b32.xlu0 %v9228, 32
  %v9280 = vpop.permute.xlu0 %9279
  %9281 = vrot.lane.b32.xlu0 %v9229, 32
  %v9282 = vpop.permute.xlu0 %9281
  %9283 = vrot.lane.b32.xlu0 %v9230, 32
  %v9284 = vpop.permute.xlu0 %9283
  %9285 = vrot.lane.b32.xlu0 %v9231, 32
  %v9286 = vpop.permute.xlu0 %9285
  %9287 = vrot.lane.b32.xlu0 %v9232, 32
  %v9288 = vpop.permute.xlu0 %9287
  %9289 = vrot.lane.b32.xlu0 %v9233, 32
  %v9290 = vpop.permute.xlu0 %9289
  %9291 = vrot.lane.b32.xlu0 %v9234, 32
  %v9292 = vpop.permute.xlu0 %9291
  %9293 = vrot.lane.b32.xlu0 %v9235, 32
  %v9294 = vpop.permute.xlu0 %9293
  %9295 = vrot.lane.b32.xlu0 %v9236, 32
  %v9296 = vpop.permute.xlu0 %9295
  %9297 = vrot.lane.b32.xlu0 %v9237, 32
  %v9298 = vpop.permute.xlu0 %9297
  %9299 = vrot.lane.b32.xlu0 %v9238, 32
  %v9300 = vpop.permute.xlu0 %9299
  %9301 = vrot.lane.b32.xlu0 %v9239, 32
  %v9302 = vpop.permute.xlu0 %9301
  %9303 = vrot.lane.b32.xlu0 %v9240, 32
  %v9304 = vpop.permute.xlu0 %9303
  %v9369 = vunpack.c.l.b16 %v8120
  %v9370 = vunpack.c.l.b16 %v8121
  %v9371 = vunpack.c.l.b16 %v8122
  %v9372 = vunpack.c.l.b16 %v8123
  %v9373 = vunpack.c.l.b16 %v8124
  %v9374 = vunpack.c.l.b16 %v8125
  %v9375 = vunpack.c.l.b16 %v8126
  %v9376 = vunpack.c.l.b16 %v8127
  %v9377 = vunpack.c.l.b16 %v8128
  %v9378 = vunpack.c.l.b16 %v8129
  %v9379 = vunpack.c.l.b16 %v8130
  %v9380 = vunpack.c.l.b16 %v8131
  %v9381 = vunpack.c.l.b16 %v8132
  %v9382 = vunpack.c.l.b16 %v8133
  %v9383 = vunpack.c.l.b16 %v8134
  %v9384 = vunpack.c.l.b16 %v8135
  %v9385 = vunpack.c.l.b16 %v8136
  %v9386 = vunpack.c.l.b16 %v8137
  %v9387 = vunpack.c.l.b16 %v8138
  %v9388 = vunpack.c.l.b16 %v8139
  %v9389 = vunpack.c.l.b16 %v8140
  %v9390 = vunpack.c.l.b16 %v8141
  %v9391 = vunpack.c.l.b16 %v8142
  %v9392 = vunpack.c.l.b16 %v8143
  %v9393 = vunpack.c.l.b16 %v8144
  %v9394 = vunpack.c.l.b16 %v8145
  %v9395 = vunpack.c.l.b16 %v8146
  %v9396 = vunpack.c.l.b16 %v8147
  %v9397 = vunpack.c.l.b16 %v8148
  %v9398 = vunpack.c.l.b16 %v8149
  %v9399 = vunpack.c.l.b16 %v8150
  %v9400 = vunpack.c.l.b16 %v8151
  %v9401 = vunpack.c.l.b16 %v8152
  %v9402 = vunpack.c.l.b16 %v8153
  %v9403 = vunpack.c.l.b16 %v8154
  %v9404 = vunpack.c.l.b16 %v8155
  %v9405 = vunpack.c.l.b16 %v8156
  %v9406 = vunpack.c.l.b16 %v8157
  %v9407 = vunpack.c.l.b16 %v8158
  %v9408 = vunpack.c.l.b16 %v8159
  %v9409 = vunpack.c.l.b16 %v8160
  %v9410 = vunpack.c.l.b16 %v8161
  %v9411 = vunpack.c.l.b16 %v8162
  %v9412 = vunpack.c.l.b16 %v8163
  %v9413 = vunpack.c.l.b16 %v8164
  %v9414 = vunpack.c.l.b16 %v8165
  %v9415 = vunpack.c.l.b16 %v8166
  %v9416 = vunpack.c.l.b16 %v8167
  %v9417 = vunpack.c.l.b16 %v8168
  %v9418 = vunpack.c.l.b16 %v8169
  %v9419 = vunpack.c.l.b16 %v8170
  %v9420 = vunpack.c.l.b16 %v8171
  %v9421 = vunpack.c.l.b16 %v8172
  %v9422 = vunpack.c.l.b16 %v8173
  %v9423 = vunpack.c.l.b16 %v8174
  %v9424 = vunpack.c.l.b16 %v8175
  %v9425 = vunpack.c.l.b16 %v8176
  %v9426 = vunpack.c.l.b16 %v8177
  %v9427 = vunpack.c.l.b16 %v8178
  %v9428 = vunpack.c.l.b16 %v8179
  %v9429 = vunpack.c.l.b16 %v8180
  %v9430 = vunpack.c.l.b16 %v8181
  %v9431 = vunpack.c.l.b16 %v8182
  %v9432 = vunpack.c.l.b16 %v8183
  %v9433 = vpack.c.b16 %v9370, %v9369
  %v9434 = vpack.c.b16 %v9372, %v9371
  %v9435 = vpack.c.b16 %v9374, %v9373
  %v9436 = vpack.c.b16 %v9376, %v9375
  %v9437 = vpack.c.b16 %v9378, %v9377
  %v9438 = vpack.c.b16 %v9380, %v9379
  %v9439 = vpack.c.b16 %v9382, %v9381
  %v9440 = vpack.c.b16 %v9384, %v9383
  %v9441 = vpack.c.b16 %v9386, %v9385
  %v9442 = vpack.c.b16 %v9388, %v9387
  %v9443 = vpack.c.b16 %v9390, %v9389
  %v9444 = vpack.c.b16 %v9392, %v9391
  %v9445 = vpack.c.b16 %v9394, %v9393
  %v9446 = vpack.c.b16 %v9396, %v9395
  %v9447 = vpack.c.b16 %v9398, %v9397
  %v9448 = vpack.c.b16 %v9400, %v9399
  %v9449 = vpack.c.b16 %v9402, %v9401
  %v9450 = vpack.c.b16 %v9404, %v9403
  %v9451 = vpack.c.b16 %v9406, %v9405
  %v9452 = vpack.c.b16 %v9408, %v9407
  %v9453 = vpack.c.b16 %v9410, %v9409
  %v9454 = vpack.c.b16 %v9412, %v9411
  %v9455 = vpack.c.b16 %v9414, %v9413
  %v9456 = vpack.c.b16 %v9416, %v9415
  %v9457 = vpack.c.b16 %v9418, %v9417
  %v9458 = vpack.c.b16 %v9420, %v9419
  %v9459 = vpack.c.b16 %v9422, %v9421
  %v9460 = vpack.c.b16 %v9424, %v9423
  %v9461 = vpack.c.b16 %v9426, %v9425
  %v9462 = vpack.c.b16 %v9428, %v9427
  %v9463 = vpack.c.b16 %v9430, %v9429
  %v9464 = vpack.c.b16 %v9432, %v9431
  %9465 = vrot.lane.b32.xlu0 %v9433, 48
  %v9466 = vpop.permute.xlu0 %9465
  %9467 = vrot.lane.b32.xlu0 %v9434, 48
  %v9468 = vpop.permute.xlu0 %9467
  %9469 = vrot.lane.b32.xlu0 %v9435, 48
  %v9470 = vpop.permute.xlu0 %9469
  %9471 = vrot.lane.b32.xlu0 %v9436, 48
  %v9472 = vpop.permute.xlu0 %9471
  %9473 = vrot.lane.b32.xlu0 %v9437, 48
  %v9474 = vpop.permute.xlu0 %9473
  %9475 = vrot.lane.b32.xlu0 %v9438, 48
  %v9476 = vpop.permute.xlu0 %9475
  %9477 = vrot.lane.b32.xlu0 %v9439, 48
  %v9478 = vpop.permute.xlu0 %9477
  %9479 = vrot.lane.b32.xlu0 %v9440, 48
  %v9480 = vpop.permute.xlu0 %9479
  %9481 = vrot.lane.b32.xlu0 %v9441, 48
  %v9482 = vpop.permute.xlu0 %9481
  %9483 = vrot.lane.b32.xlu0 %v9442, 48
  %v9484 = vpop.permute.xlu0 %9483
  %9485 = vrot.lane.b32.xlu0 %v9443, 48
  %v9486 = vpop.permute.xlu0 %9485
  %9487 = vrot.lane.b32.xlu0 %v9444, 48
  %v9488 = vpop.permute.xlu0 %9487
  %9489 = vrot.lane.b32.xlu0 %v9445, 48
  %v9490 = vpop.permute.xlu0 %9489
  %9491 = vrot.lane.b32.xlu0 %v9446, 48
  %v9492 = vpop.permute.xlu0 %9491
  %9493 = vrot.lane.b32.xlu0 %v9447, 48
  %v9494 = vpop.permute.xlu0 %9493
  %9495 = vrot.lane.b32.xlu0 %v9448, 48
  %v9496 = vpop.permute.xlu0 %9495
  %9497 = vrot.lane.b32.xlu0 %v9449, 48
  %v9498 = vpop.permute.xlu0 %9497
  %9499 = vrot.lane.b32.xlu0 %v9450, 48
  %v9500 = vpop.permute.xlu0 %9499
  %9501 = vrot.lane.b32.xlu0 %v9451, 48
  %v9502 = vpop.permute.xlu0 %9501
  %9503 = vrot.lane.b32.xlu0 %v9452, 48
  %v9504 = vpop.permute.xlu0 %9503
  %9505 = vrot.lane.b32.xlu0 %v9453, 48
  %v9506 = vpop.permute.xlu0 %9505
  %9507 = vrot.lane.b32.xlu0 %v9454, 48
  %v9508 = vpop.permute.xlu0 %9507
  %9509 = vrot.lane.b32.xlu0 %v9455, 48
  %v9510 = vpop.permute.xlu0 %9509
  %9511 = vrot.lane.b32.xlu0 %v9456, 48
  %v9512 = vpop.permute.xlu0 %9511
  %9513 = vrot.lane.b32.xlu0 %v9457, 48
  %v9514 = vpop.permute.xlu0 %9513
  %9515 = vrot.lane.b32.xlu0 %v9458, 48
  %v9516 = vpop.permute.xlu0 %9515
  %9517 = vrot.lane.b32.xlu0 %v9459, 48
  %v9518 = vpop.permute.xlu0 %9517
  %9519 = vrot.lane.b32.xlu0 %v9460, 48
  %v9520 = vpop.permute.xlu0 %9519
  %9521 = vrot.lane.b32.xlu0 %v9461, 48
  %v9522 = vpop.permute.xlu0 %9521
  %9523 = vrot.lane.b32.xlu0 %v9462, 48
  %v9524 = vpop.permute.xlu0 %9523
  %9525 = vrot.lane.b32.xlu0 %v9463, 48
  %v9526 = vpop.permute.xlu0 %9525
  %9527 = vrot.lane.b32.xlu0 %v9464, 48
  %v9528 = vpop.permute.xlu0 %9527
  %v9561 = vunpack.c.l.b16 %v3672
  %v9562 = vunpack.c.l.b16 %v8184
  %v9563 = vunpack.c.l.b16 %v3675
  %v9564 = vunpack.c.l.b16 %v8185
  %v9565 = vunpack.c.l.b16 %v3678
  %v9566 = vunpack.c.l.b16 %v8186
  %v9567 = vunpack.c.l.b16 %v3681
  %v9568 = vunpack.c.l.b16 %v8187
  %v9569 = vunpack.c.l.b16 %v3684
  %v9570 = vunpack.c.l.b16 %v8188
  %v9571 = vunpack.c.l.b16 %v3687
  %v9572 = vunpack.c.l.b16 %v8189
  %v9573 = vunpack.c.l.b16 %v3690
  %v9574 = vunpack.c.l.b16 %v8190
  %v9575 = vunpack.c.l.b16 %v3693
  %v9576 = vunpack.c.l.b16 %v8191
  %v9577 = vunpack.c.l.b16 %v3696
  %v9578 = vunpack.c.l.b16 %v8192
  %v9579 = vunpack.c.l.b16 %v3699
  %v9580 = vunpack.c.l.b16 %v8193
  %v9581 = vunpack.c.l.b16 %v3702
  %v9582 = vunpack.c.l.b16 %v8194
  %v9583 = vunpack.c.l.b16 %v3705
  %v9584 = vunpack.c.l.b16 %v8195
  %v9585 = vunpack.c.l.b16 %v3708
  %v9586 = vunpack.c.l.b16 %v8196
  %v9587 = vunpack.c.l.b16 %v3711
  %v9588 = vunpack.c.l.b16 %v8197
  %v9589 = vunpack.c.l.b16 %v3714
  %v9590 = vunpack.c.l.b16 %v8198
  %v9591 = vunpack.c.l.b16 %v3717
  %v9592 = vunpack.c.l.b16 %v8199
  %v9593 = vunpack.c.l.b16 %v3720
  %v9594 = vunpack.c.l.b16 %v8200
  %v9595 = vunpack.c.l.b16 %v3723
  %v9596 = vunpack.c.l.b16 %v8201
  %v9597 = vunpack.c.l.b16 %v3726
  %v9598 = vunpack.c.l.b16 %v8202
  %v9599 = vunpack.c.l.b16 %v3729
  %v9600 = vunpack.c.l.b16 %v8203
  %v9601 = vunpack.c.l.b16 %v3732
  %v9602 = vunpack.c.l.b16 %v8204
  %v9603 = vunpack.c.l.b16 %v3735
  %v9604 = vunpack.c.l.b16 %v8205
  %v9605 = vunpack.c.l.b16 %v3738
  %v9606 = vunpack.c.l.b16 %v8206
  %v9607 = vunpack.c.l.b16 %v3741
  %v9608 = vunpack.c.l.b16 %v8207
  %v9609 = vunpack.c.l.b16 %v3744
  %v9610 = vunpack.c.l.b16 %v8208
  %v9611 = vunpack.c.l.b16 %v3747
  %v9612 = vunpack.c.l.b16 %v8209
  %v9613 = vunpack.c.l.b16 %v3750
  %v9614 = vunpack.c.l.b16 %v8210
  %v9615 = vunpack.c.l.b16 %v3753
  %v9616 = vunpack.c.l.b16 %v8211
  %v9617 = vunpack.c.l.b16 %v3756
  %v9618 = vunpack.c.l.b16 %v8212
  %v9619 = vunpack.c.l.b16 %v3759
  %v9620 = vunpack.c.l.b16 %v8213
  %v9621 = vunpack.c.l.b16 %v3762
  %v9622 = vunpack.c.l.b16 %v8214
  %v9623 = vunpack.c.l.b16 %v3765
  %v9624 = vunpack.c.l.b16 %v8215
  %v9625 = vpack.c.b16 %v9562, %v9561
  %v9626 = vpack.c.b16 %v9564, %v9563
  %v9627 = vpack.c.b16 %v9566, %v9565
  %v9628 = vpack.c.b16 %v9568, %v9567
  %v9629 = vpack.c.b16 %v9570, %v9569
  %v9630 = vpack.c.b16 %v9572, %v9571
  %v9631 = vpack.c.b16 %v9574, %v9573
  %v9632 = vpack.c.b16 %v9576, %v9575
  %v9633 = vpack.c.b16 %v9578, %v9577
  %v9634 = vpack.c.b16 %v9580, %v9579
  %v9635 = vpack.c.b16 %v9582, %v9581
  %v9636 = vpack.c.b16 %v9584, %v9583
  %v9637 = vpack.c.b16 %v9586, %v9585
  %v9638 = vpack.c.b16 %v9588, %v9587
  %v9639 = vpack.c.b16 %v9590, %v9589
  %v9640 = vpack.c.b16 %v9592, %v9591
  %v9641 = vpack.c.b16 %v9594, %v9593
  %v9642 = vpack.c.b16 %v9596, %v9595
  %v9643 = vpack.c.b16 %v9598, %v9597
  %v9644 = vpack.c.b16 %v9600, %v9599
  %v9645 = vpack.c.b16 %v9602, %v9601
  %v9646 = vpack.c.b16 %v9604, %v9603
  %v9647 = vpack.c.b16 %v9606, %v9605
  %v9648 = vpack.c.b16 %v9608, %v9607
  %v9649 = vpack.c.b16 %v9610, %v9609
  %v9650 = vpack.c.b16 %v9612, %v9611
  %v9651 = vpack.c.b16 %v9614, %v9613
  %v9652 = vpack.c.b16 %v9616, %v9615
  %v9653 = vpack.c.b16 %v9618, %v9617
  %v9654 = vpack.c.b16 %v9620, %v9619
  %v9655 = vpack.c.b16 %v9622, %v9621
  %v9656 = vpack.c.b16 %v9624, %v9623
  %9657 = vrot.lane.b32.xlu0 %v9625, 80
  %v9658 = vpop.permute.xlu0 %9657
  %9659 = vrot.lane.b32.xlu0 %v9626, 80
  %v9660 = vpop.permute.xlu0 %9659
  %9661 = vrot.lane.b32.xlu0 %v9627, 80
  %v9662 = vpop.permute.xlu0 %9661
  %9663 = vrot.lane.b32.xlu0 %v9628, 80
  %v9664 = vpop.permute.xlu0 %9663
  %9665 = vrot.lane.b32.xlu0 %v9629, 80
  %v9666 = vpop.permute.xlu0 %9665
  %9667 = vrot.lane.b32.xlu0 %v9630, 80
  %v9668 = vpop.permute.xlu0 %9667
  %9669 = vrot.lane.b32.xlu0 %v9631, 80
  %v9670 = vpop.permute.xlu0 %9669
  %9671 = vrot.lane.b32.xlu0 %v9632, 80
  %v9672 = vpop.permute.xlu0 %9671
  %9673 = vrot.lane.b32.xlu0 %v9633, 80
  %v9674 = vpop.permute.xlu0 %9673
  %9675 = vrot.lane.b32.xlu0 %v9634, 80
  %v9676 = vpop.permute.xlu0 %9675
  %9677 = vrot.lane.b32.xlu0 %v9635, 80
  %v9678 = vpop.permute.xlu0 %9677
  %9679 = vrot.lane.b32.xlu0 %v9636, 80
  %v9680 = vpop.permute.xlu0 %9679
  %9681 = vrot.lane.b32.xlu0 %v9637, 80
  %v9682 = vpop.permute.xlu0 %9681
  %9683 = vrot.lane.b32.xlu0 %v9638, 80
  %v9684 = vpop.permute.xlu0 %9683
  %9685 = vrot.lane.b32.xlu0 %v9639, 80
  %v9686 = vpop.permute.xlu0 %9685
  %9687 = vrot.lane.b32.xlu0 %v9640, 80
  %v9688 = vpop.permute.xlu0 %9687
  %9689 = vrot.lane.b32.xlu0 %v9641, 80
  %v9690 = vpop.permute.xlu0 %9689
  %9691 = vrot.lane.b32.xlu0 %v9642, 80
  %v9692 = vpop.permute.xlu0 %9691
  %9693 = vrot.lane.b32.xlu0 %v9643, 80
  %v9694 = vpop.permute.xlu0 %9693
  %9695 = vrot.lane.b32.xlu0 %v9644, 80
  %v9696 = vpop.permute.xlu0 %9695
  %9697 = vrot.lane.b32.xlu0 %v9645, 80
  %v9698 = vpop.permute.xlu0 %9697
  %9699 = vrot.lane.b32.xlu0 %v9646, 80
  %v9700 = vpop.permute.xlu0 %9699
  %9701 = vrot.lane.b32.xlu0 %v9647, 80
  %v9702 = vpop.permute.xlu0 %9701
  %9703 = vrot.lane.b32.xlu0 %v9648, 80
  %v9704 = vpop.permute.xlu0 %9703
  %9705 = vrot.lane.b32.xlu0 %v9649, 80
  %v9706 = vpop.permute.xlu0 %9705
  %9707 = vrot.lane.b32.xlu0 %v9650, 80
  %v9708 = vpop.permute.xlu0 %9707
  %9709 = vrot.lane.b32.xlu0 %v9651, 80
  %v9710 = vpop.permute.xlu0 %9709
  %9711 = vrot.lane.b32.xlu0 %v9652, 80
  %v9712 = vpop.permute.xlu0 %9711
  %9713 = vrot.lane.b32.xlu0 %v9653, 80
  %v9714 = vpop.permute.xlu0 %9713
  %9715 = vrot.lane.b32.xlu0 %v9654, 80
  %v9716 = vpop.permute.xlu0 %9715
  %9717 = vrot.lane.b32.xlu0 %v9655, 80
  %v9718 = vpop.permute.xlu0 %9717
  %9719 = vrot.lane.b32.xlu0 %v9656, 80
  %v9720 = vpop.permute.xlu0 %9719
  %v9785 = vunpack.c.l.b16 %v8217
  %v9786 = vunpack.c.l.b16 %v8218
  %v9787 = vunpack.c.l.b16 %v8219
  %v9788 = vunpack.c.l.b16 %v8220
  %v9789 = vunpack.c.l.b16 %v8221
  %v9790 = vunpack.c.l.b16 %v8222
  %v9791 = vunpack.c.l.b16 %v8223
  %v9792 = vunpack.c.l.b16 %v8224
  %v9793 = vunpack.c.l.b16 %v8225
  %v9794 = vunpack.c.l.b16 %v8226
  %v9795 = vunpack.c.l.b16 %v8227
  %v9796 = vunpack.c.l.b16 %v8228
  %v9797 = vunpack.c.l.b16 %v8229
  %v9798 = vunpack.c.l.b16 %v8230
  %v9799 = vunpack.c.l.b16 %v8231
  %v9800 = vunpack.c.l.b16 %v8232
  %v9801 = vunpack.c.l.b16 %v8233
  %v9802 = vunpack.c.l.b16 %v8234
  %v9803 = vunpack.c.l.b16 %v8235
  %v9804 = vunpack.c.l.b16 %v8236
  %v9805 = vunpack.c.l.b16 %v8237
  %v9806 = vunpack.c.l.b16 %v8238
  %v9807 = vunpack.c.l.b16 %v8239
  %v9808 = vunpack.c.l.b16 %v8240
  %v9809 = vunpack.c.l.b16 %v8241
  %v9810 = vunpack.c.l.b16 %v8242
  %v9811 = vunpack.c.l.b16 %v8243
  %v9812 = vunpack.c.l.b16 %v8244
  %v9813 = vunpack.c.l.b16 %v8245
  %v9814 = vunpack.c.l.b16 %v8246
  %v9815 = vunpack.c.l.b16 %v8247
  %v9816 = vunpack.c.l.b16 %v8248
  %v9817 = vunpack.c.l.b16 %v8249
  %v9818 = vunpack.c.l.b16 %v8250
  %v9819 = vunpack.c.l.b16 %v8251
  %v9820 = vunpack.c.l.b16 %v8252
  %v9821 = vunpack.c.l.b16 %v8253
  %v9822 = vunpack.c.l.b16 %v8254
  %v9823 = vunpack.c.l.b16 %v8255
  %v9824 = vunpack.c.l.b16 %v8256
  %v9825 = vunpack.c.l.b16 %v8257
  %v9826 = vunpack.c.l.b16 %v8258
  %v9827 = vunpack.c.l.b16 %v8259
  %v9828 = vunpack.c.l.b16 %v8260
  %v9829 = vunpack.c.l.b16 %v8261
  %v9830 = vunpack.c.l.b16 %v8262
  %v9831 = vunpack.c.l.b16 %v8263
  %v9832 = vunpack.c.l.b16 %v8264
  %v9833 = vunpack.c.l.b16 %v8265
  %v9834 = vunpack.c.l.b16 %v8266
  %v9835 = vunpack.c.l.b16 %v8267
  %v9836 = vunpack.c.l.b16 %v8268
  %v9837 = vunpack.c.l.b16 %v8269
  %v9838 = vunpack.c.l.b16 %v8270
  %v9839 = vunpack.c.l.b16 %v8271
  %v9840 = vunpack.c.l.b16 %v8272
  %v9841 = vunpack.c.l.b16 %v8273
  %v9842 = vunpack.c.l.b16 %v8274
  %v9843 = vunpack.c.l.b16 %v8275
  %v9844 = vunpack.c.l.b16 %v8276
  %v9845 = vunpack.c.l.b16 %v8277
  %v9846 = vunpack.c.l.b16 %v8278
  %v9847 = vunpack.c.l.b16 %v8279
  %v9848 = vunpack.c.l.b16 %v8280
  %v9849 = vpack.c.b16 %v9786, %v9785
  %v9850 = vpack.c.b16 %v9788, %v9787
  %v9851 = vpack.c.b16 %v9790, %v9789
  %v9852 = vpack.c.b16 %v9792, %v9791
  %v9853 = vpack.c.b16 %v9794, %v9793
  %v9854 = vpack.c.b16 %v9796, %v9795
  %v9855 = vpack.c.b16 %v9798, %v9797
  %v9856 = vpack.c.b16 %v9800, %v9799
  %v9857 = vpack.c.b16 %v9802, %v9801
  %v9858 = vpack.c.b16 %v9804, %v9803
  %v9859 = vpack.c.b16 %v9806, %v9805
  %v9860 = vpack.c.b16 %v9808, %v9807
  %v9861 = vpack.c.b16 %v9810, %v9809
  %v9862 = vpack.c.b16 %v9812, %v9811
  %v9863 = vpack.c.b16 %v9814, %v9813
  %v9864 = vpack.c.b16 %v9816, %v9815
  %v9865 = vpack.c.b16 %v9818, %v9817
  %v9866 = vpack.c.b16 %v9820, %v9819
  %v9867 = vpack.c.b16 %v9822, %v9821
  %v9868 = vpack.c.b16 %v9824, %v9823
  %v9869 = vpack.c.b16 %v9826, %v9825
  %v9870 = vpack.c.b16 %v9828, %v9827
  %v9871 = vpack.c.b16 %v9830, %v9829
  %v9872 = vpack.c.b16 %v9832, %v9831
  %v9873 = vpack.c.b16 %v9834, %v9833
  %v9874 = vpack.c.b16 %v9836, %v9835
  %v9875 = vpack.c.b16 %v9838, %v9837
  %v9876 = vpack.c.b16 %v9840, %v9839
  %v9877 = vpack.c.b16 %v9842, %v9841
  %v9878 = vpack.c.b16 %v9844, %v9843
  %v9879 = vpack.c.b16 %v9846, %v9845
  %v9880 = vpack.c.b16 %v9848, %v9847
  %9881 = vrot.lane.b32.xlu0 %v9849, 96
  %v9882 = vpop.permute.xlu0 %9881
  %9883 = vrot.lane.b32.xlu0 %v9850, 96
  %v9884 = vpop.permute.xlu0 %9883
  %9885 = vrot.lane.b32.xlu0 %v9851, 96
  %v9886 = vpop.permute.xlu0 %9885
  %9887 = vrot.lane.b32.xlu0 %v9852, 96
  %v9888 = vpop.permute.xlu0 %9887
  %9889 = vrot.lane.b32.xlu0 %v9853, 96
  %v9890 = vpop.permute.xlu0 %9889
  %9891 = vrot.lane.b32.xlu0 %v9854, 96
  %v9892 = vpop.permute.xlu0 %9891
  %9893 = vrot.lane.b32.xlu0 %v9855, 96
  %v9894 = vpop.permute.xlu0 %9893
  %9895 = vrot.lane.b32.xlu0 %v9856, 96
  %v9896 = vpop.permute.xlu0 %9895
  %9897 = vrot.lane.b32.xlu0 %v9857, 96
  %v9898 = vpop.permute.xlu0 %9897
  %9899 = vrot.lane.b32.xlu0 %v9858, 96
  %v9900 = vpop.permute.xlu0 %9899
  %9901 = vrot.lane.b32.xlu0 %v9859, 96
  %v9902 = vpop.permute.xlu0 %9901
  %9903 = vrot.lane.b32.xlu0 %v9860, 96
  %v9904 = vpop.permute.xlu0 %9903
  %9905 = vrot.lane.b32.xlu0 %v9861, 96
  %v9906 = vpop.permute.xlu0 %9905
  %9907 = vrot.lane.b32.xlu0 %v9862, 96
  %v9908 = vpop.permute.xlu0 %9907
  %9909 = vrot.lane.b32.xlu0 %v9863, 96
  %v9910 = vpop.permute.xlu0 %9909
  %9911 = vrot.lane.b32.xlu0 %v9864, 96
  %v9912 = vpop.permute.xlu0 %9911
  %9913 = vrot.lane.b32.xlu0 %v9865, 96
  %v9914 = vpop.permute.xlu0 %9913
  %9915 = vrot.lane.b32.xlu0 %v9866, 96
  %v9916 = vpop.permute.xlu0 %9915
  %9917 = vrot.lane.b32.xlu0 %v9867, 96
  %v9918 = vpop.permute.xlu0 %9917
  %9919 = vrot.lane.b32.xlu0 %v9868, 96
  %v9920 = vpop.permute.xlu0 %9919
  %9921 = vrot.lane.b32.xlu0 %v9869, 96
  %v9922 = vpop.permute.xlu0 %9921
  %9923 = vrot.lane.b32.xlu0 %v9870, 96
  %v9924 = vpop.permute.xlu0 %9923
  %9925 = vrot.lane.b32.xlu0 %v9871, 96
  %v9926 = vpop.permute.xlu0 %9925
  %9927 = vrot.lane.b32.xlu0 %v9872, 96
  %v9928 = vpop.permute.xlu0 %9927
  %9929 = vrot.lane.b32.xlu0 %v9873, 96
  %v9930 = vpop.permute.xlu0 %9929
  %9931 = vrot.lane.b32.xlu0 %v9874, 96
  %v9932 = vpop.permute.xlu0 %9931
  %9933 = vrot.lane.b32.xlu0 %v9875, 96
  %v9934 = vpop.permute.xlu0 %9933
  %9935 = vrot.lane.b32.xlu0 %v9876, 96
  %v9936 = vpop.permute.xlu0 %9935
  %9937 = vrot.lane.b32.xlu0 %v9877, 96
  %v9938 = vpop.permute.xlu0 %9937
  %9939 = vrot.lane.b32.xlu0 %v9878, 96
  %v9940 = vpop.permute.xlu0 %9939
  %9941 = vrot.lane.b32.xlu0 %v9879, 96
  %v9942 = vpop.permute.xlu0 %9941
  %9943 = vrot.lane.b32.xlu0 %v9880, 96
  %v9944 = vpop.permute.xlu0 %9943
  %v9945 = vunpack.c.l.b16 %v8476
  %v9946 = vunpack.c.l.b16 %v8479
  %v9947 = vunpack.c.l.b16 %v8483
  %v9948 = vunpack.c.l.b16 %v8486
  %v9949 = vunpack.c.l.b16 %v8490
  %v9950 = vunpack.c.l.b16 %v8493
  %v9951 = vunpack.c.l.b16 %v8497
  %v9952 = vunpack.c.l.b16 %v8500
  %v9953 = vunpack.c.l.b16 %v8504
  %v9954 = vunpack.c.l.b16 %v8507
  %v9955 = vunpack.c.l.b16 %v8511
  %v9956 = vunpack.c.l.b16 %v8514
  %v9957 = vunpack.c.l.b16 %v8518
  %v9958 = vunpack.c.l.b16 %v8521
  %v9959 = vunpack.c.l.b16 %v8525
  %v9960 = vunpack.c.l.b16 %v8528
  %v9961 = vunpack.c.l.b16 %v8532
  %v9962 = vunpack.c.l.b16 %v8535
  %v9963 = vunpack.c.l.b16 %v8539
  %v9964 = vunpack.c.l.b16 %v8542
  %v9965 = vunpack.c.l.b16 %v8546
  %v9966 = vunpack.c.l.b16 %v8549
  %v9967 = vunpack.c.l.b16 %v8553
  %v9968 = vunpack.c.l.b16 %v8556
  %v9969 = vunpack.c.l.b16 %v8560
  %v9970 = vunpack.c.l.b16 %v8563
  %v9971 = vunpack.c.l.b16 %v8567
  %v9972 = vunpack.c.l.b16 %v8570
  %v9973 = vunpack.c.l.b16 %v8574
  %v9974 = vunpack.c.l.b16 %v8577
  %v9975 = vunpack.c.l.b16 %v8581
  %v9976 = vunpack.c.l.b16 %v8584
  %v9977 = vunpack.c.l.b16 %v8588
  %v9978 = vunpack.c.l.b16 %v8591
  %v9979 = vunpack.c.l.b16 %v8595
  %v9980 = vunpack.c.l.b16 %v8598
  %v9981 = vunpack.c.l.b16 %v8602
  %v9982 = vunpack.c.l.b16 %v8605
  %v9983 = vunpack.c.l.b16 %v8609
  %v9984 = vunpack.c.l.b16 %v8612
  %v9985 = vunpack.c.l.b16 %v8616
  %v9986 = vunpack.c.l.b16 %v8619
  %v9987 = vunpack.c.l.b16 %v8623
  %v9988 = vunpack.c.l.b16 %v8626
  %v9989 = vunpack.c.l.b16 %v8630
  %v9990 = vunpack.c.l.b16 %v8633
  %v9991 = vunpack.c.l.b16 %v8637
  %v9992 = vunpack.c.l.b16 %v8640
  %v9993 = vunpack.c.l.b16 %v8644
  %v9994 = vunpack.c.l.b16 %v8647
  %v9995 = vunpack.c.l.b16 %v8651
  %v9996 = vunpack.c.l.b16 %v8654
  %v9997 = vunpack.c.l.b16 %v8658
  %v9998 = vunpack.c.l.b16 %v8661
  %v9999 = vunpack.c.l.b16 %v8665
  %v10000 = vunpack.c.l.b16 %v8668
  %v10001 = vunpack.c.l.b16 %v8672
  %v10002 = vunpack.c.l.b16 %v8675
  %v10003 = vunpack.c.l.b16 %v8679
  %v10004 = vunpack.c.l.b16 %v8682
  %v10005 = vunpack.c.l.b16 %v8686
  %v10006 = vunpack.c.l.b16 %v8689
  %v10007 = vunpack.c.l.b16 %v8693
  %v10008 = vunpack.c.l.b16 %v8696
  %v10009 = vpack.c.b16 %v9946, %v9945
  %v10010 = vpack.c.b16 %v9948, %v9947
  %v10011 = vpack.c.b16 %v9950, %v9949
  %v10012 = vpack.c.b16 %v9952, %v9951
  %v10013 = vpack.c.b16 %v9954, %v9953
  %v10014 = vpack.c.b16 %v9956, %v9955
  %v10015 = vpack.c.b16 %v9958, %v9957
  %v10016 = vpack.c.b16 %v9960, %v9959
  %v10017 = vpack.c.b16 %v9962, %v9961
  %v10018 = vpack.c.b16 %v9964, %v9963
  %v10019 = vpack.c.b16 %v9966, %v9965
  %v10020 = vpack.c.b16 %v9968, %v9967
  %v10021 = vpack.c.b16 %v9970, %v9969
  %v10022 = vpack.c.b16 %v9972, %v9971
  %v10023 = vpack.c.b16 %v9974, %v9973
  %v10024 = vpack.c.b16 %v9976, %v9975
  %v10025 = vpack.c.b16 %v9978, %v9977
  %v10026 = vpack.c.b16 %v9980, %v9979
  %v10027 = vpack.c.b16 %v9982, %v9981
  %v10028 = vpack.c.b16 %v9984, %v9983
  %v10029 = vpack.c.b16 %v9986, %v9985
  %v10030 = vpack.c.b16 %v9988, %v9987
  %v10031 = vpack.c.b16 %v9990, %v9989
  %v10032 = vpack.c.b16 %v9992, %v9991
  %v10033 = vpack.c.b16 %v9994, %v9993
  %v10034 = vpack.c.b16 %v9996, %v9995
  %v10035 = vpack.c.b16 %v9998, %v9997
  %v10036 = vpack.c.b16 %v10000, %v9999
  %v10037 = vpack.c.b16 %v10002, %v10001
  %v10038 = vpack.c.b16 %v10004, %v10003
  %v10039 = vpack.c.b16 %v10006, %v10005
  %v10040 = vpack.c.b16 %v10008, %v10007
  %10041 = vrot.lane.b32.xlu0 %v10009, 112
  %v10042 = vpop.permute.xlu0 %10041
  %10043 = vrot.lane.b32.xlu0 %v10010, 112
  %v10044 = vpop.permute.xlu0 %10043
  %10045 = vrot.lane.b32.xlu0 %v10011, 112
  %v10046 = vpop.permute.xlu0 %10045
  %10047 = vrot.lane.b32.xlu0 %v10012, 112
  %v10048 = vpop.permute.xlu0 %10047
  %10049 = vrot.lane.b32.xlu0 %v10013, 112
  %v10050 = vpop.permute.xlu0 %10049
  %10051 = vrot.lane.b32.xlu0 %v10014, 112
  %v10052 = vpop.permute.xlu0 %10051
  %10053 = vrot.lane.b32.xlu0 %v10015, 112
  %v10054 = vpop.permute.xlu0 %10053
  %10055 = vrot.lane.b32.xlu0 %v10016, 112
  %v10056 = vpop.permute.xlu0 %10055
  %10057 = vrot.lane.b32.xlu0 %v10017, 112
  %v10058 = vpop.permute.xlu0 %10057
  %10059 = vrot.lane.b32.xlu0 %v10018, 112
  %v10060 = vpop.permute.xlu0 %10059
  %10061 = vrot.lane.b32.xlu0 %v10019, 112
  %v10062 = vpop.permute.xlu0 %10061
  %10063 = vrot.lane.b32.xlu0 %v10020, 112
  %v10064 = vpop.permute.xlu0 %10063
  %10065 = vrot.lane.b32.xlu0 %v10021, 112
  %v10066 = vpop.permute.xlu0 %10065
  %10067 = vrot.lane.b32.xlu0 %v10022, 112
  %v10068 = vpop.permute.xlu0 %10067
  %10069 = vrot.lane.b32.xlu0 %v10023, 112
  %v10070 = vpop.permute.xlu0 %10069
  %10071 = vrot.lane.b32.xlu0 %v10024, 112
  %v10072 = vpop.permute.xlu0 %10071
  %10073 = vrot.lane.b32.xlu0 %v10025, 112
  %v10074 = vpop.permute.xlu0 %10073
  %10075 = vrot.lane.b32.xlu0 %v10026, 112
  %v10076 = vpop.permute.xlu0 %10075
  %10077 = vrot.lane.b32.xlu0 %v10027, 112
  %v10078 = vpop.permute.xlu0 %10077
  %10079 = vrot.lane.b32.xlu0 %v10028, 112
  %v10080 = vpop.permute.xlu0 %10079
  %10081 = vrot.lane.b32.xlu0 %v10029, 112
  %v10082 = vpop.permute.xlu0 %10081
  %10083 = vrot.lane.b32.xlu0 %v10030, 112
  %v10084 = vpop.permute.xlu0 %10083
  %10085 = vrot.lane.b32.xlu0 %v10031, 112
  %v10086 = vpop.permute.xlu0 %10085
  %10087 = vrot.lane.b32.xlu0 %v10032, 112
  %v10088 = vpop.permute.xlu0 %10087
  %10089 = vrot.lane.b32.xlu0 %v10033, 112
  %v10090 = vpop.permute.xlu0 %10089
  %10091 = vrot.lane.b32.xlu0 %v10034, 112
  %v10092 = vpop.permute.xlu0 %10091
  %10093 = vrot.lane.b32.xlu0 %v10035, 112
  %v10094 = vpop.permute.xlu0 %10093
  %10095 = vrot.lane.b32.xlu0 %v10036, 112
  %v10096 = vpop.permute.xlu0 %10095
  %10097 = vrot.lane.b32.xlu0 %v10037, 112
  %v10098 = vpop.permute.xlu0 %10097
  %10099 = vrot.lane.b32.xlu0 %v10038, 112
  %v10100 = vpop.permute.xlu0 %10099
  %10101 = vrot.lane.b32.xlu0 %v10039, 112
  %v10102 = vpop.permute.xlu0 %10101
  %10103 = vrot.lane.b32.xlu0 %v10040, 112
  %v10104 = vpop.permute.xlu0 %10103
  %v10169 = vunpack.c.l.b16 %v8697
  %v10170 = vunpack.c.l.b16 %v8698
  %v10171 = vunpack.c.l.b16 %v8699
  %v10172 = vunpack.c.l.b16 %v8700
  %v10173 = vunpack.c.l.b16 %v8701
  %v10174 = vunpack.c.l.b16 %v8702
  %v10175 = vunpack.c.l.b16 %v8703
  %v10176 = vunpack.c.l.b16 %v8704
  %v10177 = vunpack.c.l.b16 %v8705
  %v10178 = vunpack.c.l.b16 %v8706
  %v10179 = vunpack.c.l.b16 %v8707
  %v10180 = vunpack.c.l.b16 %v8708
  %v10181 = vunpack.c.l.b16 %v8709
  %v10182 = vunpack.c.l.b16 %v8710
  %v10183 = vunpack.c.l.b16 %v8711
  %v10184 = vunpack.c.l.b16 %v8712
  %v10185 = vunpack.c.l.b16 %v8713
  %v10186 = vunpack.c.l.b16 %v8714
  %v10187 = vunpack.c.l.b16 %v8715
  %v10188 = vunpack.c.l.b16 %v8716
  %v10189 = vunpack.c.l.b16 %v8717
  %v10190 = vunpack.c.l.b16 %v8718
  %v10191 = vunpack.c.l.b16 %v8719
  %v10192 = vunpack.c.l.b16 %v8720
  %v10193 = vunpack.c.l.b16 %v8721
  %v10194 = vunpack.c.l.b16 %v8722
  %v10195 = vunpack.c.l.b16 %v8723
  %v10196 = vunpack.c.l.b16 %v8724
  %v10197 = vunpack.c.l.b16 %v8725
  %v10198 = vunpack.c.l.b16 %v8726
  %v10199 = vunpack.c.l.b16 %v8727
  %v10200 = vunpack.c.l.b16 %v8728
  %v10201 = vunpack.c.l.b16 %v8729
  %v10202 = vunpack.c.l.b16 %v8730
  %v10203 = vunpack.c.l.b16 %v8731
  %v10204 = vunpack.c.l.b16 %v8732
  %v10205 = vunpack.c.l.b16 %v8733
  %v10206 = vunpack.c.l.b16 %v8734
  %v10207 = vunpack.c.l.b16 %v8735
  %v10208 = vunpack.c.l.b16 %v8736
  %v10209 = vunpack.c.l.b16 %v8737
  %v10210 = vunpack.c.l.b16 %v8738
  %v10211 = vunpack.c.l.b16 %v8739
  %v10212 = vunpack.c.l.b16 %v8740
  %v10213 = vunpack.c.l.b16 %v8741
  %v10214 = vunpack.c.l.b16 %v8742
  %v10215 = vunpack.c.l.b16 %v8743
  %v10216 = vunpack.c.l.b16 %v8744
  %v10217 = vunpack.c.l.b16 %v8745
  %v10218 = vunpack.c.l.b16 %v8746
  %v10219 = vunpack.c.l.b16 %v8747
  %v10220 = vunpack.c.l.b16 %v8748
  %v10221 = vunpack.c.l.b16 %v8749
  %v10222 = vunpack.c.l.b16 %v8750
  %v10223 = vunpack.c.l.b16 %v8751
  %v10224 = vunpack.c.l.b16 %v8752
  %v10225 = vunpack.c.l.b16 %v8753
  %v10226 = vunpack.c.l.b16 %v8754
  %v10227 = vunpack.c.l.b16 %v8755
  %v10228 = vunpack.c.l.b16 %v8756
  %v10229 = vunpack.c.l.b16 %v8757
  %v10230 = vunpack.c.l.b16 %v8758
  %v10231 = vunpack.c.l.b16 %v8759
  %v10232 = vunpack.c.l.b16 %v8760
  %v10233 = vpack.c.b16 %v10170, %v10169
  %v10234 = vpack.c.b16 %v10172, %v10171
  %v10235 = vpack.c.b16 %v10174, %v10173
  %v10236 = vpack.c.b16 %v10176, %v10175
  %v10237 = vpack.c.b16 %v10178, %v10177
  %v10238 = vpack.c.b16 %v10180, %v10179
  %v10239 = vpack.c.b16 %v10182, %v10181
  %v10240 = vpack.c.b16 %v10184, %v10183
  %v10241 = vpack.c.b16 %v10186, %v10185
  %v10242 = vpack.c.b16 %v10188, %v10187
  %v10243 = vpack.c.b16 %v10190, %v10189
  %v10244 = vpack.c.b16 %v10192, %v10191
  %v10245 = vpack.c.b16 %v10194, %v10193
  %v10246 = vpack.c.b16 %v10196, %v10195
  %v10247 = vpack.c.b16 %v10198, %v10197
  %v10248 = vpack.c.b16 %v10200, %v10199
  %v10249 = vpack.c.b16 %v10202, %v10201
  %v10250 = vpack.c.b16 %v10204, %v10203
  %v10251 = vpack.c.b16 %v10206, %v10205
  %v10252 = vpack.c.b16 %v10208, %v10207
  %v10253 = vpack.c.b16 %v10210, %v10209
  %v10254 = vpack.c.b16 %v10212, %v10211
  %v10255 = vpack.c.b16 %v10214, %v10213
  %v10256 = vpack.c.b16 %v10216, %v10215
  %v10257 = vpack.c.b16 %v10218, %v10217
  %v10258 = vpack.c.b16 %v10220, %v10219
  %v10259 = vpack.c.b16 %v10222, %v10221
  %v10260 = vpack.c.b16 %v10224, %v10223
  %v10261 = vpack.c.b16 %v10226, %v10225
  %v10262 = vpack.c.b16 %v10228, %v10227
  %v10263 = vpack.c.b16 %v10230, %v10229
  %v10264 = vpack.c.b16 %v10232, %v10231
  %v10267 = vsel %vm1010, %v8889, %v9018
  %v10270 = vsel %vm1010, %v8890, %v9020
  %v10273 = vsel %vm1010, %v8891, %v9022
  %v10276 = vsel %vm1010, %v8892, %v9024
  %v10279 = vsel %vm1010, %v8893, %v9026
  %v10282 = vsel %vm1010, %v8894, %v9028
  %v10285 = vsel %vm1010, %v8895, %v9030
  %v10288 = vsel %vm1010, %v8896, %v9032
  %v10291 = vsel %vm1010, %v8897, %v9034
  %v10294 = vsel %vm1010, %v8898, %v9036
  %v10297 = vsel %vm1010, %v8899, %v9038
  %v10300 = vsel %vm1010, %v8900, %v9040
  %v10303 = vsel %vm1010, %v8901, %v9042
  %v10306 = vsel %vm1010, %v8902, %v9044
  %v10309 = vsel %vm1010, %v8903, %v9046
  %v10312 = vsel %vm1010, %v8904, %v9048
  %v10315 = vsel %vm1010, %v8905, %v9050
  %v10318 = vsel %vm1010, %v8906, %v9052
  %v10321 = vsel %vm1010, %v8907, %v9054
  %v10324 = vsel %vm1010, %v8908, %v9056
  %v10327 = vsel %vm1010, %v8909, %v9058
  %v10330 = vsel %vm1010, %v8910, %v9060
  %v10333 = vsel %vm1010, %v8911, %v9062
  %v10336 = vsel %vm1010, %v8912, %v9064
  %v10339 = vsel %vm1010, %v8913, %v9066
  %v10342 = vsel %vm1010, %v8914, %v9068
  %v10345 = vsel %vm1010, %v8915, %v9070
  %v10348 = vsel %vm1010, %v8916, %v9072
  %v10351 = vsel %vm1010, %v8917, %v9074
  %v10354 = vsel %vm1010, %v8918, %v9076
  %v10357 = vsel %vm1010, %v8919, %v9078
  %v10360 = vsel %vm1010, %v8920, %v9080
  %v10362 = vsel %vm6648, %v10267, %v9242
  %v10364 = vsel %vm6648, %v10270, %v9244
  %v10366 = vsel %vm6648, %v10273, %v9246
  %v10368 = vsel %vm6648, %v10276, %v9248
  %v10370 = vsel %vm6648, %v10279, %v9250
  %v10372 = vsel %vm6648, %v10282, %v9252
  %v10374 = vsel %vm6648, %v10285, %v9254
  %v10376 = vsel %vm6648, %v10288, %v9256
  %v10378 = vsel %vm6648, %v10291, %v9258
  %v10380 = vsel %vm6648, %v10294, %v9260
  %v10382 = vsel %vm6648, %v10297, %v9262
  %v10384 = vsel %vm6648, %v10300, %v9264
  %v10386 = vsel %vm6648, %v10303, %v9266
  %v10388 = vsel %vm6648, %v10306, %v9268
  %v10390 = vsel %vm6648, %v10309, %v9270
  %v10392 = vsel %vm6648, %v10312, %v9272
  %v10394 = vsel %vm6648, %v10315, %v9274
  %v10396 = vsel %vm6648, %v10318, %v9276
  %v10398 = vsel %vm6648, %v10321, %v9278
  %v10400 = vsel %vm6648, %v10324, %v9280
  %v10402 = vsel %vm6648, %v10327, %v9282
  %v10404 = vsel %vm6648, %v10330, %v9284
  %v10406 = vsel %vm6648, %v10333, %v9286
  %v10408 = vsel %vm6648, %v10336, %v9288
  %v10410 = vsel %vm6648, %v10339, %v9290
  %v10412 = vsel %vm6648, %v10342, %v9292
  %v10414 = vsel %vm6648, %v10345, %v9294
  %v10416 = vsel %vm6648, %v10348, %v9296
  %v10418 = vsel %vm6648, %v10351, %v9298
  %v10420 = vsel %vm6648, %v10354, %v9300
  %v10422 = vsel %vm6648, %v10357, %v9302
  %v10424 = vsel %vm6648, %v10360, %v9304
  %v10426 = vsel %vm6713, %v10362, %v9466
  %v10428 = vsel %vm6713, %v10364, %v9468
  %v10430 = vsel %vm6713, %v10366, %v9470
  %v10432 = vsel %vm6713, %v10368, %v9472
  %v10434 = vsel %vm6713, %v10370, %v9474
  %v10436 = vsel %vm6713, %v10372, %v9476
  %v10438 = vsel %vm6713, %v10374, %v9478
  %v10440 = vsel %vm6713, %v10376, %v9480
  %v10442 = vsel %vm6713, %v10378, %v9482
  %v10444 = vsel %vm6713, %v10380, %v9484
  %v10446 = vsel %vm6713, %v10382, %v9486
  %v10448 = vsel %vm6713, %v10384, %v9488
  %v10450 = vsel %vm6713, %v10386, %v9490
  %v10452 = vsel %vm6713, %v10388, %v9492
  %v10454 = vsel %vm6713, %v10390, %v9494
  %v10456 = vsel %vm6713, %v10392, %v9496
  %v10458 = vsel %vm6713, %v10394, %v9498
  %v10460 = vsel %vm6713, %v10396, %v9500
  %v10462 = vsel %vm6713, %v10398, %v9502
  %v10464 = vsel %vm6713, %v10400, %v9504
  %v10466 = vsel %vm6713, %v10402, %v9506
  %v10468 = vsel %vm6713, %v10404, %v9508
  %v10470 = vsel %vm6713, %v10406, %v9510
  %v10472 = vsel %vm6713, %v10408, %v9512
  %v10474 = vsel %vm6713, %v10410, %v9514
  %v10476 = vsel %vm6713, %v10412, %v9516
  %v10478 = vsel %vm6713, %v10414, %v9518
  %v10480 = vsel %vm6713, %v10416, %v9520
  %v10482 = vsel %vm6713, %v10418, %v9522
  %v10484 = vsel %vm6713, %v10420, %v9524
  %v10486 = vsel %vm6713, %v10422, %v9526
  %v10488 = vsel %vm6713, %v10424, %v9528
  %v10489 = vsel %vm6778, %v10426, %v5913
  %v10490 = vsel %vm6778, %v10428, %v5915
  %v10491 = vsel %vm6778, %v10430, %v5917
  %v10492 = vsel %vm6778, %v10432, %v5919
  %v10493 = vsel %vm6778, %v10434, %v5921
  %v10494 = vsel %vm6778, %v10436, %v5923
  %v10495 = vsel %vm6778, %v10438, %v5925
  %v10496 = vsel %vm6778, %v10440, %v5927
  %v10497 = vsel %vm6778, %v10442, %v5929
  %v10498 = vsel %vm6778, %v10444, %v5931
  %v10499 = vsel %vm6778, %v10446, %v5933
  %v10500 = vsel %vm6778, %v10448, %v5935
  %v10501 = vsel %vm6778, %v10450, %v5937
  %v10502 = vsel %vm6778, %v10452, %v5939
  %v10503 = vsel %vm6778, %v10454, %v5941
  %v10504 = vsel %vm6778, %v10456, %v5943
  %v10505 = vsel %vm6778, %v10458, %v5945
  %v10506 = vsel %vm6778, %v10460, %v5947
  %v10507 = vsel %vm6778, %v10462, %v5949
  %v10508 = vsel %vm6778, %v10464, %v5951
  %v10509 = vsel %vm6778, %v10466, %v5953
  %v10510 = vsel %vm6778, %v10468, %v5955
  %v10511 = vsel %vm6778, %v10470, %v5957
  %v10512 = vsel %vm6778, %v10472, %v5959
  %v10513 = vsel %vm6778, %v10474, %v5961
  %v10514 = vsel %vm6778, %v10476, %v5963
  %v10515 = vsel %vm6778, %v10478, %v5965
  %v10516 = vsel %vm6778, %v10480, %v5967
  %v10517 = vsel %vm6778, %v10482, %v5969
  %v10518 = vsel %vm6778, %v10484, %v5971
  %v10519 = vsel %vm6778, %v10486, %v5973
  %v10520 = vsel %vm6778, %v10488, %v5975
  %v10522 = vsel %vm6843, %v10489, %v9658
  %v10524 = vsel %vm6843, %v10490, %v9660
  %v10526 = vsel %vm6843, %v10491, %v9662
  %v10528 = vsel %vm6843, %v10492, %v9664
  %v10530 = vsel %vm6843, %v10493, %v9666
  %v10532 = vsel %vm6843, %v10494, %v9668
  %v10534 = vsel %vm6843, %v10495, %v9670
  %v10536 = vsel %vm6843, %v10496, %v9672
  %v10538 = vsel %vm6843, %v10497, %v9674
  %v10540 = vsel %vm6843, %v10498, %v9676
  %v10542 = vsel %vm6843, %v10499, %v9678
  %v10544 = vsel %vm6843, %v10500, %v9680
  %v10546 = vsel %vm6843, %v10501, %v9682
  %v10548 = vsel %vm6843, %v10502, %v9684
  %v10550 = vsel %vm6843, %v10503, %v9686
  %v10552 = vsel %vm6843, %v10504, %v9688
  %v10554 = vsel %vm6843, %v10505, %v9690
  %v10556 = vsel %vm6843, %v10506, %v9692
  %v10558 = vsel %vm6843, %v10507, %v9694
  %v10560 = vsel %vm6843, %v10508, %v9696
  %v10562 = vsel %vm6843, %v10509, %v9698
  %v10564 = vsel %vm6843, %v10510, %v9700
  %v10566 = vsel %vm6843, %v10511, %v9702
  %v10568 = vsel %vm6843, %v10512, %v9704
  %v10570 = vsel %vm6843, %v10513, %v9706
  %v10572 = vsel %vm6843, %v10514, %v9708
  %v10574 = vsel %vm6843, %v10515, %v9710
  %v10576 = vsel %vm6843, %v10516, %v9712
  %v10578 = vsel %vm6843, %v10517, %v9714
  %v10580 = vsel %vm6843, %v10518, %v9716
  %v10582 = vsel %vm6843, %v10519, %v9718
  %v10584 = vsel %vm6843, %v10520, %v9720
  %v10586 = vsel %vm6908, %v10522, %v9882
  %v10588 = vsel %vm6908, %v10524, %v9884
  %v10590 = vsel %vm6908, %v10526, %v9886
  %v10592 = vsel %vm6908, %v10528, %v9888
  %v10594 = vsel %vm6908, %v10530, %v9890
  %v10596 = vsel %vm6908, %v10532, %v9892
  %v10598 = vsel %vm6908, %v10534, %v9894
  %v10600 = vsel %vm6908, %v10536, %v9896
  %v10602 = vsel %vm6908, %v10538, %v9898
  %v10604 = vsel %vm6908, %v10540, %v9900
  %v10606 = vsel %vm6908, %v10542, %v9902
  %v10608 = vsel %vm6908, %v10544, %v9904
  %v10610 = vsel %vm6908, %v10546, %v9906
  %v10612 = vsel %vm6908, %v10548, %v9908
  %v10614 = vsel %vm6908, %v10550, %v9910
  %v10616 = vsel %vm6908, %v10552, %v9912
  %v10618 = vsel %vm6908, %v10554, %v9914
  %v10620 = vsel %vm6908, %v10556, %v9916
  %v10622 = vsel %vm6908, %v10558, %v9918
  %v10624 = vsel %vm6908, %v10560, %v9920
  %v10626 = vsel %vm6908, %v10562, %v9922
  %v10628 = vsel %vm6908, %v10564, %v9924
  %v10630 = vsel %vm6908, %v10566, %v9926
  %v10632 = vsel %vm6908, %v10568, %v9928
  %v10634 = vsel %vm6908, %v10570, %v9930
  %v10636 = vsel %vm6908, %v10572, %v9932
  %v10638 = vsel %vm6908, %v10574, %v9934
  %v10640 = vsel %vm6908, %v10576, %v9936
  %v10642 = vsel %vm6908, %v10578, %v9938
  %v10644 = vsel %vm6908, %v10580, %v9940
  %v10646 = vsel %vm6908, %v10582, %v9942
  %v10648 = vsel %vm6908, %v10584, %v9944
  %v10650 = vsel %vm6973, %v10586, %v10042
  %v10653 = vsel %vm6973, %v10588, %v10044
  %v10656 = vsel %vm6973, %v10590, %v10046
  %v10659 = vsel %vm6973, %v10592, %v10048
  %v10662 = vsel %vm6973, %v10594, %v10050
  %v10665 = vsel %vm6973, %v10596, %v10052
  %v10668 = vsel %vm6973, %v10598, %v10054
  %v10671 = vsel %vm6973, %v10600, %v10056
  %v10674 = vsel %vm6973, %v10602, %v10058
  %v10677 = vsel %vm6973, %v10604, %v10060
  %v10680 = vsel %vm6973, %v10606, %v10062
  %v10683 = vsel %vm6973, %v10608, %v10064
  %v10686 = vsel %vm6973, %v10610, %v10066
  %v10689 = vsel %vm6973, %v10612, %v10068
  %v10692 = vsel %vm6973, %v10614, %v10070
  %v10695 = vsel %vm6973, %v10616, %v10072
  %v10698 = vsel %vm6973, %v10618, %v10074
  %v10701 = vsel %vm6973, %v10620, %v10076
  %v10704 = vsel %vm6973, %v10622, %v10078
  %v10707 = vsel %vm6973, %v10624, %v10080
  %v10710 = vsel %vm6973, %v10626, %v10082
  %v10713 = vsel %vm6973, %v10628, %v10084
  %v10716 = vsel %vm6973, %v10630, %v10086
  %v10719 = vsel %vm6973, %v10632, %v10088
  %v10722 = vsel %vm6973, %v10634, %v10090
  %v10725 = vsel %vm6973, %v10636, %v10092
  %v10728 = vsel %vm6973, %v10638, %v10094
  %v10731 = vsel %vm6973, %v10640, %v10096
  %v10734 = vsel %vm6973, %v10642, %v10098
  %v10737 = vsel %vm6973, %v10644, %v10100
  %v10740 = vsel %vm6973, %v10646, %v10102
  %v10743 = vsel %vm6973, %v10648, %v10104
  %v10745 = vld [vmem:[%s6] sm:$0xf]
  %v10746 = vld [vmem:[%s6 + $0x4] sm:$0xf]
  %v10747 = vld [vmem:[%s6 + $0x8] sm:$0xf]
  %v10748 = vld [vmem:[%s6 + $0xc] sm:$0xf]
  %v10749 = vld [vmem:[%s6 + $0x10] sm:$0xf]
  %v10750 = vld [vmem:[%s6 + $0x14] sm:$0xf]
  %v10751 = vld [vmem:[%s6 + $0x18] sm:$0xf]
  %v10752 = vld [vmem:[%s6 + $0x1c] sm:$0xf]
  %v10753 = vld [vmem:[%s6 + $0x20] sm:$0xf]
  %v10754 = vld [vmem:[%s6 + $0x24] sm:$0xf]
  %v10755 = vld [vmem:[%s6 + $0x28] sm:$0xf]
  %v10756 = vld [vmem:[%s6 + $0x2c] sm:$0xf]
  %v10757 = vld [vmem:[%s6 + $0x30] sm:$0xf]
  %v10758 = vld [vmem:[%s6 + $0x34] sm:$0xf]
  %v10759 = vld [vmem:[%s6 + $0x38] sm:$0xf]
  %v10760 = vld [vmem:[%s6 + $0x3c] sm:$0xf]
  %v10761 = vld [vmem:[%s6 + $0x40] sm:$0xf]
  %v10762 = vld [vmem:[%s6 + $0x44] sm:$0xf]
  %v10781 = vunpack.c.l.b16 %v10745
  %v10782 = vunpack.c.l.b16 %v10746
  %v10783 = vunpack.c.l.b16 %v10747
  %v10784 = vunpack.c.l.b16 %v10748
  %v10785 = vunpack.c.l.b16 %v10749
  %v10786 = vunpack.c.l.b16 %v10750
  %v10787 = vunpack.c.l.b16 %v10751
  %v10788 = vunpack.c.l.b16 %v10752
  %v10789 = vunpack.c.l.b16 %v10753
  %v10790 = vunpack.c.l.b16 %v10754
  %v10791 = vunpack.c.l.b16 %v10755
  %v10792 = vunpack.c.l.b16 %v10756
  %v10793 = vunpack.c.l.b16 %v10757
  %v10794 = vunpack.c.l.b16 %v10758
  %v10795 = vunpack.c.l.b16 %v10759
  %v10796 = vunpack.c.l.b16 %v10760
  %v10797 = vunpack.c.l.b16 %v10761
  %v10798 = vunpack.c.l.b16 %v10762
  %v10799 = vpack.c.b16 %v10782, %v10781
  %v10800 = vpack.c.b16 %v10784, %v10783
  %v10801 = vpack.c.b16 %v10786, %v10785
  %v10802 = vpack.c.b16 %v10788, %v10787
  %v10803 = vpack.c.b16 %v10790, %v10789
  %v10804 = vpack.c.b16 %v10792, %v10791
  %v10805 = vpack.c.b16 %v10794, %v10793
  %v10806 = vpack.c.b16 %v10796, %v10795
  %v10807 = vpack.c.b16 %v10798, %v10797
  %v10818 = vsel %vm1010, %v10233, 0
  %v10821 = vsel %vm1010, %v10234, 0
  %v10824 = vsel %vm1010, %v10235, 0
  %v10827 = vsel %vm1010, %v10236, 0
  %v10830 = vsel %vm1010, %v10237, 0
  %v10833 = vsel %vm1010, %v10238, 0
  %v10836 = vsel %vm1010, %v10239, 0
  %v10839 = vsel %vm1010, %v10240, 0
  %v10842 = vsel %vm1010, %v10241, 0
  %v10845 = vsel %vm1010, %v10242, 0
  %v10848 = vsel %vm1010, %v10243, 0
  %v10851 = vsel %vm1010, %v10244, 0
  %v10854 = vsel %vm1010, %v10245, 0
  %v10857 = vsel %vm1010, %v10246, 0
  %v10860 = vsel %vm1010, %v10247, 0
  %v10863 = vsel %vm1010, %v10248, 0
  %v10866 = vsel %vm1010, %v10249, 0
  %v10869 = vsel %vm1010, %v10250, 0
  %v10872 = vsel %vm1010, %v10251, 0
  %v10875 = vsel %vm1010, %v10252, 0
  %v10878 = vsel %vm1010, %v10253, 0
  %v10881 = vsel %vm1010, %v10254, 0
  %v10884 = vsel %vm1010, %v10255, 0
  %v10887 = vsel %vm1010, %v10256, 0
  %v10890 = vsel %vm1010, %v10257, 0
  %v10893 = vsel %vm1010, %v10258, 0
  %v10896 = vsel %vm1010, %v10259, 0
  %v10899 = vsel %vm1010, %v10260, 0
  %v10902 = vsel %vm1010, %v10261, 0
  %v10905 = vsel %vm1010, %v10262, 0
  %v10908 = vsel %vm1010, %v10263, 0
  %v10911 = vsel %vm1010, %v10264, 0
  %10913 = vmatpush.bf16.msra.mxu0 %v10806
  %10914 = vmatpush.bf16.msra.mxu0 %v10805
  %10915 = vmatpush.bf16.msra.mxu0 %v10804
  %10916 = vmatpush.bf16.msra.mxu0 %v10803
  %10917 = vmatpush.bf16.msra.mxu0 %v10802
  %10918 = vmatpush.bf16.msra.mxu0 %v10801
  %10919 = vmatpush.bf16.msra.mxu0 %v10800
  %10920 = vmatpush.bf16.msra.mxu0 %v10799
  %10921 = vmatmul.bf16.gmra.mxu0 %v10650
  %v10922 = vpop.f32.mrf.mxu0
  %v10923 = vadd.f32 0.0, %v10922
  %v10924 = vpop.f32.mrf.mxu0
  %v10925 = vadd.f32 0.0, %v10924
  %10926 = vmatmul.bf16.gmra.mxu0 %v10653
  %v10927 = vpop.f32.mrf.mxu0
  %v10928 = vadd.f32 0.0, %v10927
  %v10929 = vpop.f32.mrf.mxu0
  %v10930 = vadd.f32 0.0, %v10929
  %10931 = vmatmul.bf16.gmra.mxu0 %v10656
  %v10932 = vpop.f32.mrf.mxu0
  %v10933 = vadd.f32 0.0, %v10932
  %v10934 = vpop.f32.mrf.mxu0
  %v10935 = vadd.f32 0.0, %v10934
  %10936 = vmatmul.bf16.gmra.mxu0 %v10659
  %v10937 = vpop.f32.mrf.mxu0
  %v10938 = vadd.f32 0.0, %v10937
  %v10939 = vpop.f32.mrf.mxu0
  %v10940 = vadd.f32 0.0, %v10939
  %10941 = vmatmul.bf16.gmra.mxu0 %v10662
  %v10942 = vpop.f32.mrf.mxu0
  %v10943 = vadd.f32 0.0, %v10942
  %v10944 = vpop.f32.mrf.mxu0
  %v10945 = vadd.f32 0.0, %v10944
  %10946 = vmatmul.bf16.gmra.mxu0 %v10665
  %v10947 = vpop.f32.mrf.mxu0
  %v10948 = vadd.f32 0.0, %v10947
  %v10949 = vpop.f32.mrf.mxu0
  %v10950 = vadd.f32 0.0, %v10949
  %10951 = vmatmul.bf16.gmra.mxu0 %v10668
  %v10952 = vpop.f32.mrf.mxu0
  %v10953 = vadd.f32 0.0, %v10952
  %v10954 = vpop.f32.mrf.mxu0
  %v10955 = vadd.f32 0.0, %v10954
  %10956 = vmatmul.bf16.gmra.mxu0 %v10671
  %v10957 = vpop.f32.mrf.mxu0
  %v10958 = vadd.f32 0.0, %v10957
  %v10959 = vpop.f32.mrf.mxu0
  %v10960 = vadd.f32 0.0, %v10959
  %10961 = vmatmul.bf16.gmra.mxu0 %v10674
  %v10962 = vpop.f32.mrf.mxu0
  %v10963 = vadd.f32 0.0, %v10962
  %v10964 = vpop.f32.mrf.mxu0
  %v10965 = vadd.f32 0.0, %v10964
  %10966 = vmatmul.bf16.gmra.mxu0 %v10677
  %v10967 = vpop.f32.mrf.mxu0
  %v10968 = vadd.f32 0.0, %v10967
  %v10969 = vpop.f32.mrf.mxu0
  %v10970 = vadd.f32 0.0, %v10969
  %10971 = vmatmul.bf16.gmra.mxu0 %v10680
  %v10972 = vpop.f32.mrf.mxu0
  %v10973 = vadd.f32 0.0, %v10972
  %v10974 = vpop.f32.mrf.mxu0
  %v10975 = vadd.f32 0.0, %v10974
  %10976 = vmatmul.bf16.gmra.mxu0 %v10683
  %v10977 = vpop.f32.mrf.mxu0
  %v10978 = vadd.f32 0.0, %v10977
  %v10979 = vpop.f32.mrf.mxu0
  %v10980 = vadd.f32 0.0, %v10979
  %10981 = vmatmul.bf16.gmra.mxu0 %v10686
  %v10982 = vpop.f32.mrf.mxu0
  %v10983 = vadd.f32 0.0, %v10982
  %v10984 = vpop.f32.mrf.mxu0
  %v10985 = vadd.f32 0.0, %v10984
  %10986 = vmatmul.bf16.gmra.mxu0 %v10689
  %v10987 = vpop.f32.mrf.mxu0
  %v10988 = vadd.f32 0.0, %v10987
  %v10989 = vpop.f32.mrf.mxu0
  %v10990 = vadd.f32 0.0, %v10989
  %10991 = vmatmul.bf16.gmra.mxu0 %v10692
  %v10992 = vpop.f32.mrf.mxu0
  %v10993 = vadd.f32 0.0, %v10992
  %v10994 = vpop.f32.mrf.mxu0
  %v10995 = vadd.f32 0.0, %v10994
  %10996 = vmatmul.bf16.gmra.mxu0 %v10695
  %v10997 = vpop.f32.mrf.mxu0
  %v10998 = vadd.f32 0.0, %v10997
  %v10999 = vpop.f32.mrf.mxu0
  %v11000 = vadd.f32 0.0, %v10999
  %11001 = vmatmul.bf16.gmra.mxu0 %v10698
  %v11002 = vpop.f32.mrf.mxu0
  %v11003 = vadd.f32 0.0, %v11002
  %v11004 = vpop.f32.mrf.mxu0
  %v11005 = vadd.f32 0.0, %v11004
  %11006 = vmatmul.bf16.gmra.mxu0 %v10701
  %v11007 = vpop.f32.mrf.mxu0
  %v11008 = vadd.f32 0.0, %v11007
  %v11009 = vpop.f32.mrf.mxu0
  %v11010 = vadd.f32 0.0, %v11009
  %11011 = vmatmul.bf16.gmra.mxu0 %v10704
  %v11012 = vpop.f32.mrf.mxu0
  %v11013 = vadd.f32 0.0, %v11012
  %v11014 = vpop.f32.mrf.mxu0
  %v11015 = vadd.f32 0.0, %v11014
  %11016 = vmatmul.bf16.gmra.mxu0 %v10707
  %v11017 = vpop.f32.mrf.mxu0
  %v11018 = vadd.f32 0.0, %v11017
  %v11019 = vpop.f32.mrf.mxu0
  %v11020 = vadd.f32 0.0, %v11019
  %11021 = vmatmul.bf16.gmra.mxu0 %v10710
  %v11022 = vpop.f32.mrf.mxu0
  %v11023 = vadd.f32 0.0, %v11022
  %v11024 = vpop.f32.mrf.mxu0
  %v11025 = vadd.f32 0.0, %v11024
  %11026 = vmatmul.bf16.gmra.mxu0 %v10713
  %v11027 = vpop.f32.mrf.mxu0
  %v11028 = vadd.f32 0.0, %v11027
  %v11029 = vpop.f32.mrf.mxu0
  %v11030 = vadd.f32 0.0, %v11029
  %11031 = vmatmul.bf16.gmra.mxu0 %v10716
  %v11032 = vpop.f32.mrf.mxu0
  %v11033 = vadd.f32 0.0, %v11032
  %v11034 = vpop.f32.mrf.mxu0
  %v11035 = vadd.f32 0.0, %v11034
  %11036 = vmatmul.bf16.gmra.mxu0 %v10719
  %v11037 = vpop.f32.mrf.mxu0
  %v11038 = vadd.f32 0.0, %v11037
  %v11039 = vpop.f32.mrf.mxu0
  %v11040 = vadd.f32 0.0, %v11039
  %11041 = vmatmul.bf16.gmra.mxu0 %v10722
  %v11042 = vpop.f32.mrf.mxu0
  %v11043 = vadd.f32 0.0, %v11042
  %v11044 = vpop.f32.mrf.mxu0
  %v11045 = vadd.f32 0.0, %v11044
  %11046 = vmatmul.bf16.gmra.mxu0 %v10725
  %v11047 = vpop.f32.mrf.mxu0
  %v11048 = vadd.f32 0.0, %v11047
  %v11049 = vpop.f32.mrf.mxu0
  %v11050 = vadd.f32 0.0, %v11049
  %11051 = vmatmul.bf16.gmra.mxu0 %v10728
  %v11052 = vpop.f32.mrf.mxu0
  %v11053 = vadd.f32 0.0, %v11052
  %v11054 = vpop.f32.mrf.mxu0
  %v11055 = vadd.f32 0.0, %v11054
  %11056 = vmatmul.bf16.gmra.mxu0 %v10731
  %v11057 = vpop.f32.mrf.mxu0
  %v11058 = vadd.f32 0.0, %v11057
  %v11059 = vpop.f32.mrf.mxu0
  %v11060 = vadd.f32 0.0, %v11059
  %11061 = vmatmul.bf16.gmra.mxu0 %v10734
  %v11062 = vpop.f32.mrf.mxu0
  %v11063 = vadd.f32 0.0, %v11062
  %v11064 = vpop.f32.mrf.mxu0
  %v11065 = vadd.f32 0.0, %v11064
  %11066 = vmatmul.bf16.gmra.mxu0 %v10737
  %v11067 = vpop.f32.mrf.mxu0
  %v11068 = vadd.f32 0.0, %v11067
  %v11069 = vpop.f32.mrf.mxu0
  %v11070 = vadd.f32 0.0, %v11069
  %11071 = vmatmul.bf16.gmra.mxu0 %v10740
  %v11072 = vpop.f32.mrf.mxu0
  %v11073 = vadd.f32 0.0, %v11072
  %v11074 = vpop.f32.mrf.mxu0
  %v11075 = vadd.f32 0.0, %v11074
  %11076 = vmatmul.bf16.gmra.mxu0 %v10743
  %v11077 = vpop.f32.mrf.mxu0
  %v11078 = vadd.f32 0.0, %v11077
  %v11079 = vpop.f32.mrf.mxu0
  %v11080 = vadd.f32 0.0, %v11079
  %11081 = vdwg.mxu0
  %11082 = vmatpush.bf16.msra.mxu0 0
  %11083 = vmatpush.bf16.msra.mxu0 0
  %11084 = vmatpush.bf16.msra.mxu0 0
  %11085 = vmatpush.bf16.msra.mxu0 0
  %11086 = vmatpush.bf16.msra.mxu0 0
  %11087 = vmatpush.bf16.msra.mxu0 0
  %11088 = vmatpush.bf16.msra.mxu0 0
  %11089 = vmatpush.bf16.msra.mxu0 %v10807
  %11090 = vmatmul.bf16.gmra.mxu0 %v10818
  %v11091 = vpop.f32.mrf.mxu0
  %v11092 = vadd.f32 %v10923, %v11091
  %v11093 = vpop.f32.mrf.mxu0
  %v11094 = vadd.f32 %v10925, %v11093
  %11095 = vmatmul.bf16.gmra.mxu0 %v10821
  %v11096 = vpop.f32.mrf.mxu0
  %v11097 = vadd.f32 %v10928, %v11096
  %v11098 = vpop.f32.mrf.mxu0
  %v11099 = vadd.f32 %v10930, %v11098
  %11100 = vmatmul.bf16.gmra.mxu0 %v10824
  %v11101 = vpop.f32.mrf.mxu0
  %v11102 = vadd.f32 %v10933, %v11101
  %v11103 = vpop.f32.mrf.mxu0
  %v11104 = vadd.f32 %v10935, %v11103
  %11105 = vmatmul.bf16.gmra.mxu0 %v10827
  %v11106 = vpop.f32.mrf.mxu0
  %v11107 = vadd.f32 %v10938, %v11106
  %v11108 = vpop.f32.mrf.mxu0
  %v11109 = vadd.f32 %v10940, %v11108
  %11110 = vmatmul.bf16.gmra.mxu0 %v10830
  %v11111 = vpop.f32.mrf.mxu0
  %v11112 = vadd.f32 %v10943, %v11111
  %v11113 = vpop.f32.mrf.mxu0
  %v11114 = vadd.f32 %v10945, %v11113
  %11115 = vmatmul.bf16.gmra.mxu0 %v10833
  %v11116 = vpop.f32.mrf.mxu0
  %v11117 = vadd.f32 %v10948, %v11116
  %v11118 = vpop.f32.mrf.mxu0
  %v11119 = vadd.f32 %v10950, %v11118
  %11120 = vmatmul.bf16.gmra.mxu0 %v10836
  %v11121 = vpop.f32.mrf.mxu0
  %v11122 = vadd.f32 %v10953, %v11121
  %v11123 = vpop.f32.mrf.mxu0
  %v11124 = vadd.f32 %v10955, %v11123
  %11125 = vmatmul.bf16.gmra.mxu0 %v10839
  %v11126 = vpop.f32.mrf.mxu0
  %v11127 = vadd.f32 %v10958, %v11126
  %v11128 = vpop.f32.mrf.mxu0
  %v11129 = vadd.f32 %v10960, %v11128
  %11130 = vmatmul.bf16.gmra.mxu0 %v10842
  %v11131 = vpop.f32.mrf.mxu0
  %v11132 = vadd.f32 %v10963, %v11131
  %v11133 = vpop.f32.mrf.mxu0
  %v11134 = vadd.f32 %v10965, %v11133
  %11135 = vmatmul.bf16.gmra.mxu0 %v10845
  %v11136 = vpop.f32.mrf.mxu0
  %v11137 = vadd.f32 %v10968, %v11136
  %v11138 = vpop.f32.mrf.mxu0
  %v11139 = vadd.f32 %v10970, %v11138
  %11140 = vmatmul.bf16.gmra.mxu0 %v10848
  %v11141 = vpop.f32.mrf.mxu0
  %v11142 = vadd.f32 %v10973, %v11141
  %v11143 = vpop.f32.mrf.mxu0
  %v11144 = vadd.f32 %v10975, %v11143
  %11145 = vmatmul.bf16.gmra.mxu0 %v10851
  %v11146 = vpop.f32.mrf.mxu0
  %v11147 = vadd.f32 %v10978, %v11146
  %v11148 = vpop.f32.mrf.mxu0
  %v11149 = vadd.f32 %v10980, %v11148
  %11150 = vmatmul.bf16.gmra.mxu0 %v10854
  %v11151 = vpop.f32.mrf.mxu0
  %v11152 = vadd.f32 %v10983, %v11151
  %v11153 = vpop.f32.mrf.mxu0
  %v11154 = vadd.f32 %v10985, %v11153
  %11155 = vmatmul.bf16.gmra.mxu0 %v10857
  %v11156 = vpop.f32.mrf.mxu0
  %v11157 = vadd.f32 %v10988, %v11156
  %v11158 = vpop.f32.mrf.mxu0
  %v11159 = vadd.f32 %v10990, %v11158
  %11160 = vmatmul.bf16.gmra.mxu0 %v10860
  %v11161 = vpop.f32.mrf.mxu0
  %v11162 = vadd.f32 %v10993, %v11161
  %v11163 = vpop.f32.mrf.mxu0
  %v11164 = vadd.f32 %v10995, %v11163
  %11165 = vmatmul.bf16.gmra.mxu0 %v10863
  %v11166 = vpop.f32.mrf.mxu0
  %v11167 = vadd.f32 %v10998, %v11166
  %v11168 = vpop.f32.mrf.mxu0
  %v11169 = vadd.f32 %v11000, %v11168
  %11170 = vmatmul.bf16.gmra.mxu0 %v10866
  %v11171 = vpop.f32.mrf.mxu0
  %v11172 = vadd.f32 %v11003, %v11171
  %v11173 = vpop.f32.mrf.mxu0
  %v11174 = vadd.f32 %v11005, %v11173
  %11175 = vmatmul.bf16.gmra.mxu0 %v10869
  %v11176 = vpop.f32.mrf.mxu0
  %v11177 = vadd.f32 %v11008, %v11176
  %v11178 = vpop.f32.mrf.mxu0
  %v11179 = vadd.f32 %v11010, %v11178
  %11180 = vmatmul.bf16.gmra.mxu0 %v10872
  %v11181 = vpop.f32.mrf.mxu0
  %v11182 = vadd.f32 %v11013, %v11181
  %v11183 = vpop.f32.mrf.mxu0
  %v11184 = vadd.f32 %v11015, %v11183
  %11185 = vmatmul.bf16.gmra.mxu0 %v10875
  %v11186 = vpop.f32.mrf.mxu0
  %v11187 = vadd.f32 %v11018, %v11186
  %v11188 = vpop.f32.mrf.mxu0
  %v11189 = vadd.f32 %v11020, %v11188
  %11190 = vmatmul.bf16.gmra.mxu0 %v10878
  %v11191 = vpop.f32.mrf.mxu0
  %v11192 = vadd.f32 %v11023, %v11191
  %v11193 = vpop.f32.mrf.mxu0
  %v11194 = vadd.f32 %v11025, %v11193
  %11195 = vmatmul.bf16.gmra.mxu0 %v10881
  %v11196 = vpop.f32.mrf.mxu0
  %v11197 = vadd.f32 %v11028, %v11196
  %v11198 = vpop.f32.mrf.mxu0
  %v11199 = vadd.f32 %v11030, %v11198
  %11200 = vmatmul.bf16.gmra.mxu0 %v10884
  %v11201 = vpop.f32.mrf.mxu0
  %v11202 = vadd.f32 %v11033, %v11201
  %v11203 = vpop.f32.mrf.mxu0
  %v11204 = vadd.f32 %v11035, %v11203
  %11205 = vmatmul.bf16.gmra.mxu0 %v10887
  %v11206 = vpop.f32.mrf.mxu0
  %v11207 = vadd.f32 %v11038, %v11206
  %v11208 = vpop.f32.mrf.mxu0
  %v11209 = vadd.f32 %v11040, %v11208
  %11210 = vmatmul.bf16.gmra.mxu0 %v10890
  %v11211 = vpop.f32.mrf.mxu0
  %v11212 = vadd.f32 %v11043, %v11211
  %v11213 = vpop.f32.mrf.mxu0
  %v11214 = vadd.f32 %v11045, %v11213
  %11215 = vmatmul.bf16.gmra.mxu0 %v10893
  %v11216 = vpop.f32.mrf.mxu0
  %v11217 = vadd.f32 %v11048, %v11216
  %v11218 = vpop.f32.mrf.mxu0
  %v11219 = vadd.f32 %v11050, %v11218
  %11220 = vmatmul.bf16.gmra.mxu0 %v10896
  %v11221 = vpop.f32.mrf.mxu0
  %v11222 = vadd.f32 %v11053, %v11221
  %v11223 = vpop.f32.mrf.mxu0
  %v11224 = vadd.f32 %v11055, %v11223
  %11225 = vmatmul.bf16.gmra.mxu0 %v10899
  %v11226 = vpop.f32.mrf.mxu0
  %v11227 = vadd.f32 %v11058, %v11226
  %v11228 = vpop.f32.mrf.mxu0
  %v11229 = vadd.f32 %v11060, %v11228
  %11230 = vmatmul.bf16.gmra.mxu0 %v10902
  %v11231 = vpop.f32.mrf.mxu0
  %v11232 = vadd.f32 %v11063, %v11231
  %v11233 = vpop.f32.mrf.mxu0
  %v11234 = vadd.f32 %v11065, %v11233
  %11235 = vmatmul.bf16.gmra.mxu0 %v10905
  %v11236 = vpop.f32.mrf.mxu0
  %v11237 = vadd.f32 %v11068, %v11236
  %v11238 = vpop.f32.mrf.mxu0
  %v11239 = vadd.f32 %v11070, %v11238
  %11240 = vmatmul.bf16.gmra.mxu0 %v10908
  %v11241 = vpop.f32.mrf.mxu0
  %v11242 = vadd.f32 %v11073, %v11241
  %v11243 = vpop.f32.mrf.mxu0
  %v11244 = vadd.f32 %v11075, %v11243
  %11245 = vmatmul.bf16.gmra.mxu0 %v10911
  %v11246 = vpop.f32.mrf.mxu0
  %v11247 = vadd.f32 %v11078, %v11246
  %v11248 = vpop.f32.mrf.mxu0
  %v11249 = vadd.f32 %v11080, %v11248
  %11250 = vdwg.mxu0
  %11315 = vrot.lane.b32.xlu0 %v7417, 32
  %v11316 = vpop.permute.xlu0 %11315
  %11317 = vrot.lane.b32.xlu0 %v7419, 32
  %v11318 = vpop.permute.xlu0 %11317
  %11319 = vrot.lane.b32.xlu0 %v7422, 32
  %v11320 = vpop.permute.xlu0 %11319
  %11321 = vrot.lane.b32.xlu0 %v7424, 32
  %v11322 = vpop.permute.xlu0 %11321
  %11323 = vrot.lane.b32.xlu0 %v7427, 32
  %v11324 = vpop.permute.xlu0 %11323
  %11325 = vrot.lane.b32.xlu0 %v7429, 32
  %v11326 = vpop.permute.xlu0 %11325
  %11327 = vrot.lane.b32.xlu0 %v7432, 32
  %v11328 = vpop.permute.xlu0 %11327
  %11329 = vrot.lane.b32.xlu0 %v7434, 32
  %v11330 = vpop.permute.xlu0 %11329
  %11331 = vrot.lane.b32.xlu0 %v7437, 32
  %v11332 = vpop.permute.xlu0 %11331
  %11333 = vrot.lane.b32.xlu0 %v7439, 32
  %v11334 = vpop.permute.xlu0 %11333
  %11335 = vrot.lane.b32.xlu0 %v7442, 32
  %v11336 = vpop.permute.xlu0 %11335
  %11337 = vrot.lane.b32.xlu0 %v7444, 32
  %v11338 = vpop.permute.xlu0 %11337
  %11339 = vrot.lane.b32.xlu0 %v7447, 32
  %v11340 = vpop.permute.xlu0 %11339
  %11341 = vrot.lane.b32.xlu0 %v7449, 32
  %v11342 = vpop.permute.xlu0 %11341
  %11343 = vrot.lane.b32.xlu0 %v7452, 32
  %v11344 = vpop.permute.xlu0 %11343
  %11345 = vrot.lane.b32.xlu0 %v7454, 32
  %v11346 = vpop.permute.xlu0 %11345
  %11347 = vrot.lane.b32.xlu0 %v7457, 32
  %v11348 = vpop.permute.xlu0 %11347
  %11349 = vrot.lane.b32.xlu0 %v7459, 32
  %v11350 = vpop.permute.xlu0 %11349
  %11351 = vrot.lane.b32.xlu0 %v7462, 32
  %v11352 = vpop.permute.xlu0 %11351
  %11353 = vrot.lane.b32.xlu0 %v7464, 32
  %v11354 = vpop.permute.xlu0 %11353
  %11355 = vrot.lane.b32.xlu0 %v7467, 32
  %v11356 = vpop.permute.xlu0 %11355
  %11357 = vrot.lane.b32.xlu0 %v7469, 32
  %v11358 = vpop.permute.xlu0 %11357
  %11359 = vrot.lane.b32.xlu0 %v7472, 32
  %v11360 = vpop.permute.xlu0 %11359
  %11361 = vrot.lane.b32.xlu0 %v7474, 32
  %v11362 = vpop.permute.xlu0 %11361
  %11363 = vrot.lane.b32.xlu0 %v7477, 32
  %v11364 = vpop.permute.xlu0 %11363
  %11365 = vrot.lane.b32.xlu0 %v7479, 32
  %v11366 = vpop.permute.xlu0 %11365
  %11367 = vrot.lane.b32.xlu0 %v7482, 32
  %v11368 = vpop.permute.xlu0 %11367
  %11369 = vrot.lane.b32.xlu0 %v7484, 32
  %v11370 = vpop.permute.xlu0 %11369
  %11371 = vrot.lane.b32.xlu0 %v7487, 32
  %v11372 = vpop.permute.xlu0 %11371
  %11373 = vrot.lane.b32.xlu0 %v7489, 32
  %v11374 = vpop.permute.xlu0 %11373
  %11375 = vrot.lane.b32.xlu0 %v7492, 32
  %v11376 = vpop.permute.xlu0 %11375
  %11377 = vrot.lane.b32.xlu0 %v7494, 32
  %v11378 = vpop.permute.xlu0 %11377
  %11379 = vrot.lane.b32.xlu0 %v7497, 32
  %v11380 = vpop.permute.xlu0 %11379
  %11381 = vrot.lane.b32.xlu0 %v7499, 32
  %v11382 = vpop.permute.xlu0 %11381
  %11383 = vrot.lane.b32.xlu0 %v7502, 32
  %v11384 = vpop.permute.xlu0 %11383
  %11385 = vrot.lane.b32.xlu0 %v7504, 32
  %v11386 = vpop.permute.xlu0 %11385
  %11387 = vrot.lane.b32.xlu0 %v7507, 32
  %v11388 = vpop.permute.xlu0 %11387
  %11389 = vrot.lane.b32.xlu0 %v7509, 32
  %v11390 = vpop.permute.xlu0 %11389
  %11391 = vrot.lane.b32.xlu0 %v7512, 32
  %v11392 = vpop.permute.xlu0 %11391
  %11393 = vrot.lane.b32.xlu0 %v7514, 32
  %v11394 = vpop.permute.xlu0 %11393
  %11395 = vrot.lane.b32.xlu0 %v7517, 32
  %v11396 = vpop.permute.xlu0 %11395
  %11397 = vrot.lane.b32.xlu0 %v7519, 32
  %v11398 = vpop.permute.xlu0 %11397
  %11399 = vrot.lane.b32.xlu0 %v7522, 32
  %v11400 = vpop.permute.xlu0 %11399
  %11401 = vrot.lane.b32.xlu0 %v7524, 32
  %v11402 = vpop.permute.xlu0 %11401
  %11403 = vrot.lane.b32.xlu0 %v7527, 32
  %v11404 = vpop.permute.xlu0 %11403
  %11405 = vrot.lane.b32.xlu0 %v7529, 32
  %v11406 = vpop.permute.xlu0 %11405
  %11407 = vrot.lane.b32.xlu0 %v7532, 32
  %v11408 = vpop.permute.xlu0 %11407
  %11409 = vrot.lane.b32.xlu0 %v7534, 32
  %v11410 = vpop.permute.xlu0 %11409
  %11411 = vrot.lane.b32.xlu0 %v7537, 32
  %v11412 = vpop.permute.xlu0 %11411
  %11413 = vrot.lane.b32.xlu0 %v7539, 32
  %v11414 = vpop.permute.xlu0 %11413
  %11415 = vrot.lane.b32.xlu0 %v7542, 32
  %v11416 = vpop.permute.xlu0 %11415
  %11417 = vrot.lane.b32.xlu0 %v7544, 32
  %v11418 = vpop.permute.xlu0 %11417
  %11419 = vrot.lane.b32.xlu0 %v7547, 32
  %v11420 = vpop.permute.xlu0 %11419
  %11421 = vrot.lane.b32.xlu0 %v7549, 32
  %v11422 = vpop.permute.xlu0 %11421
  %11423 = vrot.lane.b32.xlu0 %v7552, 32
  %v11424 = vpop.permute.xlu0 %11423
  %11425 = vrot.lane.b32.xlu0 %v7554, 32
  %v11426 = vpop.permute.xlu0 %11425
  %11427 = vrot.lane.b32.xlu0 %v7557, 32
  %v11428 = vpop.permute.xlu0 %11427
  %11429 = vrot.lane.b32.xlu0 %v7559, 32
  %v11430 = vpop.permute.xlu0 %11429
  %11431 = vrot.lane.b32.xlu0 %v7562, 32
  %v11432 = vpop.permute.xlu0 %11431
  %11433 = vrot.lane.b32.xlu0 %v7564, 32
  %v11434 = vpop.permute.xlu0 %11433
  %11435 = vrot.lane.b32.xlu0 %v7567, 32
  %v11436 = vpop.permute.xlu0 %11435
  %11437 = vrot.lane.b32.xlu0 %v7569, 32
  %v11438 = vpop.permute.xlu0 %11437
  %11439 = vrot.lane.b32.xlu0 %v7572, 32
  %v11440 = vpop.permute.xlu0 %11439
  %11441 = vrot.lane.b32.xlu0 %v7574, 32
  %v11442 = vpop.permute.xlu0 %11441
  %11571 = vrot.lane.b32.xlu0 %v11092, 48
  %v11572 = vpop.permute.xlu0 %11571
  %11573 = vrot.lane.b32.xlu0 %v11094, 48
  %v11574 = vpop.permute.xlu0 %11573
  %11575 = vrot.lane.b32.xlu0 %v11097, 48
  %v11576 = vpop.permute.xlu0 %11575
  %11577 = vrot.lane.b32.xlu0 %v11099, 48
  %v11578 = vpop.permute.xlu0 %11577
  %11579 = vrot.lane.b32.xlu0 %v11102, 48
  %v11580 = vpop.permute.xlu0 %11579
  %11581 = vrot.lane.b32.xlu0 %v11104, 48
  %v11582 = vpop.permute.xlu0 %11581
  %11583 = vrot.lane.b32.xlu0 %v11107, 48
  %v11584 = vpop.permute.xlu0 %11583
  %11585 = vrot.lane.b32.xlu0 %v11109, 48
  %v11586 = vpop.permute.xlu0 %11585
  %11587 = vrot.lane.b32.xlu0 %v11112, 48
  %v11588 = vpop.permute.xlu0 %11587
  %11589 = vrot.lane.b32.xlu0 %v11114, 48
  %v11590 = vpop.permute.xlu0 %11589
  %11591 = vrot.lane.b32.xlu0 %v11117, 48
  %v11592 = vpop.permute.xlu0 %11591
  %11593 = vrot.lane.b32.xlu0 %v11119, 48
  %v11594 = vpop.permute.xlu0 %11593
  %11595 = vrot.lane.b32.xlu0 %v11122, 48
  %v11596 = vpop.permute.xlu0 %11595
  %11597 = vrot.lane.b32.xlu0 %v11124, 48
  %v11598 = vpop.permute.xlu0 %11597
  %11599 = vrot.lane.b32.xlu0 %v11127, 48
  %v11600 = vpop.permute.xlu0 %11599
  %11601 = vrot.lane.b32.xlu0 %v11129, 48
  %v11602 = vpop.permute.xlu0 %11601
  %11603 = vrot.lane.b32.xlu0 %v11132, 48
  %v11604 = vpop.permute.xlu0 %11603
  %11605 = vrot.lane.b32.xlu0 %v11134, 48
  %v11606 = vpop.permute.xlu0 %11605
  %11607 = vrot.lane.b32.xlu0 %v11137, 48
  %v11608 = vpop.permute.xlu0 %11607
  %11609 = vrot.lane.b32.xlu0 %v11139, 48
  %v11610 = vpop.permute.xlu0 %11609
  %11611 = vrot.lane.b32.xlu0 %v11142, 48
  %v11612 = vpop.permute.xlu0 %11611
  %11613 = vrot.lane.b32.xlu0 %v11144, 48
  %v11614 = vpop.permute.xlu0 %11613
  %11615 = vrot.lane.b32.xlu0 %v11147, 48
  %v11616 = vpop.permute.xlu0 %11615
  %11617 = vrot.lane.b32.xlu0 %v11149, 48
  %v11618 = vpop.permute.xlu0 %11617
  %11619 = vrot.lane.b32.xlu0 %v11152, 48
  %v11620 = vpop.permute.xlu0 %11619
  %11621 = vrot.lane.b32.xlu0 %v11154, 48
  %v11622 = vpop.permute.xlu0 %11621
  %11623 = vrot.lane.b32.xlu0 %v11157, 48
  %v11624 = vpop.permute.xlu0 %11623
  %11625 = vrot.lane.b32.xlu0 %v11159, 48
  %v11626 = vpop.permute.xlu0 %11625
  %11627 = vrot.lane.b32.xlu0 %v11162, 48
  %v11628 = vpop.permute.xlu0 %11627
  %11629 = vrot.lane.b32.xlu0 %v11164, 48
  %v11630 = vpop.permute.xlu0 %11629
  %11631 = vrot.lane.b32.xlu0 %v11167, 48
  %v11632 = vpop.permute.xlu0 %11631
  %11633 = vrot.lane.b32.xlu0 %v11169, 48
  %v11634 = vpop.permute.xlu0 %11633
  %11635 = vrot.lane.b32.xlu0 %v11172, 48
  %v11636 = vpop.permute.xlu0 %11635
  %11637 = vrot.lane.b32.xlu0 %v11174, 48
  %v11638 = vpop.permute.xlu0 %11637
  %11639 = vrot.lane.b32.xlu0 %v11177, 48
  %v11640 = vpop.permute.xlu0 %11639
  %11641 = vrot.lane.b32.xlu0 %v11179, 48
  %v11642 = vpop.permute.xlu0 %11641
  %11643 = vrot.lane.b32.xlu0 %v11182, 48
  %v11644 = vpop.permute.xlu0 %11643
  %11645 = vrot.lane.b32.xlu0 %v11184, 48
  %v11646 = vpop.permute.xlu0 %11645
  %11647 = vrot.lane.b32.xlu0 %v11187, 48
  %v11648 = vpop.permute.xlu0 %11647
  %11649 = vrot.lane.b32.xlu0 %v11189, 48
  %v11650 = vpop.permute.xlu0 %11649
  %11651 = vrot.lane.b32.xlu0 %v11192, 48
  %v11652 = vpop.permute.xlu0 %11651
  %11653 = vrot.lane.b32.xlu0 %v11194, 48
  %v11654 = vpop.permute.xlu0 %11653
  %11655 = vrot.lane.b32.xlu0 %v11197, 48
  %v11656 = vpop.permute.xlu0 %11655
  %11657 = vrot.lane.b32.xlu0 %v11199, 48
  %v11658 = vpop.permute.xlu0 %11657
  %11659 = vrot.lane.b32.xlu0 %v11202, 48
  %v11660 = vpop.permute.xlu0 %11659
  %11661 = vrot.lane.b32.xlu0 %v11204, 48
  %v11662 = vpop.permute.xlu0 %11661
  %11663 = vrot.lane.b32.xlu0 %v11207, 48
  %v11664 = vpop.permute.xlu0 %11663
  %11665 = vrot.lane.b32.xlu0 %v11209, 48
  %v11666 = vpop.permute.xlu0 %11665
  %11667 = vrot.lane.b32.xlu0 %v11212, 48
  %v11668 = vpop.permute.xlu0 %11667
  %11669 = vrot.lane.b32.xlu0 %v11214, 48
  %v11670 = vpop.permute.xlu0 %11669
  %11671 = vrot.lane.b32.xlu0 %v11217, 48
  %v11672 = vpop.permute.xlu0 %11671
  %11673 = vrot.lane.b32.xlu0 %v11219, 48
  %v11674 = vpop.permute.xlu0 %11673
  %11675 = vrot.lane.b32.xlu0 %v11222, 48
  %v11676 = vpop.permute.xlu0 %11675
  %11677 = vrot.lane.b32.xlu0 %v11224, 48
  %v11678 = vpop.permute.xlu0 %11677
  %11679 = vrot.lane.b32.xlu0 %v11227, 48
  %v11680 = vpop.permute.xlu0 %11679
  %11681 = vrot.lane.b32.xlu0 %v11229, 48
  %v11682 = vpop.permute.xlu0 %11681
  %11683 = vrot.lane.b32.xlu0 %v11232, 48
  %v11684 = vpop.permute.xlu0 %11683
  %11685 = vrot.lane.b32.xlu0 %v11234, 48
  %v11686 = vpop.permute.xlu0 %11685
  %11687 = vrot.lane.b32.xlu0 %v11237, 48
  %v11688 = vpop.permute.xlu0 %11687
  %11689 = vrot.lane.b32.xlu0 %v11239, 48
  %v11690 = vpop.permute.xlu0 %11689
  %11691 = vrot.lane.b32.xlu0 %v11242, 48
  %v11692 = vpop.permute.xlu0 %11691
  %11693 = vrot.lane.b32.xlu0 %v11244, 48
  %v11694 = vpop.permute.xlu0 %11693
  %11695 = vrot.lane.b32.xlu0 %v11247, 48
  %v11696 = vpop.permute.xlu0 %11695
  %11697 = vrot.lane.b32.xlu0 %v11249, 48
  %v11698 = vpop.permute.xlu0 %11697
  %v11763 = vsel %vm6648, %v1841, %v11316
  %v11764 = vsel %vm6648, %v1843, %v11318
  %v11765 = vsel %vm6648, %v1846, %v11320
  %v11766 = vsel %vm6648, %v1848, %v11322
  %v11767 = vsel %vm6648, %v1851, %v11324
  %v11768 = vsel %vm6648, %v1853, %v11326
  %v11769 = vsel %vm6648, %v1856, %v11328
  %v11770 = vsel %vm6648, %v1858, %v11330
  %v11771 = vsel %vm6648, %v1861, %v11332
  %v11772 = vsel %vm6648, %v1863, %v11334
  %v11773 = vsel %vm6648, %v1866, %v11336
  %v11774 = vsel %vm6648, %v1868, %v11338
  %v11775 = vsel %vm6648, %v1871, %v11340
  %v11776 = vsel %vm6648, %v1873, %v11342
  %v11777 = vsel %vm6648, %v1876, %v11344
  %v11778 = vsel %vm6648, %v1878, %v11346
  %v11779 = vsel %vm6648, %v1881, %v11348
  %v11780 = vsel %vm6648, %v1883, %v11350
  %v11781 = vsel %vm6648, %v1886, %v11352
  %v11782 = vsel %vm6648, %v1888, %v11354
  %v11783 = vsel %vm6648, %v1891, %v11356
  %v11784 = vsel %vm6648, %v1893, %v11358
  %v11785 = vsel %vm6648, %v1896, %v11360
  %v11786 = vsel %vm6648, %v1898, %v11362
  %v11787 = vsel %vm6648, %v1901, %v11364
  %v11788 = vsel %vm6648, %v1903, %v11366
  %v11789 = vsel %vm6648, %v1906, %v11368
  %v11790 = vsel %vm6648, %v1908, %v11370
  %v11791 = vsel %vm6648, %v1911, %v11372
  %v11792 = vsel %vm6648, %v1913, %v11374
  %v11793 = vsel %vm6648, %v1916, %v11376
  %v11794 = vsel %vm6648, %v1918, %v11378
  %v11795 = vsel %vm6648, %v1921, %v11380
  %v11796 = vsel %vm6648, %v1923, %v11382
  %v11797 = vsel %vm6648, %v1926, %v11384
  %v11798 = vsel %vm6648, %v1928, %v11386
  %v11799 = vsel %vm6648, %v1931, %v11388
  %v11800 = vsel %vm6648, %v1933, %v11390
  %v11801 = vsel %vm6648, %v1936, %v11392
  %v11802 = vsel %vm6648, %v1938, %v11394
  %v11803 = vsel %vm6648, %v1941, %v11396
  %v11804 = vsel %vm6648, %v1943, %v11398
  %v11805 = vsel %vm6648, %v1946, %v11400
  %v11806 = vsel %vm6648, %v1948, %v11402
  %v11807 = vsel %vm6648, %v1951, %v11404
  %v11808 = vsel %vm6648, %v1953, %v11406
  %v11809 = vsel %vm6648, %v1956, %v11408
  %v11810 = vsel %vm6648, %v1958, %v11410
  %v11811 = vsel %vm6648, %v1961, %v11412
  %v11812 = vsel %vm6648, %v1963, %v11414
  %v11813 = vsel %vm6648, %v1966, %v11416
  %v11814 = vsel %vm6648, %v1968, %v11418
  %v11815 = vsel %vm6648, %v1971, %v11420
  %v11816 = vsel %vm6648, %v1973, %v11422
  %v11817 = vsel %vm6648, %v1976, %v11424
  %v11818 = vsel %vm6648, %v1978, %v11426
  %v11819 = vsel %vm6648, %v1981, %v11428
  %v11820 = vsel %vm6648, %v1983, %v11430
  %v11821 = vsel %vm6648, %v1986, %v11432
  %v11822 = vsel %vm6648, %v1988, %v11434
  %v11823 = vsel %vm6648, %v1991, %v11436
  %v11824 = vsel %vm6648, %v1993, %v11438
  %v11825 = vsel %vm6648, %v1996, %v11440
  %v11826 = vsel %vm6648, %v1998, %v11442
  %v11827 = vsel %vm6713, %v11763, %v11572
  %v11828 = vsel %vm6713, %v11764, %v11574
  %v11829 = vsel %vm6713, %v11765, %v11576
  %v11830 = vsel %vm6713, %v11766, %v11578
  %v11831 = vsel %vm6713, %v11767, %v11580
  %v11832 = vsel %vm6713, %v11768, %v11582
  %v11833 = vsel %vm6713, %v11769, %v11584
  %v11834 = vsel %vm6713, %v11770, %v11586
  %v11835 = vsel %vm6713, %v11771, %v11588
  %v11836 = vsel %vm6713, %v11772, %v11590
  %v11837 = vsel %vm6713, %v11773, %v11592
  %v11838 = vsel %vm6713, %v11774, %v11594
  %v11839 = vsel %vm6713, %v11775, %v11596
  %v11840 = vsel %vm6713, %v11776, %v11598
  %v11841 = vsel %vm6713, %v11777, %v11600
  %v11842 = vsel %vm6713, %v11778, %v11602
  %v11843 = vsel %vm6713, %v11779, %v11604
  %v11844 = vsel %vm6713, %v11780, %v11606
  %v11845 = vsel %vm6713, %v11781, %v11608
  %v11846 = vsel %vm6713, %v11782, %v11610
  %v11847 = vsel %vm6713, %v11783, %v11612
  %v11848 = vsel %vm6713, %v11784, %v11614
  %v11849 = vsel %vm6713, %v11785, %v11616
  %v11850 = vsel %vm6713, %v11786, %v11618
  %v11851 = vsel %vm6713, %v11787, %v11620
  %v11852 = vsel %vm6713, %v11788, %v11622
  %v11853 = vsel %vm6713, %v11789, %v11624
  %v11854 = vsel %vm6713, %v11790, %v11626
  %v11855 = vsel %vm6713, %v11791, %v11628
  %v11856 = vsel %vm6713, %v11792, %v11630
  %v11857 = vsel %vm6713, %v11793, %v11632
  %v11858 = vsel %vm6713, %v11794, %v11634
  %v11859 = vsel %vm6713, %v11795, %v11636
  %v11860 = vsel %vm6713, %v11796, %v11638
  %v11861 = vsel %vm6713, %v11797, %v11640
  %v11862 = vsel %vm6713, %v11798, %v11642
  %v11863 = vsel %vm6713, %v11799, %v11644
  %v11864 = vsel %vm6713, %v11800, %v11646
  %v11865 = vsel %vm6713, %v11801, %v11648
  %v11866 = vsel %vm6713, %v11802, %v11650
  %v11867 = vsel %vm6713, %v11803, %v11652
  %v11868 = vsel %vm6713, %v11804, %v11654
  %v11869 = vsel %vm6713, %v11805, %v11656
  %v11870 = vsel %vm6713, %v11806, %v11658
  %v11871 = vsel %vm6713, %v11807, %v11660
  %v11872 = vsel %vm6713, %v11808, %v11662
  %v11873 = vsel %vm6713, %v11809, %v11664
  %v11874 = vsel %vm6713, %v11810, %v11666
  %v11875 = vsel %vm6713, %v11811, %v11668
  %v11876 = vsel %vm6713, %v11812, %v11670
  %v11877 = vsel %vm6713, %v11813, %v11672
  %v11878 = vsel %vm6713, %v11814, %v11674
  %v11879 = vsel %vm6713, %v11815, %v11676
  %v11880 = vsel %vm6713, %v11816, %v11678
  %v11881 = vsel %vm6713, %v11817, %v11680
  %v11882 = vsel %vm6713, %v11818, %v11682
  %v11883 = vsel %vm6713, %v11819, %v11684
  %v11884 = vsel %vm6713, %v11820, %v11686
  %v11885 = vsel %vm6713, %v11821, %v11688
  %v11886 = vsel %vm6713, %v11822, %v11690
  %v11887 = vsel %vm6713, %v11823, %v11692
  %v11888 = vsel %vm6713, %v11824, %v11694
  %v11889 = vsel %vm6713, %v11825, %v11696
  %v11890 = vsel %vm6713, %v11826, %v11698
  %v11891 = vpack.c.bf16 %v11828, %v11827
  %v11892 = vpack.c.bf16 %v11830, %v11829
  %v11893 = vpack.c.bf16 %v11832, %v11831
  %v11894 = vpack.c.bf16 %v11834, %v11833
  %v11895 = vpack.c.bf16 %v11836, %v11835
  %v11896 = vpack.c.bf16 %v11838, %v11837
  %v11897 = vpack.c.bf16 %v11840, %v11839
  %v11898 = vpack.c.bf16 %v11842, %v11841
  %v11899 = vpack.c.bf16 %v11844, %v11843
  %v11900 = vpack.c.bf16 %v11846, %v11845
  %v11901 = vpack.c.bf16 %v11848, %v11847
  %v11902 = vpack.c.bf16 %v11850, %v11849
  %v11903 = vpack.c.bf16 %v11852, %v11851
  %v11904 = vpack.c.bf16 %v11854, %v11853
  %v11905 = vpack.c.bf16 %v11856, %v11855
  %v11906 = vpack.c.bf16 %v11858, %v11857
  %v11907 = vpack.c.bf16 %v11860, %v11859
  %v11908 = vpack.c.bf16 %v11862, %v11861
  %v11909 = vpack.c.bf16 %v11864, %v11863
  %v11910 = vpack.c.bf16 %v11866, %v11865
  %v11911 = vpack.c.bf16 %v11868, %v11867
  %v11912 = vpack.c.bf16 %v11870, %v11869
  %v11913 = vpack.c.bf16 %v11872, %v11871
  %v11914 = vpack.c.bf16 %v11874, %v11873
  %v11915 = vpack.c.bf16 %v11876, %v11875
  %v11916 = vpack.c.bf16 %v11878, %v11877
  %v11917 = vpack.c.bf16 %v11880, %v11879
  %v11918 = vpack.c.bf16 %v11882, %v11881
  %v11919 = vpack.c.bf16 %v11884, %v11883
  %v11920 = vpack.c.bf16 %v11886, %v11885
  %v11921 = vpack.c.bf16 %v11888, %v11887
  %v11922 = vpack.c.bf16 %v11890, %v11889
  %v11923 = vld [vmem:[%s3] sm:$0xf]
  %v11924 = vld [vmem:[%s3 + $0x4] sm:$0xf]
  %v11925 = vld [vmem:[%s3 + $0x8] sm:$0xf]
  %v11926 = vld [vmem:[%s3 + $0xc] sm:$0xf]
  %v11927 = vld [vmem:[%s3 + $0x10] sm:$0xf]
  %v11928 = vld [vmem:[%s3 + $0x14] sm:$0xf]
  %v11929 = vld [vmem:[%s3 + $0x18] sm:$0xf]
  %v11930 = vld [vmem:[%s3 + $0x1c] sm:$0xf]
  %v11939 = vunpack.c.l.b16 %v11923
  %v11940 = vunpack.c.l.b16 %v11924
  %v11941 = vunpack.c.l.b16 %v11925
  %v11942 = vunpack.c.l.b16 %v11926
  %v11943 = vunpack.c.l.b16 %v11927
  %v11944 = vunpack.c.l.b16 %v11928
  %v11945 = vunpack.c.l.b16 %v11929
  %v11946 = vunpack.c.l.b16 %v11930
  %v11947 = vpack.c.b16 %v11940, %v11939
  %v11948 = vpack.c.b16 %v11942, %v11941
  %v11949 = vpack.c.b16 %v11944, %v11943
  %v11950 = vpack.c.b16 %v11946, %v11945
  %v11956 = vsel %vm6778, %v11891, 0
  %v11959 = vsel %vm6778, %v11892, 0
  %v11962 = vsel %vm6778, %v11893, 0
  %v11965 = vsel %vm6778, %v11894, 0
  %v11968 = vsel %vm6778, %v11895, 0
  %v11971 = vsel %vm6778, %v11896, 0
  %v11974 = vsel %vm6778, %v11897, 0
  %v11977 = vsel %vm6778, %v11898, 0
  %v11980 = vsel %vm6778, %v11899, 0
  %v11983 = vsel %vm6778, %v11900, 0
  %v11986 = vsel %vm6778, %v11901, 0
  %v11989 = vsel %vm6778, %v11902, 0
  %v11992 = vsel %vm6778, %v11903, 0
  %v11995 = vsel %vm6778, %v11904, 0
  %v11998 = vsel %vm6778, %v11905, 0
  %v12001 = vsel %vm6778, %v11906, 0
  %v12004 = vsel %vm6778, %v11907, 0
  %v12007 = vsel %vm6778, %v11908, 0
  %v12010 = vsel %vm6778, %v11909, 0
  %v12013 = vsel %vm6778, %v11910, 0
  %v12016 = vsel %vm6778, %v11911, 0
  %v12019 = vsel %vm6778, %v11912, 0
  %v12022 = vsel %vm6778, %v11913, 0
  %v12025 = vsel %vm6778, %v11914, 0
  %v12028 = vsel %vm6778, %v11915, 0
  %v12031 = vsel %vm6778, %v11916, 0
  %v12034 = vsel %vm6778, %v11917, 0
  %v12037 = vsel %vm6778, %v11918, 0
  %v12040 = vsel %vm6778, %v11919, 0
  %v12043 = vsel %vm6778, %v11920, 0
  %v12046 = vsel %vm6778, %v11921, 0
  %v12049 = vsel %vm6778, %v11922, 0
  %12051 = vmatpush.bf16.msra.mxu0 0
  %12052 = vmatpush.bf16.msra.mxu0 0
  %12053 = vmatpush.bf16.msra.mxu0 0
  %12054 = vmatpush.bf16.msra.mxu0 0
  %12055 = vmatpush.bf16.msra.mxu0 %v11950
  %12056 = vmatpush.bf16.msra.mxu0 %v11949
  %12057 = vmatpush.bf16.msra.mxu0 %v11948
  %12058 = vmatpush.bf16.msra.mxu0 %v11947
  %12059 = vmatmul.bf16.gmra.mxu0 %v11956
  %v12060 = vpop.f32.mrf.mxu0
  %v12061 = vadd.f32 0.0, %v12060
  %v12062 = vpop.f32.mrf.mxu0
  %v12063 = vadd.f32 0.0, %v12062
  %12064 = vmatmul.bf16.gmra.mxu0 %v11959
  %v12065 = vpop.f32.mrf.mxu0
  %v12066 = vadd.f32 0.0, %v12065
  %v12067 = vpop.f32.mrf.mxu0
  %v12068 = vadd.f32 0.0, %v12067
  %12069 = vmatmul.bf16.gmra.mxu0 %v11962
  %v12070 = vpop.f32.mrf.mxu0
  %v12071 = vadd.f32 0.0, %v12070
  %v12072 = vpop.f32.mrf.mxu0
  %v12073 = vadd.f32 0.0, %v12072
  %12074 = vmatmul.bf16.gmra.mxu0 %v11965
  %v12075 = vpop.f32.mrf.mxu0
  %v12076 = vadd.f32 0.0, %v12075
  %v12077 = vpop.f32.mrf.mxu0
  %v12078 = vadd.f32 0.0, %v12077
  %12079 = vmatmul.bf16.gmra.mxu0 %v11968
  %v12080 = vpop.f32.mrf.mxu0
  %v12081 = vadd.f32 0.0, %v12080
  %v12082 = vpop.f32.mrf.mxu0
  %v12083 = vadd.f32 0.0, %v12082
  %12084 = vmatmul.bf16.gmra.mxu0 %v11971
  %v12085 = vpop.f32.mrf.mxu0
  %v12086 = vadd.f32 0.0, %v12085
  %v12087 = vpop.f32.mrf.mxu0
  %v12088 = vadd.f32 0.0, %v12087
  %12089 = vmatmul.bf16.gmra.mxu0 %v11974
  %v12090 = vpop.f32.mrf.mxu0
  %v12091 = vadd.f32 0.0, %v12090
  %v12092 = vpop.f32.mrf.mxu0
  %v12093 = vadd.f32 0.0, %v12092
  %12094 = vmatmul.bf16.gmra.mxu0 %v11977
  %v12095 = vpop.f32.mrf.mxu0
  %v12096 = vadd.f32 0.0, %v12095
  %v12097 = vpop.f32.mrf.mxu0
  %v12098 = vadd.f32 0.0, %v12097
  %12099 = vmatmul.bf16.gmra.mxu0 %v11980
  %v12100 = vpop.f32.mrf.mxu0
  %v12101 = vadd.f32 0.0, %v12100
  %v12102 = vpop.f32.mrf.mxu0
  %v12103 = vadd.f32 0.0, %v12102
  %12104 = vmatmul.bf16.gmra.mxu0 %v11983
  %v12105 = vpop.f32.mrf.mxu0
  %v12106 = vadd.f32 0.0, %v12105
  %v12107 = vpop.f32.mrf.mxu0
  %v12108 = vadd.f32 0.0, %v12107
  %12109 = vmatmul.bf16.gmra.mxu0 %v11986
  %v12110 = vpop.f32.mrf.mxu0
  %v12111 = vadd.f32 0.0, %v12110
  %v12112 = vpop.f32.mrf.mxu0
  %v12113 = vadd.f32 0.0, %v12112
  %12114 = vmatmul.bf16.gmra.mxu0 %v11989
  %v12115 = vpop.f32.mrf.mxu0
  %v12116 = vadd.f32 0.0, %v12115
  %v12117 = vpop.f32.mrf.mxu0
  %v12118 = vadd.f32 0.0, %v12117
  %12119 = vmatmul.bf16.gmra.mxu0 %v11992
  %v12120 = vpop.f32.mrf.mxu0
  %v12121 = vadd.f32 0.0, %v12120
  %v12122 = vpop.f32.mrf.mxu0
  %v12123 = vadd.f32 0.0, %v12122
  %12124 = vmatmul.bf16.gmra.mxu0 %v11995
  %v12125 = vpop.f32.mrf.mxu0
  %v12126 = vadd.f32 0.0, %v12125
  %v12127 = vpop.f32.mrf.mxu0
  %v12128 = vadd.f32 0.0, %v12127
  %12129 = vmatmul.bf16.gmra.mxu0 %v11998
  %v12130 = vpop.f32.mrf.mxu0
  %v12131 = vadd.f32 0.0, %v12130
  %v12132 = vpop.f32.mrf.mxu0
  %v12133 = vadd.f32 0.0, %v12132
  %12134 = vmatmul.bf16.gmra.mxu0 %v12001
  %v12135 = vpop.f32.mrf.mxu0
  %v12136 = vadd.f32 0.0, %v12135
  %v12137 = vpop.f32.mrf.mxu0
  %v12138 = vadd.f32 0.0, %v12137
  %12139 = vmatmul.bf16.gmra.mxu0 %v12004
  %v12140 = vpop.f32.mrf.mxu0
  %v12141 = vadd.f32 0.0, %v12140
  %v12142 = vpop.f32.mrf.mxu0
  %v12143 = vadd.f32 0.0, %v12142
  %12144 = vmatmul.bf16.gmra.mxu0 %v12007
  %v12145 = vpop.f32.mrf.mxu0
  %v12146 = vadd.f32 0.0, %v12145
  %v12147 = vpop.f32.mrf.mxu0
  %v12148 = vadd.f32 0.0, %v12147
  %12149 = vmatmul.bf16.gmra.mxu0 %v12010
  %v12150 = vpop.f32.mrf.mxu0
  %v12151 = vadd.f32 0.0, %v12150
  %v12152 = vpop.f32.mrf.mxu0
  %v12153 = vadd.f32 0.0, %v12152
  %12154 = vmatmul.bf16.gmra.mxu0 %v12013
  %v12155 = vpop.f32.mrf.mxu0
  %v12156 = vadd.f32 0.0, %v12155
  %v12157 = vpop.f32.mrf.mxu0
  %v12158 = vadd.f32 0.0, %v12157
  %12159 = vmatmul.bf16.gmra.mxu0 %v12016
  %v12160 = vpop.f32.mrf.mxu0
  %v12161 = vadd.f32 0.0, %v12160
  %v12162 = vpop.f32.mrf.mxu0
  %v12163 = vadd.f32 0.0, %v12162
  %12164 = vmatmul.bf16.gmra.mxu0 %v12019
  %v12165 = vpop.f32.mrf.mxu0
  %v12166 = vadd.f32 0.0, %v12165
  %v12167 = vpop.f32.mrf.mxu0
  %v12168 = vadd.f32 0.0, %v12167
  %12169 = vmatmul.bf16.gmra.mxu0 %v12022
  %v12170 = vpop.f32.mrf.mxu0
  %v12171 = vadd.f32 0.0, %v12170
  %v12172 = vpop.f32.mrf.mxu0
  %v12173 = vadd.f32 0.0, %v12172
  %12174 = vmatmul.bf16.gmra.mxu0 %v12025
  %v12175 = vpop.f32.mrf.mxu0
  %v12176 = vadd.f32 0.0, %v12175
  %v12177 = vpop.f32.mrf.mxu0
  %v12178 = vadd.f32 0.0, %v12177
  %12179 = vmatmul.bf16.gmra.mxu0 %v12028
  %v12180 = vpop.f32.mrf.mxu0
  %v12181 = vadd.f32 0.0, %v12180
  %v12182 = vpop.f32.mrf.mxu0
  %v12183 = vadd.f32 0.0, %v12182
  %12184 = vmatmul.bf16.gmra.mxu0 %v12031
  %v12185 = vpop.f32.mrf.mxu0
  %v12186 = vadd.f32 0.0, %v12185
  %v12187 = vpop.f32.mrf.mxu0
  %v12188 = vadd.f32 0.0, %v12187
  %12189 = vmatmul.bf16.gmra.mxu0 %v12034
  %v12190 = vpop.f32.mrf.mxu0
  %v12191 = vadd.f32 0.0, %v12190
  %v12192 = vpop.f32.mrf.mxu0
  %v12193 = vadd.f32 0.0, %v12192
  %12194 = vmatmul.bf16.gmra.mxu0 %v12037
  %v12195 = vpop.f32.mrf.mxu0
  %v12196 = vadd.f32 0.0, %v12195
  %v12197 = vpop.f32.mrf.mxu0
  %v12198 = vadd.f32 0.0, %v12197
  %12199 = vmatmul.bf16.gmra.mxu0 %v12040
  %v12200 = vpop.f32.mrf.mxu0
  %v12201 = vadd.f32 0.0, %v12200
  %v12202 = vpop.f32.mrf.mxu0
  %v12203 = vadd.f32 0.0, %v12202
  %12204 = vmatmul.bf16.gmra.mxu0 %v12043
  %v12205 = vpop.f32.mrf.mxu0
  %v12206 = vadd.f32 0.0, %v12205
  %v12207 = vpop.f32.mrf.mxu0
  %v12208 = vadd.f32 0.0, %v12207
  %12209 = vmatmul.bf16.gmra.mxu0 %v12046
  %v12210 = vpop.f32.mrf.mxu0
  %v12211 = vadd.f32 0.0, %v12210
  %v12212 = vpop.f32.mrf.mxu0
  %v12213 = vadd.f32 0.0, %v12212
  %12214 = vmatmul.bf16.gmra.mxu0 %v12049
  %v12215 = vpop.f32.mrf.mxu0
  %v12216 = vadd.f32 0.0, %v12215
  %v12217 = vpop.f32.mrf.mxu0
  %v12218 = vadd.f32 0.0, %v12217
  %12219 = vdwg.mxu0
  %v12220 = vperm.slane %v1213, 0
  %v12221 = vadd.f32 %v12061, %v12220
  %v12222 = vadd.f32 %v12063, %v12220
  %v12223 = vadd.f32 %v12066, %v12220
  %v12224 = vadd.f32 %v12068, %v12220
  %v12225 = vadd.f32 %v12071, %v12220
  %v12226 = vadd.f32 %v12073, %v12220
  %v12227 = vadd.f32 %v12076, %v12220
  %v12228 = vadd.f32 %v12078, %v12220
  %v12229 = vadd.f32 %v12081, %v12220
  %v12230 = vadd.f32 %v12083, %v12220
  %v12231 = vadd.f32 %v12086, %v12220
  %v12232 = vadd.f32 %v12088, %v12220
  %v12233 = vadd.f32 %v12091, %v12220
  %v12234 = vadd.f32 %v12093, %v12220
  %v12235 = vadd.f32 %v12096, %v12220
  %v12236 = vadd.f32 %v12098, %v12220
  %v12237 = vadd.f32 %v12101, %v12220
  %v12238 = vadd.f32 %v12103, %v12220
  %v12239 = vadd.f32 %v12106, %v12220
  %v12240 = vadd.f32 %v12108, %v12220
  %v12241 = vadd.f32 %v12111, %v12220
  %v12242 = vadd.f32 %v12113, %v12220
  %v12243 = vadd.f32 %v12116, %v12220
  %v12244 = vadd.f32 %v12118, %v12220
  %v12245 = vadd.f32 %v12121, %v12220
  %v12246 = vadd.f32 %v12123, %v12220
  %v12247 = vadd.f32 %v12126, %v12220
  %v12248 = vadd.f32 %v12128, %v12220
  %v12249 = vadd.f32 %v12131, %v12220
  %v12250 = vadd.f32 %v12133, %v12220
  %v12251 = vadd.f32 %v12136, %v12220
  %v12252 = vadd.f32 %v12138, %v12220
  %12253 = vxpose.xlu0.b32.start [1/16] %v12221, 128
  %12254 = vxpose.xlu0.b32.cont [2/16] %v12222, 128
  %12255 = vxpose.xlu0.b32.cont [3/16] %v12223, 128
  %12256 = vxpose.xlu0.b32.cont [4/16] %v12224, 128
  %12257 = vxpose.xlu0.b32.cont [5/16] %v12225, 128
  %12258 = vxpose.xlu0.b32.cont [6/16] %v12226, 128
  %12259 = vxpose.xlu0.b32.cont [7/16] %v12227, 128
  %12260 = vxpose.xlu0.b32.cont [8/16] %v12228, 128
  %12261 = vxpose.xlu0.b32.cont [9/16] %v12229, 128
  %12262 = vxpose.xlu0.b32.cont [10/16] %v12230, 128
  %12263 = vxpose.xlu0.b32.cont [11/16] %v12231, 128
  %12264 = vxpose.xlu0.b32.cont [12/16] %v12232, 128
  %12265 = vxpose.xlu0.b32.cont [13/16] %v12233, 128
  %12266 = vxpose.xlu0.b32.cont [14/16] %v12234, 128
  %12267 = vxpose.xlu0.b32.cont [15/16] %v12235, 128
  %12268 = vxpose.xlu0.b32.end [16/16] %v12236, 128
  %v12269 = vpop.trf.xlu0
  %v12270 = vpop.trf.xlu0
  %v12271 = vpop.trf.xlu0
  %v12272 = vpop.trf.xlu0
  %v12273 = vpop.trf.xlu0
  %v12274 = vpop.trf.xlu0
  %v12275 = vpop.trf.xlu0
  %v12276 = vpop.trf.xlu0
  %v12277 = vpop.trf.xlu0
  %v12278 = vpop.trf.xlu0
  %v12279 = vpop.trf.xlu0
  %v12280 = vpop.trf.xlu0
  %v12281 = vpop.trf.xlu0
  %v12282 = vpop.trf.xlu0
  %v12283 = vpop.trf.xlu0
  %v12284 = vpop.trf.xlu0
  %12285 = vxpose.xlu0.b32.start [1/16] %v12237, 128
  %12286 = vxpose.xlu0.b32.cont [2/16] %v12238, 128
  %12287 = vxpose.xlu0.b32.cont [3/16] %v12239, 128
  %12288 = vxpose.xlu0.b32.cont [4/16] %v12240, 128
  %12289 = vxpose.xlu0.b32.cont [5/16] %v12241, 128
  %12290 = vxpose.xlu0.b32.cont [6/16] %v12242, 128
  %12291 = vxpose.xlu0.b32.cont [7/16] %v12243, 128
  %12292 = vxpose.xlu0.b32.cont [8/16] %v12244, 128
  %12293 = vxpose.xlu0.b32.cont [9/16] %v12245, 128
  %12294 = vxpose.xlu0.b32.cont [10/16] %v12246, 128
  %12295 = vxpose.xlu0.b32.cont [11/16] %v12247, 128
  %12296 = vxpose.xlu0.b32.cont [12/16] %v12248, 128
  %12297 = vxpose.xlu0.b32.cont [13/16] %v12249, 128
  %12298 = vxpose.xlu0.b32.cont [14/16] %v12250, 128
  %12299 = vxpose.xlu0.b32.cont [15/16] %v12251, 128
  %12300 = vxpose.xlu0.b32.end [16/16] %v12252, 128
  %v12301 = vpop.trf.xlu0
  %v12302 = vpop.trf.xlu0
  %v12303 = vpop.trf.xlu0
  %v12304 = vpop.trf.xlu0
  %v12305 = vpop.trf.xlu0
  %v12306 = vpop.trf.xlu0
  %v12307 = vpop.trf.xlu0
  %v12308 = vpop.trf.xlu0
  %v12309 = vpop.trf.xlu0
  %v12310 = vpop.trf.xlu0
  %v12311 = vpop.trf.xlu0
  %v12312 = vpop.trf.xlu0
  %v12313 = vpop.trf.xlu0
  %v12314 = vpop.trf.xlu0
  %v12315 = vpop.trf.xlu0
  %v12316 = vpop.trf.xlu0
  %12317 = vst [vmem:[%s7] sm:$0xff] %v12269
  %12318 = vst [vmem:[%s7 + $0x8] sm:$0xff] %v12301
  %12319 = vst [vmem:[%s7 + $0x10] sm:$0xff] %v12270
  %12320 = vst [vmem:[%s7 + $0x18] sm:$0xff] %v12302
  %v12321 = vperm.slane %v1213, 1
  %v12322 = vadd.f32 %v12141, %v12321
  %v12323 = vadd.f32 %v12143, %v12321
  %v12324 = vadd.f32 %v12146, %v12321
  %v12325 = vadd.f32 %v12148, %v12321
  %v12326 = vadd.f32 %v12151, %v12321
  %v12327 = vadd.f32 %v12153, %v12321
  %v12328 = vadd.f32 %v12156, %v12321
  %v12329 = vadd.f32 %v12158, %v12321
  %v12330 = vadd.f32 %v12161, %v12321
  %v12331 = vadd.f32 %v12163, %v12321
  %v12332 = vadd.f32 %v12166, %v12321
  %v12333 = vadd.f32 %v12168, %v12321
  %v12334 = vadd.f32 %v12171, %v12321
  %v12335 = vadd.f32 %v12173, %v12321
  %v12336 = vadd.f32 %v12176, %v12321
  %v12337 = vadd.f32 %v12178, %v12321
  %v12338 = vadd.f32 %v12181, %v12321
  %v12339 = vadd.f32 %v12183, %v12321
  %v12340 = vadd.f32 %v12186, %v12321
  %v12341 = vadd.f32 %v12188, %v12321
  %v12342 = vadd.f32 %v12191, %v12321
  %v12343 = vadd.f32 %v12193, %v12321
  %v12344 = vadd.f32 %v12196, %v12321
  %v12345 = vadd.f32 %v12198, %v12321
  %v12346 = vadd.f32 %v12201, %v12321
  %v12347 = vadd.f32 %v12203, %v12321
  %v12348 = vadd.f32 %v12206, %v12321
  %v12349 = vadd.f32 %v12208, %v12321
  %v12350 = vadd.f32 %v12211, %v12321
  %v12351 = vadd.f32 %v12213, %v12321
  %v12352 = vadd.f32 %v12216, %v12321
  %v12353 = vadd.f32 %v12218, %v12321
  %12354 = vxpose.xlu0.b32.start [1/16] %v12322, 128
  %12355 = vxpose.xlu0.b32.cont [2/16] %v12323, 128
  %12356 = vxpose.xlu0.b32.cont [3/16] %v12324, 128
  %12357 = vxpose.xlu0.b32.cont [4/16] %v12325, 128
  %12358 = vxpose.xlu0.b32.cont [5/16] %v12326, 128
  %12359 = vxpose.xlu0.b32.cont [6/16] %v12327, 128
  %12360 = vxpose.xlu0.b32.cont [7/16] %v12328, 128
  %12361 = vxpose.xlu0.b32.cont [8/16] %v12329, 128
  %12362 = vxpose.xlu0.b32.cont [9/16] %v12330, 128
  %12363 = vxpose.xlu0.b32.cont [10/16] %v12331, 128
  %12364 = vxpose.xlu0.b32.cont [11/16] %v12332, 128
  %12365 = vxpose.xlu0.b32.cont [12/16] %v12333, 128
  %12366 = vxpose.xlu0.b32.cont [13/16] %v12334, 128
  %12367 = vxpose.xlu0.b32.cont [14/16] %v12335, 128
  %12368 = vxpose.xlu0.b32.cont [15/16] %v12336, 128
  %12369 = vxpose.xlu0.b32.end [16/16] %v12337, 128
  %v12370 = vpop.trf.xlu0
  %v12371 = vpop.trf.xlu0
  %v12372 = vpop.trf.xlu0
  %v12373 = vpop.trf.xlu0
  %v12374 = vpop.trf.xlu0
  %v12375 = vpop.trf.xlu0
  %v12376 = vpop.trf.xlu0
  %v12377 = vpop.trf.xlu0
  %v12378 = vpop.trf.xlu0
  %v12379 = vpop.trf.xlu0
  %v12380 = vpop.trf.xlu0
  %v12381 = vpop.trf.xlu0
  %v12382 = vpop.trf.xlu0
  %v12383 = vpop.trf.xlu0
  %v12384 = vpop.trf.xlu0
  %v12385 = vpop.trf.xlu0
  %12386 = vxpose.xlu0.b32.start [1/16] %v12338, 128
  %12387 = vxpose.xlu0.b32.cont [2/16] %v12339, 128
  %12388 = vxpose.xlu0.b32.cont [3/16] %v12340, 128
  %12389 = vxpose.xlu0.b32.cont [4/16] %v12341, 128
  %12390 = vxpose.xlu0.b32.cont [5/16] %v12342, 128
  %12391 = vxpose.xlu0.b32.cont [6/16] %v12343, 128
  %12392 = vxpose.xlu0.b32.cont [7/16] %v12344, 128
  %12393 = vxpose.xlu0.b32.cont [8/16] %v12345, 128
  %12394 = vxpose.xlu0.b32.cont [9/16] %v12346, 128
  %12395 = vxpose.xlu0.b32.cont [10/16] %v12347, 128
  %12396 = vxpose.xlu0.b32.cont [11/16] %v12348, 128
  %12397 = vxpose.xlu0.b32.cont [12/16] %v12349, 128
  %12398 = vxpose.xlu0.b32.cont [13/16] %v12350, 128
  %12399 = vxpose.xlu0.b32.cont [14/16] %v12351, 128
  %12400 = vxpose.xlu0.b32.cont [15/16] %v12352, 128
  %12401 = vxpose.xlu0.b32.end [16/16] %v12353, 128
  %v12402 = vpop.trf.xlu0
  %v12403 = vpop.trf.xlu0
  %v12404 = vpop.trf.xlu0
  %v12405 = vpop.trf.xlu0
  %v12406 = vpop.trf.xlu0
  %v12407 = vpop.trf.xlu0
  %v12408 = vpop.trf.xlu0
  %v12409 = vpop.trf.xlu0
  %v12410 = vpop.trf.xlu0
  %v12411 = vpop.trf.xlu0
  %v12412 = vpop.trf.xlu0
  %v12413 = vpop.trf.xlu0
  %v12414 = vpop.trf.xlu0
  %v12415 = vpop.trf.xlu0
  %v12416 = vpop.trf.xlu0
  %v12417 = vpop.trf.xlu0
  %s12418 = scalar_lea.vmem %s7, 32
  %12419 = vst [vmem:[%s12418] sm:$0xff] %v12370
  %12420 = vst [vmem:[%s12418 + $0x8] sm:$0xff] %v12402
  %12421 = vst [vmem:[%s12418 + $0x10] sm:$0xff] %v12371
  %12422 = vst [vmem:[%s12418 + $0x18] sm:$0xff] %v12403
  // Predicated region
  $region30: #{aspp_pallas.1} parent=0 // pred_check
    _
  $region31: #{aspp_pallas.1} parent=0 // pred_check_branch
    %12424 = sbr.rel (0) target = $region33
  $region32: #{aspp_pallas.1} parent=0 // pred_region
    _
  $region33: #{aspp_pallas.1} parent=0 // pred_fallthru
    _
  // Predicated region
  $region34: #{aspp_pallas.1} parent=0 // pred_check
    _
  $region35: #{aspp_pallas.1} parent=0 // pred_check_branch
    %12426 = sbr.rel (0) target = $region37
  $region36: #{aspp_pallas.1} parent=0 // pred_region
    _
  $region37: #{aspp_pallas.1} parent=0 // pred_fallthru
    _

</llo_original>
